<compile_context>
chip_gen: v7x
topology: tpu7x:2x2x1
jax: 0.10.0
libtpu: 0.0.40
codegen_flags: <defaults>
</compile_context>

<pallas_src>
import jax
import jax.numpy as jnp
from jax import lax
from jax.experimental import pallas as pl
from jax.experimental.pallas import tpu as pltpu

VMEM_SPEC = pl.BlockSpec(memory_space=pltpu.MemorySpace.VMEM)
LANE = 128
SUBLANE = 8

# ---- static model config (toy shapes consistent with the module) ----
FILTERS = (1, 3, 5)
E = 32            # word embedding dim
CC = 16           # char embedding dim
F = 32            # conv filters_dim
H = 32            # lstm hidden dim (per direction)
TAGSET = 8
VOCAB_W, VOCAB_C = 50, 30
W_PAD, C_PAD = VOCAB_W + 1, VOCAB_C


def _round_up(x, m):
    return ((x + m - 1) // m) * m


# ----------------------------------------------------------------------------
# Fused char CNN: one matmul for ALL taps of ALL filter widths.
#   ce2d: (N*L, Cc) bf16
#   wcat: (Cc, sum(k)*F) bf16   (lane-concat of all taps, filter-major)
#   conv_b: (nf, 1, F) f32
#   -> (N, f_pad) bf16, lane-dense (nf*F zero-padded to f_pad)
# ----------------------------------------------------------------------------
def char_cnn(ce2d, n_words, n_chars, wcat, conv_b, filters, f_dim, f_pad):
    N, L = n_words, n_chars
    TTF = int(wcat.shape[1])
    assert all(k <= L for k in filters), "filter wider than max chars per word"

    def kernel(ce_ref, w_ref, b_ref, out_ref):
        # ONE (N*L, Cc) x (Cc, sum(k)*F) MXU matmul for every tap of every
        # filter; ce is read from vregs once.
        y = jnp.dot(ce_ref[...], w_ref[...],
                    preferred_element_type=jnp.float32)          # (N*L, TTF)
        y3 = y.reshape(N, L, TTF)
        feats = []
        col = 0
        for fi, k in enumerate(filters):
            P = L - k + 1
            # shifted accumulation on the small result (no per-tap matmul)
            acc = y3[:, 0:P, col:col + f_dim]
            for j in range(1, k):
                acc = acc + y3[:, j:j + P, col + j * f_dim:col + (j + 1) * f_dim]
            col += k * f_dim
            # bias constant over positions -> add after max;
            # relu(max(x)+b) == max(relu(x+b)) since relu is monotone.
            m = jnp.max(acc, axis=1) + b_ref[fi]                 # (N, F)
            feats.append(jnp.maximum(m, 0.0))
        out = jnp.concatenate(feats, axis=-1)                    # (N, nf*F)
        pad = f_pad - out.shape[1]
        if pad:
            out = jnp.concatenate(
                [out, jnp.zeros((N, pad), jnp.float32)], axis=-1)
        out_ref[...] = out.astype(jnp.bfloat16)                  # lane-dense bf16

    # TODO(synk): for non-toy N, grid over word tiles with BlockSpec index
    # maps + dimension_semantics=("parallel",) and a v7x-sized VMEM budget.
    return pl.pallas_call(
        kernel,
        out_shape=jax.ShapeDtypeStruct((N, f_pad), jnp.bfloat16),
        in_specs=[VMEM_SPEC] * 3,
        out_specs=VMEM_SPEC,
    )(ce2d, wcat, conv_b)


# ----------------------------------------------------------------------------
# Fused single-layer bidirectional LSTM (PyTorch gate order i,f,g,o)
# + linear tag head epilogue (tagset padded to lane-dense 128 columns).
#   we2d:   (T*Bp, E)      bf16   word embeddings (time-major, batch-padded)
#   cf2d:   (T*Bp, f_pad)  bf16   char features (lane-padded)
#   wih_w:  (E, 8H)        bf16   word rows of [W_ih_f | W_ih_b]
#   wih_c:  (f_pad, 8H)    bf16   char rows of [W_ih_f | W_ih_b], zero-padded
#   b_cat:  (1, 8H)        f32    [b_f | b_b]
#   whh_blk:(2H, 8H)       bf16   block-diag(W_hh_f, W_hh_b)
#   lw_f/lw_b: (H, NT_pad) bf16;  l_b: (1, NT_pad) f32
#   -> logits (T, Bp, NT_pad) f32
# ----------------------------------------------------------------------------
def bilstm_head(we2d, cf2d, wih_w, wih_c, b_cat, whh_blk, lw_f, lw_b, l_b,
                T, Bp):
    Hd = int(whh_blk.shape[0]) // 2
    H4 = 4 * Hd
    NT = int(lw_f.shape[1])

    def kernel(we_ref, cf_ref, ww_ref, wc_ref, b_ref, whh_ref,
               lwf_ref, lwb_ref, lb_ref, out_ref, g_ref, hf_ref, hb_ref):
        # ---- input projections for BOTH directions in one 8H-wide pass,
        #      W_ih split row-wise so no concat(we, cf) is materialized ----
        g_ref[...] = (jnp.dot(we_ref[...], ww_ref[...],
                              preferred_element_type=jnp.float32)
                      + jnp.dot(cf_ref[...], wc_ref[...],
                                preferred_element_type=jnp.float32)
                      + b_ref[...]).reshape(T, Bp, 2 * H4)

        whh = whh_ref[...]                                   # (2H, 8H) bf16

        def gates(gv, c):
            i_g = jax.nn.sigmoid(gv[:, 0:Hd])
            f_g = jax.nn.sigmoid(gv[:, Hd:2 * Hd])
            g_g = jnp.tanh(gv[:, 2 * Hd:3 * Hd])
            o_g = jax.nn.sigmoid(gv[:, 3 * Hd:4 * Hd])
            c_new = f_g * c + i_g * g_g
            h_new = (o_g * jnp.tanh(c_new)).astype(jnp.bfloat16)
            return h_new, c_new

        # ---- fused recurrence: ONE MXU call per step covers fwd + bwd ----
        def step(t, carry):
            h_cat, c_f, c_b = carry                          # (Bp,2H) bf16
            tb = T - 1 - t
            rec = jnp.dot(h_cat, whh,
                          preferred_element_type=jnp.float32)  # (Bp, 8H)
            g_f = g_ref[t][:, 0:H4] + rec[:, 0:H4]
            g_b = g_ref[tb][:, H4:2 * H4] + rec[:, H4:2 * H4]
            h_f, c_f = gates(g_f, c_f)
            h_b, c_b = gates(g_b, c_b)
            hf_ref[t, :, :] = h_f
            hb_ref[tb, :, :] = h_b
            return (jnp.concatenate([h_f, h_b], axis=-1), c_f, c_b)

        zc = jnp.zeros((Bp, Hd), jnp.float32)
        h0 = jnp.zeros((Bp, 2 * Hd), jnp.bfloat16)
        lax.fori_loop(0, T, step, (h0, zc, zc),
                      unroll=True if T <= 16 else 4)

        # ---- fused linear tag head, lane-dense (128-col) output store ----
        hf2d = hf_ref[...].reshape(T * Bp, Hd)
        hb2d = hb_ref[...].reshape(T * Bp, Hd)
        logits = (jnp.dot(hf2d, lwf_ref[...], preferred_element_type=jnp.float32)
                  + jnp.dot(hb2d, lwb_ref[...], preferred_element_type=jnp.float32)
                  + lb_ref[...])
        out_ref[...] = logits.reshape(T, Bp, NT)

    # TODO(synk): for non-toy T/B, tile T via emit_pipeline / grid, set
    # vmem_limit_bytes for v7x (64 MiB), and on v7x split fwd/bwd across the
    # two TensorCores instead of the block-diag fused recurrence matmul.
    return pl.pallas_call(
        kernel,
        out_shape=jax.ShapeDtypeStruct((T, Bp, NT), jnp.float32),
        in_specs=[VMEM_SPEC] * 9,
        out_specs=VMEM_SPEC,
        scratch_shapes=[
            pltpu.VMEM((T, Bp, 2 * H4), jnp.float32),   # fwd|bwd input gates
            pltpu.VMEM((T, Bp, Hd), jnp.bfloat16),      # fwd hidden states
            pltpu.VMEM((T, Bp, Hd), jnp.bfloat16),      # bwd hidden states
        ],
    )(we2d, cf2d, wih_w, wih_c, b_cat, whh_blk, lw_f, lw_b, l_b)


# ----------------------------------------------------------------------------
# Full forward (only gathers + tiny int/weight reshuffles in XLA glue)
# ----------------------------------------------------------------------------
@jax.jit
def bilstm_tagger_forward(params, word_ids, char_ids):
    B, T = word_ids.shape
    L = char_ids.shape[2]
    Bp = _round_up(B, SUBLANE)
    nf = len(FILTERS)
    f_pad = _round_up(nf * F, LANE)

    # batch pad + time-major reorder at the INDEX level (cheap int32 ops;
    # the f32 activation tensor never round-trips HBM for concat/pad/transpose)
    w_ids = jnp.pad(word_ids, ((0, Bp - B), (0, 0)), constant_values=W_PAD)
    c_ids = jnp.pad(char_ids, ((0, Bp - B), (0, 0), (0, 0)),
                    constant_values=C_PAD)
    w_ids = jnp.transpose(w_ids, (1, 0))                     # (T, Bp)
    c_ids = jnp.transpose(c_ids, (1, 0, 2))                  # (T, Bp, L)

    we2d = params["wemb"][w_ids].astype(jnp.bfloat16).reshape(T * Bp, E)
    ce2d = params["cemb"][c_ids].astype(jnp.bfloat16).reshape(T * Bp * L, CC)

    # lane-concat all conv taps into one (Cc, sum(k)*F) RHS
    wcat = jnp.concatenate(
        [w.transpose(1, 0, 2).reshape(CC, w.shape[0] * F)
         for w in params["conv_w"]], axis=1)                 # (Cc, 9F) bf16
    char_feat = char_cnn(ce2d, T * Bp, L, wcat, params["conv_b"],
                         FILTERS, F, f_pad)                  # (T*Bp, f_pad) bf16

    # combined LSTM weights: fwd|bwd lane-concat (8H cols), word/char row
    # split (matches the in-kernel row-wise W_ih split), block-diag W_hh
    wih_f, whh_f, b_f, wih_b, whh_b, b_b = params["lstm"]
    wih_cat = jnp.concatenate([wih_f, wih_b], axis=1)        # (D, 8H) bf16
    wih_w = wih_cat[:E]                                      # (E, 8H)
    wih_c = jnp.pad(wih_cat[E:],
                    ((0, f_pad - (wih_cat.shape[0] - E)), (0, 0)))  # (f_pad,8H)
    b_cat = jnp.concatenate([b_f, b_b], axis=1)              # (1, 8H) f32
    zH = jnp.zeros((H, 4 * H), whh_f.dtype)
    whh_blk = jnp.concatenate(
        [jnp.concatenate([whh_f, zH], axis=1),
         jnp.concatenate([zH, whh_b], axis=1)], axis=0)      # (2H, 8H) bf16

    # linear tag head weights, tagset padded to 128 lanes
    lin_w, lin_b = params["lin_w"], params["lin_b"]
    tags = lin_w.shape[1]
    nt_pad = _round_up(tags, LANE)
    lw_f = jnp.pad(lin_w[:H], ((0, 0), (0, nt_pad - tags))).astype(jnp.bfloat16)
    lw_b = jnp.pad(lin_w[H:], ((0, 0), (0, nt_pad - tags))).astype(jnp.bfloat16)
    l_b = jnp.pad(lin_b, ((0, 0), (0, nt_pad - tags)))

    logits = bilstm_head(we2d, char_feat, wih_w, wih_c, b_cat, whh_blk,
                         lw_f, lw_b, l_b, T, Bp)             # (T, Bp, nt_pad)
    return jnp.transpose(logits[:, :B, :tags], (1, 0, 2))    # (B, T, tags)


# ----------------------------------------------------------------------------
# Deterministic synthetic parameters
# ----------------------------------------------------------------------------
def init_params(key):
    ks = jax.random.split(key, 2 + 2 * len(FILTERS) + 6 + 2)
    kit = iter(ks)
    scale = 0.1

    wemb = scale * jax.random.normal(next(kit), (VOCAB_W + 2, E), jnp.float32)
    wemb = wemb.at[W_PAD].set(0.0)
    cemb = scale * jax.random.normal(next(kit), (VOCAB_C + 1, CC), jnp.float32)
    cemb = cemb.at[C_PAD].set(0.0)

    conv_w, conv_b = [], []
    for k in FILTERS:
        conv_w.append((scale * jax.random.normal(next(kit), (k, CC, F),
                                                 jnp.float32)).astype(jnp.bfloat16))
        conv_b.append(scale * jax.random.normal(next(kit), (1, F), jnp.float32))
    conv_b = jnp.stack(conv_b, axis=0)                       # (nf, 1, F) f32

    D = E * (len(FILTERS) + 1)
    lstm = []
    for _ in range(2):  # forward dir, backward dir
        wih = (scale * jax.random.normal(next(kit), (D, 4 * H),
                                         jnp.float32)).astype(jnp.bfloat16)
        whh = (scale * jax.random.normal(next(kit), (H, 4 * H),
                                         jnp.float32)).astype(jnp.bfloat16)
        # TODO(synk): real PyTorch checkpoints have b_ih + b_hh; sum them here.
        b = scale * jax.random.normal(next(kit), (1, 4 * H), jnp.float32)
        lstm += [wih, whh, b]

    lin_w = scale * jax.random.normal(next(kit), (2 * H, TAGSET), jnp.float32)
    lin_b = scale * jax.random.normal(next(kit), (1, TAGSET), jnp.float32)

    return {"wemb": wemb, "cemb": cemb, "conv_w": conv_w, "conv_b": conv_b,
            "lstm": tuple(lstm), "lin_w": lin_w, "lin_b": lin_b}


if __name__ == "__main__":
    B, T, L = 2, 8, 8   # batch, seq len (words), max chars per word

    key = jax.random.PRNGKey(0)
    kp, kw, kc = jax.random.split(key, 3)

    params = init_params(kp)
    word_ids = jax.random.randint(kw, (B, T), 0, VOCAB_W, dtype=jnp.int32)
    char_ids = jax.random.randint(kc, (B, T, L), 0, VOCAB_C, dtype=jnp.int32)

    out = jax.block_until_ready(bilstm_tagger_forward(params, word_ids, char_ids))

    assert out.shape == (B, T, TAGSET), out.shape
    assert bool(jnp.all(jnp.isfinite(out)))
    print("KERNEL_OK")
</pallas_src>

<mosaic_0001>
module attributes {stable_mosaic.version = 11 : i64} {
  func.func @kernel(%arg0: memref<512x16xbf16, #tpu.memory_space<vmem>>, %arg1: memref<16x288xbf16, #tpu.memory_space<vmem>>, %arg2: memref<3x1x32xf32, #tpu.memory_space<vmem>>, %arg3: memref<64x128xbf16, #tpu.memory_space<vmem>>) attributes {dimension_semantics = [], scalar_prefetch = 0 : i64, scratch_operands = 0 : i64, tpu.core_type = #tpu.core_type<tc>} {
    %c0 = arith.constant 0 : index
    %c0_0 = arith.constant 0 : index
    %0 = vector.load %arg0[%c0, %c0_0] : memref<512x16xbf16, #tpu.memory_space<vmem>>, vector<512x16xbf16>
    %c0_1 = arith.constant 0 : index
    %c0_2 = arith.constant 0 : index
    %1 = vector.load %arg1[%c0_1, %c0_2] : memref<16x288xbf16, #tpu.memory_space<vmem>>, vector<16x288xbf16>
    %cst = arith.constant dense<0.000000e+00> : vector<512x288xf32>
    %2 = tpu.matmul %0, %1, %cst {dimension_numbers = #tpu.dot_dimension_numbers<[1], [0], [0], [1], [0, 0, 1, 1], [], []>} : vector<512x16xbf16>, vector<16x288xbf16>, vector<512x288xf32> -> vector<512x288xf32>
    %3 = vector.shape_cast %2 : vector<512x288xf32> to vector<64x8x288xf32>
    %4 = vector.extract_strided_slice %3 {offsets = [0, 0, 0], sizes = [64, 8, 32], strides = [1, 1, 1]} : vector<64x8x288xf32> to vector<64x8x32xf32>
    %cst_3 = arith.constant dense<0xFF800000> : vector<64x32xf32>
    %5 = vector.multi_reduction <maximumf>, %4, %cst_3 [1] : vector<64x8x32xf32> to vector<64x32xf32>
    %c0_4 = arith.constant 0 : index
    %c0_5 = arith.constant 0 : index
    %c0_6 = arith.constant 0 : index
    %6 = vector.load %arg2[%c0_4, %c0_5, %c0_6] : memref<3x1x32xf32, #tpu.memory_space<vmem>>, vector<1x1x32xf32>
    %7 = vector.shape_cast %6 : vector<1x1x32xf32> to vector<1x32xf32>
    %8 = vector.broadcast %7 : vector<1x32xf32> to vector<64x32xf32>
    %9 = arith.addf %5, %8 : vector<64x32xf32>
    %cst_7 = arith.constant 0.000000e+00 : f32
    %10 = vector.broadcast %cst_7 : f32 to vector<64x32xf32>
    %11 = arith.maximumf %9, %10 : vector<64x32xf32>
    %12 = vector.extract_strided_slice %3 {offsets = [0, 0, 32], sizes = [64, 6, 32], strides = [1, 1, 1]} : vector<64x8x288xf32> to vector<64x6x32xf32>
    %13 = vector.extract_strided_slice %3 {offsets = [0, 1, 64], sizes = [64, 6, 32], strides = [1, 1, 1]} : vector<64x8x288xf32> to vector<64x6x32xf32>
    %14 = arith.addf %12, %13 : vector<64x6x32xf32>
    %15 = vector.extract_strided_slice %3 {offsets = [0, 2, 96], sizes = [64, 6, 32], strides = [1, 1, 1]} : vector<64x8x288xf32> to vector<64x6x32xf32>
    %16 = arith.addf %14, %15 : vector<64x6x32xf32>
    %cst_8 = arith.constant dense<0xFF800000> : vector<64x32xf32>
    %17 = vector.multi_reduction <maximumf>, %16, %cst_8 [1] : vector<64x6x32xf32> to vector<64x32xf32>
    %c1 = arith.constant 1 : index
    %c0_9 = arith.constant 0 : index
    %c0_10 = arith.constant 0 : index
    %18 = vector.load %arg2[%c1, %c0_9, %c0_10] : memref<3x1x32xf32, #tpu.memory_space<vmem>>, vector<1x1x32xf32>
    %19 = vector.shape_cast %18 : vector<1x1x32xf32> to vector<1x32xf32>
    %20 = vector.broadcast %19 : vector<1x32xf32> to vector<64x32xf32>
    %21 = arith.addf %17, %20 : vector<64x32xf32>
    %cst_11 = arith.constant 0.000000e+00 : f32
    %22 = vector.broadcast %cst_11 : f32 to vector<64x32xf32>
    %23 = arith.maximumf %21, %22 : vector<64x32xf32>
    %24 = vector.extract_strided_slice %3 {offsets = [0, 0, 128], sizes = [64, 4, 32], strides = [1, 1, 1]} : vector<64x8x288xf32> to vector<64x4x32xf32>
    %25 = vector.extract_strided_slice %3 {offsets = [0, 1, 160], sizes = [64, 4, 32], strides = [1, 1, 1]} : vector<64x8x288xf32> to vector<64x4x32xf32>
    %26 = arith.addf %24, %25 : vector<64x4x32xf32>
    %27 = vector.extract_strided_slice %3 {offsets = [0, 2, 192], sizes = [64, 4, 32], strides = [1, 1, 1]} : vector<64x8x288xf32> to vector<64x4x32xf32>
    %28 = arith.addf %26, %27 : vector<64x4x32xf32>
    %29 = vector.extract_strided_slice %3 {offsets = [0, 3, 224], sizes = [64, 4, 32], strides = [1, 1, 1]} : vector<64x8x288xf32> to vector<64x4x32xf32>
    %30 = arith.addf %28, %29 : vector<64x4x32xf32>
    %31 = vector.extract_strided_slice %3 {offsets = [0, 4, 256], sizes = [64, 4, 32], strides = [1, 1, 1]} : vector<64x8x288xf32> to vector<64x4x32xf32>
    %32 = arith.addf %30, %31 : vector<64x4x32xf32>
    %cst_12 = arith.constant dense<0xFF800000> : vector<64x32xf32>
    %33 = vector.multi_reduction <maximumf>, %32, %cst_12 [1] : vector<64x4x32xf32> to vector<64x32xf32>
    %c2 = arith.constant 2 : index
    %c0_13 = arith.constant 0 : index
    %c0_14 = arith.constant 0 : index
    %34 = vector.load %arg2[%c2, %c0_13, %c0_14] : memref<3x1x32xf32, #tpu.memory_space<vmem>>, vector<1x1x32xf32>
    %35 = vector.shape_cast %34 : vector<1x1x32xf32> to vector<1x32xf32>
    %36 = vector.broadcast %35 : vector<1x32xf32> to vector<64x32xf32>
    %37 = arith.addf %33, %36 : vector<64x32xf32>
    %cst_15 = arith.constant 0.000000e+00 : f32
    %38 = vector.broadcast %cst_15 : f32 to vector<64x32xf32>
    %39 = arith.maximumf %37, %38 : vector<64x32xf32>
    %40 = tpu.concatenate %11, %23, %39 in 1 : vector<64x32xf32>, vector<64x32xf32>, vector<64x32xf32> -> vector<64x96xf32>
    %cst_16 = arith.constant 0.000000e+00 : f32
    %41 = vector.broadcast %cst_16 : f32 to vector<64x32xf32>
    %42 = tpu.concatenate %40, %41 in 1 : vector<64x96xf32>, vector<64x32xf32> -> vector<64x128xf32>
    %43 = arith.truncf %42 : vector<64x128xf32> to vector<64x128xbf16>
    %c0_17 = arith.constant 0 : index
    %c0_18 = arith.constant 0 : index
    %44 = vector.load %arg3[%c0_17, %c0_18] : memref<64x128xbf16, #tpu.memory_space<vmem>>, vector<64x128xbf16>
    tpu.vector_store %arg3[%c0_17, %c0_18], %43 {strides = array<i32>} : memref<64x128xbf16, #tpu.memory_space<vmem>>, vector<64x128xbf16>,
    return
  }
}

module attributes {stable_mosaic.version = 11 : i64} {
  func.func @kernel(%arg0: memref<64x32xbf16, #tpu.memory_space<vmem>>, %arg1: memref<64x128xbf16, #tpu.memory_space<vmem>>, %arg2: memref<32x256xbf16, #tpu.memory_space<vmem>>, %arg3: memref<128x256xbf16, #tpu.memory_space<vmem>>, %arg4: memref<1x256xf32, #tpu.memory_space<vmem>>, %arg5: memref<64x256xbf16, #tpu.memory_space<vmem>>, %arg6: memref<32x128xbf16, #tpu.memory_space<vmem>>, %arg7: memref<32x128xbf16, #tpu.memory_space<vmem>>, %arg8: memref<1x128xf32, #tpu.memory_space<vmem>>, %arg9: memref<8x8x128xf32, #tpu.memory_space<vmem>>, %arg10: memref<8x8x256xf32, #tpu.memory_space<vmem>>, %arg11: memref<8x8x32xbf16, #tpu.memory_space<vmem>>, %arg12: memref<8x8x32xbf16, #tpu.memory_space<vmem>>) attributes {dimension_semantics = [], scalar_prefetch = 0 : i64, scratch_operands = 3 : i64, tpu.core_type = #tpu.core_type<tc>} {
    %c0 = arith.constant 0 : index
    %c0_0 = arith.constant 0 : index
    %0 = vector.load %arg0[%c0, %c0_0] : memref<64x32xbf16, #tpu.memory_space<vmem>>, vector<64x32xbf16>
    %c0_1 = arith.constant 0 : index
    %c0_2 = arith.constant 0 : index
    %1 = vector.load %arg2[%c0_1, %c0_2] : memref<32x256xbf16, #tpu.memory_space<vmem>>, vector<32x256xbf16>
    %cst = arith.constant dense<0.000000e+00> : vector<64x256xf32>
    %2 = tpu.matmul %0, %1, %cst {dimension_numbers = #tpu.dot_dimension_numbers<[1], [0], [0], [1], [0, 0, 1, 1], [], []>} : vector<64x32xbf16>, vector<32x256xbf16>, vector<64x256xf32> -> vector<64x256xf32>
    %c0_3 = arith.constant 0 : index
    %c0_4 = arith.constant 0 : index
    %3 = vector.load %arg1[%c0_3, %c0_4] : memref<64x128xbf16, #tpu.memory_space<vmem>>, vector<64x128xbf16>
    %c0_5 = arith.constant 0 : index
    %c0_6 = arith.constant 0 : index
    %4 = vector.load %arg3[%c0_5, %c0_6] : memref<128x256xbf16, #tpu.memory_space<vmem>>, vector<128x256xbf16>
    %cst_7 = arith.constant dense<0.000000e+00> : vector<64x256xf32>
    %5 = tpu.matmul %3, %4, %cst_7 {dimension_numbers = #tpu.dot_dimension_numbers<[1], [0], [0], [1], [0, 0, 1, 1], [], []>} : vector<64x128xbf16>, vector<128x256xbf16>, vector<64x256xf32> -> vector<64x256xf32>
    %6 = arith.addf %2, %5 : vector<64x256xf32>
    %c0_8 = arith.constant 0 : index
    %c0_9 = arith.constant 0 : index
    %7 = vector.load %arg4[%c0_8, %c0_9] : memref<1x256xf32, #tpu.memory_space<vmem>>, vector<1x256xf32>
    %8 = vector.broadcast %7 : vector<1x256xf32> to vector<64x256xf32>
    %9 = arith.addf %6, %8 : vector<64x256xf32>
    %10 = vector.shape_cast %9 : vector<64x256xf32> to vector<8x8x256xf32>
    %c0_10 = arith.constant 0 : index
    %c0_11 = arith.constant 0 : index
    %c0_12 = arith.constant 0 : index
    %11 = vector.load %arg10[%c0_10, %c0_11, %c0_12] : memref<8x8x256xf32, #tpu.memory_space<vmem>>, vector<8x8x256xf32>
    tpu.vector_store %arg10[%c0_10, %c0_11, %c0_12], %10 {strides = array<i32>} : memref<8x8x256xf32, #tpu.memory_space<vmem>>, vector<8x8x256xf32>,
    %c0_13 = arith.constant 0 : index
    %c0_14 = arith.constant 0 : index
    %12 = vector.load %arg5[%c0_13, %c0_14] : memref<64x256xbf16, #tpu.memory_space<vmem>>, vector<64x256xbf16>
    %cst_15 = arith.constant 0.000000e+00 : f32
    %13 = vector.broadcast %cst_15 : f32 to vector<8x32xf32>
    %cst_16 = arith.constant 0.000000e+00 : bf16
    %14 = vector.broadcast %cst_16 : bf16 to vector<8x64xbf16>
    %c0_i32 = arith.constant 0 : i32
    %c7_i32 = arith.constant 7 : i32
    %15 = arith.subi %c7_i32, %c0_i32 : i32
    %cst_17 = arith.constant dense<0.000000e+00> : vector<8x256xf32>
    %16 = tpu.matmul %14, %12, %cst_17 {dimension_numbers = #tpu.dot_dimension_numbers<[1], [0], [0], [1], [0, 0, 1, 1], [], []>} : vector<8x64xbf16>, vector<64x256xbf16>, vector<8x256xf32> -> vector<8x256xf32>
    %17 = arith.index_cast %c0_i32 : i32 to index
    %c0_18 = arith.constant 0 : index
    %c0_19 = arith.constant 0 : index
    %18 = vector.load %arg10[%17, %c0_18, %c0_19] : memref<8x8x256xf32, #tpu.memory_space<vmem>>, vector<1x8x256xf32>
    %19 = vector.shape_cast %18 : vector<1x8x256xf32> to vector<8x256xf32>
    %20 = vector.extract_strided_slice %19 {offsets = [0, 0], sizes = [8, 128], strides = [1, 1]} : vector<8x256xf32> to vector<8x128xf32>
    %21 = vector.extract_strided_slice %16 {offsets = [0, 0], sizes = [8, 128], strides = [1, 1]} : vector<8x256xf32> to vector<8x128xf32>
    %22 = arith.addf %20, %21 : vector<8x128xf32>
    %23 = arith.index_cast %15 : i32 to index
    %c0_20 = arith.constant 0 : index
    %c0_21 = arith.constant 0 : index
    %24 = vector.load %arg10[%23, %c0_20, %c0_21] : memref<8x8x256xf32, #tpu.memory_space<vmem>>, vector<1x8x256xf32>
    %25 = vector.shape_cast %24 : vector<1x8x256xf32> to vector<8x256xf32>
    %26 = vector.extract_strided_slice %25 {offsets = [0, 128], sizes = [8, 128], strides = [1, 1]} : vector<8x256xf32> to vector<8x128xf32>
    %27 = vector.extract_strided_slice %16 {offsets = [0, 128], sizes = [8, 128], strides = [1, 1]} : vector<8x256xf32> to vector<8x128xf32>
    %28 = arith.addf %26, %27 : vector<8x128xf32>
    %29 = vector.extract_strided_slice %22 {offsets = [0, 0], sizes = [8, 32], strides = [1, 1]} : vector<8x128xf32> to vector<8x32xf32>
    %30 = arith.negf %29 : vector<8x32xf32>
    %31 = math.exp %30 : vector<8x32xf32>
    %cst_22 = arith.constant 1.000000e+00 : f32
    %32 = vector.broadcast %cst_22 : f32 to vector<8x32xf32>
    %33 = arith.addf %32, %31 : vector<8x32xf32>
    %34 = arith.divf %32, %33 : vector<8x32xf32>
    %35 = vector.extract_strided_slice %22 {offsets = [0, 32], sizes = [8, 32], strides = [1, 1]} : vector<8x128xf32> to vector<8x32xf32>
    %36 = arith.negf %35 : vector<8x32xf32>
    %37 = math.exp %36 : vector<8x32xf32>
    %cst_23 = arith.constant 1.000000e+00 : f32
    %38 = vector.broadcast %cst_23 : f32 to vector<8x32xf32>
    %39 = arith.addf %38, %37 : vector<8x32xf32>
    %40 = arith.divf %38, %39 : vector<8x32xf32>
    %41 = vector.extract_strided_slice %22 {offsets = [0, 64], sizes = [8, 32], strides = [1, 1]} : vector<8x128xf32> to vector<8x32xf32>
    %42 = math.tanh %41 : vector<8x32xf32>
    %43 = vector.extract_strided_slice %22 {offsets = [0, 96], sizes = [8, 32], strides = [1, 1]} : vector<8x128xf32> to vector<8x32xf32>
    %44 = arith.negf %43 : vector<8x32xf32>
    %45 = math.exp %44 : vector<8x32xf32>
    %cst_24 = arith.constant 1.000000e+00 : f32
    %46 = vector.broadcast %cst_24 : f32 to vector<8x32xf32>
    %47 = arith.addf %46, %45 : vector<8x32xf32>
    %48 = arith.divf %46, %47 : vector<8x32xf32>
    %49 = arith.mulf %40, %13 : vector<8x32xf32>
    %50 = arith.mulf %34, %42 : vector<8x32xf32>
    %51 = arith.addf %49, %50 : vector<8x32xf32>
    %52 = math.tanh %51 : vector<8x32xf32>
    %53 = arith.mulf %48, %52 : vector<8x32xf32>
    %54 = arith.truncf %53 : vector<8x32xf32> to vector<8x32xbf16>
    %55 = vector.extract_strided_slice %28 {offsets = [0, 0], sizes = [8, 32], strides = [1, 1]} : vector<8x128xf32> to vector<8x32xf32>
    %56 = arith.negf %55 : vector<8x32xf32>
    %57 = math.exp %56 : vector<8x32xf32>
    %cst_25 = arith.constant 1.000000e+00 : f32
    %58 = vector.broadcast %cst_25 : f32 to vector<8x32xf32>
    %59 = arith.addf %58, %57 : vector<8x32xf32>
    %60 = arith.divf %58, %59 : vector<8x32xf32>
    %61 = vector.extract_strided_slice %28 {offsets = [0, 32], sizes = [8, 32], strides = [1, 1]} : vector<8x128xf32> to vector<8x32xf32>
    %62 = arith.negf %61 : vector<8x32xf32>
    %63 = math.exp %62 : vector<8x32xf32>
    %cst_26 = arith.constant 1.000000e+00 : f32
    %64 = vector.broadcast %cst_26 : f32 to vector<8x32xf32>
    %65 = arith.addf %64, %63 : vector<8x32xf32>
    %66 = arith.divf %64, %65 : vector<8x32xf32>
    %67 = vector.extract_strided_slice %28 {offsets = [0, 64], sizes = [8, 32], strides = [1, 1]} : vector<8x128xf32> to vector<8x32xf32>
    %68 = math.tanh %67 : vector<8x32xf32>
    %69 = vector.extract_strided_slice %28 {offsets = [0, 96], sizes = [8, 32], strides = [1, 1]} : vector<8x128xf32> to vector<8x32xf32>
    %70 = arith.negf %69 : vector<8x32xf32>
    %71 = math.exp %70 : vector<8x32xf32>
    %cst_27 = arith.constant 1.000000e+00 : f32
    %72 = vector.broadcast %cst_27 : f32 to vector<8x32xf32>
    %73 = arith.addf %72, %71 : vector<8x32xf32>
    %74 = arith.divf %72, %73 : vector<8x32xf32>
    %75 = arith.mulf %66, %13 : vector<8x32xf32>
    %76 = arith.mulf %60, %68 : vector<8x32xf32>
    %77 = arith.addf %75, %76 : vector<8x32xf32>
    %78 = math.tanh %77 : vector<8x32xf32>
    %79 = arith.mulf %74, %78 : vector<8x32xf32>
    %80 = arith.truncf %79 : vector<8x32xf32> to vector<8x32xbf16>
    %81 = arith.index_cast %c0_i32 : i32 to index
    %c0_28 = arith.constant 0 : index
    %c0_29 = arith.constant 0 : index
    %82 = vector.load %arg11[%81, %c0_28, %c0_29] : memref<8x8x32xbf16, #tpu.memory_space<vmem>>, vector<1x8x32xbf16>
    %83 = vector.shape_cast %82 : vector<1x8x32xbf16> to vector<8x32xbf16>
    %84 = vector.shape_cast %54 : vector<8x32xbf16> to vector<1x8x32xbf16>
    tpu.vector_store %arg11[%81, %c0_28, %c0_29], %84 {strides = array<i32>} : memref<8x8x32xbf16, #tpu.memory_space<vmem>>, vector<1x8x32xbf16>,
    %85 = arith.index_cast %15 : i32 to index
    %c0_30 = arith.constant 0 : index
    %c0_31 = arith.constant 0 : index
    %86 = vector.load %arg12[%85, %c0_30, %c0_31] : memref<8x8x32xbf16, #tpu.memory_space<vmem>>, vector<1x8x32xbf16>
    %87 = vector.shape_cast %86 : vector<1x8x32xbf16> to vector<8x32xbf16>
    %88 = vector.shape_cast %80 : vector<8x32xbf16> to vector<1x8x32xbf16>
    tpu.vector_store %arg12[%85, %c0_30, %c0_31], %88 {strides = array<i32>} : memref<8x8x32xbf16, #tpu.memory_space<vmem>>, vector<1x8x32xbf16>,
    %89 = tpu.concatenate %54, %80 in 1 : vector<8x32xbf16>, vector<8x32xbf16> -> vector<8x64xbf16>
    %c1_i32 = arith.constant 1 : i32
    %c7_i32_32 = arith.constant 7 : i32
    %90 = arith.subi %c7_i32_32, %c1_i32 : i32
    %cst_33 = arith.constant dense<0.000000e+00> : vector<8x256xf32>
    %91 = tpu.matmul %89, %12, %cst_33 {dimension_numbers = #tpu.dot_dimension_numbers<[1], [0], [0], [1], [0, 0, 1, 1], [], []>} : vector<8x64xbf16>, vector<64x256xbf16>, vector<8x256xf32> -> vector<8x256xf32>
    %92 = arith.index_cast %c1_i32 : i32 to index
    %c0_34 = arith.constant 0 : index
    %c0_35 = arith.constant 0 : index
    %93 = vector.load %arg10[%92, %c0_34, %c0_35] : memref<8x8x256xf32, #tpu.memory_space<vmem>>, vector<1x8x256xf32>
    %94 = vector.shape_cast %93 : vector<1x8x256xf32> to vector<8x256xf32>
    %95 = vector.extract_strided_slice %94 {offsets = [0, 0], sizes = [8, 128], strides = [1, 1]} : vector<8x256xf32> to vector<8x128xf32>
    %96 = vector.extract_strided_slice %91 {offsets = [0, 0], sizes = [8, 128], strides = [1, 1]} : vector<8x256xf32> to vector<8x128xf32>
    %97 = arith.addf %95, %96 : vector<8x128xf32>
    %98 = arith.index_cast %90 : i32 to index
    %c0_36 = arith.constant 0 : index
    %c0_37 = arith.constant 0 : index
    %99 = vector.load %arg10[%98, %c0_36, %c0_37] : memref<8x8x256xf32, #tpu.memory_space<vmem>>, vector<1x8x256xf32>
    %100 = vector.shape_cast %99 : vector<1x8x256xf32> to vector<8x256xf32>
    %101 = vector.extract_strided_slice %100 {offsets = [0, 128], sizes = [8, 128], strides = [1, 1]} : vector<8x256xf32> to vector<8x128xf32>
    %102 = vector.extract_strided_slice %91 {offsets = [0, 128], sizes = [8, 128], strides = [1, 1]} : vector<8x256xf32> to vector<8x128xf32>
    %103 = arith.addf %101, %102 : vector<8x128xf32>
    %104 = vector.extract_strided_slice %97 {offsets = [0, 0], sizes = [8, 32], strides = [1, 1]} : vector<8x128xf32> to vector<8x32xf32>
    %105 = arith.negf %104 : vector<8x32xf32>
    %106 = math.exp %105 : vector<8x32xf32>
    %cst_38 = arith.constant 1.000000e+00 : f32
    %107 = vector.broadcast %cst_38 : f32 to vector<8x32xf32>
    %108 = arith.addf %107, %106 : vector<8x32xf32>
    %109 = arith.divf %107, %108 : vector<8x32xf32>
    %110 = vector.extract_strided_slice %97 {offsets = [0, 32], sizes = [8, 32], strides = [1, 1]} : vector<8x128xf32> to vector<8x32xf32>
    %111 = arith.negf %110 : vector<8x32xf32>
    %112 = math.exp %111 : vector<8x32xf32>
    %cst_39 = arith.constant 1.000000e+00 : f32
    %113 = vector.broadcast %cst_39 : f32 to vector<8x32xf32>
    %114 = arith.addf %113, %112 : vector<8x32xf32>
    %115 = arith.divf %113, %114 : vector<8x32xf32>
    %116 = vector.extract_strided_slice %97 {offsets = [0, 64], sizes = [8, 32], strides = [1, 1]} : vector<8x128xf32> to vector<8x32xf32>
    %117 = math.tanh %116 : vector<8x32xf32>
    %118 = vector.extract_strided_slice %97 {offsets = [0, 96], sizes = [8, 32], strides = [1, 1]} : vector<8x128xf32> to vector<8x32xf32>
    %119 = arith.negf %118 : vector<8x32xf32>
    %120 = math.exp %119 : vector<8x32xf32>
    %cst_40 = arith.constant 1.000000e+00 : f32
    %121 = vector.broadcast %cst_40 : f32 to vector<8x32xf32>
    %122 = arith.addf %121, %120 : vector<8x32xf32>
    %123 = arith.divf %121, %122 : vector<8x32xf32>
    %124 = arith.mulf %115, %51 : vector<8x32xf32>
    %125 = arith.mulf %109, %117 : vector<8x32xf32>
    %126 = arith.addf %124, %125 : vector<8x32xf32>
    %127 = math.tanh %126 : vector<8x32xf32>
    %128 = arith.mulf %123, %127 : vector<8x32xf32>
    %129 = arith.truncf %128 : vector<8x32xf32> to vector<8x32xbf16>
    %130 = vector.extract_strided_slice %103 {offsets = [0, 0], sizes = [8, 32], strides = [1, 1]} : vector<8x128xf32> to vector<8x32xf32>
    %131 = arith.negf %130 : vector<8x32xf32>
    %132 = math.exp %131 : vector<8x32xf32>
    %cst_41 = arith.constant 1.000000e+00 : f32
    %133 = vector.broadcast %cst_41 : f32 to vector<8x32xf32>
    %134 = arith.addf %133, %132 : vector<8x32xf32>
    %135 = arith.divf %133, %134 : vector<8x32xf32>
    %136 = vector.extract_strided_slice %103 {offsets = [0, 32], sizes = [8, 32], strides = [1, 1]} : vector<8x128xf32> to vector<8x32xf32>
    %137 = arith.negf %136 : vector<8x32xf32>
    %138 = math.exp %137 : vector<8x32xf32>
    %cst_42 = arith.constant 1.000000e+00 : f32
    %139 = vector.broadcast %cst_42 : f32 to vector<8x32xf32>
    %140 = arith.addf %139, %138 : vector<8x32xf32>
    %141 = arith.divf %139, %140 : vector<8x32xf32>
    %142 = vector.extract_strided_slice %103 {offsets = [0, 64], sizes = [8, 32], strides = [1, 1]} : vector<8x128xf32> to vector<8x32xf32>
    %143 = math.tanh %142 : vector<8x32xf32>
    %144 = vector.extract_strided_slice %103 {offsets = [0, 96], sizes = [8, 32], strides = [1, 1]} : vector<8x128xf32> to vector<8x32xf32>
    %145 = arith.negf %144 : vector<8x32xf32>
    %146 = math.exp %145 : vector<8x32xf32>
    %cst_43 = arith.constant 1.000000e+00 : f32
    %147 = vector.broadcast %cst_43 : f32 to vector<8x32xf32>
    %148 = arith.addf %147, %146 : vector<8x32xf32>
    %149 = arith.divf %147, %148 : vector<8x32xf32>
    %150 = arith.mulf %141, %77 : vector<8x32xf32>
    %151 = arith.mulf %135, %143 : vector<8x32xf32>
    %152 = arith.addf %150, %151 : vector<8x32xf32>
    %153 = math.tanh %152 : vector<8x32xf32>
    %154 = arith.mulf %149, %153 : vector<8x32xf32>
    %155 = arith.truncf %154 : vector<8x32xf32> to vector<8x32xbf16>
    %156 = arith.index_cast %c1_i32 : i32 to index
    %c0_44 = arith.constant 0 : index
    %c0_45 = arith.constant 0 : index
    %157 = vector.load %arg11[%156, %c0_44, %c0_45] : memref<8x8x32xbf16, #tpu.memory_space<vmem>>, vector<1x8x32xbf16>
    %158 = vector.shape_cast %157 : vector<1x8x32xbf16> to vector<8x32xbf16>
    %159 = vector.shape_cast %129 : vector<8x32xbf16> to vector<1x8x32xbf16>
    tpu.vector_store %arg11[%156, %c0_44, %c0_45], %159 {strides = array<i32>} : memref<8x8x32xbf16, #tpu.memory_space<vmem>>, vector<1x8x32xbf16>,
    %160 = arith.index_cast %90 : i32 to index
    %c0_46 = arith.constant 0 : index
    %c0_47 = arith.constant 0 : index
    %161 = vector.load %arg12[%160, %c0_46, %c0_47] : memref<8x8x32xbf16, #tpu.memory_space<vmem>>, vector<1x8x32xbf16>
    %162 = vector.shape_cast %161 : vector<1x8x32xbf16> to vector<8x32xbf16>
    %163 = vector.shape_cast %155 : vector<8x32xbf16> to vector<1x8x32xbf16>
    tpu.vector_store %arg12[%160, %c0_46, %c0_47], %163 {strides = array<i32>} : memref<8x8x32xbf16, #tpu.memory_space<vmem>>, vector<1x8x32xbf16>,
    %164 = tpu.concatenate %129, %155 in 1 : vector<8x32xbf16>, vector<8x32xbf16> -> vector<8x64xbf16>
    %c2_i32 = arith.constant 2 : i32
    %c7_i32_48 = arith.constant 7 : i32
    %165 = arith.subi %c7_i32_48, %c2_i32 : i32
    %cst_49 = arith.constant dense<0.000000e+00> : vector<8x256xf32>
    %166 = tpu.matmul %164, %12, %cst_49 {dimension_numbers = #tpu.dot_dimension_numbers<[1], [0], [0], [1], [0, 0, 1, 1], [], []>} : vector<8x64xbf16>, vector<64x256xbf16>, vector<8x256xf32> -> vector<8x256xf32>
    %167 = arith.index_cast %c2_i32 : i32 to index
    %c0_50 = arith.constant 0 : index
    %c0_51 = arith.constant 0 : index
    %168 = vector.load %arg10[%167, %c0_50, %c0_51] : memref<8x8x256xf32, #tpu.memory_space<vmem>>, vector<1x8x256xf32>
    %169 = vector.shape_cast %168 : vector<1x8x256xf32> to vector<8x256xf32>
    %170 = vector.extract_strided_slice %169 {offsets = [0, 0], sizes = [8, 128], strides = [1, 1]} : vector<8x256xf32> to vector<8x128xf32>
    %171 = vector.extract_strided_slice %166 {offsets = [0, 0], sizes = [8, 128], strides = [1, 1]} : vector<8x256xf32> to vector<8x128xf32>
    %172 = arith.addf %170, %171 : vector<8x128xf32>
    %173 = arith.index_cast %165 : i32 to index
    %c0_52 = arith.constant 0 : index
    %c0_53 = arith.constant 0 : index
    %174 = vector.load %arg10[%173, %c0_52, %c0_53] : memref<8x8x256xf32, #tpu.memory_space<vmem>>, vector<1x8x256xf32>
    %175 = vector.shape_cast %174 : vector<1x8x256xf32> to vector<8x256xf32>
    %176 = vector.extract_strided_slice %175 {offsets = [0, 128], sizes = [8, 128], strides = [1, 1]} : vector<8x256xf32> to vector<8x128xf32>
    %177 = vector.extract_strided_slice %166 {offsets = [0, 128], sizes = [8, 128], strides = [1, 1]} : vector<8x256xf32> to vector<8x128xf32>
    %178 = arith.addf %176, %177 : vector<8x128xf32>
    %179 = vector.extract_strided_slice %172 {offsets = [0, 0], sizes = [8, 32], strides = [1, 1]} : vector<8x128xf32> to vector<8x32xf32>
    %180 = arith.negf %179 : vector<8x32xf32>
    %181 = math.exp %180 : vector<8x32xf32>
    %cst_54 = arith.constant 1.000000e+00 : f32
    %182 = vector.broadcast %cst_54 : f32 to vector<8x32xf32>
    %183 = arith.addf %182, %181 : vector<8x32xf32>
    %184 = arith.divf %182, %183 : vector<8x32xf32>
    %185 = vector.extract_strided_slice %172 {offsets = [0, 32], sizes = [8, 32], strides = [1, 1]} : vector<8x128xf32> to vector<8x32xf32>
    %186 = arith.negf %185 : vector<8x32xf32>
    %187 = math.exp %186 : vector<8x32xf32>
    %cst_55 = arith.constant 1.000000e+00 : f32
    %188 = vector.broadcast %cst_55 : f32 to vector<8x32xf32>
    %189 = arith.addf %188, %187 : vector<8x32xf32>
    %190 = arith.divf %188, %189 : vector<8x32xf32>
    %191 = vector.extract_strided_slice %172 {offsets = [0, 64], sizes = [8, 32], strides = [1, 1]} : vector<8x128xf32> to vector<8x32xf32>
    %192 = math.tanh %191 : vector<8x32xf32>
    %193 = vector.extract_strided_slice %172 {offsets = [0, 96], sizes = [8, 32], strides = [1, 1]} : vector<8x128xf32> to vector<8x32xf32>
    %194 = arith.negf %193 : vector<8x32xf32>
    %195 = math.exp %194 : vector<8x32xf32>
    %cst_56 = arith.constant 1.000000e+00 : f32
    %196 = vector.broadcast %cst_56 : f32 to vector<8x32xf32>
    %197 = arith.addf %196, %195 : vector<8x32xf32>
    %198 = arith.divf %196, %197 : vector<8x32xf32>
    %199 = arith.mulf %190, %126 : vector<8x32xf32>
    %200 = arith.mulf %184, %192 : vector<8x32xf32>
    %201 = arith.addf %199, %200 : vector<8x32xf32>
    %202 = math.tanh %201 : vector<8x32xf32>
    %203 = arith.mulf %198, %202 : vector<8x32xf32>
    %204 = arith.truncf %203 : vector<8x32xf32> to vector<8x32xbf16>
    %205 = vector.extract_strided_slice %178 {offsets = [0, 0], sizes = [8, 32], strides = [1, 1]} : vector<8x128xf32> to vector<8x32xf32>
    %206 = arith.negf %205 : vector<8x32xf32>
    %207 = math.exp %206 : vector<8x32xf32>
    %cst_57 = arith.constant 1.000000e+00 : f32
    %208 = vector.broadcast %cst_57 : f32 to vector<8x32xf32>
    %209 = arith.addf %208, %207 : vector<8x32xf32>
    %210 = arith.divf %208, %209 : vector<8x32xf32>
    %211 = vector.extract_strided_slice %178 {offsets = [0, 32], sizes = [8, 32], strides = [1, 1]} : vector<8x128xf32> to vector<8x32xf32>
    %212 = arith.negf %211 : vector<8x32xf32>
    %213 = math.exp %212 : vector<8x32xf32>
    %cst_58 = arith.constant 1.000000e+00 : f32
    %214 = vector.broadcast %cst_58 : f32 to vector<8x32xf32>
    %215 = arith.addf %214, %213 : vector<8x32xf32>
    %216 = arith.divf %214, %215 : vector<8x32xf32>
    %217 = vector.extract_strided_slice %178 {offsets = [0, 64], sizes = [8, 32], strides = [1, 1]} : vector<8x128xf32> to vector<8x32xf32>
    %218 = math.tanh %217 : vector<8x32xf32>
    %219 = vector.extract_strided_slice %178 {offsets = [0, 96], sizes = [8, 32], strides = [1, 1]} : vector<8x128xf32> to vector<8x32xf32>
    %220 = arith.negf %219 : vector<8x32xf32>
    %221 = math.exp %220 : vector<8x32xf32>
    %cst_59 = arith.constant 1.000000e+00 : f32
    %222 = vector.broadcast %cst_59 : f32 to vector<8x32xf32>
    %223 = arith.addf %222, %221 : vector<8x32xf32>
    %224 = arith.divf %222, %223 : vector<8x32xf32>
    %225 = arith.mulf %216, %152 : vector<8x32xf32>
    %226 = arith.mulf %210, %218 : vector<8x32xf32>
    %227 = arith.addf %225, %226 : vector<8x32xf32>
    %228 = math.tanh %227 : vector<8x32xf32>
    %229 = arith.mulf %224, %228 : vector<8x32xf32>
    %230 = arith.truncf %229 : vector<8x32xf32> to vector<8x32xbf16>
    %231 = arith.index_cast %c2_i32 : i32 to index
    %c0_60 = arith.constant 0 : index
    %c0_61 = arith.constant 0 : index
    %232 = vector.load %arg11[%231, %c0_60, %c0_61] : memref<8x8x32xbf16, #tpu.memory_space<vmem>>, vector<1x8x32xbf16>
    %233 = vector.shape_cast %232 : vector<1x8x32xbf16> to vector<8x32xbf16>
    %234 = vector.shape_cast %204 : vector<8x32xbf16> to vector<1x8x32xbf16>
    tpu.vector_store %arg11[%231, %c0_60, %c0_61], %234 {strides = array<i32>} : memref<8x8x32xbf16, #tpu.memory_space<vmem>>, vector<1x8x32xbf16>,
    %235 = arith.index_cast %165 : i32 to index
    %c0_62 = arith.constant 0 : index
    %c0_63 = arith.constant 0 : index
    %236 = vector.load %arg12[%235, %c0_62, %c0_63] : memref<8x8x32xbf16, #tpu.memory_space<vmem>>, vector<1x8x32xbf16>
    %237 = vector.shape_cast %236 : vector<1x8x32xbf16> to vector<8x32xbf16>
    %238 = vector.shape_cast %230 : vector<8x32xbf16> to vector<1x8x32xbf16>
    tpu.vector_store %arg12[%235, %c0_62, %c0_63], %238 {strides = array<i32>} : memref<8x8x32xbf16, #tpu.memory_space<vmem>>, vector<1x8x32xbf16>,
    %239 = tpu.concatenate %204, %230 in 1 : vector<8x32xbf16>, vector<8x32xbf16> -> vector<8x64xbf16>
    %c3_i32 = arith.constant 3 : i32
    %c7_i32_64 = arith.constant 7 : i32
    %240 = arith.subi %c7_i32_64, %c3_i32 : i32
    %cst_65 = arith.constant dense<0.000000e+00> : vector<8x256xf32>
    %241 = tpu.matmul %239, %12, %cst_65 {dimension_numbers = #tpu.dot_dimension_numbers<[1], [0], [0], [1], [0, 0, 1, 1], [], []>} : vector<8x64xbf16>, vector<64x256xbf16>, vector<8x256xf32> -> vector<8x256xf32>
    %242 = arith.index_cast %c3_i32 : i32 to index
    %c0_66 = arith.constant 0 : index
    %c0_67 = arith.constant 0 : index
    %243 = vector.load %arg10[%242, %c0_66, %c0_67] : memref<8x8x256xf32, #tpu.memory_space<vmem>>, vector<1x8x256xf32>
    %244 = vector.shape_cast %243 : vector<1x8x256xf32> to vector<8x256xf32>
    %245 = vector.extract_strided_slice %244 {offsets = [0, 0], sizes = [8, 128], strides = [1, 1]} : vector<8x256xf32> to vector<8x128xf32>
    %246 = vector.extract_strided_slice %241 {offsets = [0, 0], sizes = [8, 128], strides = [1, 1]} : vector<8x256xf32> to vector<8x128xf32>
    %247 = arith.addf %245, %246 : vector<8x128xf32>
    %248 = arith.index_cast %240 : i32 to index
    %c0_68 = arith.constant 0 : index
    %c0_69 = arith.constant 0 : index
    %249 = vector.load %arg10[%248, %c0_68, %c0_69] : memref<8x8x256xf32, #tpu.memory_space<vmem>>, vector<1x8x256xf32>
    %250 = vector.shape_cast %249 : vector<1x8x256xf32> to vector<8x256xf32>
    %251 = vector.extract_strided_slice %250 {offsets = [0, 128], sizes = [8, 128], strides = [1, 1]} : vector<8x256xf32> to vector<8x128xf32>
    %252 = vector.extract_strided_slice %241 {offsets = [0, 128], sizes = [8, 128], strides = [1, 1]} : vector<8x256xf32> to vector<8x128xf32>
    %253 = arith.addf %251, %252 : vector<8x128xf32>
    %254 = vector.extract_strided_slice %247 {offsets = [0, 0], sizes = [8, 32], strides = [1, 1]} : vector<8x128xf32> to vector<8x32xf32>
    %255 = arith.negf %254 : vector<8x32xf32>
    %256 = math.exp %255 : vector<8x32xf32>
    %cst_70 = arith.constant 1.000000e+00 : f32
    %257 = vector.broadcast %cst_70 : f32 to vector<8x32xf32>
    %258 = arith.addf %257, %256 : vector<8x32xf32>
    %259 = arith.divf %257, %258 : vector<8x32xf32>
    %260 = vector.extract_strided_slice %247 {offsets = [0, 32], sizes = [8, 32], strides = [1, 1]} : vector<8x128xf32> to vector<8x32xf32>
    %261 = arith.negf %260 : vector<8x32xf32>
    %262 = math.exp %261 : vector<8x32xf32>
    %cst_71 = arith.constant 1.000000e+00 : f32
    %263 = vector.broadcast %cst_71 : f32 to vector<8x32xf32>
    %264 = arith.addf %263, %262 : vector<8x32xf32>
    %265 = arith.divf %263, %264 : vector<8x32xf32>
    %266 = vector.extract_strided_slice %247 {offsets = [0, 64], sizes = [8, 32], strides = [1, 1]} : vector<8x128xf32> to vector<8x32xf32>
    %267 = math.tanh %266 : vector<8x32xf32>
    %268 = vector.extract_strided_slice %247 {offsets = [0, 96], sizes = [8, 32], strides = [1, 1]} : vector<8x128xf32> to vector<8x32xf32>
    %269 = arith.negf %268 : vector<8x32xf32>
    %270 = math.exp %269 : vector<8x32xf32>
    %cst_72 = arith.constant 1.000000e+00 : f32
    %271 = vector.broadcast %cst_72 : f32 to vector<8x32xf32>
    %272 = arith.addf %271, %270 : vector<8x32xf32>
    %273 = arith.divf %271, %272 : vector<8x32xf32>
    %274 = arith.mulf %265, %201 : vector<8x32xf32>
    %275 = arith.mulf %259, %267 : vector<8x32xf32>
    %276 = arith.addf %274, %275 : vector<8x32xf32>
    %277 = math.tanh %276 : vector<8x32xf32>
    %278 = arith.mulf %273, %277 : vector<8x32xf32>
    %279 = arith.truncf %278 : vector<8x32xf32> to vector<8x32xbf16>
    %280 = vector.extract_strided_slice %253 {offsets = [0, 0], sizes = [8, 32], strides = [1, 1]} : vector<8x128xf32> to vector<8x32xf32>
    %281 = arith.negf %280 : vector<8x32xf32>
    %282 = math.exp %281 : vector<8x32xf32>
    %cst_73 = arith.constant 1.000000e+00 : f32
    %283 = vector.broadcast %cst_73 : f32 to vector<8x32xf32>
    %284 = arith.addf %283, %282 : vector<8x32xf32>
    %285 = arith.divf %283, %284 : vector<8x32xf32>
    %286 = vector.extract_strided_slice %253 {offsets = [0, 32], sizes = [8, 32], strides = [1, 1]} : vector<8x128xf32> to vector<8x32xf32>
    %287 = arith.negf %286 : vector<8x32xf32>
    %288 = math.exp %287 : vector<8x32xf32>
    %cst_74 = arith.constant 1.000000e+00 : f32
    %289 = vector.broadcast %cst_74 : f32 to vector<8x32xf32>
    %290 = arith.addf %289, %288 : vector<8x32xf32>
    %291 = arith.divf %289, %290 : vector<8x32xf32>
    %292 = vector.extract_strided_slice %253 {offsets = [0, 64], sizes = [8, 32], strides = [1, 1]} : vector<8x128xf32> to vector<8x32xf32>
    %293 = math.tanh %292 : vector<8x32xf32>
    %294 = vector.extract_strided_slice %253 {offsets = [0, 96], sizes = [8, 32], strides = [1, 1]} : vector<8x128xf32> to vector<8x32xf32>
    %295 = arith.negf %294 : vector<8x32xf32>
    %296 = math.exp %295 : vector<8x32xf32>
    %cst_75 = arith.constant 1.000000e+00 : f32
    %297 = vector.broadcast %cst_75 : f32 to vector<8x32xf32>
    %298 = arith.addf %297, %296 : vector<8x32xf32>
    %299 = arith.divf %297, %298 : vector<8x32xf32>
    %300 = arith.mulf %291, %227 : vector<8x32xf32>
    %301 = arith.mulf %285, %293 : vector<8x32xf32>
    %302 = arith.addf %300, %301 : vector<8x32xf32>
    %303 = math.tanh %302 : vector<8x32xf32>
    %304 = arith.mulf %299, %303 : vector<8x32xf32>
    %305 = arith.truncf %304 : vector<8x32xf32> to vector<8x32xbf16>
    %306 = arith.index_cast %c3_i32 : i32 to index
    %c0_76 = arith.constant 0 : index
    %c0_77 = arith.constant 0 : index
    %307 = vector.load %arg11[%306, %c0_76, %c0_77] : memref<8x8x32xbf16, #tpu.memory_space<vmem>>, vector<1x8x32xbf16>
    %308 = vector.shape_cast %307 : vector<1x8x32xbf16> to vector<8x32xbf16>
    %309 = vector.shape_cast %279 : vector<8x32xbf16> to vector<1x8x32xbf16>
    tpu.vector_store %arg11[%306, %c0_76, %c0_77], %309 {strides = array<i32>} : memref<8x8x32xbf16, #tpu.memory_space<vmem>>, vector<1x8x32xbf16>,
    %310 = arith.index_cast %240 : i32 to index
    %c0_78 = arith.constant 0 : index
    %c0_79 = arith.constant 0 : index
    %311 = vector.load %arg12[%310, %c0_78, %c0_79] : memref<8x8x32xbf16, #tpu.memory_space<vmem>>, vector<1x8x32xbf16>
    %312 = vector.shape_cast %311 : vector<1x8x32xbf16> to vector<8x32xbf16>
    %313 = vector.shape_cast %305 : vector<8x32xbf16> to vector<1x8x32xbf16>
    tpu.vector_store %arg12[%310, %c0_78, %c0_79], %313 {strides = array<i32>} : memref<8x8x32xbf16, #tpu.memory_space<vmem>>, vector<1x8x32xbf16>,
    %314 = tpu.concatenate %279, %305 in 1 : vector<8x32xbf16>, vector<8x32xbf16> -> vector<8x64xbf16>
    %c4_i32 = arith.constant 4 : i32
    %c7_i32_80 = arith.constant 7 : i32
    %315 = arith.subi %c7_i32_80, %c4_i32 : i32
    %cst_81 = arith.constant dense<0.000000e+00> : vector<8x256xf32>
    %316 = tpu.matmul %314, %12, %cst_81 {dimension_numbers = #tpu.dot_dimension_numbers<[1], [0], [0], [1], [0, 0, 1, 1], [], []>} : vector<8x64xbf16>, vector<64x256xbf16>, vector<8x256xf32> -> vector<8x256xf32>
    %317 = arith.index_cast %c4_i32 : i32 to index
    %c0_82 = arith.constant 0 : index
    %c0_83 = arith.constant 0 : index
    %318 = vector.load %arg10[%317, %c0_82, %c0_83] : memref<8x8x256xf32, #tpu.memory_space<vmem>>, vector<1x8x256xf32>
    %319 = vector.shape_cast %318 : vector<1x8x256xf32> to vector<8x256xf32>
    %320 = vector.extract_strided_slice %319 {offsets = [0, 0], sizes = [8, 128], strides = [1, 1]} : vector<8x256xf32> to vector<8x128xf32>
    %321 = vector.extract_strided_slice %316 {offsets = [0, 0], sizes = [8, 128], strides = [1, 1]} : vector<8x256xf32> to vector<8x128xf32>
    %322 = arith.addf %320, %321 : vector<8x128xf32>
    %323 = arith.index_cast %315 : i32 to index
    %c0_84 = arith.constant 0 : index
    %c0_85 = arith.constant 0 : index
    %324 = vector.load %arg10[%323, %c0_84, %c0_85] : memref<8x8x256xf32, #tpu.memory_space<vmem>>, vector<1x8x256xf32>
    %325 = vector.shape_cast %324 : vector<1x8x256xf32> to vector<8x256xf32>
    %326 = vector.extract_strided_slice %325 {offsets = [0, 128], sizes = [8, 128], strides = [1, 1]} : vector<8x256xf32> to vector<8x128xf32>
    %327 = vector.extract_strided_slice %316 {offsets = [0, 128], sizes = [8, 128], strides = [1, 1]} : vector<8x256xf32> to vector<8x128xf32>
    %328 = arith.addf %326, %327 : vector<8x128xf32>
    %329 = vector.extract_strided_slice %322 {offsets = [0, 0], sizes = [8, 32], strides = [1, 1]} : vector<8x128xf32> to vector<8x32xf32>
    %330 = arith.negf %329 : vector<8x32xf32>
    %331 = math.exp %330 : vector<8x32xf32>
    %cst_86 = arith.constant 1.000000e+00 : f32
    %332 = vector.broadcast %cst_86 : f32 to vector<8x32xf32>
    %333 = arith.addf %332, %331 : vector<8x32xf32>
    %334 = arith.divf %332, %333 : vector<8x32xf32>
    %335 = vector.extract_strided_slice %322 {offsets = [0, 32], sizes = [8, 32], strides = [1, 1]} : vector<8x128xf32> to vector<8x32xf32>
    %336 = arith.negf %335 : vector<8x32xf32>
    %337 = math.exp %336 : vector<8x32xf32>
    %cst_87 = arith.constant 1.000000e+00 : f32
    %338 = vector.broadcast %cst_87 : f32 to vector<8x32xf32>
    %339 = arith.addf %338, %337 : vector<8x32xf32>
    %340 = arith.divf %338, %339 : vector<8x32xf32>
    %341 = vector.extract_strided_slice %322 {offsets = [0, 64], sizes = [8, 32], strides = [1, 1]} : vector<8x128xf32> to vector<8x32xf32>
    %342 = math.tanh %341 : vector<8x32xf32>
    %343 = vector.extract_strided_slice %322 {offsets = [0, 96], sizes = [8, 32], strides = [1, 1]} : vector<8x128xf32> to vector<8x32xf32>
    %344 = arith.negf %343 : vector<8x32xf32>
    %345 = math.exp %344 : vector<8x32xf32>
    %cst_88 = arith.constant 1.000000e+00 : f32
    %346 = vector.broadcast %cst_88 : f32 to vector<8x32xf32>
    %347 = arith.addf %346, %345 : vector<8x32xf32>
    %348 = arith.divf %346, %347 : vector<8x32xf32>
    %349 = arith.mulf %340, %276 : vector<8x32xf32>
    %350 = arith.mulf %334, %342 : vector<8x32xf32>
    %351 = arith.addf %349, %350 : vector<8x32xf32>
    %352 = math.tanh %351 : vector<8x32xf32>
    %353 = arith.mulf %348, %352 : vector<8x32xf32>
    %354 = arith.truncf %353 : vector<8x32xf32> to vector<8x32xbf16>
    %355 = vector.extract_strided_slice %328 {offsets = [0, 0], sizes = [8, 32], strides = [1, 1]} : vector<8x128xf32> to vector<8x32xf32>
    %356 = arith.negf %355 : vector<8x32xf32>
    %357 = math.exp %356 : vector<8x32xf32>
    %cst_89 = arith.constant 1.000000e+00 : f32
    %358 = vector.broadcast %cst_89 : f32 to vector<8x32xf32>
    %359 = arith.addf %358, %357 : vector<8x32xf32>
    %360 = arith.divf %358, %359 : vector<8x32xf32>
    %361 = vector.extract_strided_slice %328 {offsets = [0, 32], sizes = [8, 32], strides = [1, 1]} : vector<8x128xf32> to vector<8x32xf32>
    %362 = arith.negf %361 : vector<8x32xf32>
    %363 = math.exp %362 : vector<8x32xf32>
    %cst_90 = arith.constant 1.000000e+00 : f32
    %364 = vector.broadcast %cst_90 : f32 to vector<8x32xf32>
    %365 = arith.addf %364, %363 : vector<8x32xf32>
    %366 = arith.divf %364, %365 : vector<8x32xf32>
    %367 = vector.extract_strided_slice %328 {offsets = [0, 64], sizes = [8, 32], strides = [1, 1]} : vector<8x128xf32> to vector<8x32xf32>
    %368 = math.tanh %367 : vector<8x32xf32>
    %369 = vector.extract_strided_slice %328 {offsets = [0, 96], sizes = [8, 32], strides = [1, 1]} : vector<8x128xf32> to vector<8x32xf32>
    %370 = arith.negf %369 : vector<8x32xf32>
    %371 = math.exp %370 : vector<8x32xf32>
    %cst_91 = arith.constant 1.000000e+00 : f32
    %372 = vector.broadcast %cst_91 : f32 to vector<8x32xf32>
    %373 = arith.addf %372, %371 : vector<8x32xf32>
    %374 = arith.divf %372, %373 : vector<8x32xf32>
    %375 = arith.mulf %366, %302 : vector<8x32xf32>
    %376 = arith.mulf %360, %368 : vector<8x32xf32>
    %377 = arith.addf %375, %376 : vector<8x32xf32>
    %378 = math.tanh %377 : vector<8x32xf32>
    %379 = arith.mulf %374, %378 : vector<8x32xf32>
    %380 = arith.truncf %379 : vector<8x32xf32> to vector<8x32xbf16>
    %381 = arith.index_cast %c4_i32 : i32 to index
    %c0_92 = arith.constant 0 : index
    %c0_93 = arith.constant 0 : index
    %382 = vector.load %arg11[%381, %c0_92, %c0_93] : memref<8x8x32xbf16, #tpu.memory_space<vmem>>, vector<1x8x32xbf16>
    %383 = vector.shape_cast %382 : vector<1x8x32xbf16> to vector<8x32xbf16>
    %384 = vector.shape_cast %354 : vector<8x32xbf16> to vector<1x8x32xbf16>
    tpu.vector_store %arg11[%381, %c0_92, %c0_93], %384 {strides = array<i32>} : memref<8x8x32xbf16, #tpu.memory_space<vmem>>, vector<1x8x32xbf16>,
    %385 = arith.index_cast %315 : i32 to index
    %c0_94 = arith.constant 0 : index
    %c0_95 = arith.constant 0 : index
    %386 = vector.load %arg12[%385, %c0_94, %c0_95] : memref<8x8x32xbf16, #tpu.memory_space<vmem>>, vector<1x8x32xbf16>
    %387 = vector.shape_cast %386 : vector<1x8x32xbf16> to vector<8x32xbf16>
    %388 = vector.shape_cast %380 : vector<8x32xbf16> to vector<1x8x32xbf16>
    tpu.vector_store %arg12[%385, %c0_94, %c0_95], %388 {strides = array<i32>} : memref<8x8x32xbf16, #tpu.memory_space<vmem>>, vector<1x8x32xbf16>,
    %389 = tpu.concatenate %354, %380 in 1 : vector<8x32xbf16>, vector<8x32xbf16> -> vector<8x64xbf16>
    %c5_i32 = arith.constant 5 : i32
    %c7_i32_96 = arith.constant 7 : i32
    %390 = arith.subi %c7_i32_96, %c5_i32 : i32
    %cst_97 = arith.constant dense<0.000000e+00> : vector<8x256xf32>
    %391 = tpu.matmul %389, %12, %cst_97 {dimension_numbers = #tpu.dot_dimension_numbers<[1], [0], [0], [1], [0, 0, 1, 1], [], []>} : vector<8x64xbf16>, vector<64x256xbf16>, vector<8x256xf32> -> vector<8x256xf32>
    %392 = arith.index_cast %c5_i32 : i32 to index
    %c0_98 = arith.constant 0 : index
    %c0_99 = arith.constant 0 : index
    %393 = vector.load %arg10[%392, %c0_98, %c0_99] : memref<8x8x256xf32, #tpu.memory_space<vmem>>, vector<1x8x256xf32>
    %394 = vector.shape_cast %393 : vector<1x8x256xf32> to vector<8x256xf32>
    %395 = vector.extract_strided_slice %394 {offsets = [0, 0], sizes = [8, 128], strides = [1, 1]} : vector<8x256xf32> to vector<8x128xf32>
    %396 = vector.extract_strided_slice %391 {offsets = [0, 0], sizes = [8, 128], strides = [1, 1]} : vector<8x256xf32> to vector<8x128xf32>
    %397 = arith.addf %395, %396 : vector<8x128xf32>
    %398 = arith.index_cast %390 : i32 to index
    %c0_100 = arith.constant 0 : index
    %c0_101 = arith.constant 0 : index
    %399 = vector.load %arg10[%398, %c0_100, %c0_101] : memref<8x8x256xf32, #tpu.memory_space<vmem>>, vector<1x8x256xf32>
    %400 = vector.shape_cast %399 : vector<1x8x256xf32> to vector<8x256xf32>
    %401 = vector.extract_strided_slice %400 {offsets = [0, 128], sizes = [8, 128], strides = [1, 1]} : vector<8x256xf32> to vector<8x128xf32>
    %402 = vector.extract_strided_slice %391 {offsets = [0, 128], sizes = [8, 128], strides = [1, 1]} : vector<8x256xf32> to vector<8x128xf32>
    %403 = arith.addf %401, %402 : vector<8x128xf32>
    %404 = vector.extract_strided_slice %397 {offsets = [0, 0], sizes = [8, 32], strides = [1, 1]} : vector<8x128xf32> to vector<8x32xf32>
    %405 = arith.negf %404 : vector<8x32xf32>
    %406 = math.exp %405 : vector<8x32xf32>
    %cst_102 = arith.constant 1.000000e+00 : f32
    %407 = vector.broadcast %cst_102 : f32 to vector<8x32xf32>
    %408 = arith.addf %407, %406 : vector<8x32xf32>
    %409 = arith.divf %407, %408 : vector<8x32xf32>
    %410 = vector.extract_strided_slice %397 {offsets = [0, 32], sizes = [8, 32], strides = [1, 1]} : vector<8x128xf32> to vector<8x32xf32>
    %411 = arith.negf %410 : vector<8x32xf32>
    %412 = math.exp %411 : vector<8x32xf32>
    %cst_103 = arith.constant 1.000000e+00 : f32
    %413 = vector.broadcast %cst_103 : f32 to vector<8x32xf32>
    %414 = arith.addf %413, %412 : vector<8x32xf32>
    %415 = arith.divf %413, %414 : vector<8x32xf32>
    %416 = vector.extract_strided_slice %397 {offsets = [0, 64], sizes = [8, 32], strides = [1, 1]} : vector<8x128xf32> to vector<8x32xf32>
    %417 = math.tanh %416 : vector<8x32xf32>
    %418 = vector.extract_strided_slice %397 {offsets = [0, 96], sizes = [8, 32], strides = [1, 1]} : vector<8x128xf32> to vector<8x32xf32>
    %419 = arith.negf %418 : vector<8x32xf32>
    %420 = math.exp %419 : vector<8x32xf32>
    %cst_104 = arith.constant 1.000000e+00 : f32
    %421 = vector.broadcast %cst_104 : f32 to vector<8x32xf32>
    %422 = arith.addf %421, %420 : vector<8x32xf32>
    %423 = arith.divf %421, %422 : vector<8x32xf32>
    %424 = arith.mulf %415, %351 : vector<8x32xf32>
    %425 = arith.mulf %409, %417 : vector<8x32xf32>
    %426 = arith.addf %424, %425 : vector<8x32xf32>
    %427 = math.tanh %426 : vector<8x32xf32>
    %428 = arith.mulf %423, %427 : vector<8x32xf32>
    %429 = arith.truncf %428 : vector<8x32xf32> to vector<8x32xbf16>
    %430 = vector.extract_strided_slice %403 {offsets = [0, 0], sizes = [8, 32], strides = [1, 1]} : vector<8x128xf32> to vector<8x32xf32>
    %431 = arith.negf %430 : vector<8x32xf32>
    %432 = math.exp %431 : vector<8x32xf32>
    %cst_105 = arith.constant 1.000000e+00 : f32
    %433 = vector.broadcast %cst_105 : f32 to vector<8x32xf32>
    %434 = arith.addf %433, %432 : vector<8x32xf32>
    %435 = arith.divf %433, %434 : vector<8x32xf32>
    %436 = vector.extract_strided_slice %403 {offsets = [0, 32], sizes = [8, 32], strides = [1, 1]} : vector<8x128xf32> to vector<8x32xf32>
    %437 = arith.negf %436 : vector<8x32xf32>
    %438 = math.exp %437 : vector<8x32xf32>
    %cst_106 = arith.constant 1.000000e+00 : f32
    %439 = vector.broadcast %cst_106 : f32 to vector<8x32xf32>
    %440 = arith.addf %439, %438 : vector<8x32xf32>
    %441 = arith.divf %439, %440 : vector<8x32xf32>
    %442 = vector.extract_strided_slice %403 {offsets = [0, 64], sizes = [8, 32], strides = [1, 1]} : vector<8x128xf32> to vector<8x32xf32>
    %443 = math.tanh %442 : vector<8x32xf32>
    %444 = vector.extract_strided_slice %403 {offsets = [0, 96], sizes = [8, 32], strides = [1, 1]} : vector<8x128xf32> to vector<8x32xf32>
    %445 = arith.negf %444 : vector<8x32xf32>
    %446 = math.exp %445 : vector<8x32xf32>
    %cst_107 = arith.constant 1.000000e+00 : f32
    %447 = vector.broadcast %cst_107 : f32 to vector<8x32xf32>
    %448 = arith.addf %447, %446 : vector<8x32xf32>
    %449 = arith.divf %447, %448 : vector<8x32xf32>
    %450 = arith.mulf %441, %377 : vector<8x32xf32>
    %451 = arith.mulf %435, %443 : vector<8x32xf32>
    %452 = arith.addf %450, %451 : vector<8x32xf32>
    %453 = math.tanh %452 : vector<8x32xf32>
    %454 = arith.mulf %449, %453 : vector<8x32xf32>
    %455 = arith.truncf %454 : vector<8x32xf32> to vector<8x32xbf16>
    %456 = arith.index_cast %c5_i32 : i32 to index
    %c0_108 = arith.constant 0 : index
    %c0_109 = arith.constant 0 : index
    %457 = vector.load %arg11[%456, %c0_108, %c0_109] : memref<8x8x32xbf16, #tpu.memory_space<vmem>>, vector<1x8x32xbf16>
    %458 = vector.shape_cast %457 : vector<1x8x32xbf16> to vector<8x32xbf16>
    %459 = vector.shape_cast %429 : vector<8x32xbf16> to vector<1x8x32xbf16>
    tpu.vector_store %arg11[%456, %c0_108, %c0_109], %459 {strides = array<i32>} : memref<8x8x32xbf16, #tpu.memory_space<vmem>>, vector<1x8x32xbf16>,
    %460 = arith.index_cast %390 : i32 to index
    %c0_110 = arith.constant 0 : index
    %c0_111 = arith.constant 0 : index
    %461 = vector.load %arg12[%460, %c0_110, %c0_111] : memref<8x8x32xbf16, #tpu.memory_space<vmem>>, vector<1x8x32xbf16>
    %462 = vector.shape_cast %461 : vector<1x8x32xbf16> to vector<8x32xbf16>
    %463 = vector.shape_cast %455 : vector<8x32xbf16> to vector<1x8x32xbf16>
    tpu.vector_store %arg12[%460, %c0_110, %c0_111], %463 {strides = array<i32>} : memref<8x8x32xbf16, #tpu.memory_space<vmem>>, vector<1x8x32xbf16>,
    %464 = tpu.concatenate %429, %455 in 1 : vector<8x32xbf16>, vector<8x32xbf16> -> vector<8x64xbf16>
    %c6_i32 = arith.constant 6 : i32
    %c7_i32_112 = arith.constant 7 : i32
    %465 = arith.subi %c7_i32_112, %c6_i32 : i32
    %cst_113 = arith.constant dense<0.000000e+00> : vector<8x256xf32>
    %466 = tpu.matmul %464, %12, %cst_113 {dimension_numbers = #tpu.dot_dimension_numbers<[1], [0], [0], [1], [0, 0, 1, 1], [], []>} : vector<8x64xbf16>, vector<64x256xbf16>, vector<8x256xf32> -> vector<8x256xf32>
    %467 = arith.index_cast %c6_i32 : i32 to index
    %c0_114 = arith.constant 0 : index
    %c0_115 = arith.constant 0 : index
    %468 = vector.load %arg10[%467, %c0_114, %c0_115] : memref<8x8x256xf32, #tpu.memory_space<vmem>>, vector<1x8x256xf32>
    %469 = vector.shape_cast %468 : vector<1x8x256xf32> to vector<8x256xf32>
    %470 = vector.extract_strided_slice %469 {offsets = [0, 0], sizes = [8, 128], strides = [1, 1]} : vector<8x256xf32> to vector<8x128xf32>
    %471 = vector.extract_strided_slice %466 {offsets = [0, 0], sizes = [8, 128], strides = [1, 1]} : vector<8x256xf32> to vector<8x128xf32>
    %472 = arith.addf %470, %471 : vector<8x128xf32>
    %473 = arith.index_cast %465 : i32 to index
    %c0_116 = arith.constant 0 : index
    %c0_117 = arith.constant 0 : index
    %474 = vector.load %arg10[%473, %c0_116, %c0_117] : memref<8x8x256xf32, #tpu.memory_space<vmem>>, vector<1x8x256xf32>
    %475 = vector.shape_cast %474 : vector<1x8x256xf32> to vector<8x256xf32>
    %476 = vector.extract_strided_slice %475 {offsets = [0, 128], sizes = [8, 128], strides = [1, 1]} : vector<8x256xf32> to vector<8x128xf32>
    %477 = vector.extract_strided_slice %466 {offsets = [0, 128], sizes = [8, 128], strides = [1, 1]} : vector<8x256xf32> to vector<8x128xf32>
    %478 = arith.addf %476, %477 : vector<8x128xf32>
    %479 = vector.extract_strided_slice %472 {offsets = [0, 0], sizes = [8, 32], strides = [1, 1]} : vector<8x128xf32> to vector<8x32xf32>
    %480 = arith.negf %479 : vector<8x32xf32>
    %481 = math.exp %480 : vector<8x32xf32>
    %cst_118 = arith.constant 1.000000e+00 : f32
    %482 = vector.broadcast %cst_118 : f32 to vector<8x32xf32>
    %483 = arith.addf %482, %481 : vector<8x32xf32>
    %484 = arith.divf %482, %483 : vector<8x32xf32>
    %485 = vector.extract_strided_slice %472 {offsets = [0, 32], sizes = [8, 32], strides = [1, 1]} : vector<8x128xf32> to vector<8x32xf32>
    %486 = arith.negf %485 : vector<8x32xf32>
    %487 = math.exp %486 : vector<8x32xf32>
    %cst_119 = arith.constant 1.000000e+00 : f32
    %488 = vector.broadcast %cst_119 : f32 to vector<8x32xf32>
    %489 = arith.addf %488, %487 : vector<8x32xf32>
    %490 = arith.divf %488, %489 : vector<8x32xf32>
    %491 = vector.extract_strided_slice %472 {offsets = [0, 64], sizes = [8, 32], strides = [1, 1]} : vector<8x128xf32> to vector<8x32xf32>
    %492 = math.tanh %491 : vector<8x32xf32>
    %493 = vector.extract_strided_slice %472 {offsets = [0, 96], sizes = [8, 32], strides = [1, 1]} : vector<8x128xf32> to vector<8x32xf32>
    %494 = arith.negf %493 : vector<8x32xf32>
    %495 = math.exp %494 : vector<8x32xf32>
    %cst_120 = arith.constant 1.000000e+00 : f32
    %496 = vector.broadcast %cst_120 : f32 to vector<8x32xf32>
    %497 = arith.addf %496, %495 : vector<8x32xf32>
    %498 = arith.divf %496, %497 : vector<8x32xf32>
    %499 = arith.mulf %490, %426 : vector<8x32xf32>
    %500 = arith.mulf %484, %492 : vector<8x32xf32>
    %501 = arith.addf %499, %500 : vector<8x32xf32>
    %502 = math.tanh %501 : vector<8x32xf32>
    %503 = arith.mulf %498, %502 : vector<8x32xf32>
    %504 = arith.truncf %503 : vector<8x32xf32> to vector<8x32xbf16>
    %505 = vector.extract_strided_slice %478 {offsets = [0, 0], sizes = [8, 32], strides = [1, 1]} : vector<8x128xf32> to vector<8x32xf32>
    %506 = arith.negf %505 : vector<8x32xf32>
    %507 = math.exp %506 : vector<8x32xf32>
    %cst_121 = arith.constant 1.000000e+00 : f32
    %508 = vector.broadcast %cst_121 : f32 to vector<8x32xf32>
    %509 = arith.addf %508, %507 : vector<8x32xf32>
    %510 = arith.divf %508, %509 : vector<8x32xf32>
    %511 = vector.extract_strided_slice %478 {offsets = [0, 32], sizes = [8, 32], strides = [1, 1]} : vector<8x128xf32> to vector<8x32xf32>
    %512 = arith.negf %511 : vector<8x32xf32>
    %513 = math.exp %512 : vector<8x32xf32>
    %cst_122 = arith.constant 1.000000e+00 : f32
    %514 = vector.broadcast %cst_122 : f32 to vector<8x32xf32>
    %515 = arith.addf %514, %513 : vector<8x32xf32>
    %516 = arith.divf %514, %515 : vector<8x32xf32>
    %517 = vector.extract_strided_slice %478 {offsets = [0, 64], sizes = [8, 32], strides = [1, 1]} : vector<8x128xf32> to vector<8x32xf32>
    %518 = math.tanh %517 : vector<8x32xf32>
    %519 = vector.extract_strided_slice %478 {offsets = [0, 96], sizes = [8, 32], strides = [1, 1]} : vector<8x128xf32> to vector<8x32xf32>
    %520 = arith.negf %519 : vector<8x32xf32>
    %521 = math.exp %520 : vector<8x32xf32>
    %cst_123 = arith.constant 1.000000e+00 : f32
    %522 = vector.broadcast %cst_123 : f32 to vector<8x32xf32>
    %523 = arith.addf %522, %521 : vector<8x32xf32>
    %524 = arith.divf %522, %523 : vector<8x32xf32>
    %525 = arith.mulf %516, %452 : vector<8x32xf32>
    %526 = arith.mulf %510, %518 : vector<8x32xf32>
    %527 = arith.addf %525, %526 : vector<8x32xf32>
    %528 = math.tanh %527 : vector<8x32xf32>
    %529 = arith.mulf %524, %528 : vector<8x32xf32>
    %530 = arith.truncf %529 : vector<8x32xf32> to vector<8x32xbf16>
    %531 = arith.index_cast %c6_i32 : i32 to index
    %c0_124 = arith.constant 0 : index
    %c0_125 = arith.constant 0 : index
    %532 = vector.load %arg11[%531, %c0_124, %c0_125] : memref<8x8x32xbf16, #tpu.memory_space<vmem>>, vector<1x8x32xbf16>
    %533 = vector.shape_cast %532 : vector<1x8x32xbf16> to vector<8x32xbf16>
    %534 = vector.shape_cast %504 : vector<8x32xbf16> to vector<1x8x32xbf16>
    tpu.vector_store %arg11[%531, %c0_124, %c0_125], %534 {strides = array<i32>} : memref<8x8x32xbf16, #tpu.memory_space<vmem>>, vector<1x8x32xbf16>,
    %535 = arith.index_cast %465 : i32 to index
    %c0_126 = arith.constant 0 : index
    %c0_127 = arith.constant 0 : index
    %536 = vector.load %arg12[%535, %c0_126, %c0_127] : memref<8x8x32xbf16, #tpu.memory_space<vmem>>, vector<1x8x32xbf16>
    %537 = vector.shape_cast %536 : vector<1x8x32xbf16> to vector<8x32xbf16>
    %538 = vector.shape_cast %530 : vector<8x32xbf16> to vector<1x8x32xbf16>
    tpu.vector_store %arg12[%535, %c0_126, %c0_127], %538 {strides = array<i32>} : memref<8x8x32xbf16, #tpu.memory_space<vmem>>, vector<1x8x32xbf16>,
    %539 = tpu.concatenate %504, %530 in 1 : vector<8x32xbf16>, vector<8x32xbf16> -> vector<8x64xbf16>
    %c7_i32_128 = arith.constant 7 : i32
    %c7_i32_129 = arith.constant 7 : i32
    %540 = arith.subi %c7_i32_129, %c7_i32_128 : i32
    %cst_130 = arith.constant dense<0.000000e+00> : vector<8x256xf32>
    %541 = tpu.matmul %539, %12, %cst_130 {dimension_numbers = #tpu.dot_dimension_numbers<[1], [0], [0], [1], [0, 0, 1, 1], [], []>} : vector<8x64xbf16>, vector<64x256xbf16>, vector<8x256xf32> -> vector<8x256xf32>
    %542 = arith.index_cast %c7_i32_128 : i32 to index
    %c0_131 = arith.constant 0 : index
    %c0_132 = arith.constant 0 : index
    %543 = vector.load %arg10[%542, %c0_131, %c0_132] : memref<8x8x256xf32, #tpu.memory_space<vmem>>, vector<1x8x256xf32>
    %544 = vector.shape_cast %543 : vector<1x8x256xf32> to vector<8x256xf32>
    %545 = vector.extract_strided_slice %544 {offsets = [0, 0], sizes = [8, 128], strides = [1, 1]} : vector<8x256xf32> to vector<8x128xf32>
    %546 = vector.extract_strided_slice %541 {offsets = [0, 0], sizes = [8, 128], strides = [1, 1]} : vector<8x256xf32> to vector<8x128xf32>
    %547 = arith.addf %545, %546 : vector<8x128xf32>
    %548 = arith.index_cast %540 : i32 to index
    %c0_133 = arith.constant 0 : index
    %c0_134 = arith.constant 0 : index
    %549 = vector.load %arg10[%548, %c0_133, %c0_134] : memref<8x8x256xf32, #tpu.memory_space<vmem>>, vector<1x8x256xf32>
    %550 = vector.shape_cast %549 : vector<1x8x256xf32> to vector<8x256xf32>
    %551 = vector.extract_strided_slice %550 {offsets = [0, 128], sizes = [8, 128], strides = [1, 1]} : vector<8x256xf32> to vector<8x128xf32>
    %552 = vector.extract_strided_slice %541 {offsets = [0, 128], sizes = [8, 128], strides = [1, 1]} : vector<8x256xf32> to vector<8x128xf32>
    %553 = arith.addf %551, %552 : vector<8x128xf32>
    %554 = vector.extract_strided_slice %547 {offsets = [0, 0], sizes = [8, 32], strides = [1, 1]} : vector<8x128xf32> to vector<8x32xf32>
    %555 = arith.negf %554 : vector<8x32xf32>
    %556 = math.exp %555 : vector<8x32xf32>
    %cst_135 = arith.constant 1.000000e+00 : f32
    %557 = vector.broadcast %cst_135 : f32 to vector<8x32xf32>
    %558 = arith.addf %557, %556 : vector<8x32xf32>
    %559 = arith.divf %557, %558 : vector<8x32xf32>
    %560 = vector.extract_strided_slice %547 {offsets = [0, 32], sizes = [8, 32], strides = [1, 1]} : vector<8x128xf32> to vector<8x32xf32>
    %561 = arith.negf %560 : vector<8x32xf32>
    %562 = math.exp %561 : vector<8x32xf32>
    %cst_136 = arith.constant 1.000000e+00 : f32
    %563 = vector.broadcast %cst_136 : f32 to vector<8x32xf32>
    %564 = arith.addf %563, %562 : vector<8x32xf32>
    %565 = arith.divf %563, %564 : vector<8x32xf32>
    %566 = vector.extract_strided_slice %547 {offsets = [0, 64], sizes = [8, 32], strides = [1, 1]} : vector<8x128xf32> to vector<8x32xf32>
    %567 = math.tanh %566 : vector<8x32xf32>
    %568 = vector.extract_strided_slice %547 {offsets = [0, 96], sizes = [8, 32], strides = [1, 1]} : vector<8x128xf32> to vector<8x32xf32>
    %569 = arith.negf %568 : vector<8x32xf32>
    %570 = math.exp %569 : vector<8x32xf32>
    %cst_137 = arith.constant 1.000000e+00 : f32
    %571 = vector.broadcast %cst_137 : f32 to vector<8x32xf32>
    %572 = arith.addf %571, %570 : vector<8x32xf32>
    %573 = arith.divf %571, %572 : vector<8x32xf32>
    %574 = arith.mulf %565, %501 : vector<8x32xf32>
    %575 = arith.mulf %559, %567 : vector<8x32xf32>
    %576 = arith.addf %574, %575 : vector<8x32xf32>
    %577 = math.tanh %576 : vector<8x32xf32>
    %578 = arith.mulf %573, %577 : vector<8x32xf32>
    %579 = arith.truncf %578 : vector<8x32xf32> to vector<8x32xbf16>
    %580 = vector.extract_strided_slice %553 {offsets = [0, 0], sizes = [8, 32], strides = [1, 1]} : vector<8x128xf32> to vector<8x32xf32>
    %581 = arith.negf %580 : vector<8x32xf32>
    %582 = math.exp %581 : vector<8x32xf32>
    %cst_138 = arith.constant 1.000000e+00 : f32
    %583 = vector.broadcast %cst_138 : f32 to vector<8x32xf32>
    %584 = arith.addf %583, %582 : vector<8x32xf32>
    %585 = arith.divf %583, %584 : vector<8x32xf32>
    %586 = vector.extract_strided_slice %553 {offsets = [0, 32], sizes = [8, 32], strides = [1, 1]} : vector<8x128xf32> to vector<8x32xf32>
    %587 = arith.negf %586 : vector<8x32xf32>
    %588 = math.exp %587 : vector<8x32xf32>
    %cst_139 = arith.constant 1.000000e+00 : f32
    %589 = vector.broadcast %cst_139 : f32 to vector<8x32xf32>
    %590 = arith.addf %589, %588 : vector<8x32xf32>
    %591 = arith.divf %589, %590 : vector<8x32xf32>
    %592 = vector.extract_strided_slice %553 {offsets = [0, 64], sizes = [8, 32], strides = [1, 1]} : vector<8x128xf32> to vector<8x32xf32>
    %593 = math.tanh %592 : vector<8x32xf32>
    %594 = vector.extract_strided_slice %553 {offsets = [0, 96], sizes = [8, 32], strides = [1, 1]} : vector<8x128xf32> to vector<8x32xf32>
    %595 = arith.negf %594 : vector<8x32xf32>
    %596 = math.exp %595 : vector<8x32xf32>
    %cst_140 = arith.constant 1.000000e+00 : f32
    %597 = vector.broadcast %cst_140 : f32 to vector<8x32xf32>
    %598 = arith.addf %597, %596 : vector<8x32xf32>
    %599 = arith.divf %597, %598 : vector<8x32xf32>
    %600 = arith.mulf %591, %527 : vector<8x32xf32>
    %601 = arith.mulf %585, %593 : vector<8x32xf32>
    %602 = arith.addf %600, %601 : vector<8x32xf32>
    %603 = math.tanh %602 : vector<8x32xf32>
    %604 = arith.mulf %599, %603 : vector<8x32xf32>
    %605 = arith.truncf %604 : vector<8x32xf32> to vector<8x32xbf16>
    %606 = arith.index_cast %c7_i32_128 : i32 to index
    %c0_141 = arith.constant 0 : index
    %c0_142 = arith.constant 0 : index
    %607 = vector.load %arg11[%606, %c0_141, %c0_142] : memref<8x8x32xbf16, #tpu.memory_space<vmem>>, vector<1x8x32xbf16>
    %608 = vector.shape_cast %607 : vector<1x8x32xbf16> to vector<8x32xbf16>
    %609 = vector.shape_cast %579 : vector<8x32xbf16> to vector<1x8x32xbf16>
    tpu.vector_store %arg11[%606, %c0_141, %c0_142], %609 {strides = array<i32>} : memref<8x8x32xbf16, #tpu.memory_space<vmem>>, vector<1x8x32xbf16>,
    %610 = arith.index_cast %540 : i32 to index
    %c0_143 = arith.constant 0 : index
    %c0_144 = arith.constant 0 : index
    %611 = vector.load %arg12[%610, %c0_143, %c0_144] : memref<8x8x32xbf16, #tpu.memory_space<vmem>>, vector<1x8x32xbf16>
    %612 = vector.shape_cast %611 : vector<1x8x32xbf16> to vector<8x32xbf16>
    %613 = vector.shape_cast %605 : vector<8x32xbf16> to vector<1x8x32xbf16>
    tpu.vector_store %arg12[%610, %c0_143, %c0_144], %613 {strides = array<i32>} : memref<8x8x32xbf16, #tpu.memory_space<vmem>>, vector<1x8x32xbf16>,
    %614 = tpu.concatenate %579, %605 in 1 : vector<8x32xbf16>, vector<8x32xbf16> -> vector<8x64xbf16>
    %c8_i32 = arith.constant 8 : i32
    %c0_145 = arith.constant 0 : index
    %c0_146 = arith.constant 0 : index
    %c0_147 = arith.constant 0 : index
    %615 = vector.load %arg11[%c0_145, %c0_146, %c0_147] : memref<8x8x32xbf16, #tpu.memory_space<vmem>>, vector<8x8x32xbf16>
    %616 = vector.shape_cast %615 : vector<8x8x32xbf16> to vector<64x32xbf16>
    %c0_148 = arith.constant 0 : index
    %c0_149 = arith.constant 0 : index
    %c0_150 = arith.constant 0 : index
    %617 = vector.load %arg12[%c0_148, %c0_149, %c0_150] : memref<8x8x32xbf16, #tpu.memory_space<vmem>>, vector<8x8x32xbf16>
    %618 = vector.shape_cast %617 : vector<8x8x32xbf16> to vector<64x32xbf16>
    %c0_151 = arith.constant 0 : index
    %c0_152 = arith.constant 0 : index
    %619 = vector.load %arg6[%c0_151, %c0_152] : memref<32x128xbf16, #tpu.memory_space<vmem>>, vector<32x128xbf16>
    %cst_153 = arith.constant dense<0.000000e+00> : vector<64x128xf32>
    %620 = tpu.matmul %616, %619, %cst_153 {dimension_numbers = #tpu.dot_dimension_numbers<[1], [0], [0], [1], [0, 0, 1, 1], [], []>} : vector<64x32xbf16>, vector<32x128xbf16>, vector<64x128xf32> -> vector<64x128xf32>
    %c0_154 = arith.constant 0 : index
    %c0_155 = arith.constant 0 : index
    %621 = vector.load %arg7[%c0_154, %c0_155] : memref<32x128xbf16, #tpu.memory_space<vmem>>, vector<32x128xbf16>
    %cst_156 = arith.constant dense<0.000000e+00> : vector<64x128xf32>
    %622 = tpu.matmul %618, %621, %cst_156 {dimension_numbers = #tpu.dot_dimension_numbers<[1], [0], [0], [1], [0, 0, 1, 1], [], []>} : vector<64x32xbf16>, vector<32x128xbf16>, vector<64x128xf32> -> vector<64x128xf32>
    %623 = arith.addf %620, %622 : vector<64x128xf32>
    %c0_157 = arith.constant 0 : index
    %c0_158 = arith.constant 0 : index
    %624 = vector.load %arg8[%c0_157, %c0_158] : memref<1x128xf32, #tpu.memory_space<vmem>>, vector<1x128xf32>
    %625 = vector.broadcast %624 : vector<1x128xf32> to vector<64x128xf32>
    %626 = arith.addf %623, %625 : vector<64x128xf32>
    %627 = vector.shape_cast %626 : vector<64x128xf32> to vector<8x8x128xf32>
    %c0_159 = arith.constant 0 : index
    %c0_160 = arith.constant 0 : index
    %c0_161 = arith.constant 0 : index
    %628 = vector.load %arg9[%c0_159, %c0_160, %c0_161] : memref<8x8x128xf32, #tpu.memory_space<vmem>>, vector<8x8x128xf32>
    tpu.vector_store %arg9[%c0_159, %c0_160, %c0_161], %627 {strides = array<i32>} : memref<8x8x128xf32, #tpu.memory_space<vmem>>, vector<8x8x128xf32>,
    return
  }
}

</mosaic_0001>

<llo_original>
// kernel: bilstm_tagger_forward.3
$region0: #{bilstm_tagger_forward.3}
  #allocation0 [shape = 'u32[]', space=smem, size = 0x4, offset = 0x4, fixed_abs, tag = 'smem constant byte address 0x4 - core index']
  #allocation1 [shape = 'u32[144,128]{1,0:T(1,128)}', space=vmem, size = 0x12000, scoped, tag = 'internal scratch']
  #allocation2 [shape = 'f32[8,8,256]{2,1,0:T(8,128)}', space=vmem, size = 0x10000, scoped, tag = 'scratch operand']
  #allocation3 [shape = 'bf16[8,8,32]{2,1,0:T(8,128)(2,1)}', space=vmem, size = 0x4000, scoped, tag = 'scratch operand']
  #allocation4 [shape = 'bf16[8,8,32]{2,1,0:T(8,128)(2,1)}', space=vmem, size = 0x4000, scoped, tag = 'scratch operand']
  %s0 = inlined_call_operand.vmem [shape: bf16[64,32], index: 0, kind: input, shape index: {}]
  %s1 = inlined_call_operand.vmem [shape: bf16[64,128], index: 1, kind: input, shape index: {}]
  %s2 = inlined_call_operand.vmem [shape: bf16[32,256], index: 2, kind: input, shape index: {}]
  %s3 = inlined_call_operand.vmem [shape: bf16[128,256], index: 3, kind: input, shape index: {}]
  %s4 = inlined_call_operand.vmem [shape: f32[1,256], index: 4, kind: input, shape index: {}]
  %s5 = inlined_call_operand.vmem [shape: bf16[64,256], index: 5, kind: input, shape index: {}]
  %s6 = inlined_call_operand.vmem [shape: bf16[32,128], index: 6, kind: input, shape index: {}]
  %s7 = inlined_call_operand.vmem [shape: bf16[32,128], index: 7, kind: input, shape index: {}]
  %s8 = inlined_call_operand.vmem [shape: f32[1,128], index: 8, kind: input, shape index: {}]
  %s9 = inlined_call_operand.vmem [shape: f32[8,8,128], index: 9, kind: output, shape index: {}]
  %s10 = sld [smem:[#allocation0]]
  $region46: #{bilstm_tagger_forward.3} parent=0
    _
  %s12 = ssub.s32 1, %s10
  %s13 = scalar_select 0, %s12, %s10
  // Predicated region
  $region2: #{bilstm_tagger_forward.3} parent=0 // pred_check
    _
  $region3: #{bilstm_tagger_forward.3} parent=0 // pred_check_branch
    %15 = sbr.rel (0) target = $region5
  $region4: #{bilstm_tagger_forward.3} parent=0 // pred_region
    _
  $region5: #{bilstm_tagger_forward.3} parent=0 // pred_fallthru
    _
  // Predicated region
  $region6: #{bilstm_tagger_forward.3} parent=0 // pred_check
    _
  $region7: #{bilstm_tagger_forward.3} parent=0 // pred_check_branch
    %17 = sbr.rel (0) target = $region9
  $region8: #{bilstm_tagger_forward.3} parent=0 // pred_region
    _
  $region9: #{bilstm_tagger_forward.3} parent=0 // pred_fallthru
    _
  // Predicated region
  $region10: #{bilstm_tagger_forward.3} parent=0 // pred_check
    _
  $region11: #{bilstm_tagger_forward.3} parent=0 // pred_check_branch
    %19 = sbr.rel (0) target = $region13
  $region12: #{bilstm_tagger_forward.3} parent=0 // pred_region
    _
  $region13: #{bilstm_tagger_forward.3} parent=0 // pred_fallthru
    _
  // Predicated region
  $region14: #{bilstm_tagger_forward.3} parent=0 // pred_check
    _
  $region15: #{bilstm_tagger_forward.3} parent=0 // pred_check_branch
    %21 = sbr.rel (0) target = $region17
  $region16: #{bilstm_tagger_forward.3} parent=0 // pred_region
    _
  $region17: #{bilstm_tagger_forward.3} parent=0 // pred_fallthru
    _
  // Predicated region
  $region18: #{bilstm_tagger_forward.3} parent=0 // pred_check
    _
  $region19: #{bilstm_tagger_forward.3} parent=0 // pred_check_branch
    %23 = sbr.rel (0) target = $region21
  $region20: #{bilstm_tagger_forward.3} parent=0 // pred_region
    _
  $region21: #{bilstm_tagger_forward.3} parent=0 // pred_fallthru
    _
  // Predicated region
  $region22: #{bilstm_tagger_forward.3} parent=0 // pred_check
    _
  $region23: #{bilstm_tagger_forward.3} parent=0 // pred_check_branch
    %25 = sbr.rel (0) target = $region25
  $region24: #{bilstm_tagger_forward.3} parent=0 // pred_region
    _
  $region25: #{bilstm_tagger_forward.3} parent=0 // pred_fallthru
    _
  // Predicated region
  $region26: #{bilstm_tagger_forward.3} parent=0 // pred_check
    _
  $region27: #{bilstm_tagger_forward.3} parent=0 // pred_check_branch
    %27 = sbr.rel (0) target = $region29
  $region28: #{bilstm_tagger_forward.3} parent=0 // pred_region
    _
  $region29: #{bilstm_tagger_forward.3} parent=0 // pred_fallthru
    _
  // Predicated region
  $region30: #{bilstm_tagger_forward.3} parent=0 // pred_check
    _
  $region31: #{bilstm_tagger_forward.3} parent=0 // pred_check_branch
    %29 = sbr.rel (0) target = $region33
  $region32: #{bilstm_tagger_forward.3} parent=0 // pred_region
    _
  $region33: #{bilstm_tagger_forward.3} parent=0 // pred_fallthru
    _
  // Predicated region
  $region34: #{bilstm_tagger_forward.3} parent=0 // pred_check
    _
  $region35: #{bilstm_tagger_forward.3} parent=0 // pred_check_branch
    %31 = sbr.rel (0) target = $region37
  $region36: #{bilstm_tagger_forward.3} parent=0 // pred_region
    _
  $region37: #{bilstm_tagger_forward.3} parent=0 // pred_fallthru
    _
  %v33 = vld [vmem:[%s0] sm:$0xf]
  %v34 = vld [vmem:[%s0 + $0x4] sm:$0xf]
  %v35 = vld [vmem:[%s0 + $0x8] sm:$0xf]
  %v36 = vld [vmem:[%s0 + $0xc] sm:$0xf]
  %v37 = vld [vmem:[%s0 + $0x10] sm:$0xf]
  %v38 = vld [vmem:[%s0 + $0x14] sm:$0xf]
  %v39 = vld [vmem:[%s0 + $0x18] sm:$0xf]
  %v40 = vld [vmem:[%s0 + $0x1c] sm:$0xf]
  %v41 = vld [vmem:[%s2] sm:$0xff]
  %v42 = vld [vmem:[%s2 + $0x8] sm:$0xff]
  %v43 = vld [vmem:[%s2 + $0x10] sm:$0xff]
  %v44 = vld [vmem:[%s2 + $0x18] sm:$0xff]
  %v45 = vld [vmem:[%s1] sm:$0xf]
  %v46 = vld [vmem:[%s1 + $0x4] sm:$0xf]
  %v47 = vld [vmem:[%s1 + $0x8] sm:$0xf]
  %v48 = vld [vmem:[%s1 + $0xc] sm:$0xf]
  %v49 = vld [vmem:[%s1 + $0x10] sm:$0xf]
  %v50 = vld [vmem:[%s1 + $0x14] sm:$0xf]
  %v51 = vld [vmem:[%s1 + $0x18] sm:$0xf]
  %v52 = vld [vmem:[%s1 + $0x1c] sm:$0xf]
  %v53 = vld [vmem:[%s3] sm:$0xff]
  %v54 = vld [vmem:[%s3 + $0x8] sm:$0xff]
  %v55 = vld [vmem:[%s3 + $0x10] sm:$0xff]
  %v56 = vld [vmem:[%s3 + $0x18] sm:$0xff]
  %v57 = vld [vmem:[%s3 + $0x20] sm:$0xff]
  %v58 = vld [vmem:[%s3 + $0x28] sm:$0xff]
  %v59 = vld [vmem:[%s3 + $0x30] sm:$0xff]
  %v60 = vld [vmem:[%s3 + $0x38] sm:$0xff]
  %v61 = vld [vmem:[%s3 + $0x40] sm:$0xff]
  %v62 = vld [vmem:[%s3 + $0x48] sm:$0xff]
  %v63 = vld [vmem:[%s3 + $0x50] sm:$0xff]
  %v64 = vld [vmem:[%s3 + $0x58] sm:$0xff]
  %v65 = vld [vmem:[%s3 + $0x60] sm:$0xff]
  %v66 = vld [vmem:[%s3 + $0x68] sm:$0xff]
  %v67 = vld [vmem:[%s3 + $0x70] sm:$0xff]
  %v68 = vld [vmem:[%s3 + $0x78] sm:$0xff]
  %v77 = vunpack.c.l.b16 %v45
  %v78 = vunpack.c.l.b16 %v46
  %v79 = vunpack.c.l.b16 %v47
  %v80 = vunpack.c.l.b16 %v48
  %v81 = vunpack.c.l.b16 %v49
  %v82 = vunpack.c.l.b16 %v50
  %v83 = vunpack.c.l.b16 %v51
  %v84 = vunpack.c.l.b16 %v52
  %v85 = vpack.c.b16 %v78, %v77
  %v86 = vpack.c.b16 %v80, %v79
  %v87 = vpack.c.b16 %v82, %v81
  %v88 = vpack.c.b16 %v84, %v83
  %v109 = vunpack.c.l.b16 %v53
  %v110 = vunpack.c.h.b16 %v53
  %v111 = vunpack.c.l.b16 %v54
  %v112 = vunpack.c.h.b16 %v54
  %v113 = vunpack.c.l.b16 %v55
  %v114 = vunpack.c.h.b16 %v55
  %v115 = vunpack.c.l.b16 %v56
  %v116 = vunpack.c.h.b16 %v56
  %v117 = vunpack.c.l.b16 %v57
  %v118 = vunpack.c.h.b16 %v57
  %v119 = vunpack.c.l.b16 %v58
  %v120 = vunpack.c.h.b16 %v58
  %v121 = vunpack.c.l.b16 %v59
  %v122 = vunpack.c.h.b16 %v59
  %v123 = vunpack.c.l.b16 %v60
  %v124 = vunpack.c.h.b16 %v60
  %v125 = vunpack.c.l.b16 %v61
  %v126 = vunpack.c.h.b16 %v61
  %v127 = vunpack.c.l.b16 %v62
  %v128 = vunpack.c.h.b16 %v62
  %v129 = vunpack.c.l.b16 %v63
  %v130 = vunpack.c.h.b16 %v63
  %v131 = vunpack.c.l.b16 %v64
  %v132 = vunpack.c.h.b16 %v64
  %v133 = vunpack.c.l.b16 %v65
  %v134 = vunpack.c.h.b16 %v65
  %v135 = vunpack.c.l.b16 %v66
  %v136 = vunpack.c.h.b16 %v66
  %v137 = vunpack.c.l.b16 %v67
  %v138 = vunpack.c.h.b16 %v67
  %v139 = vunpack.c.l.b16 %v68
  %v140 = vunpack.c.h.b16 %v68
  %v141 = vpack.c.b16 %v111, %v109
  %v142 = vpack.c.b16 %v112, %v110
  %v143 = vpack.c.b16 %v115, %v113
  %v144 = vpack.c.b16 %v116, %v114
  %v145 = vpack.c.b16 %v119, %v117
  %v146 = vpack.c.b16 %v120, %v118
  %v147 = vpack.c.b16 %v123, %v121
  %v148 = vpack.c.b16 %v124, %v122
  %v149 = vpack.c.b16 %v127, %v125
  %v150 = vpack.c.b16 %v128, %v126
  %v151 = vpack.c.b16 %v131, %v129
  %v152 = vpack.c.b16 %v132, %v130
  %v153 = vpack.c.b16 %v135, %v133
  %v154 = vpack.c.b16 %v136, %v134
  %v155 = vpack.c.b16 %v139, %v137
  %v156 = vpack.c.b16 %v140, %v138
  %173 = vmatprep.subr.bf16.mxu0 %v142
  %174 = vmatpush1.bf16.msra.mxu0 %v141
  %175 = vmatprep.subr.bf16.mxu0 %v144
  %176 = vmatpush1.bf16.msra.mxu0 %v143
  %177 = vmatprep.subr.bf16.mxu0 %v146
  %178 = vmatpush1.bf16.msra.mxu0 %v145
  %179 = vmatprep.subr.bf16.mxu0 %v148
  %180 = vmatpush1.bf16.msra.mxu0 %v147
  %181 = vmatprep.subr.bf16.mxu0 %v150
  %182 = vmatpush1.bf16.msra.mxu0 %v149
  %183 = vmatprep.subr.bf16.mxu0 %v152
  %184 = vmatpush1.bf16.msra.mxu0 %v151
  %185 = vmatprep.subr.bf16.mxu0 %v154
  %186 = vmatpush1.bf16.msra.mxu0 %v153
  %187 = vmatprep.subr.bf16.mxu0 %v156
  %188 = vmatpush1.bf16.msra.mxu0 %v155
  %189 = vmatprep.subr.bf16.mxu0 0
  %190 = vmatpush1.bf16.msra.mxu0 0
  %191 = vmatprep.subr.bf16.mxu0 0
  %192 = vmatpush1.bf16.msra.mxu0 0
  %193 = vmatprep.subr.bf16.mxu0 0
  %194 = vmatpush1.bf16.msra.mxu0 0
  %195 = vmatprep.subr.bf16.mxu0 0
  %196 = vmatpush1.bf16.msra.mxu0 0
  %197 = vmatprep.subr.bf16.mxu0 0
  %198 = vmatpush1.bf16.msra.mxu0 0
  %199 = vmatprep.subr.bf16.mxu0 0
  %200 = vmatpush1.bf16.msra.mxu0 0
  %201 = vmatprep.subr.bf16.mxu0 0
  %202 = vmatpush1.bf16.msra.mxu0 0
  %203 = vmatprep.subr.bf16.mxu0 0
  %204 = vmatpush1.bf16.msra.mxu0 0
  %205 = vmatprep.mubr.bf16.mxu0 0
  %206 = vmatmul.mubr.bf16.gmra.mrb[0].mxu0 %v85
  %v207 = vpop.f32.mrb[0].mxu0
  %v208 = vadd.f32 0.0, %v207
  %v209 = vpop.f32.mrb[0].mxu0
  %v210 = vadd.f32 0.0, %v209
  %v211 = vpop.f32.mrb[0].mxu0
  %v212 = vadd.f32 0.0, %v211
  %v213 = vpop.f32.mrb[0].mxu0
  %v214 = vadd.f32 0.0, %v213
  %215 = vmatprep.mubr.bf16.mxu0 0
  %216 = vmatmul.mubr.bf16.gmra.mrb[0].mxu0 %v86
  %v217 = vpop.f32.mrb[0].mxu0
  %v218 = vadd.f32 0.0, %v217
  %v219 = vpop.f32.mrb[0].mxu0
  %v220 = vadd.f32 0.0, %v219
  %v221 = vpop.f32.mrb[0].mxu0
  %v222 = vadd.f32 0.0, %v221
  %v223 = vpop.f32.mrb[0].mxu0
  %v224 = vadd.f32 0.0, %v223
  %225 = vmatprep.mubr.bf16.mxu0 0
  %226 = vmatmul.mubr.bf16.gmra.mrb[0].mxu0 %v87
  %v227 = vpop.f32.mrb[0].mxu0
  %v228 = vadd.f32 0.0, %v227
  %v229 = vpop.f32.mrb[0].mxu0
  %v230 = vadd.f32 0.0, %v229
  %v231 = vpop.f32.mrb[0].mxu0
  %v232 = vadd.f32 0.0, %v231
  %v233 = vpop.f32.mrb[0].mxu0
  %v234 = vadd.f32 0.0, %v233
  %235 = vmatprep.mubr.bf16.mxu0 0
  %236 = vmatmul.mubr.bf16.gmra.mrb[0].mxu0 %v88
  %v237 = vpop.f32.mrb[0].mxu0
  %v238 = vadd.f32 0.0, %v237
  %v239 = vpop.f32.mrb[0].mxu0
  %v240 = vadd.f32 0.0, %v239
  %v241 = vpop.f32.mrb[0].mxu0
  %v242 = vadd.f32 0.0, %v241
  %v243 = vpop.f32.mrb[0].mxu0
  %v244 = vadd.f32 0.0, %v243
  %245 = vdwg.mxu0
  %v254 = vunpack.c.l.b16 %v33
  %v255 = vunpack.c.l.b16 %v34
  %v256 = vunpack.c.l.b16 %v35
  %v257 = vunpack.c.l.b16 %v36
  %v258 = vunpack.c.l.b16 %v37
  %v259 = vunpack.c.l.b16 %v38
  %v260 = vunpack.c.l.b16 %v39
  %v261 = vunpack.c.l.b16 %v40
  %v262 = vpack.c.b16 %v255, %v254
  %v263 = vpack.c.b16 %v257, %v256
  %v264 = vpack.c.b16 %v259, %v258
  %v265 = vpack.c.b16 %v261, %v260
  %v270 = vunpack.c.l.b16 %v41
  %v271 = vunpack.c.h.b16 %v41
  %v272 = vunpack.c.l.b16 %v42
  %v273 = vunpack.c.h.b16 %v42
  %v274 = vunpack.c.l.b16 %v43
  %v275 = vunpack.c.h.b16 %v43
  %v276 = vunpack.c.l.b16 %v44
  %v277 = vunpack.c.h.b16 %v44
  %v278 = vpack.c.b16 %v272, %v270
  %v279 = vpack.c.b16 %v273, %v271
  %v280 = vpack.c.b16 %v276, %v274
  %v281 = vpack.c.b16 %v277, %v275
  %vm286 = vcmask 261120
  %v288 = vsel %vm286, %v262, 0
  %v291 = vsel %vm286, %v263, 0
  %v294 = vsel %vm286, %v264, 0
  %v297 = vsel %vm286, %v265, 0
  %299 = vmatprep.subr.bf16.mxu0 %v279
  %300 = vmatpush1.bf16.msra.mxu0 %v278
  %301 = vmatprep.subr.bf16.mxu0 %v281
  %302 = vmatpush1.bf16.msra.mxu0 %v280
  %303 = vmatprep.subr.bf16.mxu0 0
  %304 = vmatpush1.bf16.msra.mxu0 0
  %305 = vmatprep.subr.bf16.mxu0 0
  %306 = vmatpush1.bf16.msra.mxu0 0
  %307 = vmatprep.subr.bf16.mxu0 0
  %308 = vmatpush1.bf16.msra.mxu0 0
  %309 = vmatprep.subr.bf16.mxu0 0
  %310 = vmatpush1.bf16.msra.mxu0 0
  %311 = vmatprep.subr.bf16.mxu0 0
  %312 = vmatpush1.bf16.msra.mxu0 0
  %313 = vmatprep.subr.bf16.mxu0 0
  %314 = vmatpush1.bf16.msra.mxu0 0
  %315 = vmatprep.subr.bf16.mxu0 0
  %316 = vmatpush1.bf16.msra.mxu0 0
  %317 = vmatprep.subr.bf16.mxu0 0
  %318 = vmatpush1.bf16.msra.mxu0 0
  %319 = vmatprep.subr.bf16.mxu0 0
  %320 = vmatpush1.bf16.msra.mxu0 0
  %321 = vmatprep.subr.bf16.mxu0 0
  %322 = vmatpush1.bf16.msra.mxu0 0
  %323 = vmatprep.subr.bf16.mxu0 0
  %324 = vmatpush1.bf16.msra.mxu0 0
  %325 = vmatprep.subr.bf16.mxu0 0
  %326 = vmatpush1.bf16.msra.mxu0 0
  %327 = vmatprep.subr.bf16.mxu0 0
  %328 = vmatpush1.bf16.msra.mxu0 0
  %329 = vmatprep.subr.bf16.mxu0 0
  %330 = vmatpush1.bf16.msra.mxu0 0
  %331 = vmatprep.mubr.bf16.mxu0 0
  %332 = vmatmul.mubr.bf16.gmra.mrb[0].mxu0 %v288
  %v333 = vpop.f32.mrb[0].mxu0
  %v334 = vadd.f32 %v208, %v333
  %v335 = vpop.f32.mrb[0].mxu0
  %v336 = vadd.f32 %v210, %v335
  %v337 = vpop.f32.mrb[0].mxu0
  %v338 = vadd.f32 %v212, %v337
  %v339 = vpop.f32.mrb[0].mxu0
  %v340 = vadd.f32 %v214, %v339
  %341 = vmatprep.mubr.bf16.mxu0 0
  %342 = vmatmul.mubr.bf16.gmra.mrb[0].mxu0 %v291
  %v343 = vpop.f32.mrb[0].mxu0
  %v344 = vadd.f32 %v218, %v343
  %v345 = vpop.f32.mrb[0].mxu0
  %v346 = vadd.f32 %v220, %v345
  %v347 = vpop.f32.mrb[0].mxu0
  %v348 = vadd.f32 %v222, %v347
  %v349 = vpop.f32.mrb[0].mxu0
  %v350 = vadd.f32 %v224, %v349
  %351 = vmatprep.mubr.bf16.mxu0 0
  %352 = vmatmul.mubr.bf16.gmra.mrb[0].mxu0 %v294
  %v353 = vpop.f32.mrb[0].mxu0
  %v354 = vadd.f32 %v228, %v353
  %v355 = vpop.f32.mrb[0].mxu0
  %v356 = vadd.f32 %v230, %v355
  %v357 = vpop.f32.mrb[0].mxu0
  %v358 = vadd.f32 %v232, %v357
  %v359 = vpop.f32.mrb[0].mxu0
  %v360 = vadd.f32 %v234, %v359
  %361 = vmatprep.mubr.bf16.mxu0 0
  %362 = vmatmul.mubr.bf16.gmra.mrb[0].mxu0 %v297
  %v363 = vpop.f32.mrb[0].mxu0
  %v364 = vadd.f32 %v238, %v363
  %v365 = vpop.f32.mrb[0].mxu0
  %v366 = vadd.f32 %v240, %v365
  %v367 = vpop.f32.mrb[0].mxu0
  %v368 = vadd.f32 %v242, %v367
  %v369 = vpop.f32.mrb[0].mxu0
  %v370 = vadd.f32 %v244, %v369
  %371 = vdwg.mxu0
  %v372 = vld [vmem:[%s4] sm:$0x3]
  %v374 = vlaneseq
  %v375 = vshrl.u32 %v374, 7
  %v376 = vsub.s32 0, %v375
  %v377 = vrot.slane %v372, %v376
  %v378 = vlaneseq
  %v379 = vshrl.u32 %v378, 7
  %v380 = vsub.s32 1, %v379
  %v381 = vrot.slane %v372, %v380
  %v384 = vadd.f32 %v334, %v377
  %v385 = vadd.f32 %v336, %v381
  %v386 = vadd.f32 %v338, %v377
  %v387 = vadd.f32 %v340, %v381
  %v388 = vadd.f32 %v344, %v377
  %v389 = vadd.f32 %v346, %v381
  %v390 = vadd.f32 %v348, %v377
  %v391 = vadd.f32 %v350, %v381
  %v392 = vadd.f32 %v354, %v377
  %v393 = vadd.f32 %v356, %v381
  %v394 = vadd.f32 %v358, %v377
  %v395 = vadd.f32 %v360, %v381
  %v396 = vadd.f32 %v364, %v377
  %v397 = vadd.f32 %v366, %v381
  %v398 = vadd.f32 %v368, %v377
  %v399 = vadd.f32 %v370, %v381
  %400 = vst [vmem:[#allocation2] sm:$0xff] %v384
  %401 = vst [vmem:[#allocation2 + $0x8] sm:$0xff] %v385
  %402 = vst [vmem:[#allocation2 + $0x10] sm:$0xff] %v386
  %403 = vst [vmem:[#allocation2 + $0x18] sm:$0xff] %v387
  %404 = vst [vmem:[#allocation2 + $0x20] sm:$0xff] %v388
  %405 = vst [vmem:[#allocation2 + $0x28] sm:$0xff] %v389
  %406 = vst [vmem:[#allocation2 + $0x30] sm:$0xff] %v390
  %407 = vst [vmem:[#allocation2 + $0x38] sm:$0xff] %v391
  %408 = vst [vmem:[#allocation2 + $0x40] sm:$0xff] %v392
  %409 = vst [vmem:[#allocation2 + $0x48] sm:$0xff] %v393
  %410 = vst [vmem:[#allocation2 + $0x50] sm:$0xff] %v394
  %411 = vst [vmem:[#allocation2 + $0x58] sm:$0xff] %v395
  %412 = vst [vmem:[#allocation2 + $0x60] sm:$0xff] %v396
  %413 = vst [vmem:[#allocation2 + $0x68] sm:$0xff] %v397
  %414 = vst [vmem:[#allocation2 + $0x70] sm:$0xff] %v398
  %415 = vst [vmem:[#allocation2 + $0x78] sm:$0xff] %v399
  %v416 = vld [vmem:[%s5] sm:$0xff]
  %v417 = vld [vmem:[%s5 + $0x8] sm:$0xff]
  %v418 = vld [vmem:[%s5 + $0x10] sm:$0xff]
  %v419 = vld [vmem:[%s5 + $0x18] sm:$0xff]
  %v420 = vld [vmem:[%s5 + $0x20] sm:$0xff]
  %v421 = vld [vmem:[%s5 + $0x28] sm:$0xff]
  %v422 = vld [vmem:[%s5 + $0x30] sm:$0xff]
  %v423 = vld [vmem:[%s5 + $0x38] sm:$0xff]
  %v432 = vunpack.c.l.b16 %v416
  %v433 = vunpack.c.h.b16 %v416
  %v434 = vunpack.c.l.b16 %v417
  %v435 = vunpack.c.h.b16 %v417
  %v436 = vunpack.c.l.b16 %v418
  %v437 = vunpack.c.h.b16 %v418
  %v438 = vunpack.c.l.b16 %v419
  %v439 = vunpack.c.h.b16 %v419
  %v440 = vunpack.c.l.b16 %v420
  %v441 = vunpack.c.h.b16 %v420
  %v442 = vunpack.c.l.b16 %v421
  %v443 = vunpack.c.h.b16 %v421
  %v444 = vunpack.c.l.b16 %v422
  %v445 = vunpack.c.h.b16 %v422
  %v446 = vunpack.c.l.b16 %v423
  %v447 = vunpack.c.h.b16 %v423
  %v448 = vpack.c.b16 %v434, %v432
  %v449 = vpack.c.b16 %v435, %v433
  %v450 = vpack.c.b16 %v438, %v436
  %v451 = vpack.c.b16 %v439, %v437
  %v452 = vpack.c.b16 %v442, %v440
  %v453 = vpack.c.b16 %v443, %v441
  %v454 = vpack.c.b16 %v446, %v444
  %v455 = vpack.c.b16 %v447, %v445
  %vm464 = vcmask 523264
  %v466 = vsel %vm464, 0, 0
  %468 = vmatprep.subr.bf16.mxu0 %v449
  %469 = vmatpush1.bf16.msra.mxu0 %v448
  %470 = vmatprep.subr.bf16.mxu0 %v451
  %471 = vmatpush1.bf16.msra.mxu0 %v450
  %472 = vmatprep.subr.bf16.mxu0 %v453
  %473 = vmatpush1.bf16.msra.mxu0 %v452
  %474 = vmatprep.subr.bf16.mxu0 %v455
  %475 = vmatpush1.bf16.msra.mxu0 %v454
  %476 = vmatprep.subr.bf16.mxu0 0
  %477 = vmatpush1.bf16.msra.mxu0 0
  %478 = vmatprep.subr.bf16.mxu0 0
  %479 = vmatpush1.bf16.msra.mxu0 0
  %480 = vmatprep.subr.bf16.mxu0 0
  %481 = vmatpush1.bf16.msra.mxu0 0
  %482 = vmatprep.subr.bf16.mxu0 0
  %483 = vmatpush1.bf16.msra.mxu0 0
  %484 = vmatprep.subr.bf16.mxu0 0
  %485 = vmatpush1.bf16.msra.mxu0 0
  %486 = vmatprep.subr.bf16.mxu0 0
  %487 = vmatpush1.bf16.msra.mxu0 0
  %488 = vmatprep.subr.bf16.mxu0 0
  %489 = vmatpush1.bf16.msra.mxu0 0
  %490 = vmatprep.subr.bf16.mxu0 0
  %491 = vmatpush1.bf16.msra.mxu0 0
  %492 = vmatprep.subr.bf16.mxu0 0
  %493 = vmatpush1.bf16.msra.mxu0 0
  %494 = vmatprep.subr.bf16.mxu0 0
  %495 = vmatpush1.bf16.msra.mxu0 0
  %496 = vmatprep.subr.bf16.mxu0 0
  %497 = vmatpush1.bf16.msra.mxu0 0
  %498 = vmatprep.subr.bf16.mxu0 0
  %499 = vmatpush1.bf16.msra.mxu0 0
  %500 = vmatprep.mubr.bf16.mxu0 0
  %501 = vmatmul.mubr.bf16.gmra.mrb[0].mxu0 %v466
  %v502 = vpop.f32.mrb[0].mxu0
  %v503 = vadd.f32 0.0, %v502
  %v504 = vpop.f32.mrb[0].mxu0
  %v505 = vadd.f32 0.0, %v504
  %v506 = vpop.f32.mrb[0].mxu0
  %v507 = vpop.f32.mrb[0].mxu0
  %508 = vdwg.mxu0
  %v509 = vld [vmem:[#allocation2] sm:$0xff]
  %v510 = vadd.f32 %v509, %v503
  %s511 = scalar_lea.vmem [#allocation2], 112
  %v512 = vld [vmem:[%s511 + $0x8] sm:$0xff]
  %v513 = vadd.f32 %v512, %v505
  %v514 = vxor.u32 %v510, 2147483648
  %v515 = vmul.f32 %v514, 1.442695
  %v516 = vpow.pop %v515
  %v517 = vadd.f32 %v516, 1.0
  %v518 = vrcp.pop %v517
  %v519 = vmul.f32 1.0, %v518
  %v520 = vtanh.pop %v510
  %v521 = vmul.f32 %v519, 0.0
  %523 = vrot.lane.b32.xlu0 %v520, 64
  %v524 = vpop.permute.xlu0 %523
  %v526 = vmul.f32 %v519, %v524
  %528 = vrot.lane.b32.xlu0 %v526, 32
  %v529 = vpop.permute.xlu0 %528
  %v531 = vadd.f32 %v521, %v529
  %v532 = vtanh.pop %v531
  %534 = vrot.lane.b32.xlu0 %v532, 64
  %v535 = vpop.permute.xlu0 %534
  %v537 = vmul.f32 %v519, %v535
  %v538 = vpack.c.bf16 %v537, %v537
  %v539 = vxor.u32 %v513, 2147483648
  %v540 = vmul.f32 %v539, 1.442695
  %v541 = vpow.pop %v540
  %v542 = vadd.f32 %v541, 1.0
  %v543 = vrcp.pop %v542
  %v544 = vmul.f32 1.0, %v543
  %v545 = vtanh.pop %v513
  %v546 = vmul.f32 %v544, 0.0
  %548 = vrot.lane.b32.xlu0 %v545, 64
  %v549 = vpop.permute.xlu0 %548
  %v551 = vmul.f32 %v544, %v549
  %553 = vrot.lane.b32.xlu0 %v551, 32
  %v554 = vpop.permute.xlu0 %553
  %v556 = vadd.f32 %v546, %v554
  %v557 = vtanh.pop %v556
  %559 = vrot.lane.b32.xlu0 %v557, 64
  %v560 = vpop.permute.xlu0 %559
  %v562 = vmul.f32 %v544, %v560
  %v563 = vpack.c.bf16 %v562, %v562
  %v565 = vunpack.c.l.b16 %v538
  %v566 = vpack.c.b16 %v565, %v565
  %567 = vrot.lane.b32.xlu0 %v566, 32
  %v568 = vpop.permute.xlu0 %567
  %vm570 = vcmask 257024
  %571 = vst.msk [vmem:[#allocation3] sm:$0xf] %vm570, %v568
  %v573 = vunpack.c.l.b16 %v563
  %v574 = vpack.c.b16 %v573, %v573
  %575 = vrot.lane.b32.xlu0 %v574, 32
  %v576 = vpop.permute.xlu0 %575
  %s578 = scalar_lea.vmem [#allocation4], 28
  %579 = vst.msk [vmem:[%s578] sm:$0xf] %vm570, %v576
  %580 = vrot.lane.b32.xlu0 %v538, 32
  %v581 = vpop.permute.xlu0 %580
  %582 = vrot.lane.b32.xlu0 %v563, 64
  %v583 = vpop.permute.xlu0 %582
  %v586 = vsel %vm286, %v581, %v583
  %v587 = vsel %vm464, %v586, 0
  %589 = vmatprep.subr.bf16.mxu0 %v449
  %590 = vmatpush1.bf16.msra.mxu0 %v448
  %591 = vmatprep.subr.bf16.mxu0 %v451
  %592 = vmatpush1.bf16.msra.mxu0 %v450
  %593 = vmatprep.subr.bf16.mxu0 %v453
  %594 = vmatpush1.bf16.msra.mxu0 %v452
  %595 = vmatprep.subr.bf16.mxu0 %v455
  %596 = vmatpush1.bf16.msra.mxu0 %v454
  %597 = vmatprep.subr.bf16.mxu0 0
  %598 = vmatpush1.bf16.msra.mxu0 0
  %599 = vmatprep.subr.bf16.mxu0 0
  %600 = vmatpush1.bf16.msra.mxu0 0
  %601 = vmatprep.subr.bf16.mxu0 0
  %602 = vmatpush1.bf16.msra.mxu0 0
  %603 = vmatprep.subr.bf16.mxu0 0
  %604 = vmatpush1.bf16.msra.mxu0 0
  %605 = vmatprep.subr.bf16.mxu0 0
  %606 = vmatpush1.bf16.msra.mxu0 0
  %607 = vmatprep.subr.bf16.mxu0 0
  %608 = vmatpush1.bf16.msra.mxu0 0
  %609 = vmatprep.subr.bf16.mxu0 0
  %610 = vmatpush1.bf16.msra.mxu0 0
  %611 = vmatprep.subr.bf16.mxu0 0
  %612 = vmatpush1.bf16.msra.mxu0 0
  %613 = vmatprep.subr.bf16.mxu0 0
  %614 = vmatpush1.bf16.msra.mxu0 0
  %615 = vmatprep.subr.bf16.mxu0 0
  %616 = vmatpush1.bf16.msra.mxu0 0
  %617 = vmatprep.subr.bf16.mxu0 0
  %618 = vmatpush1.bf16.msra.mxu0 0
  %619 = vmatprep.subr.bf16.mxu0 0
  %620 = vmatpush1.bf16.msra.mxu0 0
  %621 = vmatprep.mubr.bf16.mxu0 0
  %622 = vmatmul.mubr.bf16.gmra.mrb[0].mxu0 %v587
  %v623 = vpop.f32.mrb[0].mxu0
  %v624 = vadd.f32 0.0, %v623
  %v625 = vpop.f32.mrb[0].mxu0
  %v626 = vadd.f32 0.0, %v625
  %v627 = vpop.f32.mrb[0].mxu0
  %v628 = vpop.f32.mrb[0].mxu0
  %629 = vdwg.mxu0
  %s630 = scalar_lea.vmem [#allocation2], 16
  %v631 = vld [vmem:[%s630] sm:$0xff]
  %v632 = vadd.f32 %v631, %v624
  %s633 = scalar_lea.vmem [#allocation2], 96
  %v634 = vld [vmem:[%s633 + $0x8] sm:$0xff]
  %v635 = vadd.f32 %v634, %v626
  %v636 = vxor.u32 %v632, 2147483648
  %v637 = vmul.f32 %v636, 1.442695
  %v638 = vpow.pop %v637
  %v639 = vadd.f32 %v638, 1.0
  %v640 = vrcp.pop %v639
  %v641 = vmul.f32 1.0, %v640
  %v642 = vtanh.pop %v632
  %v643 = vmul.f32 %v641, %v531
  %645 = vrot.lane.b32.xlu0 %v642, 64
  %v646 = vpop.permute.xlu0 %645
  %v648 = vmul.f32 %v641, %v646
  %650 = vrot.lane.b32.xlu0 %v648, 32
  %v651 = vpop.permute.xlu0 %650
  %v653 = vadd.f32 %v643, %v651
  %v654 = vtanh.pop %v653
  %656 = vrot.lane.b32.xlu0 %v654, 64
  %v657 = vpop.permute.xlu0 %656
  %v659 = vmul.f32 %v641, %v657
  %v660 = vpack.c.bf16 %v659, %v659
  %v661 = vxor.u32 %v635, 2147483648
  %v662 = vmul.f32 %v661, 1.442695
  %v663 = vpow.pop %v662
  %v664 = vadd.f32 %v663, 1.0
  %v665 = vrcp.pop %v664
  %v666 = vmul.f32 1.0, %v665
  %v667 = vtanh.pop %v635
  %v668 = vmul.f32 %v666, %v556
  %670 = vrot.lane.b32.xlu0 %v667, 64
  %v671 = vpop.permute.xlu0 %670
  %v673 = vmul.f32 %v666, %v671
  %675 = vrot.lane.b32.xlu0 %v673, 32
  %v676 = vpop.permute.xlu0 %675
  %v678 = vadd.f32 %v668, %v676
  %v679 = vtanh.pop %v678
  %681 = vrot.lane.b32.xlu0 %v679, 64
  %v682 = vpop.permute.xlu0 %681
  %v684 = vmul.f32 %v666, %v682
  %v685 = vpack.c.bf16 %v684, %v684
  %v687 = vunpack.c.l.b16 %v660
  %v688 = vpack.c.b16 %v687, %v687
  %689 = vrot.lane.b32.xlu0 %v688, 32
  %v690 = vpop.permute.xlu0 %689
  %s692 = scalar_lea.vmem [#allocation3], 4
  %693 = vst.msk [vmem:[%s692] sm:$0xf] %vm570, %v690
  %v695 = vunpack.c.l.b16 %v685
  %v696 = vpack.c.b16 %v695, %v695
  %697 = vrot.lane.b32.xlu0 %v696, 32
  %v698 = vpop.permute.xlu0 %697
  %s700 = scalar_lea.vmem [#allocation4], 24
  %701 = vst.msk [vmem:[%s700] sm:$0xf] %vm570, %v698
  %702 = vrot.lane.b32.xlu0 %v660, 32
  %v703 = vpop.permute.xlu0 %702
  %704 = vrot.lane.b32.xlu0 %v685, 64
  %v705 = vpop.permute.xlu0 %704
  %v708 = vsel %vm286, %v703, %v705
  %v709 = vsel %vm464, %v708, 0
  %711 = vmatprep.subr.bf16.mxu0 %v449
  %712 = vmatpush1.bf16.msra.mxu0 %v448
  %713 = vmatprep.subr.bf16.mxu0 %v451
  %714 = vmatpush1.bf16.msra.mxu0 %v450
  %715 = vmatprep.subr.bf16.mxu0 %v453
  %716 = vmatpush1.bf16.msra.mxu0 %v452
  %717 = vmatprep.subr.bf16.mxu0 %v455
  %718 = vmatpush1.bf16.msra.mxu0 %v454
  %719 = vmatprep.subr.bf16.mxu0 0
  %720 = vmatpush1.bf16.msra.mxu0 0
  %721 = vmatprep.subr.bf16.mxu0 0
  %722 = vmatpush1.bf16.msra.mxu0 0
  %723 = vmatprep.subr.bf16.mxu0 0
  %724 = vmatpush1.bf16.msra.mxu0 0
  %725 = vmatprep.subr.bf16.mxu0 0
  %726 = vmatpush1.bf16.msra.mxu0 0
  %727 = vmatprep.subr.bf16.mxu0 0
  %728 = vmatpush1.bf16.msra.mxu0 0
  %729 = vmatprep.subr.bf16.mxu0 0
  %730 = vmatpush1.bf16.msra.mxu0 0
  %731 = vmatprep.subr.bf16.mxu0 0
  %732 = vmatpush1.bf16.msra.mxu0 0
  %733 = vmatprep.subr.bf16.mxu0 0
  %734 = vmatpush1.bf16.msra.mxu0 0
  %735 = vmatprep.subr.bf16.mxu0 0
  %736 = vmatpush1.bf16.msra.mxu0 0
  %737 = vmatprep.subr.bf16.mxu0 0
  %738 = vmatpush1.bf16.msra.mxu0 0
  %739 = vmatprep.subr.bf16.mxu0 0
  %740 = vmatpush1.bf16.msra.mxu0 0
  %741 = vmatprep.subr.bf16.mxu0 0
  %742 = vmatpush1.bf16.msra.mxu0 0
  %743 = vmatprep.mubr.bf16.mxu0 0
  %744 = vmatmul.mubr.bf16.gmra.mrb[0].mxu0 %v709
  %v745 = vpop.f32.mrb[0].mxu0
  %v746 = vadd.f32 0.0, %v745
  %v747 = vpop.f32.mrb[0].mxu0
  %v748 = vadd.f32 0.0, %v747
  %v749 = vpop.f32.mrb[0].mxu0
  %v750 = vpop.f32.mrb[0].mxu0
  %751 = vdwg.mxu0
  %s752 = scalar_lea.vmem [#allocation2], 32
  %v753 = vld [vmem:[%s752] sm:$0xff]
  %v754 = vadd.f32 %v753, %v746
  %s755 = scalar_lea.vmem [#allocation2], 80
  %v756 = vld [vmem:[%s755 + $0x8] sm:$0xff]
  %v757 = vadd.f32 %v756, %v748
  %v758 = vxor.u32 %v754, 2147483648
  %v759 = vmul.f32 %v758, 1.442695
  %v760 = vpow.pop %v759
  %v761 = vadd.f32 %v760, 1.0
  %v762 = vrcp.pop %v761
  %v763 = vmul.f32 1.0, %v762
  %v764 = vtanh.pop %v754
  %v765 = vmul.f32 %v763, %v653
  %767 = vrot.lane.b32.xlu0 %v764, 64
  %v768 = vpop.permute.xlu0 %767
  %v770 = vmul.f32 %v763, %v768
  %772 = vrot.lane.b32.xlu0 %v770, 32
  %v773 = vpop.permute.xlu0 %772
  %v775 = vadd.f32 %v765, %v773
  %v776 = vtanh.pop %v775
  %778 = vrot.lane.b32.xlu0 %v776, 64
  %v779 = vpop.permute.xlu0 %778
  %v781 = vmul.f32 %v763, %v779
  %v782 = vpack.c.bf16 %v781, %v781
  %v783 = vxor.u32 %v757, 2147483648
  %v784 = vmul.f32 %v783, 1.442695
  %v785 = vpow.pop %v784
  %v786 = vadd.f32 %v785, 1.0
  %v787 = vrcp.pop %v786
  %v788 = vmul.f32 1.0, %v787
  %v789 = vtanh.pop %v757
  %v790 = vmul.f32 %v788, %v678
  %792 = vrot.lane.b32.xlu0 %v789, 64
  %v793 = vpop.permute.xlu0 %792
  %v795 = vmul.f32 %v788, %v793
  %797 = vrot.lane.b32.xlu0 %v795, 32
  %v798 = vpop.permute.xlu0 %797
  %v800 = vadd.f32 %v790, %v798
  %v801 = vtanh.pop %v800
  %803 = vrot.lane.b32.xlu0 %v801, 64
  %v804 = vpop.permute.xlu0 %803
  %v806 = vmul.f32 %v788, %v804
  %v807 = vpack.c.bf16 %v806, %v806
  %v809 = vunpack.c.l.b16 %v782
  %v810 = vpack.c.b16 %v809, %v809
  %811 = vrot.lane.b32.xlu0 %v810, 32
  %v812 = vpop.permute.xlu0 %811
  %s814 = scalar_lea.vmem [#allocation3], 8
  %815 = vst.msk [vmem:[%s814] sm:$0xf] %vm570, %v812
  %v817 = vunpack.c.l.b16 %v807
  %v818 = vpack.c.b16 %v817, %v817
  %819 = vrot.lane.b32.xlu0 %v818, 32
  %v820 = vpop.permute.xlu0 %819
  %s822 = scalar_lea.vmem [#allocation4], 20
  %823 = vst.msk [vmem:[%s822] sm:$0xf] %vm570, %v820
  %824 = vrot.lane.b32.xlu0 %v782, 32
  %v825 = vpop.permute.xlu0 %824
  %826 = vrot.lane.b32.xlu0 %v807, 64
  %v827 = vpop.permute.xlu0 %826
  %v830 = vsel %vm286, %v825, %v827
  %v831 = vsel %vm464, %v830, 0
  %833 = vmatprep.subr.bf16.mxu0 %v449
  %834 = vmatpush1.bf16.msra.mxu0 %v448
  %835 = vmatprep.subr.bf16.mxu0 %v451
  %836 = vmatpush1.bf16.msra.mxu0 %v450
  %837 = vmatprep.subr.bf16.mxu0 %v453
  %838 = vmatpush1.bf16.msra.mxu0 %v452
  %839 = vmatprep.subr.bf16.mxu0 %v455
  %840 = vmatpush1.bf16.msra.mxu0 %v454
  %841 = vmatprep.subr.bf16.mxu0 0
  %842 = vmatpush1.bf16.msra.mxu0 0
  %843 = vmatprep.subr.bf16.mxu0 0
  %844 = vmatpush1.bf16.msra.mxu0 0
  %845 = vmatprep.subr.bf16.mxu0 0
  %846 = vmatpush1.bf16.msra.mxu0 0
  %847 = vmatprep.subr.bf16.mxu0 0
  %848 = vmatpush1.bf16.msra.mxu0 0
  %849 = vmatprep.subr.bf16.mxu0 0
  %850 = vmatpush1.bf16.msra.mxu0 0
  %851 = vmatprep.subr.bf16.mxu0 0
  %852 = vmatpush1.bf16.msra.mxu0 0
  %853 = vmatprep.subr.bf16.mxu0 0
  %854 = vmatpush1.bf16.msra.mxu0 0
  %855 = vmatprep.subr.bf16.mxu0 0
  %856 = vmatpush1.bf16.msra.mxu0 0
  %857 = vmatprep.subr.bf16.mxu0 0
  %858 = vmatpush1.bf16.msra.mxu0 0
  %859 = vmatprep.subr.bf16.mxu0 0
  %860 = vmatpush1.bf16.msra.mxu0 0
  %861 = vmatprep.subr.bf16.mxu0 0
  %862 = vmatpush1.bf16.msra.mxu0 0
  %863 = vmatprep.subr.bf16.mxu0 0
  %864 = vmatpush1.bf16.msra.mxu0 0
  %865 = vmatprep.mubr.bf16.mxu0 0
  %866 = vmatmul.mubr.bf16.gmra.mrb[0].mxu0 %v831
  %v867 = vpop.f32.mrb[0].mxu0
  %v868 = vadd.f32 0.0, %v867
  %v869 = vpop.f32.mrb[0].mxu0
  %v870 = vadd.f32 0.0, %v869
  %v871 = vpop.f32.mrb[0].mxu0
  %v872 = vpop.f32.mrb[0].mxu0
  %873 = vdwg.mxu0
  %s874 = scalar_lea.vmem [#allocation2], 48
  %v875 = vld [vmem:[%s874] sm:$0xff]
  %v876 = vadd.f32 %v875, %v868
  %s877 = scalar_lea.vmem [#allocation2], 64
  %v878 = vld [vmem:[%s877 + $0x8] sm:$0xff]
  %v879 = vadd.f32 %v878, %v870
  %v880 = vxor.u32 %v876, 2147483648
  %v881 = vmul.f32 %v880, 1.442695
  %v882 = vpow.pop %v881
  %v883 = vadd.f32 %v882, 1.0
  %v884 = vrcp.pop %v883
  %v885 = vmul.f32 1.0, %v884
  %v886 = vtanh.pop %v876
  %v887 = vmul.f32 %v885, %v775
  %889 = vrot.lane.b32.xlu0 %v886, 64
  %v890 = vpop.permute.xlu0 %889
  %v892 = vmul.f32 %v885, %v890
  %894 = vrot.lane.b32.xlu0 %v892, 32
  %v895 = vpop.permute.xlu0 %894
  %v897 = vadd.f32 %v887, %v895
  %v898 = vtanh.pop %v897
  %900 = vrot.lane.b32.xlu0 %v898, 64
  %v901 = vpop.permute.xlu0 %900
  %v903 = vmul.f32 %v885, %v901
  %v904 = vpack.c.bf16 %v903, %v903
  %v905 = vxor.u32 %v879, 2147483648
  %v906 = vmul.f32 %v905, 1.442695
  %v907 = vpow.pop %v906
  %v908 = vadd.f32 %v907, 1.0
  %v909 = vrcp.pop %v908
  %v910 = vmul.f32 1.0, %v909
  %v911 = vtanh.pop %v879
  %v912 = vmul.f32 %v910, %v800
  %914 = vrot.lane.b32.xlu0 %v911, 64
  %v915 = vpop.permute.xlu0 %914
  %v917 = vmul.f32 %v910, %v915
  %919 = vrot.lane.b32.xlu0 %v917, 32
  %v920 = vpop.permute.xlu0 %919
  %v922 = vadd.f32 %v912, %v920
  %v923 = vtanh.pop %v922
  %925 = vrot.lane.b32.xlu0 %v923, 64
  %v926 = vpop.permute.xlu0 %925
  %v928 = vmul.f32 %v910, %v926
  %v929 = vpack.c.bf16 %v928, %v928
  %v931 = vunpack.c.l.b16 %v904
  %v932 = vpack.c.b16 %v931, %v931
  %933 = vrot.lane.b32.xlu0 %v932, 32
  %v934 = vpop.permute.xlu0 %933
  %s936 = scalar_lea.vmem [#allocation3], 12
  %937 = vst.msk [vmem:[%s936] sm:$0xf] %vm570, %v934
  %v939 = vunpack.c.l.b16 %v929
  %v940 = vpack.c.b16 %v939, %v939
  %941 = vrot.lane.b32.xlu0 %v940, 32
  %v942 = vpop.permute.xlu0 %941
  %s944 = scalar_lea.vmem [#allocation4], 16
  %945 = vst.msk [vmem:[%s944] sm:$0xf] %vm570, %v942
  %946 = vrot.lane.b32.xlu0 %v904, 32
  %v947 = vpop.permute.xlu0 %946
  %948 = vrot.lane.b32.xlu0 %v929, 64
  %v949 = vpop.permute.xlu0 %948
  %v952 = vsel %vm286, %v947, %v949
  %v953 = vsel %vm464, %v952, 0
  %955 = vmatprep.subr.bf16.mxu0 %v449
  %956 = vmatpush1.bf16.msra.mxu0 %v448
  %957 = vmatprep.subr.bf16.mxu0 %v451
  %958 = vmatpush1.bf16.msra.mxu0 %v450
  %959 = vmatprep.subr.bf16.mxu0 %v453
  %960 = vmatpush1.bf16.msra.mxu0 %v452
  %961 = vmatprep.subr.bf16.mxu0 %v455
  %962 = vmatpush1.bf16.msra.mxu0 %v454
  %963 = vmatprep.subr.bf16.mxu0 0
  %964 = vmatpush1.bf16.msra.mxu0 0
  %965 = vmatprep.subr.bf16.mxu0 0
  %966 = vmatpush1.bf16.msra.mxu0 0
  %967 = vmatprep.subr.bf16.mxu0 0
  %968 = vmatpush1.bf16.msra.mxu0 0
  %969 = vmatprep.subr.bf16.mxu0 0
  %970 = vmatpush1.bf16.msra.mxu0 0
  %971 = vmatprep.subr.bf16.mxu0 0
  %972 = vmatpush1.bf16.msra.mxu0 0
  %973 = vmatprep.subr.bf16.mxu0 0
  %974 = vmatpush1.bf16.msra.mxu0 0
  %975 = vmatprep.subr.bf16.mxu0 0
  %976 = vmatpush1.bf16.msra.mxu0 0
  %977 = vmatprep.subr.bf16.mxu0 0
  %978 = vmatpush1.bf16.msra.mxu0 0
  %979 = vmatprep.subr.bf16.mxu0 0
  %980 = vmatpush1.bf16.msra.mxu0 0
  %981 = vmatprep.subr.bf16.mxu0 0
  %982 = vmatpush1.bf16.msra.mxu0 0
  %983 = vmatprep.subr.bf16.mxu0 0
  %984 = vmatpush1.bf16.msra.mxu0 0
  %985 = vmatprep.subr.bf16.mxu0 0
  %986 = vmatpush1.bf16.msra.mxu0 0
  %987 = vmatprep.mubr.bf16.mxu0 0
  %988 = vmatmul.mubr.bf16.gmra.mrb[0].mxu0 %v953
  %v989 = vpop.f32.mrb[0].mxu0
  %v990 = vadd.f32 0.0, %v989
  %v991 = vpop.f32.mrb[0].mxu0
  %v992 = vadd.f32 0.0, %v991
  %v993 = vpop.f32.mrb[0].mxu0
  %v994 = vpop.f32.mrb[0].mxu0
  %995 = vdwg.mxu0
  %v996 = vld [vmem:[%s877] sm:$0xff]
  %v997 = vadd.f32 %v996, %v990
  %v998 = vld [vmem:[%s874 + $0x8] sm:$0xff]
  %v999 = vadd.f32 %v998, %v992
  %v1000 = vxor.u32 %v997, 2147483648
  %v1001 = vmul.f32 %v1000, 1.442695
  %v1002 = vpow.pop %v1001
  %v1003 = vadd.f32 %v1002, 1.0
  %v1004 = vrcp.pop %v1003
  %v1005 = vmul.f32 1.0, %v1004
  %v1006 = vtanh.pop %v997
  %v1007 = vmul.f32 %v1005, %v897
  %1009 = vrot.lane.b32.xlu0 %v1006, 64
  %v1010 = vpop.permute.xlu0 %1009
  %v1012 = vmul.f32 %v1005, %v1010
  %1014 = vrot.lane.b32.xlu0 %v1012, 32
  %v1015 = vpop.permute.xlu0 %1014
  %v1017 = vadd.f32 %v1007, %v1015
  %v1018 = vtanh.pop %v1017
  %1020 = vrot.lane.b32.xlu0 %v1018, 64
  %v1021 = vpop.permute.xlu0 %1020
  %v1023 = vmul.f32 %v1005, %v1021
  %v1024 = vpack.c.bf16 %v1023, %v1023
  %v1025 = vxor.u32 %v999, 2147483648
  %v1026 = vmul.f32 %v1025, 1.442695
  %v1027 = vpow.pop %v1026
  %v1028 = vadd.f32 %v1027, 1.0
  %v1029 = vrcp.pop %v1028
  %v1030 = vmul.f32 1.0, %v1029
  %v1031 = vtanh.pop %v999
  %v1032 = vmul.f32 %v1030, %v922
  %1034 = vrot.lane.b32.xlu0 %v1031, 64
  %v1035 = vpop.permute.xlu0 %1034
  %v1037 = vmul.f32 %v1030, %v1035
  %1039 = vrot.lane.b32.xlu0 %v1037, 32
  %v1040 = vpop.permute.xlu0 %1039
  %v1042 = vadd.f32 %v1032, %v1040
  %v1043 = vtanh.pop %v1042
  %1045 = vrot.lane.b32.xlu0 %v1043, 64
  %v1046 = vpop.permute.xlu0 %1045
  %v1048 = vmul.f32 %v1030, %v1046
  %v1049 = vpack.c.bf16 %v1048, %v1048
  %v1051 = vunpack.c.l.b16 %v1024
  %v1052 = vpack.c.b16 %v1051, %v1051
  %1053 = vrot.lane.b32.xlu0 %v1052, 32
  %v1054 = vpop.permute.xlu0 %1053
  %s1056 = scalar_lea.vmem [#allocation3], 16
  %1057 = vst.msk [vmem:[%s1056] sm:$0xf] %vm570, %v1054
  %v1059 = vunpack.c.l.b16 %v1049
  %v1060 = vpack.c.b16 %v1059, %v1059
  %1061 = vrot.lane.b32.xlu0 %v1060, 32
  %v1062 = vpop.permute.xlu0 %1061
  %s1064 = scalar_lea.vmem [#allocation4], 12
  %1065 = vst.msk [vmem:[%s1064] sm:$0xf] %vm570, %v1062
  %1066 = vrot.lane.b32.xlu0 %v1024, 32
  %v1067 = vpop.permute.xlu0 %1066
  %1068 = vrot.lane.b32.xlu0 %v1049, 64
  %v1069 = vpop.permute.xlu0 %1068
  %v1072 = vsel %vm286, %v1067, %v1069
  %v1073 = vsel %vm464, %v1072, 0
  %1075 = vmatprep.subr.bf16.mxu0 %v449
  %1076 = vmatpush1.bf16.msra.mxu0 %v448
  %1077 = vmatprep.subr.bf16.mxu0 %v451
  %1078 = vmatpush1.bf16.msra.mxu0 %v450
  %1079 = vmatprep.subr.bf16.mxu0 %v453
  %1080 = vmatpush1.bf16.msra.mxu0 %v452
  %1081 = vmatprep.subr.bf16.mxu0 %v455
  %1082 = vmatpush1.bf16.msra.mxu0 %v454
  %1083 = vmatprep.subr.bf16.mxu0 0
  %1084 = vmatpush1.bf16.msra.mxu0 0
  %1085 = vmatprep.subr.bf16.mxu0 0
  %1086 = vmatpush1.bf16.msra.mxu0 0
  %1087 = vmatprep.subr.bf16.mxu0 0
  %1088 = vmatpush1.bf16.msra.mxu0 0
  %1089 = vmatprep.subr.bf16.mxu0 0
  %1090 = vmatpush1.bf16.msra.mxu0 0
  %1091 = vmatprep.subr.bf16.mxu0 0
  %1092 = vmatpush1.bf16.msra.mxu0 0
  %1093 = vmatprep.subr.bf16.mxu0 0
  %1094 = vmatpush1.bf16.msra.mxu0 0
  %1095 = vmatprep.subr.bf16.mxu0 0
  %1096 = vmatpush1.bf16.msra.mxu0 0
  %1097 = vmatprep.subr.bf16.mxu0 0
  %1098 = vmatpush1.bf16.msra.mxu0 0
  %1099 = vmatprep.subr.bf16.mxu0 0
  %1100 = vmatpush1.bf16.msra.mxu0 0
  %1101 = vmatprep.subr.bf16.mxu0 0
  %1102 = vmatpush1.bf16.msra.mxu0 0
  %1103 = vmatprep.subr.bf16.mxu0 0
  %1104 = vmatpush1.bf16.msra.mxu0 0
  %1105 = vmatprep.subr.bf16.mxu0 0
  %1106 = vmatpush1.bf16.msra.mxu0 0
  %1107 = vmatprep.mubr.bf16.mxu0 0
  %1108 = vmatmul.mubr.bf16.gmra.mrb[0].mxu0 %v1073
  %v1109 = vpop.f32.mrb[0].mxu0
  %v1110 = vadd.f32 0.0, %v1109
  %v1111 = vpop.f32.mrb[0].mxu0
  %v1112 = vadd.f32 0.0, %v1111
  %v1113 = vpop.f32.mrb[0].mxu0
  %v1114 = vpop.f32.mrb[0].mxu0
  %1115 = vdwg.mxu0
  %v1116 = vld [vmem:[%s755] sm:$0xff]
  %v1117 = vadd.f32 %v1116, %v1110
  %v1118 = vld [vmem:[%s752 + $0x8] sm:$0xff]
  %v1119 = vadd.f32 %v1118, %v1112
  %v1120 = vxor.u32 %v1117, 2147483648
  %v1121 = vmul.f32 %v1120, 1.442695
  %v1122 = vpow.pop %v1121
  %v1123 = vadd.f32 %v1122, 1.0
  %v1124 = vrcp.pop %v1123
  %v1125 = vmul.f32 1.0, %v1124
  %v1126 = vtanh.pop %v1117
  %v1127 = vmul.f32 %v1125, %v1017
  %1129 = vrot.lane.b32.xlu0 %v1126, 64
  %v1130 = vpop.permute.xlu0 %1129
  %v1132 = vmul.f32 %v1125, %v1130
  %1134 = vrot.lane.b32.xlu0 %v1132, 32
  %v1135 = vpop.permute.xlu0 %1134
  %v1137 = vadd.f32 %v1127, %v1135
  %v1138 = vtanh.pop %v1137
  %1140 = vrot.lane.b32.xlu0 %v1138, 64
  %v1141 = vpop.permute.xlu0 %1140
  %v1143 = vmul.f32 %v1125, %v1141
  %v1144 = vpack.c.bf16 %v1143, %v1143
  %v1145 = vxor.u32 %v1119, 2147483648
  %v1146 = vmul.f32 %v1145, 1.442695
  %v1147 = vpow.pop %v1146
  %v1148 = vadd.f32 %v1147, 1.0
  %v1149 = vrcp.pop %v1148
  %v1150 = vmul.f32 1.0, %v1149
  %v1151 = vtanh.pop %v1119
  %v1152 = vmul.f32 %v1150, %v1042
  %1154 = vrot.lane.b32.xlu0 %v1151, 64
  %v1155 = vpop.permute.xlu0 %1154
  %v1157 = vmul.f32 %v1150, %v1155
  %1159 = vrot.lane.b32.xlu0 %v1157, 32
  %v1160 = vpop.permute.xlu0 %1159
  %v1162 = vadd.f32 %v1152, %v1160
  %v1163 = vtanh.pop %v1162
  %1165 = vrot.lane.b32.xlu0 %v1163, 64
  %v1166 = vpop.permute.xlu0 %1165
  %v1168 = vmul.f32 %v1150, %v1166
  %v1169 = vpack.c.bf16 %v1168, %v1168
  %v1171 = vunpack.c.l.b16 %v1144
  %v1172 = vpack.c.b16 %v1171, %v1171
  %1173 = vrot.lane.b32.xlu0 %v1172, 32
  %v1174 = vpop.permute.xlu0 %1173
  %s1176 = scalar_lea.vmem [#allocation3], 20
  %1177 = vst.msk [vmem:[%s1176] sm:$0xf] %vm570, %v1174
  %v1179 = vunpack.c.l.b16 %v1169
  %v1180 = vpack.c.b16 %v1179, %v1179
  %1181 = vrot.lane.b32.xlu0 %v1180, 32
  %v1182 = vpop.permute.xlu0 %1181
  %s1184 = scalar_lea.vmem [#allocation4], 8
  %1185 = vst.msk [vmem:[%s1184] sm:$0xf] %vm570, %v1182
  %1186 = vrot.lane.b32.xlu0 %v1144, 32
  %v1187 = vpop.permute.xlu0 %1186
  %1188 = vrot.lane.b32.xlu0 %v1169, 64
  %v1189 = vpop.permute.xlu0 %1188
  %v1192 = vsel %vm286, %v1187, %v1189
  %v1193 = vsel %vm464, %v1192, 0
  %1195 = vmatprep.subr.bf16.mxu0 %v449
  %1196 = vmatpush1.bf16.msra.mxu0 %v448
  %1197 = vmatprep.subr.bf16.mxu0 %v451
  %1198 = vmatpush1.bf16.msra.mxu0 %v450
  %1199 = vmatprep.subr.bf16.mxu0 %v453
  %1200 = vmatpush1.bf16.msra.mxu0 %v452
  %1201 = vmatprep.subr.bf16.mxu0 %v455
  %1202 = vmatpush1.bf16.msra.mxu0 %v454
  %1203 = vmatprep.subr.bf16.mxu0 0
  %1204 = vmatpush1.bf16.msra.mxu0 0
  %1205 = vmatprep.subr.bf16.mxu0 0
  %1206 = vmatpush1.bf16.msra.mxu0 0
  %1207 = vmatprep.subr.bf16.mxu0 0
  %1208 = vmatpush1.bf16.msra.mxu0 0
  %1209 = vmatprep.subr.bf16.mxu0 0
  %1210 = vmatpush1.bf16.msra.mxu0 0
  %1211 = vmatprep.subr.bf16.mxu0 0
  %1212 = vmatpush1.bf16.msra.mxu0 0
  %1213 = vmatprep.subr.bf16.mxu0 0
  %1214 = vmatpush1.bf16.msra.mxu0 0
  %1215 = vmatprep.subr.bf16.mxu0 0
  %1216 = vmatpush1.bf16.msra.mxu0 0
  %1217 = vmatprep.subr.bf16.mxu0 0
  %1218 = vmatpush1.bf16.msra.mxu0 0
  %1219 = vmatprep.subr.bf16.mxu0 0
  %1220 = vmatpush1.bf16.msra.mxu0 0
  %1221 = vmatprep.subr.bf16.mxu0 0
  %1222 = vmatpush1.bf16.msra.mxu0 0
  %1223 = vmatprep.subr.bf16.mxu0 0
  %1224 = vmatpush1.bf16.msra.mxu0 0
  %1225 = vmatprep.subr.bf16.mxu0 0
  %1226 = vmatpush1.bf16.msra.mxu0 0
  %1227 = vmatprep.mubr.bf16.mxu0 0
  %1228 = vmatmul.mubr.bf16.gmra.mrb[0].mxu0 %v1193
  %v1229 = vpop.f32.mrb[0].mxu0
  %v1230 = vadd.f32 0.0, %v1229
  %v1231 = vpop.f32.mrb[0].mxu0
  %v1232 = vadd.f32 0.0, %v1231
  %v1233 = vpop.f32.mrb[0].mxu0
  %v1234 = vpop.f32.mrb[0].mxu0
  %1235 = vdwg.mxu0
  %v1236 = vld [vmem:[%s633] sm:$0xff]
  %v1237 = vadd.f32 %v1236, %v1230
  %v1238 = vld [vmem:[%s630 + $0x8] sm:$0xff]
  %v1239 = vadd.f32 %v1238, %v1232
  %v1240 = vxor.u32 %v1237, 2147483648
  %v1241 = vmul.f32 %v1240, 1.442695
  %v1242 = vpow.pop %v1241
  %v1243 = vadd.f32 %v1242, 1.0
  %v1244 = vrcp.pop %v1243
  %v1245 = vmul.f32 1.0, %v1244
  %v1246 = vtanh.pop %v1237
  %v1247 = vmul.f32 %v1245, %v1137
  %1249 = vrot.lane.b32.xlu0 %v1246, 64
  %v1250 = vpop.permute.xlu0 %1249
  %v1252 = vmul.f32 %v1245, %v1250
  %1254 = vrot.lane.b32.xlu0 %v1252, 32
  %v1255 = vpop.permute.xlu0 %1254
  %v1257 = vadd.f32 %v1247, %v1255
  %v1258 = vtanh.pop %v1257
  %1260 = vrot.lane.b32.xlu0 %v1258, 64
  %v1261 = vpop.permute.xlu0 %1260
  %v1263 = vmul.f32 %v1245, %v1261
  %v1264 = vpack.c.bf16 %v1263, %v1263
  %v1265 = vxor.u32 %v1239, 2147483648
  %v1266 = vmul.f32 %v1265, 1.442695
  %v1267 = vpow.pop %v1266
  %v1268 = vadd.f32 %v1267, 1.0
  %v1269 = vrcp.pop %v1268
  %v1270 = vmul.f32 1.0, %v1269
  %v1271 = vtanh.pop %v1239
  %v1272 = vmul.f32 %v1270, %v1162
  %1274 = vrot.lane.b32.xlu0 %v1271, 64
  %v1275 = vpop.permute.xlu0 %1274
  %v1277 = vmul.f32 %v1270, %v1275
  %1279 = vrot.lane.b32.xlu0 %v1277, 32
  %v1280 = vpop.permute.xlu0 %1279
  %v1282 = vadd.f32 %v1272, %v1280
  %v1283 = vtanh.pop %v1282
  %1285 = vrot.lane.b32.xlu0 %v1283, 64
  %v1286 = vpop.permute.xlu0 %1285
  %v1288 = vmul.f32 %v1270, %v1286
  %v1289 = vpack.c.bf16 %v1288, %v1288
  %v1291 = vunpack.c.l.b16 %v1264
  %v1292 = vpack.c.b16 %v1291, %v1291
  %1293 = vrot.lane.b32.xlu0 %v1292, 32
  %v1294 = vpop.permute.xlu0 %1293
  %s1296 = scalar_lea.vmem [#allocation3], 24
  %1297 = vst.msk [vmem:[%s1296] sm:$0xf] %vm570, %v1294
  %v1299 = vunpack.c.l.b16 %v1289
  %v1300 = vpack.c.b16 %v1299, %v1299
  %1301 = vrot.lane.b32.xlu0 %v1300, 32
  %v1302 = vpop.permute.xlu0 %1301
  %s1304 = scalar_lea.vmem [#allocation4], 4
  %1305 = vst.msk [vmem:[%s1304] sm:$0xf] %vm570, %v1302
  %1306 = vrot.lane.b32.xlu0 %v1264, 32
  %v1307 = vpop.permute.xlu0 %1306
  %1308 = vrot.lane.b32.xlu0 %v1289, 64
  %v1309 = vpop.permute.xlu0 %1308
  %v1312 = vsel %vm286, %v1307, %v1309
  %v1313 = vsel %vm464, %v1312, 0
  %1315 = vmatprep.subr.bf16.mxu0 %v449
  %1316 = vmatpush1.bf16.msra.mxu0 %v448
  %1317 = vmatprep.subr.bf16.mxu0 %v451
  %1318 = vmatpush1.bf16.msra.mxu0 %v450
  %1319 = vmatprep.subr.bf16.mxu0 %v453
  %1320 = vmatpush1.bf16.msra.mxu0 %v452
  %1321 = vmatprep.subr.bf16.mxu0 %v455
  %1322 = vmatpush1.bf16.msra.mxu0 %v454
  %1323 = vmatprep.subr.bf16.mxu0 0
  %1324 = vmatpush1.bf16.msra.mxu0 0
  %1325 = vmatprep.subr.bf16.mxu0 0
  %1326 = vmatpush1.bf16.msra.mxu0 0
  %1327 = vmatprep.subr.bf16.mxu0 0
  %1328 = vmatpush1.bf16.msra.mxu0 0
  %1329 = vmatprep.subr.bf16.mxu0 0
  %1330 = vmatpush1.bf16.msra.mxu0 0
  %1331 = vmatprep.subr.bf16.mxu0 0
  %1332 = vmatpush1.bf16.msra.mxu0 0
  %1333 = vmatprep.subr.bf16.mxu0 0
  %1334 = vmatpush1.bf16.msra.mxu0 0
  %1335 = vmatprep.subr.bf16.mxu0 0
  %1336 = vmatpush1.bf16.msra.mxu0 0
  %1337 = vmatprep.subr.bf16.mxu0 0
  %1338 = vmatpush1.bf16.msra.mxu0 0
  %1339 = vmatprep.subr.bf16.mxu0 0
  %1340 = vmatpush1.bf16.msra.mxu0 0
  %1341 = vmatprep.subr.bf16.mxu0 0
  %1342 = vmatpush1.bf16.msra.mxu0 0
  %1343 = vmatprep.subr.bf16.mxu0 0
  %1344 = vmatpush1.bf16.msra.mxu0 0
  %1345 = vmatprep.subr.bf16.mxu0 0
  %1346 = vmatpush1.bf16.msra.mxu0 0
  %1347 = vmatprep.mubr.bf16.mxu0 0
  %1348 = vmatmul.mubr.bf16.gmra.mrb[0].mxu0 %v1313
  %v1349 = vpop.f32.mrb[0].mxu0
  %v1350 = vadd.f32 0.0, %v1349
  %v1351 = vpop.f32.mrb[0].mxu0
  %v1352 = vadd.f32 0.0, %v1351
  %v1353 = vpop.f32.mrb[0].mxu0
  %v1354 = vpop.f32.mrb[0].mxu0
  %1355 = vdwg.mxu0
  %v1356 = vld [vmem:[%s511] sm:$0xff]
  %v1357 = vadd.f32 %v1356, %v1350
  %v1358 = vld [vmem:[#allocation2 + $0x8] sm:$0xff]
  %v1359 = vadd.f32 %v1358, %v1352
  %v1360 = vxor.u32 %v1357, 2147483648
  %v1361 = vmul.f32 %v1360, 1.442695
  %v1362 = vpow.pop %v1361
  %v1363 = vadd.f32 %v1362, 1.0
  %v1364 = vrcp.pop %v1363
  %v1365 = vmul.f32 1.0, %v1364
  %v1366 = vtanh.pop %v1357
  %v1367 = vmul.f32 %v1365, %v1257
  %1369 = vrot.lane.b32.xlu0 %v1366, 64
  %v1370 = vpop.permute.xlu0 %1369
  %v1372 = vmul.f32 %v1365, %v1370
  %1374 = vrot.lane.b32.xlu0 %v1372, 32
  %v1375 = vpop.permute.xlu0 %1374
  %v1377 = vadd.f32 %v1367, %v1375
  %v1378 = vtanh.pop %v1377
  %1380 = vrot.lane.b32.xlu0 %v1378, 64
  %v1381 = vpop.permute.xlu0 %1380
  %v1383 = vmul.f32 %v1365, %v1381
  %v1384 = vpack.c.bf16 %v1383, %v1383
  %v1385 = vxor.u32 %v1359, 2147483648
  %v1386 = vmul.f32 %v1385, 1.442695
  %v1387 = vpow.pop %v1386
  %v1388 = vadd.f32 %v1387, 1.0
  %v1389 = vrcp.pop %v1388
  %v1390 = vmul.f32 1.0, %v1389
  %v1391 = vtanh.pop %v1359
  %v1392 = vmul.f32 %v1390, %v1282
  %1394 = vrot.lane.b32.xlu0 %v1391, 64
  %v1395 = vpop.permute.xlu0 %1394
  %v1397 = vmul.f32 %v1390, %v1395
  %1399 = vrot.lane.b32.xlu0 %v1397, 32
  %v1400 = vpop.permute.xlu0 %1399
  %v1402 = vadd.f32 %v1392, %v1400
  %v1403 = vtanh.pop %v1402
  %1405 = vrot.lane.b32.xlu0 %v1403, 64
  %v1406 = vpop.permute.xlu0 %1405
  %v1408 = vmul.f32 %v1390, %v1406
  %v1409 = vpack.c.bf16 %v1408, %v1408
  %v1411 = vunpack.c.l.b16 %v1384
  %v1412 = vpack.c.b16 %v1411, %v1411
  %1413 = vrot.lane.b32.xlu0 %v1412, 32
  %v1414 = vpop.permute.xlu0 %1413
  %s1416 = scalar_lea.vmem [#allocation3], 28
  %1417 = vst.msk [vmem:[%s1416] sm:$0xf] %vm570, %v1414
  %v1419 = vunpack.c.l.b16 %v1409
  %v1420 = vpack.c.b16 %v1419, %v1419
  %1421 = vrot.lane.b32.xlu0 %v1420, 32
  %v1422 = vpop.permute.xlu0 %1421
  %1424 = vst.msk [vmem:[#allocation4] sm:$0xf] %vm570, %v1422
  %v1425 = vld [vmem:[#allocation3] sm:$0xf]
  %v1426 = vld [vmem:[#allocation3 + $0x4] sm:$0xf]
  %v1427 = vld [vmem:[#allocation3 + $0x8] sm:$0xf]
  %v1428 = vld [vmem:[#allocation3 + $0xc] sm:$0xf]
  %v1429 = vld [vmem:[#allocation3 + $0x10] sm:$0xf]
  %v1430 = vld [vmem:[#allocation3 + $0x14] sm:$0xf]
  %v1431 = vld [vmem:[#allocation3 + $0x18] sm:$0xf]
  %v1432 = vld [vmem:[#allocation3 + $0x1c] sm:$0xf]
  %v1433 = vld [vmem:[#allocation4] sm:$0xf]
  %v1434 = vld [vmem:[#allocation4 + $0x4] sm:$0xf]
  %v1435 = vld [vmem:[#allocation4 + $0x8] sm:$0xf]
  %v1436 = vld [vmem:[#allocation4 + $0xc] sm:$0xf]
  %v1437 = vld [vmem:[#allocation4 + $0x10] sm:$0xf]
  %v1438 = vld [vmem:[#allocation4 + $0x14] sm:$0xf]
  %v1439 = vld [vmem:[#allocation4 + $0x18] sm:$0xf]
  %v1440 = vld [vmem:[#allocation4 + $0x1c] sm:$0xf]
  %v1441 = vld [vmem:[%s6] sm:$0xf]
  %v1442 = vld [vmem:[%s6 + $0x4] sm:$0xf]
  %v1443 = vld [vmem:[%s6 + $0x8] sm:$0xf]
  %v1444 = vld [vmem:[%s6 + $0xc] sm:$0xf]
  %v1445 = vld [vmem:[%s7] sm:$0xf]
  %v1446 = vld [vmem:[%s7 + $0x4] sm:$0xf]
  %v1447 = vld [vmem:[%s7 + $0x8] sm:$0xf]
  %v1448 = vld [vmem:[%s7 + $0xc] sm:$0xf]
  %v1457 = vunpack.c.l.b16 %v1433
  %v1458 = vunpack.c.l.b16 %v1434
  %v1459 = vunpack.c.l.b16 %v1435
  %v1460 = vunpack.c.l.b16 %v1436
  %v1461 = vunpack.c.l.b16 %v1437
  %v1462 = vunpack.c.l.b16 %v1438
  %v1463 = vunpack.c.l.b16 %v1439
  %v1464 = vunpack.c.l.b16 %v1440
  %v1465 = vpack.c.b16 %v1458, %v1457
  %v1466 = vpack.c.b16 %v1460, %v1459
  %v1467 = vpack.c.b16 %v1462, %v1461
  %v1468 = vpack.c.b16 %v1464, %v1463
  %v1473 = vunpack.c.l.b16 %v1445
  %v1474 = vunpack.c.l.b16 %v1446
  %v1475 = vunpack.c.l.b16 %v1447
  %v1476 = vunpack.c.l.b16 %v1448
  %v1477 = vpack.c.b16 %v1474, %v1473
  %v1478 = vpack.c.b16 %v1476, %v1475
  %v1482 = vsel %vm286, %v1465, 0
  %v1485 = vsel %vm286, %v1466, 0
  %v1488 = vsel %vm286, %v1467, 0
  %v1491 = vsel %vm286, %v1468, 0
  %1493 = vmatprep.subr.bf16.mxu0 0
  %1494 = vmatpush1.bf16.msra.mxu0 %v1477
  %1495 = vmatprep.subr.bf16.mxu0 0
  %1496 = vmatpush1.bf16.msra.mxu0 %v1478
  %1497 = vmatprep.subr.bf16.mxu0 0
  %1498 = vmatpush1.bf16.msra.mxu0 0
  %1499 = vmatprep.subr.bf16.mxu0 0
  %1500 = vmatpush1.bf16.msra.mxu0 0
  %1501 = vmatprep.subr.bf16.mxu0 0
  %1502 = vmatpush1.bf16.msra.mxu0 0
  %1503 = vmatprep.subr.bf16.mxu0 0
  %1504 = vmatpush1.bf16.msra.mxu0 0
  %1505 = vmatprep.subr.bf16.mxu0 0
  %1506 = vmatpush1.bf16.msra.mxu0 0
  %1507 = vmatprep.subr.bf16.mxu0 0
  %1508 = vmatpush1.bf16.msra.mxu0 0
  %1509 = vmatprep.subr.bf16.mxu0 0
  %1510 = vmatpush1.bf16.msra.mxu0 0
  %1511 = vmatprep.subr.bf16.mxu0 0
  %1512 = vmatpush1.bf16.msra.mxu0 0
  %1513 = vmatprep.subr.bf16.mxu0 0
  %1514 = vmatpush1.bf16.msra.mxu0 0
  %1515 = vmatprep.subr.bf16.mxu0 0
  %1516 = vmatpush1.bf16.msra.mxu0 0
  %1517 = vmatprep.subr.bf16.mxu0 0
  %1518 = vmatpush1.bf16.msra.mxu0 0
  %1519 = vmatprep.subr.bf16.mxu0 0
  %1520 = vmatpush1.bf16.msra.mxu0 0
  %1521 = vmatprep.subr.bf16.mxu0 0
  %1522 = vmatpush1.bf16.msra.mxu0 0
  %1523 = vmatprep.subr.bf16.mxu0 0
  %1524 = vmatpush1.bf16.msra.mxu0 0
  %1525 = vmatprep.mubr.bf16.mxu0 0
  %1526 = vmatmul.mubr.bf16.gmra.mrb[0].mxu0 %v1482
  %v1527 = vpop.f32.mrb[0].mxu0
  %v1528 = vadd.f32 0.0, %v1527
  %v1529 = vpop.f32.mrb[0].mxu0
  %v1530 = vpop.f32.mrb[0].mxu0
  %v1531 = vadd.f32 0.0, %v1530
  %v1532 = vpop.f32.mrb[0].mxu0
  %1533 = vmatprep.mubr.bf16.mxu0 0
  %1534 = vmatmul.mubr.bf16.gmra.mrb[0].mxu0 %v1485
  %v1535 = vpop.f32.mrb[0].mxu0
  %v1536 = vadd.f32 0.0, %v1535
  %v1537 = vpop.f32.mrb[0].mxu0
  %v1538 = vpop.f32.mrb[0].mxu0
  %v1539 = vadd.f32 0.0, %v1538
  %v1540 = vpop.f32.mrb[0].mxu0
  %1541 = vmatprep.mubr.bf16.mxu0 0
  %1542 = vmatmul.mubr.bf16.gmra.mrb[0].mxu0 %v1488
  %v1543 = vpop.f32.mrb[0].mxu0
  %v1544 = vadd.f32 0.0, %v1543
  %v1545 = vpop.f32.mrb[0].mxu0
  %v1546 = vpop.f32.mrb[0].mxu0
  %v1547 = vadd.f32 0.0, %v1546
  %v1548 = vpop.f32.mrb[0].mxu0
  %1549 = vmatprep.mubr.bf16.mxu0 0
  %1550 = vmatmul.mubr.bf16.gmra.mrb[0].mxu0 %v1491
  %v1551 = vpop.f32.mrb[0].mxu0
  %v1552 = vadd.f32 0.0, %v1551
  %v1553 = vpop.f32.mrb[0].mxu0
  %v1554 = vpop.f32.mrb[0].mxu0
  %v1555 = vadd.f32 0.0, %v1554
  %v1556 = vpop.f32.mrb[0].mxu0
  %1557 = vdwg.mxu0
  %v1566 = vunpack.c.l.b16 %v1425
  %v1567 = vunpack.c.l.b16 %v1426
  %v1568 = vunpack.c.l.b16 %v1427
  %v1569 = vunpack.c.l.b16 %v1428
  %v1570 = vunpack.c.l.b16 %v1429
  %v1571 = vunpack.c.l.b16 %v1430
  %v1572 = vunpack.c.l.b16 %v1431
  %v1573 = vunpack.c.l.b16 %v1432
  %v1574 = vpack.c.b16 %v1567, %v1566
  %v1575 = vpack.c.b16 %v1569, %v1568
  %v1576 = vpack.c.b16 %v1571, %v1570
  %v1577 = vpack.c.b16 %v1573, %v1572
  %v1582 = vunpack.c.l.b16 %v1441
  %v1583 = vunpack.c.l.b16 %v1442
  %v1584 = vunpack.c.l.b16 %v1443
  %v1585 = vunpack.c.l.b16 %v1444
  %v1586 = vpack.c.b16 %v1583, %v1582
  %v1587 = vpack.c.b16 %v1585, %v1584
  %v1591 = vsel %vm286, %v1574, 0
  %v1594 = vsel %vm286, %v1575, 0
  %v1597 = vsel %vm286, %v1576, 0
  %v1600 = vsel %vm286, %v1577, 0
  %1602 = vmatprep.subr.bf16.mxu0 0
  %1603 = vmatpush1.bf16.msra.mxu0 %v1586
  %1604 = vmatprep.subr.bf16.mxu0 0
  %1605 = vmatpush1.bf16.msra.mxu0 %v1587
  %1606 = vmatprep.subr.bf16.mxu0 0
  %1607 = vmatpush1.bf16.msra.mxu0 0
  %1608 = vmatprep.subr.bf16.mxu0 0
  %1609 = vmatpush1.bf16.msra.mxu0 0
  %1610 = vmatprep.subr.bf16.mxu0 0
  %1611 = vmatpush1.bf16.msra.mxu0 0
  %1612 = vmatprep.subr.bf16.mxu0 0
  %1613 = vmatpush1.bf16.msra.mxu0 0
  %1614 = vmatprep.subr.bf16.mxu0 0
  %1615 = vmatpush1.bf16.msra.mxu0 0
  %1616 = vmatprep.subr.bf16.mxu0 0
  %1617 = vmatpush1.bf16.msra.mxu0 0
  %1618 = vmatprep.subr.bf16.mxu0 0
  %1619 = vmatpush1.bf16.msra.mxu0 0
  %1620 = vmatprep.subr.bf16.mxu0 0
  %1621 = vmatpush1.bf16.msra.mxu0 0
  %1622 = vmatprep.subr.bf16.mxu0 0
  %1623 = vmatpush1.bf16.msra.mxu0 0
  %1624 = vmatprep.subr.bf16.mxu0 0
  %1625 = vmatpush1.bf16.msra.mxu0 0
  %1626 = vmatprep.subr.bf16.mxu0 0
  %1627 = vmatpush1.bf16.msra.mxu0 0
  %1628 = vmatprep.subr.bf16.mxu0 0
  %1629 = vmatpush1.bf16.msra.mxu0 0
  %1630 = vmatprep.subr.bf16.mxu0 0
  %1631 = vmatpush1.bf16.msra.mxu0 0
  %1632 = vmatprep.subr.bf16.mxu0 0
  %1633 = vmatpush1.bf16.msra.mxu0 0
  %1634 = vmatprep.mubr.bf16.mxu0 0
  %1635 = vmatmul.mubr.bf16.gmra.mrb[0].mxu0 %v1591
  %v1636 = vpop.f32.mrb[0].mxu0
  %v1637 = vadd.f32 %v1528, %v1636
  %v1638 = vpop.f32.mrb[0].mxu0
  %v1639 = vpop.f32.mrb[0].mxu0
  %v1640 = vadd.f32 %v1531, %v1639
  %v1641 = vpop.f32.mrb[0].mxu0
  %1642 = vmatprep.mubr.bf16.mxu0 0
  %1643 = vmatmul.mubr.bf16.gmra.mrb[0].mxu0 %v1594
  %v1644 = vpop.f32.mrb[0].mxu0
  %v1645 = vadd.f32 %v1536, %v1644
  %v1646 = vpop.f32.mrb[0].mxu0
  %v1647 = vpop.f32.mrb[0].mxu0
  %v1648 = vadd.f32 %v1539, %v1647
  %v1649 = vpop.f32.mrb[0].mxu0
  %1650 = vmatprep.mubr.bf16.mxu0 0
  %1651 = vmatmul.mubr.bf16.gmra.mrb[0].mxu0 %v1597
  %v1652 = vpop.f32.mrb[0].mxu0
  %v1653 = vadd.f32 %v1544, %v1652
  %v1654 = vpop.f32.mrb[0].mxu0
  %v1655 = vpop.f32.mrb[0].mxu0
  %v1656 = vadd.f32 %v1547, %v1655
  %v1657 = vpop.f32.mrb[0].mxu0
  %1658 = vmatprep.mubr.bf16.mxu0 0
  %1659 = vmatmul.mubr.bf16.gmra.mrb[0].mxu0 %v1600
  %v1660 = vpop.f32.mrb[0].mxu0
  %v1661 = vadd.f32 %v1552, %v1660
  %v1662 = vpop.f32.mrb[0].mxu0
  %v1663 = vpop.f32.mrb[0].mxu0
  %v1664 = vadd.f32 %v1555, %v1663
  %v1665 = vpop.f32.mrb[0].mxu0
  %1666 = vdwg.mxu0
  %v1667 = vld [vmem:[%s8] sm:$0x1]
  %v1669 = vlaneseq
  %v1670 = vshrl.u32 %v1669, 7
  %v1671 = vsub.s32 0, %v1670
  %v1672 = vrot.slane %v1667, %v1671
  %v1674 = vadd.f32 %v1637, %v1672
  %v1675 = vadd.f32 %v1640, %v1672
  %v1676 = vadd.f32 %v1645, %v1672
  %v1677 = vadd.f32 %v1648, %v1672
  %v1678 = vadd.f32 %v1653, %v1672
  %v1679 = vadd.f32 %v1656, %v1672
  %v1680 = vadd.f32 %v1661, %v1672
  %v1681 = vadd.f32 %v1664, %v1672
  %1682 = vst [vmem:[%s9] sm:$0xff] %v1674
  %1683 = vst [vmem:[%s9 + $0x8] sm:$0xff] %v1675
  %1684 = vst [vmem:[%s9 + $0x10] sm:$0xff] %v1676
  %1685 = vst [vmem:[%s9 + $0x18] sm:$0xff] %v1677
  %1686 = vst [vmem:[%s9 + $0x20] sm:$0xff] %v1678
  %1687 = vst [vmem:[%s9 + $0x28] sm:$0xff] %v1679
  %1688 = vst [vmem:[%s9 + $0x30] sm:$0xff] %v1680
  %1689 = vst [vmem:[%s9 + $0x38] sm:$0xff] %v1681
  // Predicated region
  $region38: #{bilstm_tagger_forward.3} parent=0 // pred_check
    _
  $region39: #{bilstm_tagger_forward.3} parent=0 // pred_check_branch
    %1691 = sbr.rel (0) target = $region41
  $region40: #{bilstm_tagger_forward.3} parent=0 // pred_region
    _
  $region41: #{bilstm_tagger_forward.3} parent=0 // pred_fallthru
    _
  // Predicated region
  $region42: #{bilstm_tagger_forward.3} parent=0 // pred_check
    _
  $region43: #{bilstm_tagger_forward.3} parent=0 // pred_check_branch
    %1693 = sbr.rel (0) target = $region45
  $region44: #{bilstm_tagger_forward.3} parent=0 // pred_region
    _
  $region45: #{bilstm_tagger_forward.3} parent=0 // pred_fallthru
    _

// kernel: bilstm_tagger_forward.2
$region0: #{bilstm_tagger_forward.2}
  #allocation0 [shape = 'u32[]', space=smem, size = 0x4, offset = 0x4, fixed_abs, tag = 'smem constant byte address 0x4 - core index']
  #allocation1 [shape = 'u32[144,128]{1,0:T(1,128)}', space=vmem, size = 0x12000, scoped, tag = 'internal scratch']
  %s0 = inlined_call_operand.vmem [shape: bf16[512,16], index: 0, kind: input, shape index: {}]
  %s1 = inlined_call_operand.vmem [shape: bf16[16,288], index: 1, kind: input, shape index: {}]
  %s2 = inlined_call_operand.vmem [shape: f32[3,1,32], index: 2, kind: input, shape index: {}]
  %s3 = inlined_call_operand.vmem [shape: bf16[64,128], index: 3, kind: output, shape index: {}]
  %s4 = sld [smem:[#allocation0]]
  $region22: #{bilstm_tagger_forward.2} parent=0
    _
  %s6 = ssub.s32 1, %s4
  %s7 = scalar_select 0, %s6, %s4
  // Predicated region
  $region2: #{bilstm_tagger_forward.2} parent=0 // pred_check
    _
  $region3: #{bilstm_tagger_forward.2} parent=0 // pred_check_branch
    %9 = sbr.rel (0) target = $region5
  $region4: #{bilstm_tagger_forward.2} parent=0 // pred_region
    _
  $region5: #{bilstm_tagger_forward.2} parent=0 // pred_fallthru
    _
  // Predicated region
  $region6: #{bilstm_tagger_forward.2} parent=0 // pred_check
    _
  $region7: #{bilstm_tagger_forward.2} parent=0 // pred_check_branch
    %11 = sbr.rel (0) target = $region9
  $region8: #{bilstm_tagger_forward.2} parent=0 // pred_region
    _
  $region9: #{bilstm_tagger_forward.2} parent=0 // pred_fallthru
    _
  // Predicated region
  $region10: #{bilstm_tagger_forward.2} parent=0 // pred_check
    _
  $region11: #{bilstm_tagger_forward.2} parent=0 // pred_check_branch
    %13 = sbr.rel (0) target = $region13
  $region12: #{bilstm_tagger_forward.2} parent=0 // pred_region
    _
  $region13: #{bilstm_tagger_forward.2} parent=0 // pred_fallthru
    _
  %v15 = vld [vmem:[%s0] sm:$0xf]
  %v16 = vld [vmem:[%s0 + $0x4] sm:$0xf]
  %v17 = vld [vmem:[%s0 + $0x8] sm:$0xf]
  %v18 = vld [vmem:[%s0 + $0xc] sm:$0xf]
  %v19 = vld [vmem:[%s0 + $0x10] sm:$0xf]
  %v20 = vld [vmem:[%s0 + $0x14] sm:$0xf]
  %v21 = vld [vmem:[%s0 + $0x18] sm:$0xf]
  %v22 = vld [vmem:[%s0 + $0x1c] sm:$0xf]
  %v23 = vld [vmem:[%s0 + $0x20] sm:$0xf]
  %v24 = vld [vmem:[%s0 + $0x24] sm:$0xf]
  %v25 = vld [vmem:[%s0 + $0x28] sm:$0xf]
  %v26 = vld [vmem:[%s0 + $0x2c] sm:$0xf]
  %v27 = vld [vmem:[%s0 + $0x30] sm:$0xf]
  %v28 = vld [vmem:[%s0 + $0x34] sm:$0xf]
  %v29 = vld [vmem:[%s0 + $0x38] sm:$0xf]
  %v30 = vld [vmem:[%s0 + $0x3c] sm:$0xf]
  %v31 = vld [vmem:[%s0 + $0x40] sm:$0xf]
  %v32 = vld [vmem:[%s0 + $0x44] sm:$0xf]
  %v33 = vld [vmem:[%s0 + $0x48] sm:$0xf]
  %v34 = vld [vmem:[%s0 + $0x4c] sm:$0xf]
  %v35 = vld [vmem:[%s0 + $0x50] sm:$0xf]
  %v36 = vld [vmem:[%s0 + $0x54] sm:$0xf]
  %v37 = vld [vmem:[%s0 + $0x58] sm:$0xf]
  %v38 = vld [vmem:[%s0 + $0x5c] sm:$0xf]
  %v39 = vld [vmem:[%s0 + $0x60] sm:$0xf]
  %v40 = vld [vmem:[%s0 + $0x64] sm:$0xf]
  %v41 = vld [vmem:[%s0 + $0x68] sm:$0xf]
  %v42 = vld [vmem:[%s0 + $0x6c] sm:$0xf]
  %v43 = vld [vmem:[%s0 + $0x70] sm:$0xf]
  %v44 = vld [vmem:[%s0 + $0x74] sm:$0xf]
  %v45 = vld [vmem:[%s0 + $0x78] sm:$0xf]
  %v46 = vld [vmem:[%s0 + $0x7c] sm:$0xf]
  %v47 = vld [vmem:[%s0 + $0x80] sm:$0xf]
  %v48 = vld [vmem:[%s0 + $0x84] sm:$0xf]
  %v49 = vld [vmem:[%s0 + $0x88] sm:$0xf]
  %v50 = vld [vmem:[%s0 + $0x8c] sm:$0xf]
  %v51 = vld [vmem:[%s0 + $0x90] sm:$0xf]
  %v52 = vld [vmem:[%s0 + $0x94] sm:$0xf]
  %v53 = vld [vmem:[%s0 + $0x98] sm:$0xf]
  %v54 = vld [vmem:[%s0 + $0x9c] sm:$0xf]
  %v55 = vld [vmem:[%s0 + $0xa0] sm:$0xf]
  %v56 = vld [vmem:[%s0 + $0xa4] sm:$0xf]
  %v57 = vld [vmem:[%s0 + $0xa8] sm:$0xf]
  %v58 = vld [vmem:[%s0 + $0xac] sm:$0xf]
  %v59 = vld [vmem:[%s0 + $0xb0] sm:$0xf]
  %v60 = vld [vmem:[%s0 + $0xb4] sm:$0xf]
  %v61 = vld [vmem:[%s0 + $0xb8] sm:$0xf]
  %v62 = vld [vmem:[%s0 + $0xbc] sm:$0xf]
  %v63 = vld [vmem:[%s0 + $0xc0] sm:$0xf]
  %v64 = vld [vmem:[%s0 + $0xc4] sm:$0xf]
  %v65 = vld [vmem:[%s0 + $0xc8] sm:$0xf]
  %v66 = vld [vmem:[%s0 + $0xcc] sm:$0xf]
  %v67 = vld [vmem:[%s0 + $0xd0] sm:$0xf]
  %v68 = vld [vmem:[%s0 + $0xd4] sm:$0xf]
  %v69 = vld [vmem:[%s0 + $0xd8] sm:$0xf]
  %v70 = vld [vmem:[%s0 + $0xdc] sm:$0xf]
  %v71 = vld [vmem:[%s0 + $0xe0] sm:$0xf]
  %v72 = vld [vmem:[%s0 + $0xe4] sm:$0xf]
  %v73 = vld [vmem:[%s0 + $0xe8] sm:$0xf]
  %v74 = vld [vmem:[%s0 + $0xec] sm:$0xf]
  %v75 = vld [vmem:[%s0 + $0xf0] sm:$0xf]
  %v76 = vld [vmem:[%s0 + $0xf4] sm:$0xf]
  %v77 = vld [vmem:[%s0 + $0xf8] sm:$0xf]
  %v78 = vld [vmem:[%s0 + $0xfc] sm:$0xf]
  %v79 = vld [vmem:[%s1] sm:$0xff]
  %v80 = vld [vmem:[%s1 + $0x8] sm:$0xf]
  %v81 = vld [vmem:[%s1 + $0xc] sm:$0xff]
  %v82 = vld [vmem:[%s1 + $0x14] sm:$0xf]
  %v147 = vunpack.c.l.b16 %v15
  %v148 = vunpack.c.l.b16 %v16
  %v149 = vunpack.c.l.b16 %v17
  %v150 = vunpack.c.l.b16 %v18
  %v151 = vunpack.c.l.b16 %v19
  %v152 = vunpack.c.l.b16 %v20
  %v153 = vunpack.c.l.b16 %v21
  %v154 = vunpack.c.l.b16 %v22
  %v155 = vunpack.c.l.b16 %v23
  %v156 = vunpack.c.l.b16 %v24
  %v157 = vunpack.c.l.b16 %v25
  %v158 = vunpack.c.l.b16 %v26
  %v159 = vunpack.c.l.b16 %v27
  %v160 = vunpack.c.l.b16 %v28
  %v161 = vunpack.c.l.b16 %v29
  %v162 = vunpack.c.l.b16 %v30
  %v163 = vunpack.c.l.b16 %v31
  %v164 = vunpack.c.l.b16 %v32
  %v165 = vunpack.c.l.b16 %v33
  %v166 = vunpack.c.l.b16 %v34
  %v167 = vunpack.c.l.b16 %v35
  %v168 = vunpack.c.l.b16 %v36
  %v169 = vunpack.c.l.b16 %v37
  %v170 = vunpack.c.l.b16 %v38
  %v171 = vunpack.c.l.b16 %v39
  %v172 = vunpack.c.l.b16 %v40
  %v173 = vunpack.c.l.b16 %v41
  %v174 = vunpack.c.l.b16 %v42
  %v175 = vunpack.c.l.b16 %v43
  %v176 = vunpack.c.l.b16 %v44
  %v177 = vunpack.c.l.b16 %v45
  %v178 = vunpack.c.l.b16 %v46
  %v179 = vunpack.c.l.b16 %v47
  %v180 = vunpack.c.l.b16 %v48
  %v181 = vunpack.c.l.b16 %v49
  %v182 = vunpack.c.l.b16 %v50
  %v183 = vunpack.c.l.b16 %v51
  %v184 = vunpack.c.l.b16 %v52
  %v185 = vunpack.c.l.b16 %v53
  %v186 = vunpack.c.l.b16 %v54
  %v187 = vunpack.c.l.b16 %v55
  %v188 = vunpack.c.l.b16 %v56
  %v189 = vunpack.c.l.b16 %v57
  %v190 = vunpack.c.l.b16 %v58
  %v191 = vunpack.c.l.b16 %v59
  %v192 = vunpack.c.l.b16 %v60
  %v193 = vunpack.c.l.b16 %v61
  %v194 = vunpack.c.l.b16 %v62
  %v195 = vunpack.c.l.b16 %v63
  %v196 = vunpack.c.l.b16 %v64
  %v197 = vunpack.c.l.b16 %v65
  %v198 = vunpack.c.l.b16 %v66
  %v199 = vunpack.c.l.b16 %v67
  %v200 = vunpack.c.l.b16 %v68
  %v201 = vunpack.c.l.b16 %v69
  %v202 = vunpack.c.l.b16 %v70
  %v203 = vunpack.c.l.b16 %v71
  %v204 = vunpack.c.l.b16 %v72
  %v205 = vunpack.c.l.b16 %v73
  %v206 = vunpack.c.l.b16 %v74
  %v207 = vunpack.c.l.b16 %v75
  %v208 = vunpack.c.l.b16 %v76
  %v209 = vunpack.c.l.b16 %v77
  %v210 = vunpack.c.l.b16 %v78
  %v211 = vpack.c.b16 %v148, %v147
  %v212 = vpack.c.b16 %v150, %v149
  %v213 = vpack.c.b16 %v152, %v151
  %v214 = vpack.c.b16 %v154, %v153
  %v215 = vpack.c.b16 %v156, %v155
  %v216 = vpack.c.b16 %v158, %v157
  %v217 = vpack.c.b16 %v160, %v159
  %v218 = vpack.c.b16 %v162, %v161
  %v219 = vpack.c.b16 %v164, %v163
  %v220 = vpack.c.b16 %v166, %v165
  %v221 = vpack.c.b16 %v168, %v167
  %v222 = vpack.c.b16 %v170, %v169
  %v223 = vpack.c.b16 %v172, %v171
  %v224 = vpack.c.b16 %v174, %v173
  %v225 = vpack.c.b16 %v176, %v175
  %v226 = vpack.c.b16 %v178, %v177
  %v227 = vpack.c.b16 %v180, %v179
  %v228 = vpack.c.b16 %v182, %v181
  %v229 = vpack.c.b16 %v184, %v183
  %v230 = vpack.c.b16 %v186, %v185
  %v231 = vpack.c.b16 %v188, %v187
  %v232 = vpack.c.b16 %v190, %v189
  %v233 = vpack.c.b16 %v192, %v191
  %v234 = vpack.c.b16 %v194, %v193
  %v235 = vpack.c.b16 %v196, %v195
  %v236 = vpack.c.b16 %v198, %v197
  %v237 = vpack.c.b16 %v200, %v199
  %v238 = vpack.c.b16 %v202, %v201
  %v239 = vpack.c.b16 %v204, %v203
  %v240 = vpack.c.b16 %v206, %v205
  %v241 = vpack.c.b16 %v208, %v207
  %v242 = vpack.c.b16 %v210, %v209
  %v247 = vunpack.c.l.b16 %v79
  %v248 = vunpack.c.h.b16 %v79
  %v249 = vunpack.c.l.b16 %v80
  %v250 = vunpack.c.l.b16 %v81
  %v251 = vunpack.c.h.b16 %v81
  %v252 = vunpack.c.l.b16 %v82
  %v253 = vpack.c.b16 %v250, %v247
  %v254 = vpack.c.b16 %v251, %v248
  %v255 = vpack.c.b16 %v252, %v249
  %vm259 = vcmask 130048
  %v261 = vsel %vm259, %v211, 0
  %v264 = vsel %vm259, %v212, 0
  %v267 = vsel %vm259, %v213, 0
  %v270 = vsel %vm259, %v214, 0
  %v273 = vsel %vm259, %v215, 0
  %v276 = vsel %vm259, %v216, 0
  %v279 = vsel %vm259, %v217, 0
  %v282 = vsel %vm259, %v218, 0
  %v285 = vsel %vm259, %v219, 0
  %v288 = vsel %vm259, %v220, 0
  %v291 = vsel %vm259, %v221, 0
  %v294 = vsel %vm259, %v222, 0
  %v297 = vsel %vm259, %v223, 0
  %v300 = vsel %vm259, %v224, 0
  %v303 = vsel %vm259, %v225, 0
  %v306 = vsel %vm259, %v226, 0
  %v309 = vsel %vm259, %v227, 0
  %v312 = vsel %vm259, %v228, 0
  %v315 = vsel %vm259, %v229, 0
  %v318 = vsel %vm259, %v230, 0
  %v321 = vsel %vm259, %v231, 0
  %v324 = vsel %vm259, %v232, 0
  %v327 = vsel %vm259, %v233, 0
  %v330 = vsel %vm259, %v234, 0
  %v333 = vsel %vm259, %v235, 0
  %v336 = vsel %vm259, %v236, 0
  %v339 = vsel %vm259, %v237, 0
  %v342 = vsel %vm259, %v238, 0
  %v345 = vsel %vm259, %v239, 0
  %v348 = vsel %vm259, %v240, 0
  %v351 = vsel %vm259, %v241, 0
  %v354 = vsel %vm259, %v242, 0
  %356 = vmatprep.subr.bf16.mxu0 %v254
  %357 = vmatpush1.bf16.msra.mxu0 %v253
  %358 = vmatprep.subr.bf16.mxu0 0
  %359 = vmatpush1.bf16.msra.mxu0 0
  %360 = vmatprep.subr.bf16.mxu0 0
  %361 = vmatpush1.bf16.msra.mxu0 0
  %362 = vmatprep.subr.bf16.mxu0 0
  %363 = vmatpush1.bf16.msra.mxu0 0
  %364 = vmatprep.subr.bf16.mxu0 0
  %365 = vmatpush1.bf16.msra.mxu0 0
  %366 = vmatprep.subr.bf16.mxu0 0
  %367 = vmatpush1.bf16.msra.mxu0 0
  %368 = vmatprep.subr.bf16.mxu0 0
  %369 = vmatpush1.bf16.msra.mxu0 0
  %370 = vmatprep.subr.bf16.mxu0 0
  %371 = vmatpush1.bf16.msra.mxu0 0
  %372 = vmatprep.subr.bf16.mxu0 0
  %373 = vmatpush1.bf16.msra.mxu0 0
  %374 = vmatprep.subr.bf16.mxu0 0
  %375 = vmatpush1.bf16.msra.mxu0 0
  %376 = vmatprep.subr.bf16.mxu0 0
  %377 = vmatpush1.bf16.msra.mxu0 0
  %378 = vmatprep.subr.bf16.mxu0 0
  %379 = vmatpush1.bf16.msra.mxu0 0
  %380 = vmatprep.subr.bf16.mxu0 0
  %381 = vmatpush1.bf16.msra.mxu0 0
  %382 = vmatprep.subr.bf16.mxu0 0
  %383 = vmatpush1.bf16.msra.mxu0 0
  %384 = vmatprep.subr.bf16.mxu0 0
  %385 = vmatpush1.bf16.msra.mxu0 0
  %386 = vmatprep.subr.bf16.mxu0 0
  %387 = vmatpush1.bf16.msra.mxu0 0
  %388 = vmatprep.mubr.bf16.mxu0 0
  %389 = vmatmul.mubr.bf16.gmra.mrb[0].mxu0 %v261
  %v390 = vpop.f32.mrb[0].mxu0
  %v391 = vadd.f32 0.0, %v390
  %v392 = vpop.f32.mrb[0].mxu0
  %v393 = vadd.f32 0.0, %v392
  %v394 = vpop.f32.mrb[0].mxu0
  %v395 = vadd.f32 0.0, %v394
  %v396 = vpop.f32.mrb[0].mxu0
  %v397 = vadd.f32 0.0, %v396
  %398 = vmatprep.mubr.bf16.mxu0 0
  %399 = vmatmul.mubr.bf16.gmra.mrb[0].mxu0 %v264
  %v400 = vpop.f32.mrb[0].mxu0
  %v401 = vadd.f32 0.0, %v400
  %v402 = vpop.f32.mrb[0].mxu0
  %v403 = vadd.f32 0.0, %v402
  %v404 = vpop.f32.mrb[0].mxu0
  %v405 = vadd.f32 0.0, %v404
  %v406 = vpop.f32.mrb[0].mxu0
  %v407 = vadd.f32 0.0, %v406
  %408 = vmatprep.mubr.bf16.mxu0 0
  %409 = vmatmul.mubr.bf16.gmra.mrb[0].mxu0 %v267
  %v410 = vpop.f32.mrb[0].mxu0
  %v411 = vadd.f32 0.0, %v410
  %v412 = vpop.f32.mrb[0].mxu0
  %v413 = vadd.f32 0.0, %v412
  %v414 = vpop.f32.mrb[0].mxu0
  %v415 = vadd.f32 0.0, %v414
  %v416 = vpop.f32.mrb[0].mxu0
  %v417 = vadd.f32 0.0, %v416
  %418 = vmatprep.mubr.bf16.mxu0 0
  %419 = vmatmul.mubr.bf16.gmra.mrb[0].mxu0 %v270
  %v420 = vpop.f32.mrb[0].mxu0
  %v421 = vadd.f32 0.0, %v420
  %v422 = vpop.f32.mrb[0].mxu0
  %v423 = vadd.f32 0.0, %v422
  %v424 = vpop.f32.mrb[0].mxu0
  %v425 = vadd.f32 0.0, %v424
  %v426 = vpop.f32.mrb[0].mxu0
  %v427 = vadd.f32 0.0, %v426
  %428 = vmatprep.mubr.bf16.mxu0 0
  %429 = vmatmul.mubr.bf16.gmra.mrb[0].mxu0 %v273
  %v430 = vpop.f32.mrb[0].mxu0
  %v431 = vadd.f32 0.0, %v430
  %v432 = vpop.f32.mrb[0].mxu0
  %v433 = vadd.f32 0.0, %v432
  %v434 = vpop.f32.mrb[0].mxu0
  %v435 = vadd.f32 0.0, %v434
  %v436 = vpop.f32.mrb[0].mxu0
  %v437 = vadd.f32 0.0, %v436
  %438 = vmatprep.mubr.bf16.mxu0 0
  %439 = vmatmul.mubr.bf16.gmra.mrb[0].mxu0 %v276
  %v440 = vpop.f32.mrb[0].mxu0
  %v441 = vadd.f32 0.0, %v440
  %v442 = vpop.f32.mrb[0].mxu0
  %v443 = vadd.f32 0.0, %v442
  %v444 = vpop.f32.mrb[0].mxu0
  %v445 = vadd.f32 0.0, %v444
  %v446 = vpop.f32.mrb[0].mxu0
  %v447 = vadd.f32 0.0, %v446
  %448 = vmatprep.mubr.bf16.mxu0 0
  %449 = vmatmul.mubr.bf16.gmra.mrb[0].mxu0 %v279
  %v450 = vpop.f32.mrb[0].mxu0
  %v451 = vadd.f32 0.0, %v450
  %v452 = vpop.f32.mrb[0].mxu0
  %v453 = vadd.f32 0.0, %v452
  %v454 = vpop.f32.mrb[0].mxu0
  %v455 = vadd.f32 0.0, %v454
  %v456 = vpop.f32.mrb[0].mxu0
  %v457 = vadd.f32 0.0, %v456
  %458 = vmatprep.mubr.bf16.mxu0 0
  %459 = vmatmul.mubr.bf16.gmra.mrb[0].mxu0 %v282
  %v460 = vpop.f32.mrb[0].mxu0
  %v461 = vadd.f32 0.0, %v460
  %v462 = vpop.f32.mrb[0].mxu0
  %v463 = vadd.f32 0.0, %v462
  %v464 = vpop.f32.mrb[0].mxu0
  %v465 = vadd.f32 0.0, %v464
  %v466 = vpop.f32.mrb[0].mxu0
  %v467 = vadd.f32 0.0, %v466
  %468 = vmatprep.mubr.bf16.mxu0 0
  %469 = vmatmul.mubr.bf16.gmra.mrb[0].mxu0 %v285
  %v470 = vpop.f32.mrb[0].mxu0
  %v471 = vadd.f32 0.0, %v470
  %v472 = vpop.f32.mrb[0].mxu0
  %v473 = vadd.f32 0.0, %v472
  %v474 = vpop.f32.mrb[0].mxu0
  %v475 = vadd.f32 0.0, %v474
  %v476 = vpop.f32.mrb[0].mxu0
  %v477 = vadd.f32 0.0, %v476
  %478 = vmatprep.mubr.bf16.mxu0 0
  %479 = vmatmul.mubr.bf16.gmra.mrb[0].mxu0 %v288
  %v480 = vpop.f32.mrb[0].mxu0
  %v481 = vadd.f32 0.0, %v480
  %v482 = vpop.f32.mrb[0].mxu0
  %v483 = vadd.f32 0.0, %v482
  %v484 = vpop.f32.mrb[0].mxu0
  %v485 = vadd.f32 0.0, %v484
  %v486 = vpop.f32.mrb[0].mxu0
  %v487 = vadd.f32 0.0, %v486
  %488 = vmatprep.mubr.bf16.mxu0 0
  %489 = vmatmul.mubr.bf16.gmra.mrb[0].mxu0 %v291
  %v490 = vpop.f32.mrb[0].mxu0
  %v491 = vadd.f32 0.0, %v490
  %v492 = vpop.f32.mrb[0].mxu0
  %v493 = vadd.f32 0.0, %v492
  %v494 = vpop.f32.mrb[0].mxu0
  %v495 = vadd.f32 0.0, %v494
  %v496 = vpop.f32.mrb[0].mxu0
  %v497 = vadd.f32 0.0, %v496
  %498 = vmatprep.mubr.bf16.mxu0 0
  %499 = vmatmul.mubr.bf16.gmra.mrb[0].mxu0 %v294
  %v500 = vpop.f32.mrb[0].mxu0
  %v501 = vadd.f32 0.0, %v500
  %v502 = vpop.f32.mrb[0].mxu0
  %v503 = vadd.f32 0.0, %v502
  %v504 = vpop.f32.mrb[0].mxu0
  %v505 = vadd.f32 0.0, %v504
  %v506 = vpop.f32.mrb[0].mxu0
  %v507 = vadd.f32 0.0, %v506
  %508 = vmatprep.mubr.bf16.mxu0 0
  %509 = vmatmul.mubr.bf16.gmra.mrb[0].mxu0 %v297
  %v510 = vpop.f32.mrb[0].mxu0
  %v511 = vadd.f32 0.0, %v510
  %v512 = vpop.f32.mrb[0].mxu0
  %v513 = vadd.f32 0.0, %v512
  %v514 = vpop.f32.mrb[0].mxu0
  %v515 = vadd.f32 0.0, %v514
  %v516 = vpop.f32.mrb[0].mxu0
  %v517 = vadd.f32 0.0, %v516
  %518 = vmatprep.mubr.bf16.mxu0 0
  %519 = vmatmul.mubr.bf16.gmra.mrb[0].mxu0 %v300
  %v520 = vpop.f32.mrb[0].mxu0
  %v521 = vadd.f32 0.0, %v520
  %v522 = vpop.f32.mrb[0].mxu0
  %v523 = vadd.f32 0.0, %v522
  %v524 = vpop.f32.mrb[0].mxu0
  %v525 = vadd.f32 0.0, %v524
  %v526 = vpop.f32.mrb[0].mxu0
  %v527 = vadd.f32 0.0, %v526
  %528 = vmatprep.mubr.bf16.mxu0 0
  %529 = vmatmul.mubr.bf16.gmra.mrb[0].mxu0 %v303
  %v530 = vpop.f32.mrb[0].mxu0
  %v531 = vadd.f32 0.0, %v530
  %v532 = vpop.f32.mrb[0].mxu0
  %v533 = vadd.f32 0.0, %v532
  %v534 = vpop.f32.mrb[0].mxu0
  %v535 = vadd.f32 0.0, %v534
  %v536 = vpop.f32.mrb[0].mxu0
  %v537 = vadd.f32 0.0, %v536
  %538 = vmatprep.mubr.bf16.mxu0 0
  %539 = vmatmul.mubr.bf16.gmra.mrb[0].mxu0 %v306
  %v540 = vpop.f32.mrb[0].mxu0
  %v541 = vadd.f32 0.0, %v540
  %v542 = vpop.f32.mrb[0].mxu0
  %v543 = vadd.f32 0.0, %v542
  %v544 = vpop.f32.mrb[0].mxu0
  %v545 = vadd.f32 0.0, %v544
  %v546 = vpop.f32.mrb[0].mxu0
  %v547 = vadd.f32 0.0, %v546
  %548 = vmatprep.mubr.bf16.mxu0 0
  %549 = vmatmul.mubr.bf16.gmra.mrb[0].mxu0 %v309
  %v550 = vpop.f32.mrb[0].mxu0
  %v551 = vadd.f32 0.0, %v550
  %v552 = vpop.f32.mrb[0].mxu0
  %v553 = vadd.f32 0.0, %v552
  %v554 = vpop.f32.mrb[0].mxu0
  %v555 = vadd.f32 0.0, %v554
  %v556 = vpop.f32.mrb[0].mxu0
  %v557 = vadd.f32 0.0, %v556
  %558 = vmatprep.mubr.bf16.mxu0 0
  %559 = vmatmul.mubr.bf16.gmra.mrb[0].mxu0 %v312
  %v560 = vpop.f32.mrb[0].mxu0
  %v561 = vadd.f32 0.0, %v560
  %v562 = vpop.f32.mrb[0].mxu0
  %v563 = vadd.f32 0.0, %v562
  %v564 = vpop.f32.mrb[0].mxu0
  %v565 = vadd.f32 0.0, %v564
  %v566 = vpop.f32.mrb[0].mxu0
  %v567 = vadd.f32 0.0, %v566
  %568 = vmatprep.mubr.bf16.mxu0 0
  %569 = vmatmul.mubr.bf16.gmra.mrb[0].mxu0 %v315
  %v570 = vpop.f32.mrb[0].mxu0
  %v571 = vadd.f32 0.0, %v570
  %v572 = vpop.f32.mrb[0].mxu0
  %v573 = vadd.f32 0.0, %v572
  %v574 = vpop.f32.mrb[0].mxu0
  %v575 = vadd.f32 0.0, %v574
  %v576 = vpop.f32.mrb[0].mxu0
  %v577 = vadd.f32 0.0, %v576
  %578 = vmatprep.mubr.bf16.mxu0 0
  %579 = vmatmul.mubr.bf16.gmra.mrb[0].mxu0 %v318
  %v580 = vpop.f32.mrb[0].mxu0
  %v581 = vadd.f32 0.0, %v580
  %v582 = vpop.f32.mrb[0].mxu0
  %v583 = vadd.f32 0.0, %v582
  %v584 = vpop.f32.mrb[0].mxu0
  %v585 = vadd.f32 0.0, %v584
  %v586 = vpop.f32.mrb[0].mxu0
  %v587 = vadd.f32 0.0, %v586
  %588 = vmatprep.mubr.bf16.mxu0 0
  %589 = vmatmul.mubr.bf16.gmra.mrb[0].mxu0 %v321
  %v590 = vpop.f32.mrb[0].mxu0
  %v591 = vadd.f32 0.0, %v590
  %v592 = vpop.f32.mrb[0].mxu0
  %v593 = vadd.f32 0.0, %v592
  %v594 = vpop.f32.mrb[0].mxu0
  %v595 = vadd.f32 0.0, %v594
  %v596 = vpop.f32.mrb[0].mxu0
  %v597 = vadd.f32 0.0, %v596
  %598 = vmatprep.mubr.bf16.mxu0 0
  %599 = vmatmul.mubr.bf16.gmra.mrb[0].mxu0 %v324
  %v600 = vpop.f32.mrb[0].mxu0
  %v601 = vadd.f32 0.0, %v600
  %v602 = vpop.f32.mrb[0].mxu0
  %v603 = vadd.f32 0.0, %v602
  %v604 = vpop.f32.mrb[0].mxu0
  %v605 = vadd.f32 0.0, %v604
  %v606 = vpop.f32.mrb[0].mxu0
  %v607 = vadd.f32 0.0, %v606
  %608 = vmatprep.mubr.bf16.mxu0 0
  %609 = vmatmul.mubr.bf16.gmra.mrb[0].mxu0 %v327
  %v610 = vpop.f32.mrb[0].mxu0
  %v611 = vadd.f32 0.0, %v610
  %v612 = vpop.f32.mrb[0].mxu0
  %v613 = vadd.f32 0.0, %v612
  %v614 = vpop.f32.mrb[0].mxu0
  %v615 = vadd.f32 0.0, %v614
  %v616 = vpop.f32.mrb[0].mxu0
  %v617 = vadd.f32 0.0, %v616
  %618 = vmatprep.mubr.bf16.mxu0 0
  %619 = vmatmul.mubr.bf16.gmra.mrb[0].mxu0 %v330
  %v620 = vpop.f32.mrb[0].mxu0
  %v621 = vadd.f32 0.0, %v620
  %v622 = vpop.f32.mrb[0].mxu0
  %v623 = vadd.f32 0.0, %v622
  %v624 = vpop.f32.mrb[0].mxu0
  %v625 = vadd.f32 0.0, %v624
  %v626 = vpop.f32.mrb[0].mxu0
  %v627 = vadd.f32 0.0, %v626
  %628 = vmatprep.mubr.bf16.mxu0 0
  %629 = vmatmul.mubr.bf16.gmra.mrb[0].mxu0 %v333
  %v630 = vpop.f32.mrb[0].mxu0
  %v631 = vadd.f32 0.0, %v630
  %v632 = vpop.f32.mrb[0].mxu0
  %v633 = vadd.f32 0.0, %v632
  %v634 = vpop.f32.mrb[0].mxu0
  %v635 = vadd.f32 0.0, %v634
  %v636 = vpop.f32.mrb[0].mxu0
  %v637 = vadd.f32 0.0, %v636
  %638 = vmatprep.mubr.bf16.mxu0 0
  %639 = vmatmul.mubr.bf16.gmra.mrb[0].mxu0 %v336
  %v640 = vpop.f32.mrb[0].mxu0
  %v641 = vadd.f32 0.0, %v640
  %v642 = vpop.f32.mrb[0].mxu0
  %v643 = vadd.f32 0.0, %v642
  %v644 = vpop.f32.mrb[0].mxu0
  %v645 = vadd.f32 0.0, %v644
  %v646 = vpop.f32.mrb[0].mxu0
  %v647 = vadd.f32 0.0, %v646
  %648 = vmatprep.mubr.bf16.mxu0 0
  %649 = vmatmul.mubr.bf16.gmra.mrb[0].mxu0 %v339
  %v650 = vpop.f32.mrb[0].mxu0
  %v651 = vadd.f32 0.0, %v650
  %v652 = vpop.f32.mrb[0].mxu0
  %v653 = vadd.f32 0.0, %v652
  %v654 = vpop.f32.mrb[0].mxu0
  %v655 = vadd.f32 0.0, %v654
  %v656 = vpop.f32.mrb[0].mxu0
  %v657 = vadd.f32 0.0, %v656
  %658 = vmatprep.mubr.bf16.mxu0 0
  %659 = vmatmul.mubr.bf16.gmra.mrb[0].mxu0 %v342
  %v660 = vpop.f32.mrb[0].mxu0
  %v661 = vadd.f32 0.0, %v660
  %v662 = vpop.f32.mrb[0].mxu0
  %v663 = vadd.f32 0.0, %v662
  %v664 = vpop.f32.mrb[0].mxu0
  %v665 = vadd.f32 0.0, %v664
  %v666 = vpop.f32.mrb[0].mxu0
  %v667 = vadd.f32 0.0, %v666
  %668 = vmatprep.mubr.bf16.mxu0 0
  %669 = vmatmul.mubr.bf16.gmra.mrb[0].mxu0 %v345
  %v670 = vpop.f32.mrb[0].mxu0
  %v671 = vadd.f32 0.0, %v670
  %v672 = vpop.f32.mrb[0].mxu0
  %v673 = vadd.f32 0.0, %v672
  %v674 = vpop.f32.mrb[0].mxu0
  %v675 = vadd.f32 0.0, %v674
  %v676 = vpop.f32.mrb[0].mxu0
  %v677 = vadd.f32 0.0, %v676
  %678 = vmatprep.mubr.bf16.mxu0 0
  %679 = vmatmul.mubr.bf16.gmra.mrb[0].mxu0 %v348
  %v680 = vpop.f32.mrb[0].mxu0
  %v681 = vadd.f32 0.0, %v680
  %v682 = vpop.f32.mrb[0].mxu0
  %v683 = vadd.f32 0.0, %v682
  %v684 = vpop.f32.mrb[0].mxu0
  %v685 = vadd.f32 0.0, %v684
  %v686 = vpop.f32.mrb[0].mxu0
  %v687 = vadd.f32 0.0, %v686
  %688 = vmatprep.mubr.bf16.mxu0 0
  %689 = vmatmul.mubr.bf16.gmra.mrb[0].mxu0 %v351
  %v690 = vpop.f32.mrb[0].mxu0
  %v691 = vadd.f32 0.0, %v690
  %v692 = vpop.f32.mrb[0].mxu0
  %v693 = vadd.f32 0.0, %v692
  %v694 = vpop.f32.mrb[0].mxu0
  %v695 = vadd.f32 0.0, %v694
  %v696 = vpop.f32.mrb[0].mxu0
  %v697 = vadd.f32 0.0, %v696
  %698 = vmatprep.mubr.bf16.mxu0 0
  %699 = vmatmul.mubr.bf16.gmra.mrb[0].mxu0 %v354
  %v700 = vpop.f32.mrb[0].mxu0
  %v701 = vadd.f32 0.0, %v700
  %v702 = vpop.f32.mrb[0].mxu0
  %v703 = vadd.f32 0.0, %v702
  %v704 = vpop.f32.mrb[0].mxu0
  %v705 = vadd.f32 0.0, %v704
  %v706 = vpop.f32.mrb[0].mxu0
  %v707 = vadd.f32 0.0, %v706
  %708 = vdwg.mxu0
  %709 = vmatprep.subr.bf16.mxu0 0
  %710 = vmatpush1.bf16.msra.mxu0 %v255
  %711 = vmatprep.subr.bf16.mxu0 0
  %712 = vmatpush1.bf16.msra.mxu0 0
  %713 = vmatprep.subr.bf16.mxu0 0
  %714 = vmatpush1.bf16.msra.mxu0 0
  %715 = vmatprep.subr.bf16.mxu0 0
  %716 = vmatpush1.bf16.msra.mxu0 0
  %717 = vmatprep.subr.bf16.mxu0 0
  %718 = vmatpush1.bf16.msra.mxu0 0
  %719 = vmatprep.subr.bf16.mxu0 0
  %720 = vmatpush1.bf16.msra.mxu0 0
  %721 = vmatprep.subr.bf16.mxu0 0
  %722 = vmatpush1.bf16.msra.mxu0 0
  %723 = vmatprep.subr.bf16.mxu0 0
  %724 = vmatpush1.bf16.msra.mxu0 0
  %725 = vmatprep.subr.bf16.mxu0 0
  %726 = vmatpush1.bf16.msra.mxu0 0
  %727 = vmatprep.subr.bf16.mxu0 0
  %728 = vmatpush1.bf16.msra.mxu0 0
  %729 = vmatprep.subr.bf16.mxu0 0
  %730 = vmatpush1.bf16.msra.mxu0 0
  %731 = vmatprep.subr.bf16.mxu0 0
  %732 = vmatpush1.bf16.msra.mxu0 0
  %733 = vmatprep.subr.bf16.mxu0 0
  %734 = vmatpush1.bf16.msra.mxu0 0
  %735 = vmatprep.subr.bf16.mxu0 0
  %736 = vmatpush1.bf16.msra.mxu0 0
  %737 = vmatprep.subr.bf16.mxu0 0
  %738 = vmatpush1.bf16.msra.mxu0 0
  %739 = vmatprep.subr.bf16.mxu0 0
  %740 = vmatpush1.bf16.msra.mxu0 0
  %741 = vmatprep.mubr.bf16.mxu0 0
  %742 = vmatmul.mubr.bf16.gmra.mrb[0].mxu0 %v261
  %v743 = vpop.f32.mrb[0].mxu0
  %v744 = vadd.f32 0.0, %v743
  %v745 = vpop.f32.mrb[0].mxu0
  %v746 = vpop.f32.mrb[0].mxu0
  %v747 = vadd.f32 0.0, %v746
  %v748 = vpop.f32.mrb[0].mxu0
  %749 = vmatprep.mubr.bf16.mxu0 0
  %750 = vmatmul.mubr.bf16.gmra.mrb[0].mxu0 %v264
  %v751 = vpop.f32.mrb[0].mxu0
  %v752 = vadd.f32 0.0, %v751
  %v753 = vpop.f32.mrb[0].mxu0
  %v754 = vpop.f32.mrb[0].mxu0
  %v755 = vadd.f32 0.0, %v754
  %v756 = vpop.f32.mrb[0].mxu0
  %757 = vmatprep.mubr.bf16.mxu0 0
  %758 = vmatmul.mubr.bf16.gmra.mrb[0].mxu0 %v267
  %v759 = vpop.f32.mrb[0].mxu0
  %v760 = vadd.f32 0.0, %v759
  %v761 = vpop.f32.mrb[0].mxu0
  %v762 = vpop.f32.mrb[0].mxu0
  %v763 = vadd.f32 0.0, %v762
  %v764 = vpop.f32.mrb[0].mxu0
  %765 = vmatprep.mubr.bf16.mxu0 0
  %766 = vmatmul.mubr.bf16.gmra.mrb[0].mxu0 %v270
  %v767 = vpop.f32.mrb[0].mxu0
  %v768 = vadd.f32 0.0, %v767
  %v769 = vpop.f32.mrb[0].mxu0
  %v770 = vpop.f32.mrb[0].mxu0
  %v771 = vadd.f32 0.0, %v770
  %v772 = vpop.f32.mrb[0].mxu0
  %773 = vmatprep.mubr.bf16.mxu0 0
  %774 = vmatmul.mubr.bf16.gmra.mrb[0].mxu0 %v273
  %v775 = vpop.f32.mrb[0].mxu0
  %v776 = vadd.f32 0.0, %v775
  %v777 = vpop.f32.mrb[0].mxu0
  %v778 = vpop.f32.mrb[0].mxu0
  %v779 = vadd.f32 0.0, %v778
  %v780 = vpop.f32.mrb[0].mxu0
  %781 = vmatprep.mubr.bf16.mxu0 0
  %782 = vmatmul.mubr.bf16.gmra.mrb[0].mxu0 %v276
  %v783 = vpop.f32.mrb[0].mxu0
  %v784 = vadd.f32 0.0, %v783
  %v785 = vpop.f32.mrb[0].mxu0
  %v786 = vpop.f32.mrb[0].mxu0
  %v787 = vadd.f32 0.0, %v786
  %v788 = vpop.f32.mrb[0].mxu0
  %789 = vmatprep.mubr.bf16.mxu0 0
  %790 = vmatmul.mubr.bf16.gmra.mrb[0].mxu0 %v279
  %v791 = vpop.f32.mrb[0].mxu0
  %v792 = vadd.f32 0.0, %v791
  %v793 = vpop.f32.mrb[0].mxu0
  %v794 = vpop.f32.mrb[0].mxu0
  %v795 = vadd.f32 0.0, %v794
  %v796 = vpop.f32.mrb[0].mxu0
  %797 = vmatprep.mubr.bf16.mxu0 0
  %798 = vmatmul.mubr.bf16.gmra.mrb[0].mxu0 %v282
  %v799 = vpop.f32.mrb[0].mxu0
  %v800 = vadd.f32 0.0, %v799
  %v801 = vpop.f32.mrb[0].mxu0
  %v802 = vpop.f32.mrb[0].mxu0
  %v803 = vadd.f32 0.0, %v802
  %v804 = vpop.f32.mrb[0].mxu0
  %805 = vmatprep.mubr.bf16.mxu0 0
  %806 = vmatmul.mubr.bf16.gmra.mrb[0].mxu0 %v285
  %v807 = vpop.f32.mrb[0].mxu0
  %v808 = vadd.f32 0.0, %v807
  %v809 = vpop.f32.mrb[0].mxu0
  %v810 = vpop.f32.mrb[0].mxu0
  %v811 = vadd.f32 0.0, %v810
  %v812 = vpop.f32.mrb[0].mxu0
  %813 = vmatprep.mubr.bf16.mxu0 0
  %814 = vmatmul.mubr.bf16.gmra.mrb[0].mxu0 %v288
  %v815 = vpop.f32.mrb[0].mxu0
  %v816 = vadd.f32 0.0, %v815
  %v817 = vpop.f32.mrb[0].mxu0
  %v818 = vpop.f32.mrb[0].mxu0
  %v819 = vadd.f32 0.0, %v818
  %v820 = vpop.f32.mrb[0].mxu0
  %821 = vmatprep.mubr.bf16.mxu0 0
  %822 = vmatmul.mubr.bf16.gmra.mrb[0].mxu0 %v291
  %v823 = vpop.f32.mrb[0].mxu0
  %v824 = vadd.f32 0.0, %v823
  %v825 = vpop.f32.mrb[0].mxu0
  %v826 = vpop.f32.mrb[0].mxu0
  %v827 = vadd.f32 0.0, %v826
  %v828 = vpop.f32.mrb[0].mxu0
  %829 = vmatprep.mubr.bf16.mxu0 0
  %830 = vmatmul.mubr.bf16.gmra.mrb[0].mxu0 %v294
  %v831 = vpop.f32.mrb[0].mxu0
  %v832 = vadd.f32 0.0, %v831
  %v833 = vpop.f32.mrb[0].mxu0
  %v834 = vpop.f32.mrb[0].mxu0
  %v835 = vadd.f32 0.0, %v834
  %v836 = vpop.f32.mrb[0].mxu0
  %837 = vmatprep.mubr.bf16.mxu0 0
  %838 = vmatmul.mubr.bf16.gmra.mrb[0].mxu0 %v297
  %v839 = vpop.f32.mrb[0].mxu0
  %v840 = vadd.f32 0.0, %v839
  %v841 = vpop.f32.mrb[0].mxu0
  %v842 = vpop.f32.mrb[0].mxu0
  %v843 = vadd.f32 0.0, %v842
  %v844 = vpop.f32.mrb[0].mxu0
  %845 = vmatprep.mubr.bf16.mxu0 0
  %846 = vmatmul.mubr.bf16.gmra.mrb[0].mxu0 %v300
  %v847 = vpop.f32.mrb[0].mxu0
  %v848 = vadd.f32 0.0, %v847
  %v849 = vpop.f32.mrb[0].mxu0
  %v850 = vpop.f32.mrb[0].mxu0
  %v851 = vadd.f32 0.0, %v850
  %v852 = vpop.f32.mrb[0].mxu0
  %853 = vmatprep.mubr.bf16.mxu0 0
  %854 = vmatmul.mubr.bf16.gmra.mrb[0].mxu0 %v303
  %v855 = vpop.f32.mrb[0].mxu0
  %v856 = vadd.f32 0.0, %v855
  %v857 = vpop.f32.mrb[0].mxu0
  %v858 = vpop.f32.mrb[0].mxu0
  %v859 = vadd.f32 0.0, %v858
  %v860 = vpop.f32.mrb[0].mxu0
  %861 = vmatprep.mubr.bf16.mxu0 0
  %862 = vmatmul.mubr.bf16.gmra.mrb[0].mxu0 %v306
  %v863 = vpop.f32.mrb[0].mxu0
  %v864 = vadd.f32 0.0, %v863
  %v865 = vpop.f32.mrb[0].mxu0
  %v866 = vpop.f32.mrb[0].mxu0
  %v867 = vadd.f32 0.0, %v866
  %v868 = vpop.f32.mrb[0].mxu0
  %869 = vmatprep.mubr.bf16.mxu0 0
  %870 = vmatmul.mubr.bf16.gmra.mrb[0].mxu0 %v309
  %v871 = vpop.f32.mrb[0].mxu0
  %v872 = vadd.f32 0.0, %v871
  %v873 = vpop.f32.mrb[0].mxu0
  %v874 = vpop.f32.mrb[0].mxu0
  %v875 = vadd.f32 0.0, %v874
  %v876 = vpop.f32.mrb[0].mxu0
  %877 = vmatprep.mubr.bf16.mxu0 0
  %878 = vmatmul.mubr.bf16.gmra.mrb[0].mxu0 %v312
  %v879 = vpop.f32.mrb[0].mxu0
  %v880 = vadd.f32 0.0, %v879
  %v881 = vpop.f32.mrb[0].mxu0
  %v882 = vpop.f32.mrb[0].mxu0
  %v883 = vadd.f32 0.0, %v882
  %v884 = vpop.f32.mrb[0].mxu0
  %885 = vmatprep.mubr.bf16.mxu0 0
  %886 = vmatmul.mubr.bf16.gmra.mrb[0].mxu0 %v315
  %v887 = vpop.f32.mrb[0].mxu0
  %v888 = vadd.f32 0.0, %v887
  %v889 = vpop.f32.mrb[0].mxu0
  %v890 = vpop.f32.mrb[0].mxu0
  %v891 = vadd.f32 0.0, %v890
  %v892 = vpop.f32.mrb[0].mxu0
  %893 = vmatprep.mubr.bf16.mxu0 0
  %894 = vmatmul.mubr.bf16.gmra.mrb[0].mxu0 %v318
  %v895 = vpop.f32.mrb[0].mxu0
  %v896 = vadd.f32 0.0, %v895
  %v897 = vpop.f32.mrb[0].mxu0
  %v898 = vpop.f32.mrb[0].mxu0
  %v899 = vadd.f32 0.0, %v898
  %v900 = vpop.f32.mrb[0].mxu0
  %901 = vmatprep.mubr.bf16.mxu0 0
  %902 = vmatmul.mubr.bf16.gmra.mrb[0].mxu0 %v321
  %v903 = vpop.f32.mrb[0].mxu0
  %v904 = vadd.f32 0.0, %v903
  %v905 = vpop.f32.mrb[0].mxu0
  %v906 = vpop.f32.mrb[0].mxu0
  %v907 = vadd.f32 0.0, %v906
  %v908 = vpop.f32.mrb[0].mxu0
  %909 = vmatprep.mubr.bf16.mxu0 0
  %910 = vmatmul.mubr.bf16.gmra.mrb[0].mxu0 %v324
  %v911 = vpop.f32.mrb[0].mxu0
  %v912 = vadd.f32 0.0, %v911
  %v913 = vpop.f32.mrb[0].mxu0
  %v914 = vpop.f32.mrb[0].mxu0
  %v915 = vadd.f32 0.0, %v914
  %v916 = vpop.f32.mrb[0].mxu0
  %917 = vmatprep.mubr.bf16.mxu0 0
  %918 = vmatmul.mubr.bf16.gmra.mrb[0].mxu0 %v327
  %v919 = vpop.f32.mrb[0].mxu0
  %v920 = vadd.f32 0.0, %v919
  %v921 = vpop.f32.mrb[0].mxu0
  %v922 = vpop.f32.mrb[0].mxu0
  %v923 = vadd.f32 0.0, %v922
  %v924 = vpop.f32.mrb[0].mxu0
  %925 = vmatprep.mubr.bf16.mxu0 0
  %926 = vmatmul.mubr.bf16.gmra.mrb[0].mxu0 %v330
  %v927 = vpop.f32.mrb[0].mxu0
  %v928 = vadd.f32 0.0, %v927
  %v929 = vpop.f32.mrb[0].mxu0
  %v930 = vpop.f32.mrb[0].mxu0
  %v931 = vadd.f32 0.0, %v930
  %v932 = vpop.f32.mrb[0].mxu0
  %933 = vmatprep.mubr.bf16.mxu0 0
  %934 = vmatmul.mubr.bf16.gmra.mrb[0].mxu0 %v333
  %v935 = vpop.f32.mrb[0].mxu0
  %v936 = vadd.f32 0.0, %v935
  %v937 = vpop.f32.mrb[0].mxu0
  %v938 = vpop.f32.mrb[0].mxu0
  %v939 = vadd.f32 0.0, %v938
  %v940 = vpop.f32.mrb[0].mxu0
  %941 = vmatprep.mubr.bf16.mxu0 0
  %942 = vmatmul.mubr.bf16.gmra.mrb[0].mxu0 %v336
  %v943 = vpop.f32.mrb[0].mxu0
  %v944 = vadd.f32 0.0, %v943
  %v945 = vpop.f32.mrb[0].mxu0
  %v946 = vpop.f32.mrb[0].mxu0
  %v947 = vadd.f32 0.0, %v946
  %v948 = vpop.f32.mrb[0].mxu0
  %949 = vmatprep.mubr.bf16.mxu0 0
  %950 = vmatmul.mubr.bf16.gmra.mrb[0].mxu0 %v339
  %v951 = vpop.f32.mrb[0].mxu0
  %v952 = vadd.f32 0.0, %v951
  %v953 = vpop.f32.mrb[0].mxu0
  %v954 = vpop.f32.mrb[0].mxu0
  %v955 = vadd.f32 0.0, %v954
  %v956 = vpop.f32.mrb[0].mxu0
  %957 = vmatprep.mubr.bf16.mxu0 0
  %958 = vmatmul.mubr.bf16.gmra.mrb[0].mxu0 %v342
  %v959 = vpop.f32.mrb[0].mxu0
  %v960 = vadd.f32 0.0, %v959
  %v961 = vpop.f32.mrb[0].mxu0
  %v962 = vpop.f32.mrb[0].mxu0
  %v963 = vadd.f32 0.0, %v962
  %v964 = vpop.f32.mrb[0].mxu0
  %965 = vmatprep.mubr.bf16.mxu0 0
  %966 = vmatmul.mubr.bf16.gmra.mrb[0].mxu0 %v345
  %v967 = vpop.f32.mrb[0].mxu0
  %v968 = vadd.f32 0.0, %v967
  %v969 = vpop.f32.mrb[0].mxu0
  %v970 = vpop.f32.mrb[0].mxu0
  %v971 = vadd.f32 0.0, %v970
  %v972 = vpop.f32.mrb[0].mxu0
  %973 = vmatprep.mubr.bf16.mxu0 0
  %974 = vmatmul.mubr.bf16.gmra.mrb[0].mxu0 %v348
  %v975 = vpop.f32.mrb[0].mxu0
  %v976 = vadd.f32 0.0, %v975
  %v977 = vpop.f32.mrb[0].mxu0
  %v978 = vpop.f32.mrb[0].mxu0
  %v979 = vadd.f32 0.0, %v978
  %v980 = vpop.f32.mrb[0].mxu0
  %981 = vmatprep.mubr.bf16.mxu0 0
  %982 = vmatmul.mubr.bf16.gmra.mrb[0].mxu0 %v351
  %v983 = vpop.f32.mrb[0].mxu0
  %v984 = vadd.f32 0.0, %v983
  %v985 = vpop.f32.mrb[0].mxu0
  %v986 = vpop.f32.mrb[0].mxu0
  %v987 = vadd.f32 0.0, %v986
  %v988 = vpop.f32.mrb[0].mxu0
  %989 = vmatprep.mubr.bf16.mxu0 0
  %990 = vmatmul.mubr.bf16.gmra.mrb[0].mxu0 %v354
  %v991 = vpop.f32.mrb[0].mxu0
  %v992 = vadd.f32 0.0, %v991
  %v993 = vpop.f32.mrb[0].mxu0
  %v994 = vpop.f32.mrb[0].mxu0
  %v995 = vadd.f32 0.0, %v994
  %v996 = vpop.f32.mrb[0].mxu0
  %997 = vdwg.mxu0
  %vm998 = vcmask 261120
  %v999 = vsel %vm998, %v391, -inf
  %v1000 = vrot.slane %v999, 4
  %v1001 = vmax.f32 %v999, %v1000
  %v1002 = vrot.slane %v1001, 2
  %v1003 = vmax.f32 %v1001, %v1002
  %v1004 = vrot.slane %v1003, 1
  %v1005 = vmax.f32 %v1003, %v1004
  %v1006 = vsel %vm998, %v395, -inf
  %v1007 = vrot.slane %v1006, 4
  %v1008 = vmax.f32 %v1006, %v1007
  %v1009 = vrot.slane %v1008, 2
  %v1010 = vmax.f32 %v1008, %v1009
  %v1011 = vrot.slane %v1010, 1
  %v1012 = vmax.f32 %v1010, %v1011
  %v1013 = vsel %vm998, %v401, -inf
  %v1014 = vrot.slane %v1013, 4
  %v1015 = vmax.f32 %v1013, %v1014
  %v1016 = vrot.slane %v1015, 2
  %v1017 = vmax.f32 %v1015, %v1016
  %v1018 = vrot.slane %v1017, 1
  %v1019 = vmax.f32 %v1017, %v1018
  %v1020 = vsel %vm998, %v405, -inf
  %v1021 = vrot.slane %v1020, 4
  %v1022 = vmax.f32 %v1020, %v1021
  %v1023 = vrot.slane %v1022, 2
  %v1024 = vmax.f32 %v1022, %v1023
  %v1025 = vrot.slane %v1024, 1
  %v1026 = vmax.f32 %v1024, %v1025
  %v1027 = vsel %vm998, %v411, -inf
  %v1028 = vrot.slane %v1027, 4
  %v1029 = vmax.f32 %v1027, %v1028
  %v1030 = vrot.slane %v1029, 2
  %v1031 = vmax.f32 %v1029, %v1030
  %v1032 = vrot.slane %v1031, 1
  %v1033 = vmax.f32 %v1031, %v1032
  %v1034 = vsel %vm998, %v415, -inf
  %v1035 = vrot.slane %v1034, 4
  %v1036 = vmax.f32 %v1034, %v1035
  %v1037 = vrot.slane %v1036, 2
  %v1038 = vmax.f32 %v1036, %v1037
  %v1039 = vrot.slane %v1038, 1
  %v1040 = vmax.f32 %v1038, %v1039
  %v1041 = vsel %vm998, %v421, -inf
  %v1042 = vrot.slane %v1041, 4
  %v1043 = vmax.f32 %v1041, %v1042
  %v1044 = vrot.slane %v1043, 2
  %v1045 = vmax.f32 %v1043, %v1044
  %v1046 = vrot.slane %v1045, 1
  %v1047 = vmax.f32 %v1045, %v1046
  %v1048 = vsel %vm998, %v425, -inf
  %v1049 = vrot.slane %v1048, 4
  %v1050 = vmax.f32 %v1048, %v1049
  %v1051 = vrot.slane %v1050, 2
  %v1052 = vmax.f32 %v1050, %v1051
  %v1053 = vrot.slane %v1052, 1
  %v1054 = vmax.f32 %v1052, %v1053
  %v1055 = vsel %vm998, %v431, -inf
  %v1056 = vrot.slane %v1055, 4
  %v1057 = vmax.f32 %v1055, %v1056
  %v1058 = vrot.slane %v1057, 2
  %v1059 = vmax.f32 %v1057, %v1058
  %v1060 = vrot.slane %v1059, 1
  %v1061 = vmax.f32 %v1059, %v1060
  %v1062 = vsel %vm998, %v435, -inf
  %v1063 = vrot.slane %v1062, 4
  %v1064 = vmax.f32 %v1062, %v1063
  %v1065 = vrot.slane %v1064, 2
  %v1066 = vmax.f32 %v1064, %v1065
  %v1067 = vrot.slane %v1066, 1
  %v1068 = vmax.f32 %v1066, %v1067
  %v1069 = vsel %vm998, %v441, -inf
  %v1070 = vrot.slane %v1069, 4
  %v1071 = vmax.f32 %v1069, %v1070
  %v1072 = vrot.slane %v1071, 2
  %v1073 = vmax.f32 %v1071, %v1072
  %v1074 = vrot.slane %v1073, 1
  %v1075 = vmax.f32 %v1073, %v1074
  %v1076 = vsel %vm998, %v445, -inf
  %v1077 = vrot.slane %v1076, 4
  %v1078 = vmax.f32 %v1076, %v1077
  %v1079 = vrot.slane %v1078, 2
  %v1080 = vmax.f32 %v1078, %v1079
  %v1081 = vrot.slane %v1080, 1
  %v1082 = vmax.f32 %v1080, %v1081
  %v1083 = vsel %vm998, %v451, -inf
  %v1084 = vrot.slane %v1083, 4
  %v1085 = vmax.f32 %v1083, %v1084
  %v1086 = vrot.slane %v1085, 2
  %v1087 = vmax.f32 %v1085, %v1086
  %v1088 = vrot.slane %v1087, 1
  %v1089 = vmax.f32 %v1087, %v1088
  %v1090 = vsel %vm998, %v455, -inf
  %v1091 = vrot.slane %v1090, 4
  %v1092 = vmax.f32 %v1090, %v1091
  %v1093 = vrot.slane %v1092, 2
  %v1094 = vmax.f32 %v1092, %v1093
  %v1095 = vrot.slane %v1094, 1
  %v1096 = vmax.f32 %v1094, %v1095
  %v1097 = vsel %vm998, %v461, -inf
  %v1098 = vrot.slane %v1097, 4
  %v1099 = vmax.f32 %v1097, %v1098
  %v1100 = vrot.slane %v1099, 2
  %v1101 = vmax.f32 %v1099, %v1100
  %v1102 = vrot.slane %v1101, 1
  %v1103 = vmax.f32 %v1101, %v1102
  %v1104 = vsel %vm998, %v465, -inf
  %v1105 = vrot.slane %v1104, 4
  %v1106 = vmax.f32 %v1104, %v1105
  %v1107 = vrot.slane %v1106, 2
  %v1108 = vmax.f32 %v1106, %v1107
  %v1109 = vrot.slane %v1108, 1
  %v1110 = vmax.f32 %v1108, %v1109
  %v1111 = vsel %vm998, %v471, -inf
  %v1112 = vrot.slane %v1111, 4
  %v1113 = vmax.f32 %v1111, %v1112
  %v1114 = vrot.slane %v1113, 2
  %v1115 = vmax.f32 %v1113, %v1114
  %v1116 = vrot.slane %v1115, 1
  %v1117 = vmax.f32 %v1115, %v1116
  %v1118 = vsel %vm998, %v475, -inf
  %v1119 = vrot.slane %v1118, 4
  %v1120 = vmax.f32 %v1118, %v1119
  %v1121 = vrot.slane %v1120, 2
  %v1122 = vmax.f32 %v1120, %v1121
  %v1123 = vrot.slane %v1122, 1
  %v1124 = vmax.f32 %v1122, %v1123
  %v1125 = vsel %vm998, %v481, -inf
  %v1126 = vrot.slane %v1125, 4
  %v1127 = vmax.f32 %v1125, %v1126
  %v1128 = vrot.slane %v1127, 2
  %v1129 = vmax.f32 %v1127, %v1128
  %v1130 = vrot.slane %v1129, 1
  %v1131 = vmax.f32 %v1129, %v1130
  %v1132 = vsel %vm998, %v485, -inf
  %v1133 = vrot.slane %v1132, 4
  %v1134 = vmax.f32 %v1132, %v1133
  %v1135 = vrot.slane %v1134, 2
  %v1136 = vmax.f32 %v1134, %v1135
  %v1137 = vrot.slane %v1136, 1
  %v1138 = vmax.f32 %v1136, %v1137
  %v1139 = vsel %vm998, %v491, -inf
  %v1140 = vrot.slane %v1139, 4
  %v1141 = vmax.f32 %v1139, %v1140
  %v1142 = vrot.slane %v1141, 2
  %v1143 = vmax.f32 %v1141, %v1142
  %v1144 = vrot.slane %v1143, 1
  %v1145 = vmax.f32 %v1143, %v1144
  %v1146 = vsel %vm998, %v495, -inf
  %v1147 = vrot.slane %v1146, 4
  %v1148 = vmax.f32 %v1146, %v1147
  %v1149 = vrot.slane %v1148, 2
  %v1150 = vmax.f32 %v1148, %v1149
  %v1151 = vrot.slane %v1150, 1
  %v1152 = vmax.f32 %v1150, %v1151
  %v1153 = vsel %vm998, %v501, -inf
  %v1154 = vrot.slane %v1153, 4
  %v1155 = vmax.f32 %v1153, %v1154
  %v1156 = vrot.slane %v1155, 2
  %v1157 = vmax.f32 %v1155, %v1156
  %v1158 = vrot.slane %v1157, 1
  %v1159 = vmax.f32 %v1157, %v1158
  %v1160 = vsel %vm998, %v505, -inf
  %v1161 = vrot.slane %v1160, 4
  %v1162 = vmax.f32 %v1160, %v1161
  %v1163 = vrot.slane %v1162, 2
  %v1164 = vmax.f32 %v1162, %v1163
  %v1165 = vrot.slane %v1164, 1
  %v1166 = vmax.f32 %v1164, %v1165
  %v1167 = vsel %vm998, %v511, -inf
  %v1168 = vrot.slane %v1167, 4
  %v1169 = vmax.f32 %v1167, %v1168
  %v1170 = vrot.slane %v1169, 2
  %v1171 = vmax.f32 %v1169, %v1170
  %v1172 = vrot.slane %v1171, 1
  %v1173 = vmax.f32 %v1171, %v1172
  %v1174 = vsel %vm998, %v515, -inf
  %v1175 = vrot.slane %v1174, 4
  %v1176 = vmax.f32 %v1174, %v1175
  %v1177 = vrot.slane %v1176, 2
  %v1178 = vmax.f32 %v1176, %v1177
  %v1179 = vrot.slane %v1178, 1
  %v1180 = vmax.f32 %v1178, %v1179
  %v1181 = vsel %vm998, %v521, -inf
  %v1182 = vrot.slane %v1181, 4
  %v1183 = vmax.f32 %v1181, %v1182
  %v1184 = vrot.slane %v1183, 2
  %v1185 = vmax.f32 %v1183, %v1184
  %v1186 = vrot.slane %v1185, 1
  %v1187 = vmax.f32 %v1185, %v1186
  %v1188 = vsel %vm998, %v525, -inf
  %v1189 = vrot.slane %v1188, 4
  %v1190 = vmax.f32 %v1188, %v1189
  %v1191 = vrot.slane %v1190, 2
  %v1192 = vmax.f32 %v1190, %v1191
  %v1193 = vrot.slane %v1192, 1
  %v1194 = vmax.f32 %v1192, %v1193
  %v1195 = vsel %vm998, %v531, -inf
  %v1196 = vrot.slane %v1195, 4
  %v1197 = vmax.f32 %v1195, %v1196
  %v1198 = vrot.slane %v1197, 2
  %v1199 = vmax.f32 %v1197, %v1198
  %v1200 = vrot.slane %v1199, 1
  %v1201 = vmax.f32 %v1199, %v1200
  %v1202 = vsel %vm998, %v535, -inf
  %v1203 = vrot.slane %v1202, 4
  %v1204 = vmax.f32 %v1202, %v1203
  %v1205 = vrot.slane %v1204, 2
  %v1206 = vmax.f32 %v1204, %v1205
  %v1207 = vrot.slane %v1206, 1
  %v1208 = vmax.f32 %v1206, %v1207
  %v1209 = vsel %vm998, %v541, -inf
  %v1210 = vrot.slane %v1209, 4
  %v1211 = vmax.f32 %v1209, %v1210
  %v1212 = vrot.slane %v1211, 2
  %v1213 = vmax.f32 %v1211, %v1212
  %v1214 = vrot.slane %v1213, 1
  %v1215 = vmax.f32 %v1213, %v1214
  %v1216 = vsel %vm998, %v545, -inf
  %v1217 = vrot.slane %v1216, 4
  %v1218 = vmax.f32 %v1216, %v1217
  %v1219 = vrot.slane %v1218, 2
  %v1220 = vmax.f32 %v1218, %v1219
  %v1221 = vrot.slane %v1220, 1
  %v1222 = vmax.f32 %v1220, %v1221
  %v1223 = vsel %vm998, %v551, -inf
  %v1224 = vrot.slane %v1223, 4
  %v1225 = vmax.f32 %v1223, %v1224
  %v1226 = vrot.slane %v1225, 2
  %v1227 = vmax.f32 %v1225, %v1226
  %v1228 = vrot.slane %v1227, 1
  %v1229 = vmax.f32 %v1227, %v1228
  %v1230 = vsel %vm998, %v555, -inf
  %v1231 = vrot.slane %v1230, 4
  %v1232 = vmax.f32 %v1230, %v1231
  %v1233 = vrot.slane %v1232, 2
  %v1234 = vmax.f32 %v1232, %v1233
  %v1235 = vrot.slane %v1234, 1
  %v1236 = vmax.f32 %v1234, %v1235
  %v1237 = vsel %vm998, %v561, -inf
  %v1238 = vrot.slane %v1237, 4
  %v1239 = vmax.f32 %v1237, %v1238
  %v1240 = vrot.slane %v1239, 2
  %v1241 = vmax.f32 %v1239, %v1240
  %v1242 = vrot.slane %v1241, 1
  %v1243 = vmax.f32 %v1241, %v1242
  %v1244 = vsel %vm998, %v565, -inf
  %v1245 = vrot.slane %v1244, 4
  %v1246 = vmax.f32 %v1244, %v1245
  %v1247 = vrot.slane %v1246, 2
  %v1248 = vmax.f32 %v1246, %v1247
  %v1249 = vrot.slane %v1248, 1
  %v1250 = vmax.f32 %v1248, %v1249
  %v1251 = vsel %vm998, %v571, -inf
  %v1252 = vrot.slane %v1251, 4
  %v1253 = vmax.f32 %v1251, %v1252
  %v1254 = vrot.slane %v1253, 2
  %v1255 = vmax.f32 %v1253, %v1254
  %v1256 = vrot.slane %v1255, 1
  %v1257 = vmax.f32 %v1255, %v1256
  %v1258 = vsel %vm998, %v575, -inf
  %v1259 = vrot.slane %v1258, 4
  %v1260 = vmax.f32 %v1258, %v1259
  %v1261 = vrot.slane %v1260, 2
  %v1262 = vmax.f32 %v1260, %v1261
  %v1263 = vrot.slane %v1262, 1
  %v1264 = vmax.f32 %v1262, %v1263
  %v1265 = vsel %vm998, %v581, -inf
  %v1266 = vrot.slane %v1265, 4
  %v1267 = vmax.f32 %v1265, %v1266
  %v1268 = vrot.slane %v1267, 2
  %v1269 = vmax.f32 %v1267, %v1268
  %v1270 = vrot.slane %v1269, 1
  %v1271 = vmax.f32 %v1269, %v1270
  %v1272 = vsel %vm998, %v585, -inf
  %v1273 = vrot.slane %v1272, 4
  %v1274 = vmax.f32 %v1272, %v1273
  %v1275 = vrot.slane %v1274, 2
  %v1276 = vmax.f32 %v1274, %v1275
  %v1277 = vrot.slane %v1276, 1
  %v1278 = vmax.f32 %v1276, %v1277
  %v1279 = vsel %vm998, %v591, -inf
  %v1280 = vrot.slane %v1279, 4
  %v1281 = vmax.f32 %v1279, %v1280
  %v1282 = vrot.slane %v1281, 2
  %v1283 = vmax.f32 %v1281, %v1282
  %v1284 = vrot.slane %v1283, 1
  %v1285 = vmax.f32 %v1283, %v1284
  %v1286 = vsel %vm998, %v595, -inf
  %v1287 = vrot.slane %v1286, 4
  %v1288 = vmax.f32 %v1286, %v1287
  %v1289 = vrot.slane %v1288, 2
  %v1290 = vmax.f32 %v1288, %v1289
  %v1291 = vrot.slane %v1290, 1
  %v1292 = vmax.f32 %v1290, %v1291
  %v1293 = vsel %vm998, %v601, -inf
  %v1294 = vrot.slane %v1293, 4
  %v1295 = vmax.f32 %v1293, %v1294
  %v1296 = vrot.slane %v1295, 2
  %v1297 = vmax.f32 %v1295, %v1296
  %v1298 = vrot.slane %v1297, 1
  %v1299 = vmax.f32 %v1297, %v1298
  %v1300 = vsel %vm998, %v605, -inf
  %v1301 = vrot.slane %v1300, 4
  %v1302 = vmax.f32 %v1300, %v1301
  %v1303 = vrot.slane %v1302, 2
  %v1304 = vmax.f32 %v1302, %v1303
  %v1305 = vrot.slane %v1304, 1
  %v1306 = vmax.f32 %v1304, %v1305
  %v1307 = vsel %vm998, %v611, -inf
  %v1308 = vrot.slane %v1307, 4
  %v1309 = vmax.f32 %v1307, %v1308
  %v1310 = vrot.slane %v1309, 2
  %v1311 = vmax.f32 %v1309, %v1310
  %v1312 = vrot.slane %v1311, 1
  %v1313 = vmax.f32 %v1311, %v1312
  %v1314 = vsel %vm998, %v615, -inf
  %v1315 = vrot.slane %v1314, 4
  %v1316 = vmax.f32 %v1314, %v1315
  %v1317 = vrot.slane %v1316, 2
  %v1318 = vmax.f32 %v1316, %v1317
  %v1319 = vrot.slane %v1318, 1
  %v1320 = vmax.f32 %v1318, %v1319
  %v1321 = vsel %vm998, %v621, -inf
  %v1322 = vrot.slane %v1321, 4
  %v1323 = vmax.f32 %v1321, %v1322
  %v1324 = vrot.slane %v1323, 2
  %v1325 = vmax.f32 %v1323, %v1324
  %v1326 = vrot.slane %v1325, 1
  %v1327 = vmax.f32 %v1325, %v1326
  %v1328 = vsel %vm998, %v625, -inf
  %v1329 = vrot.slane %v1328, 4
  %v1330 = vmax.f32 %v1328, %v1329
  %v1331 = vrot.slane %v1330, 2
  %v1332 = vmax.f32 %v1330, %v1331
  %v1333 = vrot.slane %v1332, 1
  %v1334 = vmax.f32 %v1332, %v1333
  %v1335 = vsel %vm998, %v631, -inf
  %v1336 = vrot.slane %v1335, 4
  %v1337 = vmax.f32 %v1335, %v1336
  %v1338 = vrot.slane %v1337, 2
  %v1339 = vmax.f32 %v1337, %v1338
  %v1340 = vrot.slane %v1339, 1
  %v1341 = vmax.f32 %v1339, %v1340
  %v1342 = vsel %vm998, %v635, -inf
  %v1343 = vrot.slane %v1342, 4
  %v1344 = vmax.f32 %v1342, %v1343
  %v1345 = vrot.slane %v1344, 2
  %v1346 = vmax.f32 %v1344, %v1345
  %v1347 = vrot.slane %v1346, 1
  %v1348 = vmax.f32 %v1346, %v1347
  %v1349 = vsel %vm998, %v641, -inf
  %v1350 = vrot.slane %v1349, 4
  %v1351 = vmax.f32 %v1349, %v1350
  %v1352 = vrot.slane %v1351, 2
  %v1353 = vmax.f32 %v1351, %v1352
  %v1354 = vrot.slane %v1353, 1
  %v1355 = vmax.f32 %v1353, %v1354
  %v1356 = vsel %vm998, %v645, -inf
  %v1357 = vrot.slane %v1356, 4
  %v1358 = vmax.f32 %v1356, %v1357
  %v1359 = vrot.slane %v1358, 2
  %v1360 = vmax.f32 %v1358, %v1359
  %v1361 = vrot.slane %v1360, 1
  %v1362 = vmax.f32 %v1360, %v1361
  %v1363 = vsel %vm998, %v651, -inf
  %v1364 = vrot.slane %v1363, 4
  %v1365 = vmax.f32 %v1363, %v1364
  %v1366 = vrot.slane %v1365, 2
  %v1367 = vmax.f32 %v1365, %v1366
  %v1368 = vrot.slane %v1367, 1
  %v1369 = vmax.f32 %v1367, %v1368
  %v1370 = vsel %vm998, %v655, -inf
  %v1371 = vrot.slane %v1370, 4
  %v1372 = vmax.f32 %v1370, %v1371
  %v1373 = vrot.slane %v1372, 2
  %v1374 = vmax.f32 %v1372, %v1373
  %v1375 = vrot.slane %v1374, 1
  %v1376 = vmax.f32 %v1374, %v1375
  %v1377 = vsel %vm998, %v661, -inf
  %v1378 = vrot.slane %v1377, 4
  %v1379 = vmax.f32 %v1377, %v1378
  %v1380 = vrot.slane %v1379, 2
  %v1381 = vmax.f32 %v1379, %v1380
  %v1382 = vrot.slane %v1381, 1
  %v1383 = vmax.f32 %v1381, %v1382
  %v1384 = vsel %vm998, %v665, -inf
  %v1385 = vrot.slane %v1384, 4
  %v1386 = vmax.f32 %v1384, %v1385
  %v1387 = vrot.slane %v1386, 2
  %v1388 = vmax.f32 %v1386, %v1387
  %v1389 = vrot.slane %v1388, 1
  %v1390 = vmax.f32 %v1388, %v1389
  %v1391 = vsel %vm998, %v671, -inf
  %v1392 = vrot.slane %v1391, 4
  %v1393 = vmax.f32 %v1391, %v1392
  %v1394 = vrot.slane %v1393, 2
  %v1395 = vmax.f32 %v1393, %v1394
  %v1396 = vrot.slane %v1395, 1
  %v1397 = vmax.f32 %v1395, %v1396
  %v1398 = vsel %vm998, %v675, -inf
  %v1399 = vrot.slane %v1398, 4
  %v1400 = vmax.f32 %v1398, %v1399
  %v1401 = vrot.slane %v1400, 2
  %v1402 = vmax.f32 %v1400, %v1401
  %v1403 = vrot.slane %v1402, 1
  %v1404 = vmax.f32 %v1402, %v1403
  %v1405 = vsel %vm998, %v681, -inf
  %v1406 = vrot.slane %v1405, 4
  %v1407 = vmax.f32 %v1405, %v1406
  %v1408 = vrot.slane %v1407, 2
  %v1409 = vmax.f32 %v1407, %v1408
  %v1410 = vrot.slane %v1409, 1
  %v1411 = vmax.f32 %v1409, %v1410
  %v1412 = vsel %vm998, %v685, -inf
  %v1413 = vrot.slane %v1412, 4
  %v1414 = vmax.f32 %v1412, %v1413
  %v1415 = vrot.slane %v1414, 2
  %v1416 = vmax.f32 %v1414, %v1415
  %v1417 = vrot.slane %v1416, 1
  %v1418 = vmax.f32 %v1416, %v1417
  %v1419 = vsel %vm998, %v691, -inf
  %v1420 = vrot.slane %v1419, 4
  %v1421 = vmax.f32 %v1419, %v1420
  %v1422 = vrot.slane %v1421, 2
  %v1423 = vmax.f32 %v1421, %v1422
  %v1424 = vrot.slane %v1423, 1
  %v1425 = vmax.f32 %v1423, %v1424
  %v1426 = vsel %vm998, %v695, -inf
  %v1427 = vrot.slane %v1426, 4
  %v1428 = vmax.f32 %v1426, %v1427
  %v1429 = vrot.slane %v1428, 2
  %v1430 = vmax.f32 %v1428, %v1429
  %v1431 = vrot.slane %v1430, 1
  %v1432 = vmax.f32 %v1430, %v1431
  %v1433 = vsel %vm998, %v701, -inf
  %v1434 = vrot.slane %v1433, 4
  %v1435 = vmax.f32 %v1433, %v1434
  %v1436 = vrot.slane %v1435, 2
  %v1437 = vmax.f32 %v1435, %v1436
  %v1438 = vrot.slane %v1437, 1
  %v1439 = vmax.f32 %v1437, %v1438
  %v1440 = vsel %vm998, %v705, -inf
  %v1441 = vrot.slane %v1440, 4
  %v1442 = vmax.f32 %v1440, %v1441
  %v1443 = vrot.slane %v1442, 2
  %v1444 = vmax.f32 %v1442, %v1443
  %v1445 = vrot.slane %v1444, 1
  %v1446 = vmax.f32 %v1444, %v1445
  %v1447 = vld [vmem:[%s2] sm:$0x1]
  %v1449 = vlaneseq
  %v1450 = vshrl.u32 %v1449, 7
  %v1451 = vsub.s32 0, %v1450
  %v1452 = vrot.slane %v1447, %v1451
  %v1454 = vadd.f32 %v1005, %v1452
  %v1455 = vadd.f32 %v1012, %v1452
  %v1456 = vadd.f32 %v1019, %v1452
  %v1457 = vadd.f32 %v1026, %v1452
  %v1458 = vadd.f32 %v1033, %v1452
  %v1459 = vadd.f32 %v1040, %v1452
  %v1460 = vadd.f32 %v1047, %v1452
  %v1461 = vadd.f32 %v1054, %v1452
  %v1462 = vadd.f32 %v1061, %v1452
  %v1463 = vadd.f32 %v1068, %v1452
  %v1464 = vadd.f32 %v1075, %v1452
  %v1465 = vadd.f32 %v1082, %v1452
  %v1466 = vadd.f32 %v1089, %v1452
  %v1467 = vadd.f32 %v1096, %v1452
  %v1468 = vadd.f32 %v1103, %v1452
  %v1469 = vadd.f32 %v1110, %v1452
  %v1470 = vadd.f32 %v1117, %v1452
  %v1471 = vadd.f32 %v1124, %v1452
  %v1472 = vadd.f32 %v1131, %v1452
  %v1473 = vadd.f32 %v1138, %v1452
  %v1474 = vadd.f32 %v1145, %v1452
  %v1475 = vadd.f32 %v1152, %v1452
  %v1476 = vadd.f32 %v1159, %v1452
  %v1477 = vadd.f32 %v1166, %v1452
  %v1478 = vadd.f32 %v1173, %v1452
  %v1479 = vadd.f32 %v1180, %v1452
  %v1480 = vadd.f32 %v1187, %v1452
  %v1481 = vadd.f32 %v1194, %v1452
  %v1482 = vadd.f32 %v1201, %v1452
  %v1483 = vadd.f32 %v1208, %v1452
  %v1484 = vadd.f32 %v1215, %v1452
  %v1485 = vadd.f32 %v1222, %v1452
  %v1486 = vadd.f32 %v1229, %v1452
  %v1487 = vadd.f32 %v1236, %v1452
  %v1488 = vadd.f32 %v1243, %v1452
  %v1489 = vadd.f32 %v1250, %v1452
  %v1490 = vadd.f32 %v1257, %v1452
  %v1491 = vadd.f32 %v1264, %v1452
  %v1492 = vadd.f32 %v1271, %v1452
  %v1493 = vadd.f32 %v1278, %v1452
  %v1494 = vadd.f32 %v1285, %v1452
  %v1495 = vadd.f32 %v1292, %v1452
  %v1496 = vadd.f32 %v1299, %v1452
  %v1497 = vadd.f32 %v1306, %v1452
  %v1498 = vadd.f32 %v1313, %v1452
  %v1499 = vadd.f32 %v1320, %v1452
  %v1500 = vadd.f32 %v1327, %v1452
  %v1501 = vadd.f32 %v1334, %v1452
  %v1502 = vadd.f32 %v1341, %v1452
  %v1503 = vadd.f32 %v1348, %v1452
  %v1504 = vadd.f32 %v1355, %v1452
  %v1505 = vadd.f32 %v1362, %v1452
  %v1506 = vadd.f32 %v1369, %v1452
  %v1507 = vadd.f32 %v1376, %v1452
  %v1508 = vadd.f32 %v1383, %v1452
  %v1509 = vadd.f32 %v1390, %v1452
  %v1510 = vadd.f32 %v1397, %v1452
  %v1511 = vadd.f32 %v1404, %v1452
  %v1512 = vadd.f32 %v1411, %v1452
  %v1513 = vadd.f32 %v1418, %v1452
  %v1514 = vadd.f32 %v1425, %v1452
  %v1515 = vadd.f32 %v1432, %v1452
  %v1516 = vadd.f32 %v1439, %v1452
  %v1517 = vadd.f32 %v1446, %v1452
  %v1518 = vmax.f32 %v1454, 0.0
  %v1519 = vmax.f32 %v1455, 0.0
  %v1520 = vmax.f32 %v1456, 0.0
  %v1521 = vmax.f32 %v1457, 0.0
  %v1522 = vmax.f32 %v1458, 0.0
  %v1523 = vmax.f32 %v1459, 0.0
  %v1524 = vmax.f32 %v1460, 0.0
  %v1525 = vmax.f32 %v1461, 0.0
  %v1526 = vmax.f32 %v1462, 0.0
  %v1527 = vmax.f32 %v1463, 0.0
  %v1528 = vmax.f32 %v1464, 0.0
  %v1529 = vmax.f32 %v1465, 0.0
  %v1530 = vmax.f32 %v1466, 0.0
  %v1531 = vmax.f32 %v1467, 0.0
  %v1532 = vmax.f32 %v1468, 0.0
  %v1533 = vmax.f32 %v1469, 0.0
  %v1534 = vmax.f32 %v1470, 0.0
  %v1535 = vmax.f32 %v1471, 0.0
  %v1536 = vmax.f32 %v1472, 0.0
  %v1537 = vmax.f32 %v1473, 0.0
  %v1538 = vmax.f32 %v1474, 0.0
  %v1539 = vmax.f32 %v1475, 0.0
  %v1540 = vmax.f32 %v1476, 0.0
  %v1541 = vmax.f32 %v1477, 0.0
  %v1542 = vmax.f32 %v1478, 0.0
  %v1543 = vmax.f32 %v1479, 0.0
  %v1544 = vmax.f32 %v1480, 0.0
  %v1545 = vmax.f32 %v1481, 0.0
  %v1546 = vmax.f32 %v1482, 0.0
  %v1547 = vmax.f32 %v1483, 0.0
  %v1548 = vmax.f32 %v1484, 0.0
  %v1549 = vmax.f32 %v1485, 0.0
  %v1550 = vmax.f32 %v1486, 0.0
  %v1551 = vmax.f32 %v1487, 0.0
  %v1552 = vmax.f32 %v1488, 0.0
  %v1553 = vmax.f32 %v1489, 0.0
  %v1554 = vmax.f32 %v1490, 0.0
  %v1555 = vmax.f32 %v1491, 0.0
  %v1556 = vmax.f32 %v1492, 0.0
  %v1557 = vmax.f32 %v1493, 0.0
  %v1558 = vmax.f32 %v1494, 0.0
  %v1559 = vmax.f32 %v1495, 0.0
  %v1560 = vmax.f32 %v1496, 0.0
  %v1561 = vmax.f32 %v1497, 0.0
  %v1562 = vmax.f32 %v1498, 0.0
  %v1563 = vmax.f32 %v1499, 0.0
  %v1564 = vmax.f32 %v1500, 0.0
  %v1565 = vmax.f32 %v1501, 0.0
  %v1566 = vmax.f32 %v1502, 0.0
  %v1567 = vmax.f32 %v1503, 0.0
  %v1568 = vmax.f32 %v1504, 0.0
  %v1569 = vmax.f32 %v1505, 0.0
  %v1570 = vmax.f32 %v1506, 0.0
  %v1571 = vmax.f32 %v1507, 0.0
  %v1572 = vmax.f32 %v1508, 0.0
  %v1573 = vmax.f32 %v1509, 0.0
  %v1574 = vmax.f32 %v1510, 0.0
  %v1575 = vmax.f32 %v1511, 0.0
  %v1576 = vmax.f32 %v1512, 0.0
  %v1577 = vmax.f32 %v1513, 0.0
  %v1578 = vmax.f32 %v1514, 0.0
  %v1579 = vmax.f32 %v1515, 0.0
  %v1580 = vmax.f32 %v1516, 0.0
  %v1581 = vmax.f32 %v1517, 0.0
  %v1646 = vrot.slane %v391, 1
  %v1647 = vrot.slane %v395, 1
  %v1648 = vrot.slane %v401, 1
  %v1649 = vrot.slane %v405, 1
  %v1650 = vrot.slane %v411, 1
  %v1651 = vrot.slane %v415, 1
  %v1652 = vrot.slane %v421, 1
  %v1653 = vrot.slane %v425, 1
  %v1654 = vrot.slane %v431, 1
  %v1655 = vrot.slane %v435, 1
  %v1656 = vrot.slane %v441, 1
  %v1657 = vrot.slane %v445, 1
  %v1658 = vrot.slane %v451, 1
  %v1659 = vrot.slane %v455, 1
  %v1660 = vrot.slane %v461, 1
  %v1661 = vrot.slane %v465, 1
  %v1662 = vrot.slane %v471, 1
  %v1663 = vrot.slane %v475, 1
  %v1664 = vrot.slane %v481, 1
  %v1665 = vrot.slane %v485, 1
  %v1666 = vrot.slane %v491, 1
  %v1667 = vrot.slane %v495, 1
  %v1668 = vrot.slane %v501, 1
  %v1669 = vrot.slane %v505, 1
  %v1670 = vrot.slane %v511, 1
  %v1671 = vrot.slane %v515, 1
  %v1672 = vrot.slane %v521, 1
  %v1673 = vrot.slane %v525, 1
  %v1674 = vrot.slane %v531, 1
  %v1675 = vrot.slane %v535, 1
  %v1676 = vrot.slane %v541, 1
  %v1677 = vrot.slane %v545, 1
  %v1678 = vrot.slane %v551, 1
  %v1679 = vrot.slane %v555, 1
  %v1680 = vrot.slane %v561, 1
  %v1681 = vrot.slane %v565, 1
  %v1682 = vrot.slane %v571, 1
  %v1683 = vrot.slane %v575, 1
  %v1684 = vrot.slane %v581, 1
  %v1685 = vrot.slane %v585, 1
  %v1686 = vrot.slane %v591, 1
  %v1687 = vrot.slane %v595, 1
  %v1688 = vrot.slane %v601, 1
  %v1689 = vrot.slane %v605, 1
  %v1690 = vrot.slane %v611, 1
  %v1691 = vrot.slane %v615, 1
  %v1692 = vrot.slane %v621, 1
  %v1693 = vrot.slane %v625, 1
  %v1694 = vrot.slane %v631, 1
  %v1695 = vrot.slane %v635, 1
  %v1696 = vrot.slane %v641, 1
  %v1697 = vrot.slane %v645, 1
  %v1698 = vrot.slane %v651, 1
  %v1699 = vrot.slane %v655, 1
  %v1700 = vrot.slane %v661, 1
  %v1701 = vrot.slane %v665, 1
  %v1702 = vrot.slane %v671, 1
  %v1703 = vrot.slane %v675, 1
  %v1704 = vrot.slane %v681, 1
  %v1705 = vrot.slane %v685, 1
  %v1706 = vrot.slane %v691, 1
  %v1707 = vrot.slane %v695, 1
  %v1708 = vrot.slane %v701, 1
  %v1709 = vrot.slane %v705, 1
  %1710 = vrot.lane.b32.xlu0 %v1646, 96
  %v1711 = vpop.permute.xlu0 %1710
  %1712 = vrot.lane.b32.xlu0 %v1647, 96
  %v1713 = vpop.permute.xlu0 %1712
  %1714 = vrot.lane.b32.xlu0 %v1648, 96
  %v1715 = vpop.permute.xlu0 %1714
  %1716 = vrot.lane.b32.xlu0 %v1649, 96
  %v1717 = vpop.permute.xlu0 %1716
  %1718 = vrot.lane.b32.xlu0 %v1650, 96
  %v1719 = vpop.permute.xlu0 %1718
  %1720 = vrot.lane.b32.xlu0 %v1651, 96
  %v1721 = vpop.permute.xlu0 %1720
  %1722 = vrot.lane.b32.xlu0 %v1652, 96
  %v1723 = vpop.permute.xlu0 %1722
  %1724 = vrot.lane.b32.xlu0 %v1653, 96
  %v1725 = vpop.permute.xlu0 %1724
  %1726 = vrot.lane.b32.xlu0 %v1654, 96
  %v1727 = vpop.permute.xlu0 %1726
  %1728 = vrot.lane.b32.xlu0 %v1655, 96
  %v1729 = vpop.permute.xlu0 %1728
  %1730 = vrot.lane.b32.xlu0 %v1656, 96
  %v1731 = vpop.permute.xlu0 %1730
  %1732 = vrot.lane.b32.xlu0 %v1657, 96
  %v1733 = vpop.permute.xlu0 %1732
  %1734 = vrot.lane.b32.xlu0 %v1658, 96
  %v1735 = vpop.permute.xlu0 %1734
  %1736 = vrot.lane.b32.xlu0 %v1659, 96
  %v1737 = vpop.permute.xlu0 %1736
  %1738 = vrot.lane.b32.xlu0 %v1660, 96
  %v1739 = vpop.permute.xlu0 %1738
  %1740 = vrot.lane.b32.xlu0 %v1661, 96
  %v1741 = vpop.permute.xlu0 %1740
  %1742 = vrot.lane.b32.xlu0 %v1662, 96
  %v1743 = vpop.permute.xlu0 %1742
  %1744 = vrot.lane.b32.xlu0 %v1663, 96
  %v1745 = vpop.permute.xlu0 %1744
  %1746 = vrot.lane.b32.xlu0 %v1664, 96
  %v1747 = vpop.permute.xlu0 %1746
  %1748 = vrot.lane.b32.xlu0 %v1665, 96
  %v1749 = vpop.permute.xlu0 %1748
  %1750 = vrot.lane.b32.xlu0 %v1666, 96
  %v1751 = vpop.permute.xlu0 %1750
  %1752 = vrot.lane.b32.xlu0 %v1667, 96
  %v1753 = vpop.permute.xlu0 %1752
  %1754 = vrot.lane.b32.xlu0 %v1668, 96
  %v1755 = vpop.permute.xlu0 %1754
  %1756 = vrot.lane.b32.xlu0 %v1669, 96
  %v1757 = vpop.permute.xlu0 %1756
  %1758 = vrot.lane.b32.xlu0 %v1670, 96
  %v1759 = vpop.permute.xlu0 %1758
  %1760 = vrot.lane.b32.xlu0 %v1671, 96
  %v1761 = vpop.permute.xlu0 %1760
  %1762 = vrot.lane.b32.xlu0 %v1672, 96
  %v1763 = vpop.permute.xlu0 %1762
  %1764 = vrot.lane.b32.xlu0 %v1673, 96
  %v1765 = vpop.permute.xlu0 %1764
  %1766 = vrot.lane.b32.xlu0 %v1674, 96
  %v1767 = vpop.permute.xlu0 %1766
  %1768 = vrot.lane.b32.xlu0 %v1675, 96
  %v1769 = vpop.permute.xlu0 %1768
  %1770 = vrot.lane.b32.xlu0 %v1676, 96
  %v1771 = vpop.permute.xlu0 %1770
  %1772 = vrot.lane.b32.xlu0 %v1677, 96
  %v1773 = vpop.permute.xlu0 %1772
  %1774 = vrot.lane.b32.xlu0 %v1678, 96
  %v1775 = vpop.permute.xlu0 %1774
  %1776 = vrot.lane.b32.xlu0 %v1679, 96
  %v1777 = vpop.permute.xlu0 %1776
  %1778 = vrot.lane.b32.xlu0 %v1680, 96
  %v1779 = vpop.permute.xlu0 %1778
  %1780 = vrot.lane.b32.xlu0 %v1681, 96
  %v1781 = vpop.permute.xlu0 %1780
  %1782 = vrot.lane.b32.xlu0 %v1682, 96
  %v1783 = vpop.permute.xlu0 %1782
  %1784 = vrot.lane.b32.xlu0 %v1683, 96
  %v1785 = vpop.permute.xlu0 %1784
  %1786 = vrot.lane.b32.xlu0 %v1684, 96
  %v1787 = vpop.permute.xlu0 %1786
  %1788 = vrot.lane.b32.xlu0 %v1685, 96
  %v1789 = vpop.permute.xlu0 %1788
  %1790 = vrot.lane.b32.xlu0 %v1686, 96
  %v1791 = vpop.permute.xlu0 %1790
  %1792 = vrot.lane.b32.xlu0 %v1687, 96
  %v1793 = vpop.permute.xlu0 %1792
  %1794 = vrot.lane.b32.xlu0 %v1688, 96
  %v1795 = vpop.permute.xlu0 %1794
  %1796 = vrot.lane.b32.xlu0 %v1689, 96
  %v1797 = vpop.permute.xlu0 %1796
  %1798 = vrot.lane.b32.xlu0 %v1690, 96
  %v1799 = vpop.permute.xlu0 %1798
  %1800 = vrot.lane.b32.xlu0 %v1691, 96
  %v1801 = vpop.permute.xlu0 %1800
  %1802 = vrot.lane.b32.xlu0 %v1692, 96
  %v1803 = vpop.permute.xlu0 %1802
  %1804 = vrot.lane.b32.xlu0 %v1693, 96
  %v1805 = vpop.permute.xlu0 %1804
  %1806 = vrot.lane.b32.xlu0 %v1694, 96
  %v1807 = vpop.permute.xlu0 %1806
  %1808 = vrot.lane.b32.xlu0 %v1695, 96
  %v1809 = vpop.permute.xlu0 %1808
  %1810 = vrot.lane.b32.xlu0 %v1696, 96
  %v1811 = vpop.permute.xlu0 %1810
  %1812 = vrot.lane.b32.xlu0 %v1697, 96
  %v1813 = vpop.permute.xlu0 %1812
  %1814 = vrot.lane.b32.xlu0 %v1698, 96
  %v1815 = vpop.permute.xlu0 %1814
  %1816 = vrot.lane.b32.xlu0 %v1699, 96
  %v1817 = vpop.permute.xlu0 %1816
  %1818 = vrot.lane.b32.xlu0 %v1700, 96
  %v1819 = vpop.permute.xlu0 %1818
  %1820 = vrot.lane.b32.xlu0 %v1701, 96
  %v1821 = vpop.permute.xlu0 %1820
  %1822 = vrot.lane.b32.xlu0 %v1702, 96
  %v1823 = vpop.permute.xlu0 %1822
  %1824 = vrot.lane.b32.xlu0 %v1703, 96
  %v1825 = vpop.permute.xlu0 %1824
  %1826 = vrot.lane.b32.xlu0 %v1704, 96
  %v1827 = vpop.permute.xlu0 %1826
  %1828 = vrot.lane.b32.xlu0 %v1705, 96
  %v1829 = vpop.permute.xlu0 %1828
  %1830 = vrot.lane.b32.xlu0 %v1706, 96
  %v1831 = vpop.permute.xlu0 %1830
  %1832 = vrot.lane.b32.xlu0 %v1707, 96
  %v1833 = vpop.permute.xlu0 %1832
  %1834 = vrot.lane.b32.xlu0 %v1708, 96
  %v1835 = vpop.permute.xlu0 %1834
  %1836 = vrot.lane.b32.xlu0 %v1709, 96
  %v1837 = vpop.permute.xlu0 %1836
  %v1902 = vadd.f32 %v391, %v1711
  %v1903 = vadd.f32 %v395, %v1713
  %v1904 = vadd.f32 %v401, %v1715
  %v1905 = vadd.f32 %v405, %v1717
  %v1906 = vadd.f32 %v411, %v1719
  %v1907 = vadd.f32 %v415, %v1721
  %v1908 = vadd.f32 %v421, %v1723
  %v1909 = vadd.f32 %v425, %v1725
  %v1910 = vadd.f32 %v431, %v1727
  %v1911 = vadd.f32 %v435, %v1729
  %v1912 = vadd.f32 %v441, %v1731
  %v1913 = vadd.f32 %v445, %v1733
  %v1914 = vadd.f32 %v451, %v1735
  %v1915 = vadd.f32 %v455, %v1737
  %v1916 = vadd.f32 %v461, %v1739
  %v1917 = vadd.f32 %v465, %v1741
  %v1918 = vadd.f32 %v471, %v1743
  %v1919 = vadd.f32 %v475, %v1745
  %v1920 = vadd.f32 %v481, %v1747
  %v1921 = vadd.f32 %v485, %v1749
  %v1922 = vadd.f32 %v491, %v1751
  %v1923 = vadd.f32 %v495, %v1753
  %v1924 = vadd.f32 %v501, %v1755
  %v1925 = vadd.f32 %v505, %v1757
  %v1926 = vadd.f32 %v511, %v1759
  %v1927 = vadd.f32 %v515, %v1761
  %v1928 = vadd.f32 %v521, %v1763
  %v1929 = vadd.f32 %v525, %v1765
  %v1930 = vadd.f32 %v531, %v1767
  %v1931 = vadd.f32 %v535, %v1769
  %v1932 = vadd.f32 %v541, %v1771
  %v1933 = vadd.f32 %v545, %v1773
  %v1934 = vadd.f32 %v551, %v1775
  %v1935 = vadd.f32 %v555, %v1777
  %v1936 = vadd.f32 %v561, %v1779
  %v1937 = vadd.f32 %v565, %v1781
  %v1938 = vadd.f32 %v571, %v1783
  %v1939 = vadd.f32 %v575, %v1785
  %v1940 = vadd.f32 %v581, %v1787
  %v1941 = vadd.f32 %v585, %v1789
  %v1942 = vadd.f32 %v591, %v1791
  %v1943 = vadd.f32 %v595, %v1793
  %v1944 = vadd.f32 %v601, %v1795
  %v1945 = vadd.f32 %v605, %v1797
  %v1946 = vadd.f32 %v611, %v1799
  %v1947 = vadd.f32 %v615, %v1801
  %v1948 = vadd.f32 %v621, %v1803
  %v1949 = vadd.f32 %v625, %v1805
  %v1950 = vadd.f32 %v631, %v1807
  %v1951 = vadd.f32 %v635, %v1809
  %v1952 = vadd.f32 %v641, %v1811
  %v1953 = vadd.f32 %v645, %v1813
  %v1954 = vadd.f32 %v651, %v1815
  %v1955 = vadd.f32 %v655, %v1817
  %v1956 = vadd.f32 %v661, %v1819
  %v1957 = vadd.f32 %v665, %v1821
  %v1958 = vadd.f32 %v671, %v1823
  %v1959 = vadd.f32 %v675, %v1825
  %v1960 = vadd.f32 %v681, %v1827
  %v1961 = vadd.f32 %v685, %v1829
  %v1962 = vadd.f32 %v691, %v1831
  %v1963 = vadd.f32 %v695, %v1833
  %v1964 = vadd.f32 %v701, %v1835
  %v1965 = vadd.f32 %v705, %v1837
  %v1966 = vrot.slane %v391, 2
  %v1967 = vrot.slane %v395, 2
  %v1968 = vrot.slane %v401, 2
  %v1969 = vrot.slane %v405, 2
  %v1970 = vrot.slane %v411, 2
  %v1971 = vrot.slane %v415, 2
  %v1972 = vrot.slane %v421, 2
  %v1973 = vrot.slane %v425, 2
  %v1974 = vrot.slane %v431, 2
  %v1975 = vrot.slane %v435, 2
  %v1976 = vrot.slane %v441, 2
  %v1977 = vrot.slane %v445, 2
  %v1978 = vrot.slane %v451, 2
  %v1979 = vrot.slane %v455, 2
  %v1980 = vrot.slane %v461, 2
  %v1981 = vrot.slane %v465, 2
  %v1982 = vrot.slane %v471, 2
  %v1983 = vrot.slane %v475, 2
  %v1984 = vrot.slane %v481, 2
  %v1985 = vrot.slane %v485, 2
  %v1986 = vrot.slane %v491, 2
  %v1987 = vrot.slane %v495, 2
  %v1988 = vrot.slane %v501, 2
  %v1989 = vrot.slane %v505, 2
  %v1990 = vrot.slane %v511, 2
  %v1991 = vrot.slane %v515, 2
  %v1992 = vrot.slane %v521, 2
  %v1993 = vrot.slane %v525, 2
  %v1994 = vrot.slane %v531, 2
  %v1995 = vrot.slane %v535, 2
  %v1996 = vrot.slane %v541, 2
  %v1997 = vrot.slane %v545, 2
  %v1998 = vrot.slane %v551, 2
  %v1999 = vrot.slane %v555, 2
  %v2000 = vrot.slane %v561, 2
  %v2001 = vrot.slane %v565, 2
  %v2002 = vrot.slane %v571, 2
  %v2003 = vrot.slane %v575, 2
  %v2004 = vrot.slane %v581, 2
  %v2005 = vrot.slane %v585, 2
  %v2006 = vrot.slane %v591, 2
  %v2007 = vrot.slane %v595, 2
  %v2008 = vrot.slane %v601, 2
  %v2009 = vrot.slane %v605, 2
  %v2010 = vrot.slane %v611, 2
  %v2011 = vrot.slane %v615, 2
  %v2012 = vrot.slane %v621, 2
  %v2013 = vrot.slane %v625, 2
  %v2014 = vrot.slane %v631, 2
  %v2015 = vrot.slane %v635, 2
  %v2016 = vrot.slane %v641, 2
  %v2017 = vrot.slane %v645, 2
  %v2018 = vrot.slane %v651, 2
  %v2019 = vrot.slane %v655, 2
  %v2020 = vrot.slane %v661, 2
  %v2021 = vrot.slane %v665, 2
  %v2022 = vrot.slane %v671, 2
  %v2023 = vrot.slane %v675, 2
  %v2024 = vrot.slane %v681, 2
  %v2025 = vrot.slane %v685, 2
  %v2026 = vrot.slane %v691, 2
  %v2027 = vrot.slane %v695, 2
  %v2028 = vrot.slane %v701, 2
  %v2029 = vrot.slane %v705, 2
  %2030 = vrot.lane.b32.xlu0 %v1966, 64
  %v2031 = vpop.permute.xlu0 %2030
  %2032 = vrot.lane.b32.xlu0 %v1967, 64
  %v2033 = vpop.permute.xlu0 %2032
  %2034 = vrot.lane.b32.xlu0 %v1968, 64
  %v2035 = vpop.permute.xlu0 %2034
  %2036 = vrot.lane.b32.xlu0 %v1969, 64
  %v2037 = vpop.permute.xlu0 %2036
  %2038 = vrot.lane.b32.xlu0 %v1970, 64
  %v2039 = vpop.permute.xlu0 %2038
  %2040 = vrot.lane.b32.xlu0 %v1971, 64
  %v2041 = vpop.permute.xlu0 %2040
  %2042 = vrot.lane.b32.xlu0 %v1972, 64
  %v2043 = vpop.permute.xlu0 %2042
  %2044 = vrot.lane.b32.xlu0 %v1973, 64
  %v2045 = vpop.permute.xlu0 %2044
  %2046 = vrot.lane.b32.xlu0 %v1974, 64
  %v2047 = vpop.permute.xlu0 %2046
  %2048 = vrot.lane.b32.xlu0 %v1975, 64
  %v2049 = vpop.permute.xlu0 %2048
  %2050 = vrot.lane.b32.xlu0 %v1976, 64
  %v2051 = vpop.permute.xlu0 %2050
  %2052 = vrot.lane.b32.xlu0 %v1977, 64
  %v2053 = vpop.permute.xlu0 %2052
  %2054 = vrot.lane.b32.xlu0 %v1978, 64
  %v2055 = vpop.permute.xlu0 %2054
  %2056 = vrot.lane.b32.xlu0 %v1979, 64
  %v2057 = vpop.permute.xlu0 %2056
  %2058 = vrot.lane.b32.xlu0 %v1980, 64
  %v2059 = vpop.permute.xlu0 %2058
  %2060 = vrot.lane.b32.xlu0 %v1981, 64
  %v2061 = vpop.permute.xlu0 %2060
  %2062 = vrot.lane.b32.xlu0 %v1982, 64
  %v2063 = vpop.permute.xlu0 %2062
  %2064 = vrot.lane.b32.xlu0 %v1983, 64
  %v2065 = vpop.permute.xlu0 %2064
  %2066 = vrot.lane.b32.xlu0 %v1984, 64
  %v2067 = vpop.permute.xlu0 %2066
  %2068 = vrot.lane.b32.xlu0 %v1985, 64
  %v2069 = vpop.permute.xlu0 %2068
  %2070 = vrot.lane.b32.xlu0 %v1986, 64
  %v2071 = vpop.permute.xlu0 %2070
  %2072 = vrot.lane.b32.xlu0 %v1987, 64
  %v2073 = vpop.permute.xlu0 %2072
  %2074 = vrot.lane.b32.xlu0 %v1988, 64
  %v2075 = vpop.permute.xlu0 %2074
  %2076 = vrot.lane.b32.xlu0 %v1989, 64
  %v2077 = vpop.permute.xlu0 %2076
  %2078 = vrot.lane.b32.xlu0 %v1990, 64
  %v2079 = vpop.permute.xlu0 %2078
  %2080 = vrot.lane.b32.xlu0 %v1991, 64
  %v2081 = vpop.permute.xlu0 %2080
  %2082 = vrot.lane.b32.xlu0 %v1992, 64
  %v2083 = vpop.permute.xlu0 %2082
  %2084 = vrot.lane.b32.xlu0 %v1993, 64
  %v2085 = vpop.permute.xlu0 %2084
  %2086 = vrot.lane.b32.xlu0 %v1994, 64
  %v2087 = vpop.permute.xlu0 %2086
  %2088 = vrot.lane.b32.xlu0 %v1995, 64
  %v2089 = vpop.permute.xlu0 %2088
  %2090 = vrot.lane.b32.xlu0 %v1996, 64
  %v2091 = vpop.permute.xlu0 %2090
  %2092 = vrot.lane.b32.xlu0 %v1997, 64
  %v2093 = vpop.permute.xlu0 %2092
  %2094 = vrot.lane.b32.xlu0 %v1998, 64
  %v2095 = vpop.permute.xlu0 %2094
  %2096 = vrot.lane.b32.xlu0 %v1999, 64
  %v2097 = vpop.permute.xlu0 %2096
  %2098 = vrot.lane.b32.xlu0 %v2000, 64
  %v2099 = vpop.permute.xlu0 %2098
  %2100 = vrot.lane.b32.xlu0 %v2001, 64
  %v2101 = vpop.permute.xlu0 %2100
  %2102 = vrot.lane.b32.xlu0 %v2002, 64
  %v2103 = vpop.permute.xlu0 %2102
  %2104 = vrot.lane.b32.xlu0 %v2003, 64
  %v2105 = vpop.permute.xlu0 %2104
  %2106 = vrot.lane.b32.xlu0 %v2004, 64
  %v2107 = vpop.permute.xlu0 %2106
  %2108 = vrot.lane.b32.xlu0 %v2005, 64
  %v2109 = vpop.permute.xlu0 %2108
  %2110 = vrot.lane.b32.xlu0 %v2006, 64
  %v2111 = vpop.permute.xlu0 %2110
  %2112 = vrot.lane.b32.xlu0 %v2007, 64
  %v2113 = vpop.permute.xlu0 %2112
  %2114 = vrot.lane.b32.xlu0 %v2008, 64
  %v2115 = vpop.permute.xlu0 %2114
  %2116 = vrot.lane.b32.xlu0 %v2009, 64
  %v2117 = vpop.permute.xlu0 %2116
  %2118 = vrot.lane.b32.xlu0 %v2010, 64
  %v2119 = vpop.permute.xlu0 %2118
  %2120 = vrot.lane.b32.xlu0 %v2011, 64
  %v2121 = vpop.permute.xlu0 %2120
  %2122 = vrot.lane.b32.xlu0 %v2012, 64
  %v2123 = vpop.permute.xlu0 %2122
  %2124 = vrot.lane.b32.xlu0 %v2013, 64
  %v2125 = vpop.permute.xlu0 %2124
  %2126 = vrot.lane.b32.xlu0 %v2014, 64
  %v2127 = vpop.permute.xlu0 %2126
  %2128 = vrot.lane.b32.xlu0 %v2015, 64
  %v2129 = vpop.permute.xlu0 %2128
  %2130 = vrot.lane.b32.xlu0 %v2016, 64
  %v2131 = vpop.permute.xlu0 %2130
  %2132 = vrot.lane.b32.xlu0 %v2017, 64
  %v2133 = vpop.permute.xlu0 %2132
  %2134 = vrot.lane.b32.xlu0 %v2018, 64
  %v2135 = vpop.permute.xlu0 %2134
  %2136 = vrot.lane.b32.xlu0 %v2019, 64
  %v2137 = vpop.permute.xlu0 %2136
  %2138 = vrot.lane.b32.xlu0 %v2020, 64
  %v2139 = vpop.permute.xlu0 %2138
  %2140 = vrot.lane.b32.xlu0 %v2021, 64
  %v2141 = vpop.permute.xlu0 %2140
  %2142 = vrot.lane.b32.xlu0 %v2022, 64
  %v2143 = vpop.permute.xlu0 %2142
  %2144 = vrot.lane.b32.xlu0 %v2023, 64
  %v2145 = vpop.permute.xlu0 %2144
  %2146 = vrot.lane.b32.xlu0 %v2024, 64
  %v2147 = vpop.permute.xlu0 %2146
  %2148 = vrot.lane.b32.xlu0 %v2025, 64
  %v2149 = vpop.permute.xlu0 %2148
  %2150 = vrot.lane.b32.xlu0 %v2026, 64
  %v2151 = vpop.permute.xlu0 %2150
  %2152 = vrot.lane.b32.xlu0 %v2027, 64
  %v2153 = vpop.permute.xlu0 %2152
  %2154 = vrot.lane.b32.xlu0 %v2028, 64
  %v2155 = vpop.permute.xlu0 %2154
  %2156 = vrot.lane.b32.xlu0 %v2029, 64
  %v2157 = vpop.permute.xlu0 %2156
  %v2222 = vadd.f32 %v1902, %v2031
  %v2223 = vadd.f32 %v1903, %v2033
  %v2224 = vadd.f32 %v1904, %v2035
  %v2225 = vadd.f32 %v1905, %v2037
  %v2226 = vadd.f32 %v1906, %v2039
  %v2227 = vadd.f32 %v1907, %v2041
  %v2228 = vadd.f32 %v1908, %v2043
  %v2229 = vadd.f32 %v1909, %v2045
  %v2230 = vadd.f32 %v1910, %v2047
  %v2231 = vadd.f32 %v1911, %v2049
  %v2232 = vadd.f32 %v1912, %v2051
  %v2233 = vadd.f32 %v1913, %v2053
  %v2234 = vadd.f32 %v1914, %v2055
  %v2235 = vadd.f32 %v1915, %v2057
  %v2236 = vadd.f32 %v1916, %v2059
  %v2237 = vadd.f32 %v1917, %v2061
  %v2238 = vadd.f32 %v1918, %v2063
  %v2239 = vadd.f32 %v1919, %v2065
  %v2240 = vadd.f32 %v1920, %v2067
  %v2241 = vadd.f32 %v1921, %v2069
  %v2242 = vadd.f32 %v1922, %v2071
  %v2243 = vadd.f32 %v1923, %v2073
  %v2244 = vadd.f32 %v1924, %v2075
  %v2245 = vadd.f32 %v1925, %v2077
  %v2246 = vadd.f32 %v1926, %v2079
  %v2247 = vadd.f32 %v1927, %v2081
  %v2248 = vadd.f32 %v1928, %v2083
  %v2249 = vadd.f32 %v1929, %v2085
  %v2250 = vadd.f32 %v1930, %v2087
  %v2251 = vadd.f32 %v1931, %v2089
  %v2252 = vadd.f32 %v1932, %v2091
  %v2253 = vadd.f32 %v1933, %v2093
  %v2254 = vadd.f32 %v1934, %v2095
  %v2255 = vadd.f32 %v1935, %v2097
  %v2256 = vadd.f32 %v1936, %v2099
  %v2257 = vadd.f32 %v1937, %v2101
  %v2258 = vadd.f32 %v1938, %v2103
  %v2259 = vadd.f32 %v1939, %v2105
  %v2260 = vadd.f32 %v1940, %v2107
  %v2261 = vadd.f32 %v1941, %v2109
  %v2262 = vadd.f32 %v1942, %v2111
  %v2263 = vadd.f32 %v1943, %v2113
  %v2264 = vadd.f32 %v1944, %v2115
  %v2265 = vadd.f32 %v1945, %v2117
  %v2266 = vadd.f32 %v1946, %v2119
  %v2267 = vadd.f32 %v1947, %v2121
  %v2268 = vadd.f32 %v1948, %v2123
  %v2269 = vadd.f32 %v1949, %v2125
  %v2270 = vadd.f32 %v1950, %v2127
  %v2271 = vadd.f32 %v1951, %v2129
  %v2272 = vadd.f32 %v1952, %v2131
  %v2273 = vadd.f32 %v1953, %v2133
  %v2274 = vadd.f32 %v1954, %v2135
  %v2275 = vadd.f32 %v1955, %v2137
  %v2276 = vadd.f32 %v1956, %v2139
  %v2277 = vadd.f32 %v1957, %v2141
  %v2278 = vadd.f32 %v1958, %v2143
  %v2279 = vadd.f32 %v1959, %v2145
  %v2280 = vadd.f32 %v1960, %v2147
  %v2281 = vadd.f32 %v1961, %v2149
  %v2282 = vadd.f32 %v1962, %v2151
  %v2283 = vadd.f32 %v1963, %v2153
  %v2284 = vadd.f32 %v1964, %v2155
  %v2285 = vadd.f32 %v1965, %v2157
  %vm2286 = vcmask 521472
  %v2287 = vsel %vm2286, %v2222, -inf
  %v2288 = vrot.slane %v2287, 4
  %v2289 = vmax.f32 %v2287, %v2288
  %v2290 = vrot.slane %v2289, 2
  %v2291 = vmax.f32 %v2289, %v2290
  %v2292 = vrot.slane %v2291, 1
  %v2293 = vmax.f32 %v2291, %v2292
  %v2294 = vsel %vm2286, %v2223, -inf
  %v2295 = vrot.slane %v2294, 4
  %v2296 = vmax.f32 %v2294, %v2295
  %v2297 = vrot.slane %v2296, 2
  %v2298 = vmax.f32 %v2296, %v2297
  %v2299 = vrot.slane %v2298, 1
  %v2300 = vmax.f32 %v2298, %v2299
  %v2301 = vsel %vm2286, %v2224, -inf
  %v2302 = vrot.slane %v2301, 4
  %v2303 = vmax.f32 %v2301, %v2302
  %v2304 = vrot.slane %v2303, 2
  %v2305 = vmax.f32 %v2303, %v2304
  %v2306 = vrot.slane %v2305, 1
  %v2307 = vmax.f32 %v2305, %v2306
  %v2308 = vsel %vm2286, %v2225, -inf
  %v2309 = vrot.slane %v2308, 4
  %v2310 = vmax.f32 %v2308, %v2309
  %v2311 = vrot.slane %v2310, 2
  %v2312 = vmax.f32 %v2310, %v2311
  %v2313 = vrot.slane %v2312, 1
  %v2314 = vmax.f32 %v2312, %v2313
  %v2315 = vsel %vm2286, %v2226, -inf
  %v2316 = vrot.slane %v2315, 4
  %v2317 = vmax.f32 %v2315, %v2316
  %v2318 = vrot.slane %v2317, 2
  %v2319 = vmax.f32 %v2317, %v2318
  %v2320 = vrot.slane %v2319, 1
  %v2321 = vmax.f32 %v2319, %v2320
  %v2322 = vsel %vm2286, %v2227, -inf
  %v2323 = vrot.slane %v2322, 4
  %v2324 = vmax.f32 %v2322, %v2323
  %v2325 = vrot.slane %v2324, 2
  %v2326 = vmax.f32 %v2324, %v2325
  %v2327 = vrot.slane %v2326, 1
  %v2328 = vmax.f32 %v2326, %v2327
  %v2329 = vsel %vm2286, %v2228, -inf
  %v2330 = vrot.slane %v2329, 4
  %v2331 = vmax.f32 %v2329, %v2330
  %v2332 = vrot.slane %v2331, 2
  %v2333 = vmax.f32 %v2331, %v2332
  %v2334 = vrot.slane %v2333, 1
  %v2335 = vmax.f32 %v2333, %v2334
  %v2336 = vsel %vm2286, %v2229, -inf
  %v2337 = vrot.slane %v2336, 4
  %v2338 = vmax.f32 %v2336, %v2337
  %v2339 = vrot.slane %v2338, 2
  %v2340 = vmax.f32 %v2338, %v2339
  %v2341 = vrot.slane %v2340, 1
  %v2342 = vmax.f32 %v2340, %v2341
  %v2343 = vsel %vm2286, %v2230, -inf
  %v2344 = vrot.slane %v2343, 4
  %v2345 = vmax.f32 %v2343, %v2344
  %v2346 = vrot.slane %v2345, 2
  %v2347 = vmax.f32 %v2345, %v2346
  %v2348 = vrot.slane %v2347, 1
  %v2349 = vmax.f32 %v2347, %v2348
  %v2350 = vsel %vm2286, %v2231, -inf
  %v2351 = vrot.slane %v2350, 4
  %v2352 = vmax.f32 %v2350, %v2351
  %v2353 = vrot.slane %v2352, 2
  %v2354 = vmax.f32 %v2352, %v2353
  %v2355 = vrot.slane %v2354, 1
  %v2356 = vmax.f32 %v2354, %v2355
  %v2357 = vsel %vm2286, %v2232, -inf
  %v2358 = vrot.slane %v2357, 4
  %v2359 = vmax.f32 %v2357, %v2358
  %v2360 = vrot.slane %v2359, 2
  %v2361 = vmax.f32 %v2359, %v2360
  %v2362 = vrot.slane %v2361, 1
  %v2363 = vmax.f32 %v2361, %v2362
  %v2364 = vsel %vm2286, %v2233, -inf
  %v2365 = vrot.slane %v2364, 4
  %v2366 = vmax.f32 %v2364, %v2365
  %v2367 = vrot.slane %v2366, 2
  %v2368 = vmax.f32 %v2366, %v2367
  %v2369 = vrot.slane %v2368, 1
  %v2370 = vmax.f32 %v2368, %v2369
  %v2371 = vsel %vm2286, %v2234, -inf
  %v2372 = vrot.slane %v2371, 4
  %v2373 = vmax.f32 %v2371, %v2372
  %v2374 = vrot.slane %v2373, 2
  %v2375 = vmax.f32 %v2373, %v2374
  %v2376 = vrot.slane %v2375, 1
  %v2377 = vmax.f32 %v2375, %v2376
  %v2378 = vsel %vm2286, %v2235, -inf
  %v2379 = vrot.slane %v2378, 4
  %v2380 = vmax.f32 %v2378, %v2379
  %v2381 = vrot.slane %v2380, 2
  %v2382 = vmax.f32 %v2380, %v2381
  %v2383 = vrot.slane %v2382, 1
  %v2384 = vmax.f32 %v2382, %v2383
  %v2385 = vsel %vm2286, %v2236, -inf
  %v2386 = vrot.slane %v2385, 4
  %v2387 = vmax.f32 %v2385, %v2386
  %v2388 = vrot.slane %v2387, 2
  %v2389 = vmax.f32 %v2387, %v2388
  %v2390 = vrot.slane %v2389, 1
  %v2391 = vmax.f32 %v2389, %v2390
  %v2392 = vsel %vm2286, %v2237, -inf
  %v2393 = vrot.slane %v2392, 4
  %v2394 = vmax.f32 %v2392, %v2393
  %v2395 = vrot.slane %v2394, 2
  %v2396 = vmax.f32 %v2394, %v2395
  %v2397 = vrot.slane %v2396, 1
  %v2398 = vmax.f32 %v2396, %v2397
  %v2399 = vsel %vm2286, %v2238, -inf
  %v2400 = vrot.slane %v2399, 4
  %v2401 = vmax.f32 %v2399, %v2400
  %v2402 = vrot.slane %v2401, 2
  %v2403 = vmax.f32 %v2401, %v2402
  %v2404 = vrot.slane %v2403, 1
  %v2405 = vmax.f32 %v2403, %v2404
  %v2406 = vsel %vm2286, %v2239, -inf
  %v2407 = vrot.slane %v2406, 4
  %v2408 = vmax.f32 %v2406, %v2407
  %v2409 = vrot.slane %v2408, 2
  %v2410 = vmax.f32 %v2408, %v2409
  %v2411 = vrot.slane %v2410, 1
  %v2412 = vmax.f32 %v2410, %v2411
  %v2413 = vsel %vm2286, %v2240, -inf
  %v2414 = vrot.slane %v2413, 4
  %v2415 = vmax.f32 %v2413, %v2414
  %v2416 = vrot.slane %v2415, 2
  %v2417 = vmax.f32 %v2415, %v2416
  %v2418 = vrot.slane %v2417, 1
  %v2419 = vmax.f32 %v2417, %v2418
  %v2420 = vsel %vm2286, %v2241, -inf
  %v2421 = vrot.slane %v2420, 4
  %v2422 = vmax.f32 %v2420, %v2421
  %v2423 = vrot.slane %v2422, 2
  %v2424 = vmax.f32 %v2422, %v2423
  %v2425 = vrot.slane %v2424, 1
  %v2426 = vmax.f32 %v2424, %v2425
  %v2427 = vsel %vm2286, %v2242, -inf
  %v2428 = vrot.slane %v2427, 4
  %v2429 = vmax.f32 %v2427, %v2428
  %v2430 = vrot.slane %v2429, 2
  %v2431 = vmax.f32 %v2429, %v2430
  %v2432 = vrot.slane %v2431, 1
  %v2433 = vmax.f32 %v2431, %v2432
  %v2434 = vsel %vm2286, %v2243, -inf
  %v2435 = vrot.slane %v2434, 4
  %v2436 = vmax.f32 %v2434, %v2435
  %v2437 = vrot.slane %v2436, 2
  %v2438 = vmax.f32 %v2436, %v2437
  %v2439 = vrot.slane %v2438, 1
  %v2440 = vmax.f32 %v2438, %v2439
  %v2441 = vsel %vm2286, %v2244, -inf
  %v2442 = vrot.slane %v2441, 4
  %v2443 = vmax.f32 %v2441, %v2442
  %v2444 = vrot.slane %v2443, 2
  %v2445 = vmax.f32 %v2443, %v2444
  %v2446 = vrot.slane %v2445, 1
  %v2447 = vmax.f32 %v2445, %v2446
  %v2448 = vsel %vm2286, %v2245, -inf
  %v2449 = vrot.slane %v2448, 4
  %v2450 = vmax.f32 %v2448, %v2449
  %v2451 = vrot.slane %v2450, 2
  %v2452 = vmax.f32 %v2450, %v2451
  %v2453 = vrot.slane %v2452, 1
  %v2454 = vmax.f32 %v2452, %v2453
  %v2455 = vsel %vm2286, %v2246, -inf
  %v2456 = vrot.slane %v2455, 4
  %v2457 = vmax.f32 %v2455, %v2456
  %v2458 = vrot.slane %v2457, 2
  %v2459 = vmax.f32 %v2457, %v2458
  %v2460 = vrot.slane %v2459, 1
  %v2461 = vmax.f32 %v2459, %v2460
  %v2462 = vsel %vm2286, %v2247, -inf
  %v2463 = vrot.slane %v2462, 4
  %v2464 = vmax.f32 %v2462, %v2463
  %v2465 = vrot.slane %v2464, 2
  %v2466 = vmax.f32 %v2464, %v2465
  %v2467 = vrot.slane %v2466, 1
  %v2468 = vmax.f32 %v2466, %v2467
  %v2469 = vsel %vm2286, %v2248, -inf
  %v2470 = vrot.slane %v2469, 4
  %v2471 = vmax.f32 %v2469, %v2470
  %v2472 = vrot.slane %v2471, 2
  %v2473 = vmax.f32 %v2471, %v2472
  %v2474 = vrot.slane %v2473, 1
  %v2475 = vmax.f32 %v2473, %v2474
  %v2476 = vsel %vm2286, %v2249, -inf
  %v2477 = vrot.slane %v2476, 4
  %v2478 = vmax.f32 %v2476, %v2477
  %v2479 = vrot.slane %v2478, 2
  %v2480 = vmax.f32 %v2478, %v2479
  %v2481 = vrot.slane %v2480, 1
  %v2482 = vmax.f32 %v2480, %v2481
  %v2483 = vsel %vm2286, %v2250, -inf
  %v2484 = vrot.slane %v2483, 4
  %v2485 = vmax.f32 %v2483, %v2484
  %v2486 = vrot.slane %v2485, 2
  %v2487 = vmax.f32 %v2485, %v2486
  %v2488 = vrot.slane %v2487, 1
  %v2489 = vmax.f32 %v2487, %v2488
  %v2490 = vsel %vm2286, %v2251, -inf
  %v2491 = vrot.slane %v2490, 4
  %v2492 = vmax.f32 %v2490, %v2491
  %v2493 = vrot.slane %v2492, 2
  %v2494 = vmax.f32 %v2492, %v2493
  %v2495 = vrot.slane %v2494, 1
  %v2496 = vmax.f32 %v2494, %v2495
  %v2497 = vsel %vm2286, %v2252, -inf
  %v2498 = vrot.slane %v2497, 4
  %v2499 = vmax.f32 %v2497, %v2498
  %v2500 = vrot.slane %v2499, 2
  %v2501 = vmax.f32 %v2499, %v2500
  %v2502 = vrot.slane %v2501, 1
  %v2503 = vmax.f32 %v2501, %v2502
  %v2504 = vsel %vm2286, %v2253, -inf
  %v2505 = vrot.slane %v2504, 4
  %v2506 = vmax.f32 %v2504, %v2505
  %v2507 = vrot.slane %v2506, 2
  %v2508 = vmax.f32 %v2506, %v2507
  %v2509 = vrot.slane %v2508, 1
  %v2510 = vmax.f32 %v2508, %v2509
  %v2511 = vsel %vm2286, %v2254, -inf
  %v2512 = vrot.slane %v2511, 4
  %v2513 = vmax.f32 %v2511, %v2512
  %v2514 = vrot.slane %v2513, 2
  %v2515 = vmax.f32 %v2513, %v2514
  %v2516 = vrot.slane %v2515, 1
  %v2517 = vmax.f32 %v2515, %v2516
  %v2518 = vsel %vm2286, %v2255, -inf
  %v2519 = vrot.slane %v2518, 4
  %v2520 = vmax.f32 %v2518, %v2519
  %v2521 = vrot.slane %v2520, 2
  %v2522 = vmax.f32 %v2520, %v2521
  %v2523 = vrot.slane %v2522, 1
  %v2524 = vmax.f32 %v2522, %v2523
  %v2525 = vsel %vm2286, %v2256, -inf
  %v2526 = vrot.slane %v2525, 4
  %v2527 = vmax.f32 %v2525, %v2526
  %v2528 = vrot.slane %v2527, 2
  %v2529 = vmax.f32 %v2527, %v2528
  %v2530 = vrot.slane %v2529, 1
  %v2531 = vmax.f32 %v2529, %v2530
  %v2532 = vsel %vm2286, %v2257, -inf
  %v2533 = vrot.slane %v2532, 4
  %v2534 = vmax.f32 %v2532, %v2533
  %v2535 = vrot.slane %v2534, 2
  %v2536 = vmax.f32 %v2534, %v2535
  %v2537 = vrot.slane %v2536, 1
  %v2538 = vmax.f32 %v2536, %v2537
  %v2539 = vsel %vm2286, %v2258, -inf
  %v2540 = vrot.slane %v2539, 4
  %v2541 = vmax.f32 %v2539, %v2540
  %v2542 = vrot.slane %v2541, 2
  %v2543 = vmax.f32 %v2541, %v2542
  %v2544 = vrot.slane %v2543, 1
  %v2545 = vmax.f32 %v2543, %v2544
  %v2546 = vsel %vm2286, %v2259, -inf
  %v2547 = vrot.slane %v2546, 4
  %v2548 = vmax.f32 %v2546, %v2547
  %v2549 = vrot.slane %v2548, 2
  %v2550 = vmax.f32 %v2548, %v2549
  %v2551 = vrot.slane %v2550, 1
  %v2552 = vmax.f32 %v2550, %v2551
  %v2553 = vsel %vm2286, %v2260, -inf
  %v2554 = vrot.slane %v2553, 4
  %v2555 = vmax.f32 %v2553, %v2554
  %v2556 = vrot.slane %v2555, 2
  %v2557 = vmax.f32 %v2555, %v2556
  %v2558 = vrot.slane %v2557, 1
  %v2559 = vmax.f32 %v2557, %v2558
  %v2560 = vsel %vm2286, %v2261, -inf
  %v2561 = vrot.slane %v2560, 4
  %v2562 = vmax.f32 %v2560, %v2561
  %v2563 = vrot.slane %v2562, 2
  %v2564 = vmax.f32 %v2562, %v2563
  %v2565 = vrot.slane %v2564, 1
  %v2566 = vmax.f32 %v2564, %v2565
  %v2567 = vsel %vm2286, %v2262, -inf
  %v2568 = vrot.slane %v2567, 4
  %v2569 = vmax.f32 %v2567, %v2568
  %v2570 = vrot.slane %v2569, 2
  %v2571 = vmax.f32 %v2569, %v2570
  %v2572 = vrot.slane %v2571, 1
  %v2573 = vmax.f32 %v2571, %v2572
  %v2574 = vsel %vm2286, %v2263, -inf
  %v2575 = vrot.slane %v2574, 4
  %v2576 = vmax.f32 %v2574, %v2575
  %v2577 = vrot.slane %v2576, 2
  %v2578 = vmax.f32 %v2576, %v2577
  %v2579 = vrot.slane %v2578, 1
  %v2580 = vmax.f32 %v2578, %v2579
  %v2581 = vsel %vm2286, %v2264, -inf
  %v2582 = vrot.slane %v2581, 4
  %v2583 = vmax.f32 %v2581, %v2582
  %v2584 = vrot.slane %v2583, 2
  %v2585 = vmax.f32 %v2583, %v2584
  %v2586 = vrot.slane %v2585, 1
  %v2587 = vmax.f32 %v2585, %v2586
  %v2588 = vsel %vm2286, %v2265, -inf
  %v2589 = vrot.slane %v2588, 4
  %v2590 = vmax.f32 %v2588, %v2589
  %v2591 = vrot.slane %v2590, 2
  %v2592 = vmax.f32 %v2590, %v2591
  %v2593 = vrot.slane %v2592, 1
  %v2594 = vmax.f32 %v2592, %v2593
  %v2595 = vsel %vm2286, %v2266, -inf
  %v2596 = vrot.slane %v2595, 4
  %v2597 = vmax.f32 %v2595, %v2596
  %v2598 = vrot.slane %v2597, 2
  %v2599 = vmax.f32 %v2597, %v2598
  %v2600 = vrot.slane %v2599, 1
  %v2601 = vmax.f32 %v2599, %v2600
  %v2602 = vsel %vm2286, %v2267, -inf
  %v2603 = vrot.slane %v2602, 4
  %v2604 = vmax.f32 %v2602, %v2603
  %v2605 = vrot.slane %v2604, 2
  %v2606 = vmax.f32 %v2604, %v2605
  %v2607 = vrot.slane %v2606, 1
  %v2608 = vmax.f32 %v2606, %v2607
  %v2609 = vsel %vm2286, %v2268, -inf
  %v2610 = vrot.slane %v2609, 4
  %v2611 = vmax.f32 %v2609, %v2610
  %v2612 = vrot.slane %v2611, 2
  %v2613 = vmax.f32 %v2611, %v2612
  %v2614 = vrot.slane %v2613, 1
  %v2615 = vmax.f32 %v2613, %v2614
  %v2616 = vsel %vm2286, %v2269, -inf
  %v2617 = vrot.slane %v2616, 4
  %v2618 = vmax.f32 %v2616, %v2617
  %v2619 = vrot.slane %v2618, 2
  %v2620 = vmax.f32 %v2618, %v2619
  %v2621 = vrot.slane %v2620, 1
  %v2622 = vmax.f32 %v2620, %v2621
  %v2623 = vsel %vm2286, %v2270, -inf
  %v2624 = vrot.slane %v2623, 4
  %v2625 = vmax.f32 %v2623, %v2624
  %v2626 = vrot.slane %v2625, 2
  %v2627 = vmax.f32 %v2625, %v2626
  %v2628 = vrot.slane %v2627, 1
  %v2629 = vmax.f32 %v2627, %v2628
  %v2630 = vsel %vm2286, %v2271, -inf
  %v2631 = vrot.slane %v2630, 4
  %v2632 = vmax.f32 %v2630, %v2631
  %v2633 = vrot.slane %v2632, 2
  %v2634 = vmax.f32 %v2632, %v2633
  %v2635 = vrot.slane %v2634, 1
  %v2636 = vmax.f32 %v2634, %v2635
  %v2637 = vsel %vm2286, %v2272, -inf
  %v2638 = vrot.slane %v2637, 4
  %v2639 = vmax.f32 %v2637, %v2638
  %v2640 = vrot.slane %v2639, 2
  %v2641 = vmax.f32 %v2639, %v2640
  %v2642 = vrot.slane %v2641, 1
  %v2643 = vmax.f32 %v2641, %v2642
  %v2644 = vsel %vm2286, %v2273, -inf
  %v2645 = vrot.slane %v2644, 4
  %v2646 = vmax.f32 %v2644, %v2645
  %v2647 = vrot.slane %v2646, 2
  %v2648 = vmax.f32 %v2646, %v2647
  %v2649 = vrot.slane %v2648, 1
  %v2650 = vmax.f32 %v2648, %v2649
  %v2651 = vsel %vm2286, %v2274, -inf
  %v2652 = vrot.slane %v2651, 4
  %v2653 = vmax.f32 %v2651, %v2652
  %v2654 = vrot.slane %v2653, 2
  %v2655 = vmax.f32 %v2653, %v2654
  %v2656 = vrot.slane %v2655, 1
  %v2657 = vmax.f32 %v2655, %v2656
  %v2658 = vsel %vm2286, %v2275, -inf
  %v2659 = vrot.slane %v2658, 4
  %v2660 = vmax.f32 %v2658, %v2659
  %v2661 = vrot.slane %v2660, 2
  %v2662 = vmax.f32 %v2660, %v2661
  %v2663 = vrot.slane %v2662, 1
  %v2664 = vmax.f32 %v2662, %v2663
  %v2665 = vsel %vm2286, %v2276, -inf
  %v2666 = vrot.slane %v2665, 4
  %v2667 = vmax.f32 %v2665, %v2666
  %v2668 = vrot.slane %v2667, 2
  %v2669 = vmax.f32 %v2667, %v2668
  %v2670 = vrot.slane %v2669, 1
  %v2671 = vmax.f32 %v2669, %v2670
  %v2672 = vsel %vm2286, %v2277, -inf
  %v2673 = vrot.slane %v2672, 4
  %v2674 = vmax.f32 %v2672, %v2673
  %v2675 = vrot.slane %v2674, 2
  %v2676 = vmax.f32 %v2674, %v2675
  %v2677 = vrot.slane %v2676, 1
  %v2678 = vmax.f32 %v2676, %v2677
  %v2679 = vsel %vm2286, %v2278, -inf
  %v2680 = vrot.slane %v2679, 4
  %v2681 = vmax.f32 %v2679, %v2680
  %v2682 = vrot.slane %v2681, 2
  %v2683 = vmax.f32 %v2681, %v2682
  %v2684 = vrot.slane %v2683, 1
  %v2685 = vmax.f32 %v2683, %v2684
  %v2686 = vsel %vm2286, %v2279, -inf
  %v2687 = vrot.slane %v2686, 4
  %v2688 = vmax.f32 %v2686, %v2687
  %v2689 = vrot.slane %v2688, 2
  %v2690 = vmax.f32 %v2688, %v2689
  %v2691 = vrot.slane %v2690, 1
  %v2692 = vmax.f32 %v2690, %v2691
  %v2693 = vsel %vm2286, %v2280, -inf
  %v2694 = vrot.slane %v2693, 4
  %v2695 = vmax.f32 %v2693, %v2694
  %v2696 = vrot.slane %v2695, 2
  %v2697 = vmax.f32 %v2695, %v2696
  %v2698 = vrot.slane %v2697, 1
  %v2699 = vmax.f32 %v2697, %v2698
  %v2700 = vsel %vm2286, %v2281, -inf
  %v2701 = vrot.slane %v2700, 4
  %v2702 = vmax.f32 %v2700, %v2701
  %v2703 = vrot.slane %v2702, 2
  %v2704 = vmax.f32 %v2702, %v2703
  %v2705 = vrot.slane %v2704, 1
  %v2706 = vmax.f32 %v2704, %v2705
  %v2707 = vsel %vm2286, %v2282, -inf
  %v2708 = vrot.slane %v2707, 4
  %v2709 = vmax.f32 %v2707, %v2708
  %v2710 = vrot.slane %v2709, 2
  %v2711 = vmax.f32 %v2709, %v2710
  %v2712 = vrot.slane %v2711, 1
  %v2713 = vmax.f32 %v2711, %v2712
  %v2714 = vsel %vm2286, %v2283, -inf
  %v2715 = vrot.slane %v2714, 4
  %v2716 = vmax.f32 %v2714, %v2715
  %v2717 = vrot.slane %v2716, 2
  %v2718 = vmax.f32 %v2716, %v2717
  %v2719 = vrot.slane %v2718, 1
  %v2720 = vmax.f32 %v2718, %v2719
  %v2721 = vsel %vm2286, %v2284, -inf
  %v2722 = vrot.slane %v2721, 4
  %v2723 = vmax.f32 %v2721, %v2722
  %v2724 = vrot.slane %v2723, 2
  %v2725 = vmax.f32 %v2723, %v2724
  %v2726 = vrot.slane %v2725, 1
  %v2727 = vmax.f32 %v2725, %v2726
  %v2728 = vsel %vm2286, %v2285, -inf
  %v2729 = vrot.slane %v2728, 4
  %v2730 = vmax.f32 %v2728, %v2729
  %v2731 = vrot.slane %v2730, 2
  %v2732 = vmax.f32 %v2730, %v2731
  %v2733 = vrot.slane %v2732, 1
  %v2734 = vmax.f32 %v2732, %v2733
  %s2735 = scalar_lea.vmem %s2, 1
  %v2736 = vld [vmem:[%s2735] sm:$0x1]
  %v2738 = vlaneseq
  %v2739 = vshrl.u32 %v2738, 7
  %v2740 = vsub.s32 0, %v2739
  %v2741 = vrot.slane %v2736, %v2740
  %2742 = vrot.lane.b32.xlu0 %v2741, 32
  %v2743 = vpop.permute.xlu0 %2742
  %v2745 = vadd.f32 %v2293, %v2743
  %v2746 = vadd.f32 %v2300, %v2743
  %v2747 = vadd.f32 %v2307, %v2743
  %v2748 = vadd.f32 %v2314, %v2743
  %v2749 = vadd.f32 %v2321, %v2743
  %v2750 = vadd.f32 %v2328, %v2743
  %v2751 = vadd.f32 %v2335, %v2743
  %v2752 = vadd.f32 %v2342, %v2743
  %v2753 = vadd.f32 %v2349, %v2743
  %v2754 = vadd.f32 %v2356, %v2743
  %v2755 = vadd.f32 %v2363, %v2743
  %v2756 = vadd.f32 %v2370, %v2743
  %v2757 = vadd.f32 %v2377, %v2743
  %v2758 = vadd.f32 %v2384, %v2743
  %v2759 = vadd.f32 %v2391, %v2743
  %v2760 = vadd.f32 %v2398, %v2743
  %v2761 = vadd.f32 %v2405, %v2743
  %v2762 = vadd.f32 %v2412, %v2743
  %v2763 = vadd.f32 %v2419, %v2743
  %v2764 = vadd.f32 %v2426, %v2743
  %v2765 = vadd.f32 %v2433, %v2743
  %v2766 = vadd.f32 %v2440, %v2743
  %v2767 = vadd.f32 %v2447, %v2743
  %v2768 = vadd.f32 %v2454, %v2743
  %v2769 = vadd.f32 %v2461, %v2743
  %v2770 = vadd.f32 %v2468, %v2743
  %v2771 = vadd.f32 %v2475, %v2743
  %v2772 = vadd.f32 %v2482, %v2743
  %v2773 = vadd.f32 %v2489, %v2743
  %v2774 = vadd.f32 %v2496, %v2743
  %v2775 = vadd.f32 %v2503, %v2743
  %v2776 = vadd.f32 %v2510, %v2743
  %v2777 = vadd.f32 %v2517, %v2743
  %v2778 = vadd.f32 %v2524, %v2743
  %v2779 = vadd.f32 %v2531, %v2743
  %v2780 = vadd.f32 %v2538, %v2743
  %v2781 = vadd.f32 %v2545, %v2743
  %v2782 = vadd.f32 %v2552, %v2743
  %v2783 = vadd.f32 %v2559, %v2743
  %v2784 = vadd.f32 %v2566, %v2743
  %v2785 = vadd.f32 %v2573, %v2743
  %v2786 = vadd.f32 %v2580, %v2743
  %v2787 = vadd.f32 %v2587, %v2743
  %v2788 = vadd.f32 %v2594, %v2743
  %v2789 = vadd.f32 %v2601, %v2743
  %v2790 = vadd.f32 %v2608, %v2743
  %v2791 = vadd.f32 %v2615, %v2743
  %v2792 = vadd.f32 %v2622, %v2743
  %v2793 = vadd.f32 %v2629, %v2743
  %v2794 = vadd.f32 %v2636, %v2743
  %v2795 = vadd.f32 %v2643, %v2743
  %v2796 = vadd.f32 %v2650, %v2743
  %v2797 = vadd.f32 %v2657, %v2743
  %v2798 = vadd.f32 %v2664, %v2743
  %v2799 = vadd.f32 %v2671, %v2743
  %v2800 = vadd.f32 %v2678, %v2743
  %v2801 = vadd.f32 %v2685, %v2743
  %v2802 = vadd.f32 %v2692, %v2743
  %v2803 = vadd.f32 %v2699, %v2743
  %v2804 = vadd.f32 %v2706, %v2743
  %v2805 = vadd.f32 %v2713, %v2743
  %v2806 = vadd.f32 %v2720, %v2743
  %v2807 = vadd.f32 %v2727, %v2743
  %v2808 = vadd.f32 %v2734, %v2743
  %v2809 = vmax.f32 %v2745, 0.0
  %v2810 = vmax.f32 %v2746, 0.0
  %v2811 = vmax.f32 %v2747, 0.0
  %v2812 = vmax.f32 %v2748, 0.0
  %v2813 = vmax.f32 %v2749, 0.0
  %v2814 = vmax.f32 %v2750, 0.0
  %v2815 = vmax.f32 %v2751, 0.0
  %v2816 = vmax.f32 %v2752, 0.0
  %v2817 = vmax.f32 %v2753, 0.0
  %v2818 = vmax.f32 %v2754, 0.0
  %v2819 = vmax.f32 %v2755, 0.0
  %v2820 = vmax.f32 %v2756, 0.0
  %v2821 = vmax.f32 %v2757, 0.0
  %v2822 = vmax.f32 %v2758, 0.0
  %v2823 = vmax.f32 %v2759, 0.0
  %v2824 = vmax.f32 %v2760, 0.0
  %v2825 = vmax.f32 %v2761, 0.0
  %v2826 = vmax.f32 %v2762, 0.0
  %v2827 = vmax.f32 %v2763, 0.0
  %v2828 = vmax.f32 %v2764, 0.0
  %v2829 = vmax.f32 %v2765, 0.0
  %v2830 = vmax.f32 %v2766, 0.0
  %v2831 = vmax.f32 %v2767, 0.0
  %v2832 = vmax.f32 %v2768, 0.0
  %v2833 = vmax.f32 %v2769, 0.0
  %v2834 = vmax.f32 %v2770, 0.0
  %v2835 = vmax.f32 %v2771, 0.0
  %v2836 = vmax.f32 %v2772, 0.0
  %v2837 = vmax.f32 %v2773, 0.0
  %v2838 = vmax.f32 %v2774, 0.0
  %v2839 = vmax.f32 %v2775, 0.0
  %v2840 = vmax.f32 %v2776, 0.0
  %v2841 = vmax.f32 %v2777, 0.0
  %v2842 = vmax.f32 %v2778, 0.0
  %v2843 = vmax.f32 %v2779, 0.0
  %v2844 = vmax.f32 %v2780, 0.0
  %v2845 = vmax.f32 %v2781, 0.0
  %v2846 = vmax.f32 %v2782, 0.0
  %v2847 = vmax.f32 %v2783, 0.0
  %v2848 = vmax.f32 %v2784, 0.0
  %v2849 = vmax.f32 %v2785, 0.0
  %v2850 = vmax.f32 %v2786, 0.0
  %v2851 = vmax.f32 %v2787, 0.0
  %v2852 = vmax.f32 %v2788, 0.0
  %v2853 = vmax.f32 %v2789, 0.0
  %v2854 = vmax.f32 %v2790, 0.0
  %v2855 = vmax.f32 %v2791, 0.0
  %v2856 = vmax.f32 %v2792, 0.0
  %v2857 = vmax.f32 %v2793, 0.0
  %v2858 = vmax.f32 %v2794, 0.0
  %v2859 = vmax.f32 %v2795, 0.0
  %v2860 = vmax.f32 %v2796, 0.0
  %v2861 = vmax.f32 %v2797, 0.0
  %v2862 = vmax.f32 %v2798, 0.0
  %v2863 = vmax.f32 %v2799, 0.0
  %v2864 = vmax.f32 %v2800, 0.0
  %v2865 = vmax.f32 %v2801, 0.0
  %v2866 = vmax.f32 %v2802, 0.0
  %v2867 = vmax.f32 %v2803, 0.0
  %v2868 = vmax.f32 %v2804, 0.0
  %v2869 = vmax.f32 %v2805, 0.0
  %v2870 = vmax.f32 %v2806, 0.0
  %v2871 = vmax.f32 %v2807, 0.0
  %v2872 = vmax.f32 %v2808, 0.0
  %v2937 = vrot.slane %v393, 1
  %v2938 = vrot.slane %v397, 1
  %v2939 = vrot.slane %v403, 1
  %v2940 = vrot.slane %v407, 1
  %v2941 = vrot.slane %v413, 1
  %v2942 = vrot.slane %v417, 1
  %v2943 = vrot.slane %v423, 1
  %v2944 = vrot.slane %v427, 1
  %v2945 = vrot.slane %v433, 1
  %v2946 = vrot.slane %v437, 1
  %v2947 = vrot.slane %v443, 1
  %v2948 = vrot.slane %v447, 1
  %v2949 = vrot.slane %v453, 1
  %v2950 = vrot.slane %v457, 1
  %v2951 = vrot.slane %v463, 1
  %v2952 = vrot.slane %v467, 1
  %v2953 = vrot.slane %v473, 1
  %v2954 = vrot.slane %v477, 1
  %v2955 = vrot.slane %v483, 1
  %v2956 = vrot.slane %v487, 1
  %v2957 = vrot.slane %v493, 1
  %v2958 = vrot.slane %v497, 1
  %v2959 = vrot.slane %v503, 1
  %v2960 = vrot.slane %v507, 1
  %v2961 = vrot.slane %v513, 1
  %v2962 = vrot.slane %v517, 1
  %v2963 = vrot.slane %v523, 1
  %v2964 = vrot.slane %v527, 1
  %v2965 = vrot.slane %v533, 1
  %v2966 = vrot.slane %v537, 1
  %v2967 = vrot.slane %v543, 1
  %v2968 = vrot.slane %v547, 1
  %v2969 = vrot.slane %v553, 1
  %v2970 = vrot.slane %v557, 1
  %v2971 = vrot.slane %v563, 1
  %v2972 = vrot.slane %v567, 1
  %v2973 = vrot.slane %v573, 1
  %v2974 = vrot.slane %v577, 1
  %v2975 = vrot.slane %v583, 1
  %v2976 = vrot.slane %v587, 1
  %v2977 = vrot.slane %v593, 1
  %v2978 = vrot.slane %v597, 1
  %v2979 = vrot.slane %v603, 1
  %v2980 = vrot.slane %v607, 1
  %v2981 = vrot.slane %v613, 1
  %v2982 = vrot.slane %v617, 1
  %v2983 = vrot.slane %v623, 1
  %v2984 = vrot.slane %v627, 1
  %v2985 = vrot.slane %v633, 1
  %v2986 = vrot.slane %v637, 1
  %v2987 = vrot.slane %v643, 1
  %v2988 = vrot.slane %v647, 1
  %v2989 = vrot.slane %v653, 1
  %v2990 = vrot.slane %v657, 1
  %v2991 = vrot.slane %v663, 1
  %v2992 = vrot.slane %v667, 1
  %v2993 = vrot.slane %v673, 1
  %v2994 = vrot.slane %v677, 1
  %v2995 = vrot.slane %v683, 1
  %v2996 = vrot.slane %v687, 1
  %v2997 = vrot.slane %v693, 1
  %v2998 = vrot.slane %v697, 1
  %v2999 = vrot.slane %v703, 1
  %v3000 = vrot.slane %v707, 1
  %3001 = vrot.lane.b32.xlu0 %v2937, 96
  %v3002 = vpop.permute.xlu0 %3001
  %3003 = vrot.lane.b32.xlu0 %v2938, 96
  %v3004 = vpop.permute.xlu0 %3003
  %3005 = vrot.lane.b32.xlu0 %v2939, 96
  %v3006 = vpop.permute.xlu0 %3005
  %3007 = vrot.lane.b32.xlu0 %v2940, 96
  %v3008 = vpop.permute.xlu0 %3007
  %3009 = vrot.lane.b32.xlu0 %v2941, 96
  %v3010 = vpop.permute.xlu0 %3009
  %3011 = vrot.lane.b32.xlu0 %v2942, 96
  %v3012 = vpop.permute.xlu0 %3011
  %3013 = vrot.lane.b32.xlu0 %v2943, 96
  %v3014 = vpop.permute.xlu0 %3013
  %3015 = vrot.lane.b32.xlu0 %v2944, 96
  %v3016 = vpop.permute.xlu0 %3015
  %3017 = vrot.lane.b32.xlu0 %v2945, 96
  %v3018 = vpop.permute.xlu0 %3017
  %3019 = vrot.lane.b32.xlu0 %v2946, 96
  %v3020 = vpop.permute.xlu0 %3019
  %3021 = vrot.lane.b32.xlu0 %v2947, 96
  %v3022 = vpop.permute.xlu0 %3021
  %3023 = vrot.lane.b32.xlu0 %v2948, 96
  %v3024 = vpop.permute.xlu0 %3023
  %3025 = vrot.lane.b32.xlu0 %v2949, 96
  %v3026 = vpop.permute.xlu0 %3025
  %3027 = vrot.lane.b32.xlu0 %v2950, 96
  %v3028 = vpop.permute.xlu0 %3027
  %3029 = vrot.lane.b32.xlu0 %v2951, 96
  %v3030 = vpop.permute.xlu0 %3029
  %3031 = vrot.lane.b32.xlu0 %v2952, 96
  %v3032 = vpop.permute.xlu0 %3031
  %3033 = vrot.lane.b32.xlu0 %v2953, 96
  %v3034 = vpop.permute.xlu0 %3033
  %3035 = vrot.lane.b32.xlu0 %v2954, 96
  %v3036 = vpop.permute.xlu0 %3035
  %3037 = vrot.lane.b32.xlu0 %v2955, 96
  %v3038 = vpop.permute.xlu0 %3037
  %3039 = vrot.lane.b32.xlu0 %v2956, 96
  %v3040 = vpop.permute.xlu0 %3039
  %3041 = vrot.lane.b32.xlu0 %v2957, 96
  %v3042 = vpop.permute.xlu0 %3041
  %3043 = vrot.lane.b32.xlu0 %v2958, 96
  %v3044 = vpop.permute.xlu0 %3043
  %3045 = vrot.lane.b32.xlu0 %v2959, 96
  %v3046 = vpop.permute.xlu0 %3045
  %3047 = vrot.lane.b32.xlu0 %v2960, 96
  %v3048 = vpop.permute.xlu0 %3047
  %3049 = vrot.lane.b32.xlu0 %v2961, 96
  %v3050 = vpop.permute.xlu0 %3049
  %3051 = vrot.lane.b32.xlu0 %v2962, 96
  %v3052 = vpop.permute.xlu0 %3051
  %3053 = vrot.lane.b32.xlu0 %v2963, 96
  %v3054 = vpop.permute.xlu0 %3053
  %3055 = vrot.lane.b32.xlu0 %v2964, 96
  %v3056 = vpop.permute.xlu0 %3055
  %3057 = vrot.lane.b32.xlu0 %v2965, 96
  %v3058 = vpop.permute.xlu0 %3057
  %3059 = vrot.lane.b32.xlu0 %v2966, 96
  %v3060 = vpop.permute.xlu0 %3059
  %3061 = vrot.lane.b32.xlu0 %v2967, 96
  %v3062 = vpop.permute.xlu0 %3061
  %3063 = vrot.lane.b32.xlu0 %v2968, 96
  %v3064 = vpop.permute.xlu0 %3063
  %3065 = vrot.lane.b32.xlu0 %v2969, 96
  %v3066 = vpop.permute.xlu0 %3065
  %3067 = vrot.lane.b32.xlu0 %v2970, 96
  %v3068 = vpop.permute.xlu0 %3067
  %3069 = vrot.lane.b32.xlu0 %v2971, 96
  %v3070 = vpop.permute.xlu0 %3069
  %3071 = vrot.lane.b32.xlu0 %v2972, 96
  %v3072 = vpop.permute.xlu0 %3071
  %3073 = vrot.lane.b32.xlu0 %v2973, 96
  %v3074 = vpop.permute.xlu0 %3073
  %3075 = vrot.lane.b32.xlu0 %v2974, 96
  %v3076 = vpop.permute.xlu0 %3075
  %3077 = vrot.lane.b32.xlu0 %v2975, 96
  %v3078 = vpop.permute.xlu0 %3077
  %3079 = vrot.lane.b32.xlu0 %v2976, 96
  %v3080 = vpop.permute.xlu0 %3079
  %3081 = vrot.lane.b32.xlu0 %v2977, 96
  %v3082 = vpop.permute.xlu0 %3081
  %3083 = vrot.lane.b32.xlu0 %v2978, 96
  %v3084 = vpop.permute.xlu0 %3083
  %3085 = vrot.lane.b32.xlu0 %v2979, 96
  %v3086 = vpop.permute.xlu0 %3085
  %3087 = vrot.lane.b32.xlu0 %v2980, 96
  %v3088 = vpop.permute.xlu0 %3087
  %3089 = vrot.lane.b32.xlu0 %v2981, 96
  %v3090 = vpop.permute.xlu0 %3089
  %3091 = vrot.lane.b32.xlu0 %v2982, 96
  %v3092 = vpop.permute.xlu0 %3091
  %3093 = vrot.lane.b32.xlu0 %v2983, 96
  %v3094 = vpop.permute.xlu0 %3093
  %3095 = vrot.lane.b32.xlu0 %v2984, 96
  %v3096 = vpop.permute.xlu0 %3095
  %3097 = vrot.lane.b32.xlu0 %v2985, 96
  %v3098 = vpop.permute.xlu0 %3097
  %3099 = vrot.lane.b32.xlu0 %v2986, 96
  %v3100 = vpop.permute.xlu0 %3099
  %3101 = vrot.lane.b32.xlu0 %v2987, 96
  %v3102 = vpop.permute.xlu0 %3101
  %3103 = vrot.lane.b32.xlu0 %v2988, 96
  %v3104 = vpop.permute.xlu0 %3103
  %3105 = vrot.lane.b32.xlu0 %v2989, 96
  %v3106 = vpop.permute.xlu0 %3105
  %3107 = vrot.lane.b32.xlu0 %v2990, 96
  %v3108 = vpop.permute.xlu0 %3107
  %3109 = vrot.lane.b32.xlu0 %v2991, 96
  %v3110 = vpop.permute.xlu0 %3109
  %3111 = vrot.lane.b32.xlu0 %v2992, 96
  %v3112 = vpop.permute.xlu0 %3111
  %3113 = vrot.lane.b32.xlu0 %v2993, 96
  %v3114 = vpop.permute.xlu0 %3113
  %3115 = vrot.lane.b32.xlu0 %v2994, 96
  %v3116 = vpop.permute.xlu0 %3115
  %3117 = vrot.lane.b32.xlu0 %v2995, 96
  %v3118 = vpop.permute.xlu0 %3117
  %3119 = vrot.lane.b32.xlu0 %v2996, 96
  %v3120 = vpop.permute.xlu0 %3119
  %3121 = vrot.lane.b32.xlu0 %v2997, 96
  %v3122 = vpop.permute.xlu0 %3121
  %3123 = vrot.lane.b32.xlu0 %v2998, 96
  %v3124 = vpop.permute.xlu0 %3123
  %3125 = vrot.lane.b32.xlu0 %v2999, 96
  %v3126 = vpop.permute.xlu0 %3125
  %3127 = vrot.lane.b32.xlu0 %v3000, 96
  %v3128 = vpop.permute.xlu0 %3127
  %v3193 = vadd.f32 %v393, %v3002
  %v3194 = vadd.f32 %v397, %v3004
  %v3195 = vadd.f32 %v403, %v3006
  %v3196 = vadd.f32 %v407, %v3008
  %v3197 = vadd.f32 %v413, %v3010
  %v3198 = vadd.f32 %v417, %v3012
  %v3199 = vadd.f32 %v423, %v3014
  %v3200 = vadd.f32 %v427, %v3016
  %v3201 = vadd.f32 %v433, %v3018
  %v3202 = vadd.f32 %v437, %v3020
  %v3203 = vadd.f32 %v443, %v3022
  %v3204 = vadd.f32 %v447, %v3024
  %v3205 = vadd.f32 %v453, %v3026
  %v3206 = vadd.f32 %v457, %v3028
  %v3207 = vadd.f32 %v463, %v3030
  %v3208 = vadd.f32 %v467, %v3032
  %v3209 = vadd.f32 %v473, %v3034
  %v3210 = vadd.f32 %v477, %v3036
  %v3211 = vadd.f32 %v483, %v3038
  %v3212 = vadd.f32 %v487, %v3040
  %v3213 = vadd.f32 %v493, %v3042
  %v3214 = vadd.f32 %v497, %v3044
  %v3215 = vadd.f32 %v503, %v3046
  %v3216 = vadd.f32 %v507, %v3048
  %v3217 = vadd.f32 %v513, %v3050
  %v3218 = vadd.f32 %v517, %v3052
  %v3219 = vadd.f32 %v523, %v3054
  %v3220 = vadd.f32 %v527, %v3056
  %v3221 = vadd.f32 %v533, %v3058
  %v3222 = vadd.f32 %v537, %v3060
  %v3223 = vadd.f32 %v543, %v3062
  %v3224 = vadd.f32 %v547, %v3064
  %v3225 = vadd.f32 %v553, %v3066
  %v3226 = vadd.f32 %v557, %v3068
  %v3227 = vadd.f32 %v563, %v3070
  %v3228 = vadd.f32 %v567, %v3072
  %v3229 = vadd.f32 %v573, %v3074
  %v3230 = vadd.f32 %v577, %v3076
  %v3231 = vadd.f32 %v583, %v3078
  %v3232 = vadd.f32 %v587, %v3080
  %v3233 = vadd.f32 %v593, %v3082
  %v3234 = vadd.f32 %v597, %v3084
  %v3235 = vadd.f32 %v603, %v3086
  %v3236 = vadd.f32 %v607, %v3088
  %v3237 = vadd.f32 %v613, %v3090
  %v3238 = vadd.f32 %v617, %v3092
  %v3239 = vadd.f32 %v623, %v3094
  %v3240 = vadd.f32 %v627, %v3096
  %v3241 = vadd.f32 %v633, %v3098
  %v3242 = vadd.f32 %v637, %v3100
  %v3243 = vadd.f32 %v643, %v3102
  %v3244 = vadd.f32 %v647, %v3104
  %v3245 = vadd.f32 %v653, %v3106
  %v3246 = vadd.f32 %v657, %v3108
  %v3247 = vadd.f32 %v663, %v3110
  %v3248 = vadd.f32 %v667, %v3112
  %v3249 = vadd.f32 %v673, %v3114
  %v3250 = vadd.f32 %v677, %v3116
  %v3251 = vadd.f32 %v683, %v3118
  %v3252 = vadd.f32 %v687, %v3120
  %v3253 = vadd.f32 %v693, %v3122
  %v3254 = vadd.f32 %v697, %v3124
  %v3255 = vadd.f32 %v703, %v3126
  %v3256 = vadd.f32 %v707, %v3128
  %v3257 = vrot.slane %v393, 2
  %v3258 = vrot.slane %v397, 2
  %v3259 = vrot.slane %v403, 2
  %v3260 = vrot.slane %v407, 2
  %v3261 = vrot.slane %v413, 2
  %v3262 = vrot.slane %v417, 2
  %v3263 = vrot.slane %v423, 2
  %v3264 = vrot.slane %v427, 2
  %v3265 = vrot.slane %v433, 2
  %v3266 = vrot.slane %v437, 2
  %v3267 = vrot.slane %v443, 2
  %v3268 = vrot.slane %v447, 2
  %v3269 = vrot.slane %v453, 2
  %v3270 = vrot.slane %v457, 2
  %v3271 = vrot.slane %v463, 2
  %v3272 = vrot.slane %v467, 2
  %v3273 = vrot.slane %v473, 2
  %v3274 = vrot.slane %v477, 2
  %v3275 = vrot.slane %v483, 2
  %v3276 = vrot.slane %v487, 2
  %v3277 = vrot.slane %v493, 2
  %v3278 = vrot.slane %v497, 2
  %v3279 = vrot.slane %v503, 2
  %v3280 = vrot.slane %v507, 2
  %v3281 = vrot.slane %v513, 2
  %v3282 = vrot.slane %v517, 2
  %v3283 = vrot.slane %v523, 2
  %v3284 = vrot.slane %v527, 2
  %v3285 = vrot.slane %v533, 2
  %v3286 = vrot.slane %v537, 2
  %v3287 = vrot.slane %v543, 2
  %v3288 = vrot.slane %v547, 2
  %v3289 = vrot.slane %v553, 2
  %v3290 = vrot.slane %v557, 2
  %v3291 = vrot.slane %v563, 2
  %v3292 = vrot.slane %v567, 2
  %v3293 = vrot.slane %v573, 2
  %v3294 = vrot.slane %v577, 2
  %v3295 = vrot.slane %v583, 2
  %v3296 = vrot.slane %v587, 2
  %v3297 = vrot.slane %v593, 2
  %v3298 = vrot.slane %v597, 2
  %v3299 = vrot.slane %v603, 2
  %v3300 = vrot.slane %v607, 2
  %v3301 = vrot.slane %v613, 2
  %v3302 = vrot.slane %v617, 2
  %v3303 = vrot.slane %v623, 2
  %v3304 = vrot.slane %v627, 2
  %v3305 = vrot.slane %v633, 2
  %v3306 = vrot.slane %v637, 2
  %v3307 = vrot.slane %v643, 2
  %v3308 = vrot.slane %v647, 2
  %v3309 = vrot.slane %v653, 2
  %v3310 = vrot.slane %v657, 2
  %v3311 = vrot.slane %v663, 2
  %v3312 = vrot.slane %v667, 2
  %v3313 = vrot.slane %v673, 2
  %v3314 = vrot.slane %v677, 2
  %v3315 = vrot.slane %v683, 2
  %v3316 = vrot.slane %v687, 2
  %v3317 = vrot.slane %v693, 2
  %v3318 = vrot.slane %v697, 2
  %v3319 = vrot.slane %v703, 2
  %v3320 = vrot.slane %v707, 2
  %3321 = vrot.lane.b32.xlu0 %v3257, 64
  %v3322 = vpop.permute.xlu0 %3321
  %3323 = vrot.lane.b32.xlu0 %v3258, 64
  %v3324 = vpop.permute.xlu0 %3323
  %3325 = vrot.lane.b32.xlu0 %v3259, 64
  %v3326 = vpop.permute.xlu0 %3325
  %3327 = vrot.lane.b32.xlu0 %v3260, 64
  %v3328 = vpop.permute.xlu0 %3327
  %3329 = vrot.lane.b32.xlu0 %v3261, 64
  %v3330 = vpop.permute.xlu0 %3329
  %3331 = vrot.lane.b32.xlu0 %v3262, 64
  %v3332 = vpop.permute.xlu0 %3331
  %3333 = vrot.lane.b32.xlu0 %v3263, 64
  %v3334 = vpop.permute.xlu0 %3333
  %3335 = vrot.lane.b32.xlu0 %v3264, 64
  %v3336 = vpop.permute.xlu0 %3335
  %3337 = vrot.lane.b32.xlu0 %v3265, 64
  %v3338 = vpop.permute.xlu0 %3337
  %3339 = vrot.lane.b32.xlu0 %v3266, 64
  %v3340 = vpop.permute.xlu0 %3339
  %3341 = vrot.lane.b32.xlu0 %v3267, 64
  %v3342 = vpop.permute.xlu0 %3341
  %3343 = vrot.lane.b32.xlu0 %v3268, 64
  %v3344 = vpop.permute.xlu0 %3343
  %3345 = vrot.lane.b32.xlu0 %v3269, 64
  %v3346 = vpop.permute.xlu0 %3345
  %3347 = vrot.lane.b32.xlu0 %v3270, 64
  %v3348 = vpop.permute.xlu0 %3347
  %3349 = vrot.lane.b32.xlu0 %v3271, 64
  %v3350 = vpop.permute.xlu0 %3349
  %3351 = vrot.lane.b32.xlu0 %v3272, 64
  %v3352 = vpop.permute.xlu0 %3351
  %3353 = vrot.lane.b32.xlu0 %v3273, 64
  %v3354 = vpop.permute.xlu0 %3353
  %3355 = vrot.lane.b32.xlu0 %v3274, 64
  %v3356 = vpop.permute.xlu0 %3355
  %3357 = vrot.lane.b32.xlu0 %v3275, 64
  %v3358 = vpop.permute.xlu0 %3357
  %3359 = vrot.lane.b32.xlu0 %v3276, 64
  %v3360 = vpop.permute.xlu0 %3359
  %3361 = vrot.lane.b32.xlu0 %v3277, 64
  %v3362 = vpop.permute.xlu0 %3361
  %3363 = vrot.lane.b32.xlu0 %v3278, 64
  %v3364 = vpop.permute.xlu0 %3363
  %3365 = vrot.lane.b32.xlu0 %v3279, 64
  %v3366 = vpop.permute.xlu0 %3365
  %3367 = vrot.lane.b32.xlu0 %v3280, 64
  %v3368 = vpop.permute.xlu0 %3367
  %3369 = vrot.lane.b32.xlu0 %v3281, 64
  %v3370 = vpop.permute.xlu0 %3369
  %3371 = vrot.lane.b32.xlu0 %v3282, 64
  %v3372 = vpop.permute.xlu0 %3371
  %3373 = vrot.lane.b32.xlu0 %v3283, 64
  %v3374 = vpop.permute.xlu0 %3373
  %3375 = vrot.lane.b32.xlu0 %v3284, 64
  %v3376 = vpop.permute.xlu0 %3375
  %3377 = vrot.lane.b32.xlu0 %v3285, 64
  %v3378 = vpop.permute.xlu0 %3377
  %3379 = vrot.lane.b32.xlu0 %v3286, 64
  %v3380 = vpop.permute.xlu0 %3379
  %3381 = vrot.lane.b32.xlu0 %v3287, 64
  %v3382 = vpop.permute.xlu0 %3381
  %3383 = vrot.lane.b32.xlu0 %v3288, 64
  %v3384 = vpop.permute.xlu0 %3383
  %3385 = vrot.lane.b32.xlu0 %v3289, 64
  %v3386 = vpop.permute.xlu0 %3385
  %3387 = vrot.lane.b32.xlu0 %v3290, 64
  %v3388 = vpop.permute.xlu0 %3387
  %3389 = vrot.lane.b32.xlu0 %v3291, 64
  %v3390 = vpop.permute.xlu0 %3389
  %3391 = vrot.lane.b32.xlu0 %v3292, 64
  %v3392 = vpop.permute.xlu0 %3391
  %3393 = vrot.lane.b32.xlu0 %v3293, 64
  %v3394 = vpop.permute.xlu0 %3393
  %3395 = vrot.lane.b32.xlu0 %v3294, 64
  %v3396 = vpop.permute.xlu0 %3395
  %3397 = vrot.lane.b32.xlu0 %v3295, 64
  %v3398 = vpop.permute.xlu0 %3397
  %3399 = vrot.lane.b32.xlu0 %v3296, 64
  %v3400 = vpop.permute.xlu0 %3399
  %3401 = vrot.lane.b32.xlu0 %v3297, 64
  %v3402 = vpop.permute.xlu0 %3401
  %3403 = vrot.lane.b32.xlu0 %v3298, 64
  %v3404 = vpop.permute.xlu0 %3403
  %3405 = vrot.lane.b32.xlu0 %v3299, 64
  %v3406 = vpop.permute.xlu0 %3405
  %3407 = vrot.lane.b32.xlu0 %v3300, 64
  %v3408 = vpop.permute.xlu0 %3407
  %3409 = vrot.lane.b32.xlu0 %v3301, 64
  %v3410 = vpop.permute.xlu0 %3409
  %3411 = vrot.lane.b32.xlu0 %v3302, 64
  %v3412 = vpop.permute.xlu0 %3411
  %3413 = vrot.lane.b32.xlu0 %v3303, 64
  %v3414 = vpop.permute.xlu0 %3413
  %3415 = vrot.lane.b32.xlu0 %v3304, 64
  %v3416 = vpop.permute.xlu0 %3415
  %3417 = vrot.lane.b32.xlu0 %v3305, 64
  %v3418 = vpop.permute.xlu0 %3417
  %3419 = vrot.lane.b32.xlu0 %v3306, 64
  %v3420 = vpop.permute.xlu0 %3419
  %3421 = vrot.lane.b32.xlu0 %v3307, 64
  %v3422 = vpop.permute.xlu0 %3421
  %3423 = vrot.lane.b32.xlu0 %v3308, 64
  %v3424 = vpop.permute.xlu0 %3423
  %3425 = vrot.lane.b32.xlu0 %v3309, 64
  %v3426 = vpop.permute.xlu0 %3425
  %3427 = vrot.lane.b32.xlu0 %v3310, 64
  %v3428 = vpop.permute.xlu0 %3427
  %3429 = vrot.lane.b32.xlu0 %v3311, 64
  %v3430 = vpop.permute.xlu0 %3429
  %3431 = vrot.lane.b32.xlu0 %v3312, 64
  %v3432 = vpop.permute.xlu0 %3431
  %3433 = vrot.lane.b32.xlu0 %v3313, 64
  %v3434 = vpop.permute.xlu0 %3433
  %3435 = vrot.lane.b32.xlu0 %v3314, 64
  %v3436 = vpop.permute.xlu0 %3435
  %3437 = vrot.lane.b32.xlu0 %v3315, 64
  %v3438 = vpop.permute.xlu0 %3437
  %3439 = vrot.lane.b32.xlu0 %v3316, 64
  %v3440 = vpop.permute.xlu0 %3439
  %3441 = vrot.lane.b32.xlu0 %v3317, 64
  %v3442 = vpop.permute.xlu0 %3441
  %3443 = vrot.lane.b32.xlu0 %v3318, 64
  %v3444 = vpop.permute.xlu0 %3443
  %3445 = vrot.lane.b32.xlu0 %v3319, 64
  %v3446 = vpop.permute.xlu0 %3445
  %3447 = vrot.lane.b32.xlu0 %v3320, 64
  %v3448 = vpop.permute.xlu0 %3447
  %v3513 = vadd.f32 %v3193, %v3322
  %v3514 = vadd.f32 %v3194, %v3324
  %v3515 = vadd.f32 %v3195, %v3326
  %v3516 = vadd.f32 %v3196, %v3328
  %v3517 = vadd.f32 %v3197, %v3330
  %v3518 = vadd.f32 %v3198, %v3332
  %v3519 = vadd.f32 %v3199, %v3334
  %v3520 = vadd.f32 %v3200, %v3336
  %v3521 = vadd.f32 %v3201, %v3338
  %v3522 = vadd.f32 %v3202, %v3340
  %v3523 = vadd.f32 %v3203, %v3342
  %v3524 = vadd.f32 %v3204, %v3344
  %v3525 = vadd.f32 %v3205, %v3346
  %v3526 = vadd.f32 %v3206, %v3348
  %v3527 = vadd.f32 %v3207, %v3350
  %v3528 = vadd.f32 %v3208, %v3352
  %v3529 = vadd.f32 %v3209, %v3354
  %v3530 = vadd.f32 %v3210, %v3356
  %v3531 = vadd.f32 %v3211, %v3358
  %v3532 = vadd.f32 %v3212, %v3360
  %v3533 = vadd.f32 %v3213, %v3362
  %v3534 = vadd.f32 %v3214, %v3364
  %v3535 = vadd.f32 %v3215, %v3366
  %v3536 = vadd.f32 %v3216, %v3368
  %v3537 = vadd.f32 %v3217, %v3370
  %v3538 = vadd.f32 %v3218, %v3372
  %v3539 = vadd.f32 %v3219, %v3374
  %v3540 = vadd.f32 %v3220, %v3376
  %v3541 = vadd.f32 %v3221, %v3378
  %v3542 = vadd.f32 %v3222, %v3380
  %v3543 = vadd.f32 %v3223, %v3382
  %v3544 = vadd.f32 %v3224, %v3384
  %v3545 = vadd.f32 %v3225, %v3386
  %v3546 = vadd.f32 %v3226, %v3388
  %v3547 = vadd.f32 %v3227, %v3390
  %v3548 = vadd.f32 %v3228, %v3392
  %v3549 = vadd.f32 %v3229, %v3394
  %v3550 = vadd.f32 %v3230, %v3396
  %v3551 = vadd.f32 %v3231, %v3398
  %v3552 = vadd.f32 %v3232, %v3400
  %v3553 = vadd.f32 %v3233, %v3402
  %v3554 = vadd.f32 %v3234, %v3404
  %v3555 = vadd.f32 %v3235, %v3406
  %v3556 = vadd.f32 %v3236, %v3408
  %v3557 = vadd.f32 %v3237, %v3410
  %v3558 = vadd.f32 %v3238, %v3412
  %v3559 = vadd.f32 %v3239, %v3414
  %v3560 = vadd.f32 %v3240, %v3416
  %v3561 = vadd.f32 %v3241, %v3418
  %v3562 = vadd.f32 %v3242, %v3420
  %v3563 = vadd.f32 %v3243, %v3422
  %v3564 = vadd.f32 %v3244, %v3424
  %v3565 = vadd.f32 %v3245, %v3426
  %v3566 = vadd.f32 %v3246, %v3428
  %v3567 = vadd.f32 %v3247, %v3430
  %v3568 = vadd.f32 %v3248, %v3432
  %v3569 = vadd.f32 %v3249, %v3434
  %v3570 = vadd.f32 %v3250, %v3436
  %v3571 = vadd.f32 %v3251, %v3438
  %v3572 = vadd.f32 %v3252, %v3440
  %v3573 = vadd.f32 %v3253, %v3442
  %v3574 = vadd.f32 %v3254, %v3444
  %v3575 = vadd.f32 %v3255, %v3446
  %v3576 = vadd.f32 %v3256, %v3448
  %v3577 = vrot.slane %v393, 3
  %v3578 = vrot.slane %v397, 3
  %v3579 = vrot.slane %v403, 3
  %v3580 = vrot.slane %v407, 3
  %v3581 = vrot.slane %v413, 3
  %v3582 = vrot.slane %v417, 3
  %v3583 = vrot.slane %v423, 3
  %v3584 = vrot.slane %v427, 3
  %v3585 = vrot.slane %v433, 3
  %v3586 = vrot.slane %v437, 3
  %v3587 = vrot.slane %v443, 3
  %v3588 = vrot.slane %v447, 3
  %v3589 = vrot.slane %v453, 3
  %v3590 = vrot.slane %v457, 3
  %v3591 = vrot.slane %v463, 3
  %v3592 = vrot.slane %v467, 3
  %v3593 = vrot.slane %v473, 3
  %v3594 = vrot.slane %v477, 3
  %v3595 = vrot.slane %v483, 3
  %v3596 = vrot.slane %v487, 3
  %v3597 = vrot.slane %v493, 3
  %v3598 = vrot.slane %v497, 3
  %v3599 = vrot.slane %v503, 3
  %v3600 = vrot.slane %v507, 3
  %v3601 = vrot.slane %v513, 3
  %v3602 = vrot.slane %v517, 3
  %v3603 = vrot.slane %v523, 3
  %v3604 = vrot.slane %v527, 3
  %v3605 = vrot.slane %v533, 3
  %v3606 = vrot.slane %v537, 3
  %v3607 = vrot.slane %v543, 3
  %v3608 = vrot.slane %v547, 3
  %v3609 = vrot.slane %v553, 3
  %v3610 = vrot.slane %v557, 3
  %v3611 = vrot.slane %v563, 3
  %v3612 = vrot.slane %v567, 3
  %v3613 = vrot.slane %v573, 3
  %v3614 = vrot.slane %v577, 3
  %v3615 = vrot.slane %v583, 3
  %v3616 = vrot.slane %v587, 3
  %v3617 = vrot.slane %v593, 3
  %v3618 = vrot.slane %v597, 3
  %v3619 = vrot.slane %v603, 3
  %v3620 = vrot.slane %v607, 3
  %v3621 = vrot.slane %v613, 3
  %v3622 = vrot.slane %v617, 3
  %v3623 = vrot.slane %v623, 3
  %v3624 = vrot.slane %v627, 3
  %v3625 = vrot.slane %v633, 3
  %v3626 = vrot.slane %v637, 3
  %v3627 = vrot.slane %v643, 3
  %v3628 = vrot.slane %v647, 3
  %v3629 = vrot.slane %v653, 3
  %v3630 = vrot.slane %v657, 3
  %v3631 = vrot.slane %v663, 3
  %v3632 = vrot.slane %v667, 3
  %v3633 = vrot.slane %v673, 3
  %v3634 = vrot.slane %v677, 3
  %v3635 = vrot.slane %v683, 3
  %v3636 = vrot.slane %v687, 3
  %v3637 = vrot.slane %v693, 3
  %v3638 = vrot.slane %v697, 3
  %v3639 = vrot.slane %v703, 3
  %v3640 = vrot.slane %v707, 3
  %3641 = vrot.lane.b32.xlu0 %v3577, 32
  %v3642 = vpop.permute.xlu0 %3641
  %3643 = vrot.lane.b32.xlu0 %v3578, 32
  %v3644 = vpop.permute.xlu0 %3643
  %3645 = vrot.lane.b32.xlu0 %v3579, 32
  %v3646 = vpop.permute.xlu0 %3645
  %3647 = vrot.lane.b32.xlu0 %v3580, 32
  %v3648 = vpop.permute.xlu0 %3647
  %3649 = vrot.lane.b32.xlu0 %v3581, 32
  %v3650 = vpop.permute.xlu0 %3649
  %3651 = vrot.lane.b32.xlu0 %v3582, 32
  %v3652 = vpop.permute.xlu0 %3651
  %3653 = vrot.lane.b32.xlu0 %v3583, 32
  %v3654 = vpop.permute.xlu0 %3653
  %3655 = vrot.lane.b32.xlu0 %v3584, 32
  %v3656 = vpop.permute.xlu0 %3655
  %3657 = vrot.lane.b32.xlu0 %v3585, 32
  %v3658 = vpop.permute.xlu0 %3657
  %3659 = vrot.lane.b32.xlu0 %v3586, 32
  %v3660 = vpop.permute.xlu0 %3659
  %3661 = vrot.lane.b32.xlu0 %v3587, 32
  %v3662 = vpop.permute.xlu0 %3661
  %3663 = vrot.lane.b32.xlu0 %v3588, 32
  %v3664 = vpop.permute.xlu0 %3663
  %3665 = vrot.lane.b32.xlu0 %v3589, 32
  %v3666 = vpop.permute.xlu0 %3665
  %3667 = vrot.lane.b32.xlu0 %v3590, 32
  %v3668 = vpop.permute.xlu0 %3667
  %3669 = vrot.lane.b32.xlu0 %v3591, 32
  %v3670 = vpop.permute.xlu0 %3669
  %3671 = vrot.lane.b32.xlu0 %v3592, 32
  %v3672 = vpop.permute.xlu0 %3671
  %3673 = vrot.lane.b32.xlu0 %v3593, 32
  %v3674 = vpop.permute.xlu0 %3673
  %3675 = vrot.lane.b32.xlu0 %v3594, 32
  %v3676 = vpop.permute.xlu0 %3675
  %3677 = vrot.lane.b32.xlu0 %v3595, 32
  %v3678 = vpop.permute.xlu0 %3677
  %3679 = vrot.lane.b32.xlu0 %v3596, 32
  %v3680 = vpop.permute.xlu0 %3679
  %3681 = vrot.lane.b32.xlu0 %v3597, 32
  %v3682 = vpop.permute.xlu0 %3681
  %3683 = vrot.lane.b32.xlu0 %v3598, 32
  %v3684 = vpop.permute.xlu0 %3683
  %3685 = vrot.lane.b32.xlu0 %v3599, 32
  %v3686 = vpop.permute.xlu0 %3685
  %3687 = vrot.lane.b32.xlu0 %v3600, 32
  %v3688 = vpop.permute.xlu0 %3687
  %3689 = vrot.lane.b32.xlu0 %v3601, 32
  %v3690 = vpop.permute.xlu0 %3689
  %3691 = vrot.lane.b32.xlu0 %v3602, 32
  %v3692 = vpop.permute.xlu0 %3691
  %3693 = vrot.lane.b32.xlu0 %v3603, 32
  %v3694 = vpop.permute.xlu0 %3693
  %3695 = vrot.lane.b32.xlu0 %v3604, 32
  %v3696 = vpop.permute.xlu0 %3695
  %3697 = vrot.lane.b32.xlu0 %v3605, 32
  %v3698 = vpop.permute.xlu0 %3697
  %3699 = vrot.lane.b32.xlu0 %v3606, 32
  %v3700 = vpop.permute.xlu0 %3699
  %3701 = vrot.lane.b32.xlu0 %v3607, 32
  %v3702 = vpop.permute.xlu0 %3701
  %3703 = vrot.lane.b32.xlu0 %v3608, 32
  %v3704 = vpop.permute.xlu0 %3703
  %3705 = vrot.lane.b32.xlu0 %v3609, 32
  %v3706 = vpop.permute.xlu0 %3705
  %3707 = vrot.lane.b32.xlu0 %v3610, 32
  %v3708 = vpop.permute.xlu0 %3707
  %3709 = vrot.lane.b32.xlu0 %v3611, 32
  %v3710 = vpop.permute.xlu0 %3709
  %3711 = vrot.lane.b32.xlu0 %v3612, 32
  %v3712 = vpop.permute.xlu0 %3711
  %3713 = vrot.lane.b32.xlu0 %v3613, 32
  %v3714 = vpop.permute.xlu0 %3713
  %3715 = vrot.lane.b32.xlu0 %v3614, 32
  %v3716 = vpop.permute.xlu0 %3715
  %3717 = vrot.lane.b32.xlu0 %v3615, 32
  %v3718 = vpop.permute.xlu0 %3717
  %3719 = vrot.lane.b32.xlu0 %v3616, 32
  %v3720 = vpop.permute.xlu0 %3719
  %3721 = vrot.lane.b32.xlu0 %v3617, 32
  %v3722 = vpop.permute.xlu0 %3721
  %3723 = vrot.lane.b32.xlu0 %v3618, 32
  %v3724 = vpop.permute.xlu0 %3723
  %3725 = vrot.lane.b32.xlu0 %v3619, 32
  %v3726 = vpop.permute.xlu0 %3725
  %3727 = vrot.lane.b32.xlu0 %v3620, 32
  %v3728 = vpop.permute.xlu0 %3727
  %3729 = vrot.lane.b32.xlu0 %v3621, 32
  %v3730 = vpop.permute.xlu0 %3729
  %3731 = vrot.lane.b32.xlu0 %v3622, 32
  %v3732 = vpop.permute.xlu0 %3731
  %3733 = vrot.lane.b32.xlu0 %v3623, 32
  %v3734 = vpop.permute.xlu0 %3733
  %3735 = vrot.lane.b32.xlu0 %v3624, 32
  %v3736 = vpop.permute.xlu0 %3735
  %3737 = vrot.lane.b32.xlu0 %v3625, 32
  %v3738 = vpop.permute.xlu0 %3737
  %3739 = vrot.lane.b32.xlu0 %v3626, 32
  %v3740 = vpop.permute.xlu0 %3739
  %3741 = vrot.lane.b32.xlu0 %v3627, 32
  %v3742 = vpop.permute.xlu0 %3741
  %3743 = vrot.lane.b32.xlu0 %v3628, 32
  %v3744 = vpop.permute.xlu0 %3743
  %3745 = vrot.lane.b32.xlu0 %v3629, 32
  %v3746 = vpop.permute.xlu0 %3745
  %3747 = vrot.lane.b32.xlu0 %v3630, 32
  %v3748 = vpop.permute.xlu0 %3747
  %3749 = vrot.lane.b32.xlu0 %v3631, 32
  %v3750 = vpop.permute.xlu0 %3749
  %3751 = vrot.lane.b32.xlu0 %v3632, 32
  %v3752 = vpop.permute.xlu0 %3751
  %3753 = vrot.lane.b32.xlu0 %v3633, 32
  %v3754 = vpop.permute.xlu0 %3753
  %3755 = vrot.lane.b32.xlu0 %v3634, 32
  %v3756 = vpop.permute.xlu0 %3755
  %3757 = vrot.lane.b32.xlu0 %v3635, 32
  %v3758 = vpop.permute.xlu0 %3757
  %3759 = vrot.lane.b32.xlu0 %v3636, 32
  %v3760 = vpop.permute.xlu0 %3759
  %3761 = vrot.lane.b32.xlu0 %v3637, 32
  %v3762 = vpop.permute.xlu0 %3761
  %3763 = vrot.lane.b32.xlu0 %v3638, 32
  %v3764 = vpop.permute.xlu0 %3763
  %3765 = vrot.lane.b32.xlu0 %v3639, 32
  %v3766 = vpop.permute.xlu0 %3765
  %3767 = vrot.lane.b32.xlu0 %v3640, 32
  %v3768 = vpop.permute.xlu0 %3767
  %v3833 = vadd.f32 %v3513, %v3642
  %v3834 = vadd.f32 %v3514, %v3644
  %v3835 = vadd.f32 %v3515, %v3646
  %v3836 = vadd.f32 %v3516, %v3648
  %v3837 = vadd.f32 %v3517, %v3650
  %v3838 = vadd.f32 %v3518, %v3652
  %v3839 = vadd.f32 %v3519, %v3654
  %v3840 = vadd.f32 %v3520, %v3656
  %v3841 = vadd.f32 %v3521, %v3658
  %v3842 = vadd.f32 %v3522, %v3660
  %v3843 = vadd.f32 %v3523, %v3662
  %v3844 = vadd.f32 %v3524, %v3664
  %v3845 = vadd.f32 %v3525, %v3666
  %v3846 = vadd.f32 %v3526, %v3668
  %v3847 = vadd.f32 %v3527, %v3670
  %v3848 = vadd.f32 %v3528, %v3672
  %v3849 = vadd.f32 %v3529, %v3674
  %v3850 = vadd.f32 %v3530, %v3676
  %v3851 = vadd.f32 %v3531, %v3678
  %v3852 = vadd.f32 %v3532, %v3680
  %v3853 = vadd.f32 %v3533, %v3682
  %v3854 = vadd.f32 %v3534, %v3684
  %v3855 = vadd.f32 %v3535, %v3686
  %v3856 = vadd.f32 %v3536, %v3688
  %v3857 = vadd.f32 %v3537, %v3690
  %v3858 = vadd.f32 %v3538, %v3692
  %v3859 = vadd.f32 %v3539, %v3694
  %v3860 = vadd.f32 %v3540, %v3696
  %v3861 = vadd.f32 %v3541, %v3698
  %v3862 = vadd.f32 %v3542, %v3700
  %v3863 = vadd.f32 %v3543, %v3702
  %v3864 = vadd.f32 %v3544, %v3704
  %v3865 = vadd.f32 %v3545, %v3706
  %v3866 = vadd.f32 %v3546, %v3708
  %v3867 = vadd.f32 %v3547, %v3710
  %v3868 = vadd.f32 %v3548, %v3712
  %v3869 = vadd.f32 %v3549, %v3714
  %v3870 = vadd.f32 %v3550, %v3716
  %v3871 = vadd.f32 %v3551, %v3718
  %v3872 = vadd.f32 %v3552, %v3720
  %v3873 = vadd.f32 %v3553, %v3722
  %v3874 = vadd.f32 %v3554, %v3724
  %v3875 = vadd.f32 %v3555, %v3726
  %v3876 = vadd.f32 %v3556, %v3728
  %v3877 = vadd.f32 %v3557, %v3730
  %v3878 = vadd.f32 %v3558, %v3732
  %v3879 = vadd.f32 %v3559, %v3734
  %v3880 = vadd.f32 %v3560, %v3736
  %v3881 = vadd.f32 %v3561, %v3738
  %v3882 = vadd.f32 %v3562, %v3740
  %v3883 = vadd.f32 %v3563, %v3742
  %v3884 = vadd.f32 %v3564, %v3744
  %v3885 = vadd.f32 %v3565, %v3746
  %v3886 = vadd.f32 %v3566, %v3748
  %v3887 = vadd.f32 %v3567, %v3750
  %v3888 = vadd.f32 %v3568, %v3752
  %v3889 = vadd.f32 %v3569, %v3754
  %v3890 = vadd.f32 %v3570, %v3756
  %v3891 = vadd.f32 %v3571, %v3758
  %v3892 = vadd.f32 %v3572, %v3760
  %v3893 = vadd.f32 %v3573, %v3762
  %v3894 = vadd.f32 %v3574, %v3764
  %v3895 = vadd.f32 %v3575, %v3766
  %v3896 = vadd.f32 %v3576, %v3768
  %v3961 = vrot.slane %v744, 4
  %v3962 = vrot.slane %v747, 4
  %v3963 = vrot.slane %v752, 4
  %v3964 = vrot.slane %v755, 4
  %v3965 = vrot.slane %v760, 4
  %v3966 = vrot.slane %v763, 4
  %v3967 = vrot.slane %v768, 4
  %v3968 = vrot.slane %v771, 4
  %v3969 = vrot.slane %v776, 4
  %v3970 = vrot.slane %v779, 4
  %v3971 = vrot.slane %v784, 4
  %v3972 = vrot.slane %v787, 4
  %v3973 = vrot.slane %v792, 4
  %v3974 = vrot.slane %v795, 4
  %v3975 = vrot.slane %v800, 4
  %v3976 = vrot.slane %v803, 4
  %v3977 = vrot.slane %v808, 4
  %v3978 = vrot.slane %v811, 4
  %v3979 = vrot.slane %v816, 4
  %v3980 = vrot.slane %v819, 4
  %v3981 = vrot.slane %v824, 4
  %v3982 = vrot.slane %v827, 4
  %v3983 = vrot.slane %v832, 4
  %v3984 = vrot.slane %v835, 4
  %v3985 = vrot.slane %v840, 4
  %v3986 = vrot.slane %v843, 4
  %v3987 = vrot.slane %v848, 4
  %v3988 = vrot.slane %v851, 4
  %v3989 = vrot.slane %v856, 4
  %v3990 = vrot.slane %v859, 4
  %v3991 = vrot.slane %v864, 4
  %v3992 = vrot.slane %v867, 4
  %v3993 = vrot.slane %v872, 4
  %v3994 = vrot.slane %v875, 4
  %v3995 = vrot.slane %v880, 4
  %v3996 = vrot.slane %v883, 4
  %v3997 = vrot.slane %v888, 4
  %v3998 = vrot.slane %v891, 4
  %v3999 = vrot.slane %v896, 4
  %v4000 = vrot.slane %v899, 4
  %v4001 = vrot.slane %v904, 4
  %v4002 = vrot.slane %v907, 4
  %v4003 = vrot.slane %v912, 4
  %v4004 = vrot.slane %v915, 4
  %v4005 = vrot.slane %v920, 4
  %v4006 = vrot.slane %v923, 4
  %v4007 = vrot.slane %v928, 4
  %v4008 = vrot.slane %v931, 4
  %v4009 = vrot.slane %v936, 4
  %v4010 = vrot.slane %v939, 4
  %v4011 = vrot.slane %v944, 4
  %v4012 = vrot.slane %v947, 4
  %v4013 = vrot.slane %v952, 4
  %v4014 = vrot.slane %v955, 4
  %v4015 = vrot.slane %v960, 4
  %v4016 = vrot.slane %v963, 4
  %v4017 = vrot.slane %v968, 4
  %v4018 = vrot.slane %v971, 4
  %v4019 = vrot.slane %v976, 4
  %v4020 = vrot.slane %v979, 4
  %v4021 = vrot.slane %v984, 4
  %v4022 = vrot.slane %v987, 4
  %v4023 = vrot.slane %v992, 4
  %v4024 = vrot.slane %v995, 4
  %v4089 = vadd.f32 %v3833, %v3961
  %v4090 = vadd.f32 %v3834, %v3962
  %v4091 = vadd.f32 %v3835, %v3963
  %v4092 = vadd.f32 %v3836, %v3964
  %v4093 = vadd.f32 %v3837, %v3965
  %v4094 = vadd.f32 %v3838, %v3966
  %v4095 = vadd.f32 %v3839, %v3967
  %v4096 = vadd.f32 %v3840, %v3968
  %v4097 = vadd.f32 %v3841, %v3969
  %v4098 = vadd.f32 %v3842, %v3970
  %v4099 = vadd.f32 %v3843, %v3971
  %v4100 = vadd.f32 %v3844, %v3972
  %v4101 = vadd.f32 %v3845, %v3973
  %v4102 = vadd.f32 %v3846, %v3974
  %v4103 = vadd.f32 %v3847, %v3975
  %v4104 = vadd.f32 %v3848, %v3976
  %v4105 = vadd.f32 %v3849, %v3977
  %v4106 = vadd.f32 %v3850, %v3978
  %v4107 = vadd.f32 %v3851, %v3979
  %v4108 = vadd.f32 %v3852, %v3980
  %v4109 = vadd.f32 %v3853, %v3981
  %v4110 = vadd.f32 %v3854, %v3982
  %v4111 = vadd.f32 %v3855, %v3983
  %v4112 = vadd.f32 %v3856, %v3984
  %v4113 = vadd.f32 %v3857, %v3985
  %v4114 = vadd.f32 %v3858, %v3986
  %v4115 = vadd.f32 %v3859, %v3987
  %v4116 = vadd.f32 %v3860, %v3988
  %v4117 = vadd.f32 %v3861, %v3989
  %v4118 = vadd.f32 %v3862, %v3990
  %v4119 = vadd.f32 %v3863, %v3991
  %v4120 = vadd.f32 %v3864, %v3992
  %v4121 = vadd.f32 %v3865, %v3993
  %v4122 = vadd.f32 %v3866, %v3994
  %v4123 = vadd.f32 %v3867, %v3995
  %v4124 = vadd.f32 %v3868, %v3996
  %v4125 = vadd.f32 %v3869, %v3997
  %v4126 = vadd.f32 %v3870, %v3998
  %v4127 = vadd.f32 %v3871, %v3999
  %v4128 = vadd.f32 %v3872, %v4000
  %v4129 = vadd.f32 %v3873, %v4001
  %v4130 = vadd.f32 %v3874, %v4002
  %v4131 = vadd.f32 %v3875, %v4003
  %v4132 = vadd.f32 %v3876, %v4004
  %v4133 = vadd.f32 %v3877, %v4005
  %v4134 = vadd.f32 %v3878, %v4006
  %v4135 = vadd.f32 %v3879, %v4007
  %v4136 = vadd.f32 %v3880, %v4008
  %v4137 = vadd.f32 %v3881, %v4009
  %v4138 = vadd.f32 %v3882, %v4010
  %v4139 = vadd.f32 %v3883, %v4011
  %v4140 = vadd.f32 %v3884, %v4012
  %v4141 = vadd.f32 %v3885, %v4013
  %v4142 = vadd.f32 %v3886, %v4014
  %v4143 = vadd.f32 %v3887, %v4015
  %v4144 = vadd.f32 %v3888, %v4016
  %v4145 = vadd.f32 %v3889, %v4017
  %v4146 = vadd.f32 %v3890, %v4018
  %v4147 = vadd.f32 %v3891, %v4019
  %v4148 = vadd.f32 %v3892, %v4020
  %v4149 = vadd.f32 %v3893, %v4021
  %v4150 = vadd.f32 %v3894, %v4022
  %v4151 = vadd.f32 %v3895, %v4023
  %v4152 = vadd.f32 %v3896, %v4024
  %vm4153 = vcmask 257024
  %v4154 = vsel %vm4153, %v4089, -inf
  %v4155 = vrot.slane %v4154, 4
  %v4156 = vmax.f32 %v4154, %v4155
  %v4157 = vrot.slane %v4156, 2
  %v4158 = vmax.f32 %v4156, %v4157
  %v4159 = vrot.slane %v4158, 1
  %v4160 = vmax.f32 %v4158, %v4159
  %v4161 = vsel %vm4153, %v4090, -inf
  %v4162 = vrot.slane %v4161, 4
  %v4163 = vmax.f32 %v4161, %v4162
  %v4164 = vrot.slane %v4163, 2
  %v4165 = vmax.f32 %v4163, %v4164
  %v4166 = vrot.slane %v4165, 1
  %v4167 = vmax.f32 %v4165, %v4166
  %v4168 = vsel %vm4153, %v4091, -inf
  %v4169 = vrot.slane %v4168, 4
  %v4170 = vmax.f32 %v4168, %v4169
  %v4171 = vrot.slane %v4170, 2
  %v4172 = vmax.f32 %v4170, %v4171
  %v4173 = vrot.slane %v4172, 1
  %v4174 = vmax.f32 %v4172, %v4173
  %v4175 = vsel %vm4153, %v4092, -inf
  %v4176 = vrot.slane %v4175, 4
  %v4177 = vmax.f32 %v4175, %v4176
  %v4178 = vrot.slane %v4177, 2
  %v4179 = vmax.f32 %v4177, %v4178
  %v4180 = vrot.slane %v4179, 1
  %v4181 = vmax.f32 %v4179, %v4180
  %v4182 = vsel %vm4153, %v4093, -inf
  %v4183 = vrot.slane %v4182, 4
  %v4184 = vmax.f32 %v4182, %v4183
  %v4185 = vrot.slane %v4184, 2
  %v4186 = vmax.f32 %v4184, %v4185
  %v4187 = vrot.slane %v4186, 1
  %v4188 = vmax.f32 %v4186, %v4187
  %v4189 = vsel %vm4153, %v4094, -inf
  %v4190 = vrot.slane %v4189, 4
  %v4191 = vmax.f32 %v4189, %v4190
  %v4192 = vrot.slane %v4191, 2
  %v4193 = vmax.f32 %v4191, %v4192
  %v4194 = vrot.slane %v4193, 1
  %v4195 = vmax.f32 %v4193, %v4194
  %v4196 = vsel %vm4153, %v4095, -inf
  %v4197 = vrot.slane %v4196, 4
  %v4198 = vmax.f32 %v4196, %v4197
  %v4199 = vrot.slane %v4198, 2
  %v4200 = vmax.f32 %v4198, %v4199
  %v4201 = vrot.slane %v4200, 1
  %v4202 = vmax.f32 %v4200, %v4201
  %v4203 = vsel %vm4153, %v4096, -inf
  %v4204 = vrot.slane %v4203, 4
  %v4205 = vmax.f32 %v4203, %v4204
  %v4206 = vrot.slane %v4205, 2
  %v4207 = vmax.f32 %v4205, %v4206
  %v4208 = vrot.slane %v4207, 1
  %v4209 = vmax.f32 %v4207, %v4208
  %v4210 = vsel %vm4153, %v4097, -inf
  %v4211 = vrot.slane %v4210, 4
  %v4212 = vmax.f32 %v4210, %v4211
  %v4213 = vrot.slane %v4212, 2
  %v4214 = vmax.f32 %v4212, %v4213
  %v4215 = vrot.slane %v4214, 1
  %v4216 = vmax.f32 %v4214, %v4215
  %v4217 = vsel %vm4153, %v4098, -inf
  %v4218 = vrot.slane %v4217, 4
  %v4219 = vmax.f32 %v4217, %v4218
  %v4220 = vrot.slane %v4219, 2
  %v4221 = vmax.f32 %v4219, %v4220
  %v4222 = vrot.slane %v4221, 1
  %v4223 = vmax.f32 %v4221, %v4222
  %v4224 = vsel %vm4153, %v4099, -inf
  %v4225 = vrot.slane %v4224, 4
  %v4226 = vmax.f32 %v4224, %v4225
  %v4227 = vrot.slane %v4226, 2
  %v4228 = vmax.f32 %v4226, %v4227
  %v4229 = vrot.slane %v4228, 1
  %v4230 = vmax.f32 %v4228, %v4229
  %v4231 = vsel %vm4153, %v4100, -inf
  %v4232 = vrot.slane %v4231, 4
  %v4233 = vmax.f32 %v4231, %v4232
  %v4234 = vrot.slane %v4233, 2
  %v4235 = vmax.f32 %v4233, %v4234
  %v4236 = vrot.slane %v4235, 1
  %v4237 = vmax.f32 %v4235, %v4236
  %v4238 = vsel %vm4153, %v4101, -inf
  %v4239 = vrot.slane %v4238, 4
  %v4240 = vmax.f32 %v4238, %v4239
  %v4241 = vrot.slane %v4240, 2
  %v4242 = vmax.f32 %v4240, %v4241
  %v4243 = vrot.slane %v4242, 1
  %v4244 = vmax.f32 %v4242, %v4243
  %v4245 = vsel %vm4153, %v4102, -inf
  %v4246 = vrot.slane %v4245, 4
  %v4247 = vmax.f32 %v4245, %v4246
  %v4248 = vrot.slane %v4247, 2
  %v4249 = vmax.f32 %v4247, %v4248
  %v4250 = vrot.slane %v4249, 1
  %v4251 = vmax.f32 %v4249, %v4250
  %v4252 = vsel %vm4153, %v4103, -inf
  %v4253 = vrot.slane %v4252, 4
  %v4254 = vmax.f32 %v4252, %v4253
  %v4255 = vrot.slane %v4254, 2
  %v4256 = vmax.f32 %v4254, %v4255
  %v4257 = vrot.slane %v4256, 1
  %v4258 = vmax.f32 %v4256, %v4257
  %v4259 = vsel %vm4153, %v4104, -inf
  %v4260 = vrot.slane %v4259, 4
  %v4261 = vmax.f32 %v4259, %v4260
  %v4262 = vrot.slane %v4261, 2
  %v4263 = vmax.f32 %v4261, %v4262
  %v4264 = vrot.slane %v4263, 1
  %v4265 = vmax.f32 %v4263, %v4264
  %v4266 = vsel %vm4153, %v4105, -inf
  %v4267 = vrot.slane %v4266, 4
  %v4268 = vmax.f32 %v4266, %v4267
  %v4269 = vrot.slane %v4268, 2
  %v4270 = vmax.f32 %v4268, %v4269
  %v4271 = vrot.slane %v4270, 1
  %v4272 = vmax.f32 %v4270, %v4271
  %v4273 = vsel %vm4153, %v4106, -inf
  %v4274 = vrot.slane %v4273, 4
  %v4275 = vmax.f32 %v4273, %v4274
  %v4276 = vrot.slane %v4275, 2
  %v4277 = vmax.f32 %v4275, %v4276
  %v4278 = vrot.slane %v4277, 1
  %v4279 = vmax.f32 %v4277, %v4278
  %v4280 = vsel %vm4153, %v4107, -inf
  %v4281 = vrot.slane %v4280, 4
  %v4282 = vmax.f32 %v4280, %v4281
  %v4283 = vrot.slane %v4282, 2
  %v4284 = vmax.f32 %v4282, %v4283
  %v4285 = vrot.slane %v4284, 1
  %v4286 = vmax.f32 %v4284, %v4285
  %v4287 = vsel %vm4153, %v4108, -inf
  %v4288 = vrot.slane %v4287, 4
  %v4289 = vmax.f32 %v4287, %v4288
  %v4290 = vrot.slane %v4289, 2
  %v4291 = vmax.f32 %v4289, %v4290
  %v4292 = vrot.slane %v4291, 1
  %v4293 = vmax.f32 %v4291, %v4292
  %v4294 = vsel %vm4153, %v4109, -inf
  %v4295 = vrot.slane %v4294, 4
  %v4296 = vmax.f32 %v4294, %v4295
  %v4297 = vrot.slane %v4296, 2
  %v4298 = vmax.f32 %v4296, %v4297
  %v4299 = vrot.slane %v4298, 1
  %v4300 = vmax.f32 %v4298, %v4299
  %v4301 = vsel %vm4153, %v4110, -inf
  %v4302 = vrot.slane %v4301, 4
  %v4303 = vmax.f32 %v4301, %v4302
  %v4304 = vrot.slane %v4303, 2
  %v4305 = vmax.f32 %v4303, %v4304
  %v4306 = vrot.slane %v4305, 1
  %v4307 = vmax.f32 %v4305, %v4306
  %v4308 = vsel %vm4153, %v4111, -inf
  %v4309 = vrot.slane %v4308, 4
  %v4310 = vmax.f32 %v4308, %v4309
  %v4311 = vrot.slane %v4310, 2
  %v4312 = vmax.f32 %v4310, %v4311
  %v4313 = vrot.slane %v4312, 1
  %v4314 = vmax.f32 %v4312, %v4313
  %v4315 = vsel %vm4153, %v4112, -inf
  %v4316 = vrot.slane %v4315, 4
  %v4317 = vmax.f32 %v4315, %v4316
  %v4318 = vrot.slane %v4317, 2
  %v4319 = vmax.f32 %v4317, %v4318
  %v4320 = vrot.slane %v4319, 1
  %v4321 = vmax.f32 %v4319, %v4320
  %v4322 = vsel %vm4153, %v4113, -inf
  %v4323 = vrot.slane %v4322, 4
  %v4324 = vmax.f32 %v4322, %v4323
  %v4325 = vrot.slane %v4324, 2
  %v4326 = vmax.f32 %v4324, %v4325
  %v4327 = vrot.slane %v4326, 1
  %v4328 = vmax.f32 %v4326, %v4327
  %v4329 = vsel %vm4153, %v4114, -inf
  %v4330 = vrot.slane %v4329, 4
  %v4331 = vmax.f32 %v4329, %v4330
  %v4332 = vrot.slane %v4331, 2
  %v4333 = vmax.f32 %v4331, %v4332
  %v4334 = vrot.slane %v4333, 1
  %v4335 = vmax.f32 %v4333, %v4334
  %v4336 = vsel %vm4153, %v4115, -inf
  %v4337 = vrot.slane %v4336, 4
  %v4338 = vmax.f32 %v4336, %v4337
  %v4339 = vrot.slane %v4338, 2
  %v4340 = vmax.f32 %v4338, %v4339
  %v4341 = vrot.slane %v4340, 1
  %v4342 = vmax.f32 %v4340, %v4341
  %v4343 = vsel %vm4153, %v4116, -inf
  %v4344 = vrot.slane %v4343, 4
  %v4345 = vmax.f32 %v4343, %v4344
  %v4346 = vrot.slane %v4345, 2
  %v4347 = vmax.f32 %v4345, %v4346
  %v4348 = vrot.slane %v4347, 1
  %v4349 = vmax.f32 %v4347, %v4348
  %v4350 = vsel %vm4153, %v4117, -inf
  %v4351 = vrot.slane %v4350, 4
  %v4352 = vmax.f32 %v4350, %v4351
  %v4353 = vrot.slane %v4352, 2
  %v4354 = vmax.f32 %v4352, %v4353
  %v4355 = vrot.slane %v4354, 1
  %v4356 = vmax.f32 %v4354, %v4355
  %v4357 = vsel %vm4153, %v4118, -inf
  %v4358 = vrot.slane %v4357, 4
  %v4359 = vmax.f32 %v4357, %v4358
  %v4360 = vrot.slane %v4359, 2
  %v4361 = vmax.f32 %v4359, %v4360
  %v4362 = vrot.slane %v4361, 1
  %v4363 = vmax.f32 %v4361, %v4362
  %v4364 = vsel %vm4153, %v4119, -inf
  %v4365 = vrot.slane %v4364, 4
  %v4366 = vmax.f32 %v4364, %v4365
  %v4367 = vrot.slane %v4366, 2
  %v4368 = vmax.f32 %v4366, %v4367
  %v4369 = vrot.slane %v4368, 1
  %v4370 = vmax.f32 %v4368, %v4369
  %v4371 = vsel %vm4153, %v4120, -inf
  %v4372 = vrot.slane %v4371, 4
  %v4373 = vmax.f32 %v4371, %v4372
  %v4374 = vrot.slane %v4373, 2
  %v4375 = vmax.f32 %v4373, %v4374
  %v4376 = vrot.slane %v4375, 1
  %v4377 = vmax.f32 %v4375, %v4376
  %v4378 = vsel %vm4153, %v4121, -inf
  %v4379 = vrot.slane %v4378, 4
  %v4380 = vmax.f32 %v4378, %v4379
  %v4381 = vrot.slane %v4380, 2
  %v4382 = vmax.f32 %v4380, %v4381
  %v4383 = vrot.slane %v4382, 1
  %v4384 = vmax.f32 %v4382, %v4383
  %v4385 = vsel %vm4153, %v4122, -inf
  %v4386 = vrot.slane %v4385, 4
  %v4387 = vmax.f32 %v4385, %v4386
  %v4388 = vrot.slane %v4387, 2
  %v4389 = vmax.f32 %v4387, %v4388
  %v4390 = vrot.slane %v4389, 1
  %v4391 = vmax.f32 %v4389, %v4390
  %v4392 = vsel %vm4153, %v4123, -inf
  %v4393 = vrot.slane %v4392, 4
  %v4394 = vmax.f32 %v4392, %v4393
  %v4395 = vrot.slane %v4394, 2
  %v4396 = vmax.f32 %v4394, %v4395
  %v4397 = vrot.slane %v4396, 1
  %v4398 = vmax.f32 %v4396, %v4397
  %v4399 = vsel %vm4153, %v4124, -inf
  %v4400 = vrot.slane %v4399, 4
  %v4401 = vmax.f32 %v4399, %v4400
  %v4402 = vrot.slane %v4401, 2
  %v4403 = vmax.f32 %v4401, %v4402
  %v4404 = vrot.slane %v4403, 1
  %v4405 = vmax.f32 %v4403, %v4404
  %v4406 = vsel %vm4153, %v4125, -inf
  %v4407 = vrot.slane %v4406, 4
  %v4408 = vmax.f32 %v4406, %v4407
  %v4409 = vrot.slane %v4408, 2
  %v4410 = vmax.f32 %v4408, %v4409
  %v4411 = vrot.slane %v4410, 1
  %v4412 = vmax.f32 %v4410, %v4411
  %v4413 = vsel %vm4153, %v4126, -inf
  %v4414 = vrot.slane %v4413, 4
  %v4415 = vmax.f32 %v4413, %v4414
  %v4416 = vrot.slane %v4415, 2
  %v4417 = vmax.f32 %v4415, %v4416
  %v4418 = vrot.slane %v4417, 1
  %v4419 = vmax.f32 %v4417, %v4418
  %v4420 = vsel %vm4153, %v4127, -inf
  %v4421 = vrot.slane %v4420, 4
  %v4422 = vmax.f32 %v4420, %v4421
  %v4423 = vrot.slane %v4422, 2
  %v4424 = vmax.f32 %v4422, %v4423
  %v4425 = vrot.slane %v4424, 1
  %v4426 = vmax.f32 %v4424, %v4425
  %v4427 = vsel %vm4153, %v4128, -inf
  %v4428 = vrot.slane %v4427, 4
  %v4429 = vmax.f32 %v4427, %v4428
  %v4430 = vrot.slane %v4429, 2
  %v4431 = vmax.f32 %v4429, %v4430
  %v4432 = vrot.slane %v4431, 1
  %v4433 = vmax.f32 %v4431, %v4432
  %v4434 = vsel %vm4153, %v4129, -inf
  %v4435 = vrot.slane %v4434, 4
  %v4436 = vmax.f32 %v4434, %v4435
  %v4437 = vrot.slane %v4436, 2
  %v4438 = vmax.f32 %v4436, %v4437
  %v4439 = vrot.slane %v4438, 1
  %v4440 = vmax.f32 %v4438, %v4439
  %v4441 = vsel %vm4153, %v4130, -inf
  %v4442 = vrot.slane %v4441, 4
  %v4443 = vmax.f32 %v4441, %v4442
  %v4444 = vrot.slane %v4443, 2
  %v4445 = vmax.f32 %v4443, %v4444
  %v4446 = vrot.slane %v4445, 1
  %v4447 = vmax.f32 %v4445, %v4446
  %v4448 = vsel %vm4153, %v4131, -inf
  %v4449 = vrot.slane %v4448, 4
  %v4450 = vmax.f32 %v4448, %v4449
  %v4451 = vrot.slane %v4450, 2
  %v4452 = vmax.f32 %v4450, %v4451
  %v4453 = vrot.slane %v4452, 1
  %v4454 = vmax.f32 %v4452, %v4453
  %v4455 = vsel %vm4153, %v4132, -inf
  %v4456 = vrot.slane %v4455, 4
  %v4457 = vmax.f32 %v4455, %v4456
  %v4458 = vrot.slane %v4457, 2
  %v4459 = vmax.f32 %v4457, %v4458
  %v4460 = vrot.slane %v4459, 1
  %v4461 = vmax.f32 %v4459, %v4460
  %v4462 = vsel %vm4153, %v4133, -inf
  %v4463 = vrot.slane %v4462, 4
  %v4464 = vmax.f32 %v4462, %v4463
  %v4465 = vrot.slane %v4464, 2
  %v4466 = vmax.f32 %v4464, %v4465
  %v4467 = vrot.slane %v4466, 1
  %v4468 = vmax.f32 %v4466, %v4467
  %v4469 = vsel %vm4153, %v4134, -inf
  %v4470 = vrot.slane %v4469, 4
  %v4471 = vmax.f32 %v4469, %v4470
  %v4472 = vrot.slane %v4471, 2
  %v4473 = vmax.f32 %v4471, %v4472
  %v4474 = vrot.slane %v4473, 1
  %v4475 = vmax.f32 %v4473, %v4474
  %v4476 = vsel %vm4153, %v4135, -inf
  %v4477 = vrot.slane %v4476, 4
  %v4478 = vmax.f32 %v4476, %v4477
  %v4479 = vrot.slane %v4478, 2
  %v4480 = vmax.f32 %v4478, %v4479
  %v4481 = vrot.slane %v4480, 1
  %v4482 = vmax.f32 %v4480, %v4481
  %v4483 = vsel %vm4153, %v4136, -inf
  %v4484 = vrot.slane %v4483, 4
  %v4485 = vmax.f32 %v4483, %v4484
  %v4486 = vrot.slane %v4485, 2
  %v4487 = vmax.f32 %v4485, %v4486
  %v4488 = vrot.slane %v4487, 1
  %v4489 = vmax.f32 %v4487, %v4488
  %v4490 = vsel %vm4153, %v4137, -inf
  %v4491 = vrot.slane %v4490, 4
  %v4492 = vmax.f32 %v4490, %v4491
  %v4493 = vrot.slane %v4492, 2
  %v4494 = vmax.f32 %v4492, %v4493
  %v4495 = vrot.slane %v4494, 1
  %v4496 = vmax.f32 %v4494, %v4495
  %v4497 = vsel %vm4153, %v4138, -inf
  %v4498 = vrot.slane %v4497, 4
  %v4499 = vmax.f32 %v4497, %v4498
  %v4500 = vrot.slane %v4499, 2
  %v4501 = vmax.f32 %v4499, %v4500
  %v4502 = vrot.slane %v4501, 1
  %v4503 = vmax.f32 %v4501, %v4502
  %v4504 = vsel %vm4153, %v4139, -inf
  %v4505 = vrot.slane %v4504, 4
  %v4506 = vmax.f32 %v4504, %v4505
  %v4507 = vrot.slane %v4506, 2
  %v4508 = vmax.f32 %v4506, %v4507
  %v4509 = vrot.slane %v4508, 1
  %v4510 = vmax.f32 %v4508, %v4509
  %v4511 = vsel %vm4153, %v4140, -inf
  %v4512 = vrot.slane %v4511, 4
  %v4513 = vmax.f32 %v4511, %v4512
  %v4514 = vrot.slane %v4513, 2
  %v4515 = vmax.f32 %v4513, %v4514
  %v4516 = vrot.slane %v4515, 1
  %v4517 = vmax.f32 %v4515, %v4516
  %v4518 = vsel %vm4153, %v4141, -inf
  %v4519 = vrot.slane %v4518, 4
  %v4520 = vmax.f32 %v4518, %v4519
  %v4521 = vrot.slane %v4520, 2
  %v4522 = vmax.f32 %v4520, %v4521
  %v4523 = vrot.slane %v4522, 1
  %v4524 = vmax.f32 %v4522, %v4523
  %v4525 = vsel %vm4153, %v4142, -inf
  %v4526 = vrot.slane %v4525, 4
  %v4527 = vmax.f32 %v4525, %v4526
  %v4528 = vrot.slane %v4527, 2
  %v4529 = vmax.f32 %v4527, %v4528
  %v4530 = vrot.slane %v4529, 1
  %v4531 = vmax.f32 %v4529, %v4530
  %v4532 = vsel %vm4153, %v4143, -inf
  %v4533 = vrot.slane %v4532, 4
  %v4534 = vmax.f32 %v4532, %v4533
  %v4535 = vrot.slane %v4534, 2
  %v4536 = vmax.f32 %v4534, %v4535
  %v4537 = vrot.slane %v4536, 1
  %v4538 = vmax.f32 %v4536, %v4537
  %v4539 = vsel %vm4153, %v4144, -inf
  %v4540 = vrot.slane %v4539, 4
  %v4541 = vmax.f32 %v4539, %v4540
  %v4542 = vrot.slane %v4541, 2
  %v4543 = vmax.f32 %v4541, %v4542
  %v4544 = vrot.slane %v4543, 1
  %v4545 = vmax.f32 %v4543, %v4544
  %v4546 = vsel %vm4153, %v4145, -inf
  %v4547 = vrot.slane %v4546, 4
  %v4548 = vmax.f32 %v4546, %v4547
  %v4549 = vrot.slane %v4548, 2
  %v4550 = vmax.f32 %v4548, %v4549
  %v4551 = vrot.slane %v4550, 1
  %v4552 = vmax.f32 %v4550, %v4551
  %v4553 = vsel %vm4153, %v4146, -inf
  %v4554 = vrot.slane %v4553, 4
  %v4555 = vmax.f32 %v4553, %v4554
  %v4556 = vrot.slane %v4555, 2
  %v4557 = vmax.f32 %v4555, %v4556
  %v4558 = vrot.slane %v4557, 1
  %v4559 = vmax.f32 %v4557, %v4558
  %v4560 = vsel %vm4153, %v4147, -inf
  %v4561 = vrot.slane %v4560, 4
  %v4562 = vmax.f32 %v4560, %v4561
  %v4563 = vrot.slane %v4562, 2
  %v4564 = vmax.f32 %v4562, %v4563
  %v4565 = vrot.slane %v4564, 1
  %v4566 = vmax.f32 %v4564, %v4565
  %v4567 = vsel %vm4153, %v4148, -inf
  %v4568 = vrot.slane %v4567, 4
  %v4569 = vmax.f32 %v4567, %v4568
  %v4570 = vrot.slane %v4569, 2
  %v4571 = vmax.f32 %v4569, %v4570
  %v4572 = vrot.slane %v4571, 1
  %v4573 = vmax.f32 %v4571, %v4572
  %v4574 = vsel %vm4153, %v4149, -inf
  %v4575 = vrot.slane %v4574, 4
  %v4576 = vmax.f32 %v4574, %v4575
  %v4577 = vrot.slane %v4576, 2
  %v4578 = vmax.f32 %v4576, %v4577
  %v4579 = vrot.slane %v4578, 1
  %v4580 = vmax.f32 %v4578, %v4579
  %v4581 = vsel %vm4153, %v4150, -inf
  %v4582 = vrot.slane %v4581, 4
  %v4583 = vmax.f32 %v4581, %v4582
  %v4584 = vrot.slane %v4583, 2
  %v4585 = vmax.f32 %v4583, %v4584
  %v4586 = vrot.slane %v4585, 1
  %v4587 = vmax.f32 %v4585, %v4586
  %v4588 = vsel %vm4153, %v4151, -inf
  %v4589 = vrot.slane %v4588, 4
  %v4590 = vmax.f32 %v4588, %v4589
  %v4591 = vrot.slane %v4590, 2
  %v4592 = vmax.f32 %v4590, %v4591
  %v4593 = vrot.slane %v4592, 1
  %v4594 = vmax.f32 %v4592, %v4593
  %v4595 = vsel %vm4153, %v4152, -inf
  %v4596 = vrot.slane %v4595, 4
  %v4597 = vmax.f32 %v4595, %v4596
  %v4598 = vrot.slane %v4597, 2
  %v4599 = vmax.f32 %v4597, %v4598
  %v4600 = vrot.slane %v4599, 1
  %v4601 = vmax.f32 %v4599, %v4600
  %s4602 = scalar_lea.vmem %s2, 2
  %v4603 = vld [vmem:[%s4602] sm:$0x1]
  %v4605 = vlaneseq
  %v4606 = vshrl.u32 %v4605, 7
  %v4607 = vsub.s32 0, %v4606
  %v4608 = vrot.slane %v4603, %v4607
  %v4610 = vadd.f32 %v4160, %v4608
  %v4611 = vadd.f32 %v4167, %v4608
  %v4612 = vadd.f32 %v4174, %v4608
  %v4613 = vadd.f32 %v4181, %v4608
  %v4614 = vadd.f32 %v4188, %v4608
  %v4615 = vadd.f32 %v4195, %v4608
  %v4616 = vadd.f32 %v4202, %v4608
  %v4617 = vadd.f32 %v4209, %v4608
  %v4618 = vadd.f32 %v4216, %v4608
  %v4619 = vadd.f32 %v4223, %v4608
  %v4620 = vadd.f32 %v4230, %v4608
  %v4621 = vadd.f32 %v4237, %v4608
  %v4622 = vadd.f32 %v4244, %v4608
  %v4623 = vadd.f32 %v4251, %v4608
  %v4624 = vadd.f32 %v4258, %v4608
  %v4625 = vadd.f32 %v4265, %v4608
  %v4626 = vadd.f32 %v4272, %v4608
  %v4627 = vadd.f32 %v4279, %v4608
  %v4628 = vadd.f32 %v4286, %v4608
  %v4629 = vadd.f32 %v4293, %v4608
  %v4630 = vadd.f32 %v4300, %v4608
  %v4631 = vadd.f32 %v4307, %v4608
  %v4632 = vadd.f32 %v4314, %v4608
  %v4633 = vadd.f32 %v4321, %v4608
  %v4634 = vadd.f32 %v4328, %v4608
  %v4635 = vadd.f32 %v4335, %v4608
  %v4636 = vadd.f32 %v4342, %v4608
  %v4637 = vadd.f32 %v4349, %v4608
  %v4638 = vadd.f32 %v4356, %v4608
  %v4639 = vadd.f32 %v4363, %v4608
  %v4640 = vadd.f32 %v4370, %v4608
  %v4641 = vadd.f32 %v4377, %v4608
  %v4642 = vadd.f32 %v4384, %v4608
  %v4643 = vadd.f32 %v4391, %v4608
  %v4644 = vadd.f32 %v4398, %v4608
  %v4645 = vadd.f32 %v4405, %v4608
  %v4646 = vadd.f32 %v4412, %v4608
  %v4647 = vadd.f32 %v4419, %v4608
  %v4648 = vadd.f32 %v4426, %v4608
  %v4649 = vadd.f32 %v4433, %v4608
  %v4650 = vadd.f32 %v4440, %v4608
  %v4651 = vadd.f32 %v4447, %v4608
  %v4652 = vadd.f32 %v4454, %v4608
  %v4653 = vadd.f32 %v4461, %v4608
  %v4654 = vadd.f32 %v4468, %v4608
  %v4655 = vadd.f32 %v4475, %v4608
  %v4656 = vadd.f32 %v4482, %v4608
  %v4657 = vadd.f32 %v4489, %v4608
  %v4658 = vadd.f32 %v4496, %v4608
  %v4659 = vadd.f32 %v4503, %v4608
  %v4660 = vadd.f32 %v4510, %v4608
  %v4661 = vadd.f32 %v4517, %v4608
  %v4662 = vadd.f32 %v4524, %v4608
  %v4663 = vadd.f32 %v4531, %v4608
  %v4664 = vadd.f32 %v4538, %v4608
  %v4665 = vadd.f32 %v4545, %v4608
  %v4666 = vadd.f32 %v4552, %v4608
  %v4667 = vadd.f32 %v4559, %v4608
  %v4668 = vadd.f32 %v4566, %v4608
  %v4669 = vadd.f32 %v4573, %v4608
  %v4670 = vadd.f32 %v4580, %v4608
  %v4671 = vadd.f32 %v4587, %v4608
  %v4672 = vadd.f32 %v4594, %v4608
  %v4673 = vadd.f32 %v4601, %v4608
  %v4674 = vmax.f32 %v4610, 0.0
  %v4675 = vmax.f32 %v4611, 0.0
  %v4676 = vmax.f32 %v4612, 0.0
  %v4677 = vmax.f32 %v4613, 0.0
  %v4678 = vmax.f32 %v4614, 0.0
  %v4679 = vmax.f32 %v4615, 0.0
  %v4680 = vmax.f32 %v4616, 0.0
  %v4681 = vmax.f32 %v4617, 0.0
  %v4682 = vmax.f32 %v4618, 0.0
  %v4683 = vmax.f32 %v4619, 0.0
  %v4684 = vmax.f32 %v4620, 0.0
  %v4685 = vmax.f32 %v4621, 0.0
  %v4686 = vmax.f32 %v4622, 0.0
  %v4687 = vmax.f32 %v4623, 0.0
  %v4688 = vmax.f32 %v4624, 0.0
  %v4689 = vmax.f32 %v4625, 0.0
  %v4690 = vmax.f32 %v4626, 0.0
  %v4691 = vmax.f32 %v4627, 0.0
  %v4692 = vmax.f32 %v4628, 0.0
  %v4693 = vmax.f32 %v4629, 0.0
  %v4694 = vmax.f32 %v4630, 0.0
  %v4695 = vmax.f32 %v4631, 0.0
  %v4696 = vmax.f32 %v4632, 0.0
  %v4697 = vmax.f32 %v4633, 0.0
  %v4698 = vmax.f32 %v4634, 0.0
  %v4699 = vmax.f32 %v4635, 0.0
  %v4700 = vmax.f32 %v4636, 0.0
  %v4701 = vmax.f32 %v4637, 0.0
  %v4702 = vmax.f32 %v4638, 0.0
  %v4703 = vmax.f32 %v4639, 0.0
  %v4704 = vmax.f32 %v4640, 0.0
  %v4705 = vmax.f32 %v4641, 0.0
  %v4706 = vmax.f32 %v4642, 0.0
  %v4707 = vmax.f32 %v4643, 0.0
  %v4708 = vmax.f32 %v4644, 0.0
  %v4709 = vmax.f32 %v4645, 0.0
  %v4710 = vmax.f32 %v4646, 0.0
  %v4711 = vmax.f32 %v4647, 0.0
  %v4712 = vmax.f32 %v4648, 0.0
  %v4713 = vmax.f32 %v4649, 0.0
  %v4714 = vmax.f32 %v4650, 0.0
  %v4715 = vmax.f32 %v4651, 0.0
  %v4716 = vmax.f32 %v4652, 0.0
  %v4717 = vmax.f32 %v4653, 0.0
  %v4718 = vmax.f32 %v4654, 0.0
  %v4719 = vmax.f32 %v4655, 0.0
  %v4720 = vmax.f32 %v4656, 0.0
  %v4721 = vmax.f32 %v4657, 0.0
  %v4722 = vmax.f32 %v4658, 0.0
  %v4723 = vmax.f32 %v4659, 0.0
  %v4724 = vmax.f32 %v4660, 0.0
  %v4725 = vmax.f32 %v4661, 0.0
  %v4726 = vmax.f32 %v4662, 0.0
  %v4727 = vmax.f32 %v4663, 0.0
  %v4728 = vmax.f32 %v4664, 0.0
  %v4729 = vmax.f32 %v4665, 0.0
  %v4730 = vmax.f32 %v4666, 0.0
  %v4731 = vmax.f32 %v4667, 0.0
  %v4732 = vmax.f32 %v4668, 0.0
  %v4733 = vmax.f32 %v4669, 0.0
  %v4734 = vmax.f32 %v4670, 0.0
  %v4735 = vmax.f32 %v4671, 0.0
  %v4736 = vmax.f32 %v4672, 0.0
  %v4737 = vmax.f32 %v4673, 0.0
  %v4802 = vrot.slane %v1519, 7
  %vm4803 = vcmask 1041409
  %v4804 = vsel %vm4803, %v4802, %v1518
  %v4805 = vrot.slane %v1520, 6
  %vm4806 = vcmask 1042434
  %v4807 = vsel %vm4806, %v4805, %v4804
  %v4808 = vrot.slane %v1521, 5
  %vm4809 = vcmask 1043459
  %v4810 = vsel %vm4809, %v4808, %v4807
  %v4811 = vrot.slane %v1522, 4
  %vm4812 = vcmask 1044484
  %v4813 = vsel %vm4812, %v4811, %v4810
  %v4814 = vrot.slane %v1523, 3
  %vm4815 = vcmask 1045509
  %v4816 = vsel %vm4815, %v4814, %v4813
  %v4817 = vrot.slane %v1524, 2
  %vm4818 = vcmask 1046534
  %v4819 = vsel %vm4818, %v4817, %v4816
  %v4820 = vrot.slane %v1525, 1
  %vm4821 = vcmask 1047559
  %v4822 = vsel %vm4821, %v4820, %v4819
  %v4823 = vrot.slane %v1527, 7
  %v4824 = vsel %vm4803, %v4823, %v1526
  %v4825 = vrot.slane %v1528, 6
  %v4826 = vsel %vm4806, %v4825, %v4824
  %v4827 = vrot.slane %v1529, 5
  %v4828 = vsel %vm4809, %v4827, %v4826
  %v4829 = vrot.slane %v1530, 4
  %v4830 = vsel %vm4812, %v4829, %v4828
  %v4831 = vrot.slane %v1531, 3
  %v4832 = vsel %vm4815, %v4831, %v4830
  %v4833 = vrot.slane %v1532, 2
  %v4834 = vsel %vm4818, %v4833, %v4832
  %v4835 = vrot.slane %v1533, 1
  %v4836 = vsel %vm4821, %v4835, %v4834
  %v4837 = vrot.slane %v1535, 7
  %v4838 = vsel %vm4803, %v4837, %v1534
  %v4839 = vrot.slane %v1536, 6
  %v4840 = vsel %vm4806, %v4839, %v4838
  %v4841 = vrot.slane %v1537, 5
  %v4842 = vsel %vm4809, %v4841, %v4840
  %v4843 = vrot.slane %v1538, 4
  %v4844 = vsel %vm4812, %v4843, %v4842
  %v4845 = vrot.slane %v1539, 3
  %v4846 = vsel %vm4815, %v4845, %v4844
  %v4847 = vrot.slane %v1540, 2
  %v4848 = vsel %vm4818, %v4847, %v4846
  %v4849 = vrot.slane %v1541, 1
  %v4850 = vsel %vm4821, %v4849, %v4848
  %v4851 = vrot.slane %v1543, 7
  %v4852 = vsel %vm4803, %v4851, %v1542
  %v4853 = vrot.slane %v1544, 6
  %v4854 = vsel %vm4806, %v4853, %v4852
  %v4855 = vrot.slane %v1545, 5
  %v4856 = vsel %vm4809, %v4855, %v4854
  %v4857 = vrot.slane %v1546, 4
  %v4858 = vsel %vm4812, %v4857, %v4856
  %v4859 = vrot.slane %v1547, 3
  %v4860 = vsel %vm4815, %v4859, %v4858
  %v4861 = vrot.slane %v1548, 2
  %v4862 = vsel %vm4818, %v4861, %v4860
  %v4863 = vrot.slane %v1549, 1
  %v4864 = vsel %vm4821, %v4863, %v4862
  %v4865 = vrot.slane %v1551, 7
  %v4866 = vsel %vm4803, %v4865, %v1550
  %v4867 = vrot.slane %v1552, 6
  %v4868 = vsel %vm4806, %v4867, %v4866
  %v4869 = vrot.slane %v1553, 5
  %v4870 = vsel %vm4809, %v4869, %v4868
  %v4871 = vrot.slane %v1554, 4
  %v4872 = vsel %vm4812, %v4871, %v4870
  %v4873 = vrot.slane %v1555, 3
  %v4874 = vsel %vm4815, %v4873, %v4872
  %v4875 = vrot.slane %v1556, 2
  %v4876 = vsel %vm4818, %v4875, %v4874
  %v4877 = vrot.slane %v1557, 1
  %v4878 = vsel %vm4821, %v4877, %v4876
  %v4879 = vrot.slane %v1559, 7
  %v4880 = vsel %vm4803, %v4879, %v1558
  %v4881 = vrot.slane %v1560, 6
  %v4882 = vsel %vm4806, %v4881, %v4880
  %v4883 = vrot.slane %v1561, 5
  %v4884 = vsel %vm4809, %v4883, %v4882
  %v4885 = vrot.slane %v1562, 4
  %v4886 = vsel %vm4812, %v4885, %v4884
  %v4887 = vrot.slane %v1563, 3
  %v4888 = vsel %vm4815, %v4887, %v4886
  %v4889 = vrot.slane %v1564, 2
  %v4890 = vsel %vm4818, %v4889, %v4888
  %v4891 = vrot.slane %v1565, 1
  %v4892 = vsel %vm4821, %v4891, %v4890
  %v4893 = vrot.slane %v1567, 7
  %v4894 = vsel %vm4803, %v4893, %v1566
  %v4895 = vrot.slane %v1568, 6
  %v4896 = vsel %vm4806, %v4895, %v4894
  %v4897 = vrot.slane %v1569, 5
  %v4898 = vsel %vm4809, %v4897, %v4896
  %v4899 = vrot.slane %v1570, 4
  %v4900 = vsel %vm4812, %v4899, %v4898
  %v4901 = vrot.slane %v1571, 3
  %v4902 = vsel %vm4815, %v4901, %v4900
  %v4903 = vrot.slane %v1572, 2
  %v4904 = vsel %vm4818, %v4903, %v4902
  %v4905 = vrot.slane %v1573, 1
  %v4906 = vsel %vm4821, %v4905, %v4904
  %v4907 = vrot.slane %v1575, 7
  %v4908 = vsel %vm4803, %v4907, %v1574
  %v4909 = vrot.slane %v1576, 6
  %v4910 = vsel %vm4806, %v4909, %v4908
  %v4911 = vrot.slane %v1577, 5
  %v4912 = vsel %vm4809, %v4911, %v4910
  %v4913 = vrot.slane %v1578, 4
  %v4914 = vsel %vm4812, %v4913, %v4912
  %v4915 = vrot.slane %v1579, 3
  %v4916 = vsel %vm4815, %v4915, %v4914
  %v4917 = vrot.slane %v1580, 2
  %v4918 = vsel %vm4818, %v4917, %v4916
  %v4919 = vrot.slane %v1581, 1
  %v4920 = vsel %vm4821, %v4919, %v4918
  %v4993 = vrot.slane %v2810, 7
  %v4994 = vsel %vm4803, %v4993, %v2809
  %v4995 = vrot.slane %v2811, 6
  %v4996 = vsel %vm4806, %v4995, %v4994
  %v4997 = vrot.slane %v2812, 5
  %v4998 = vsel %vm4809, %v4997, %v4996
  %v4999 = vrot.slane %v2813, 4
  %v5000 = vsel %vm4812, %v4999, %v4998
  %v5001 = vrot.slane %v2814, 3
  %v5002 = vsel %vm4815, %v5001, %v5000
  %v5003 = vrot.slane %v2815, 2
  %v5004 = vsel %vm4818, %v5003, %v5002
  %v5005 = vrot.slane %v2816, 1
  %v5006 = vsel %vm4821, %v5005, %v5004
  %v5007 = vrot.slane %v2818, 7
  %v5008 = vsel %vm4803, %v5007, %v2817
  %v5009 = vrot.slane %v2819, 6
  %v5010 = vsel %vm4806, %v5009, %v5008
  %v5011 = vrot.slane %v2820, 5
  %v5012 = vsel %vm4809, %v5011, %v5010
  %v5013 = vrot.slane %v2821, 4
  %v5014 = vsel %vm4812, %v5013, %v5012
  %v5015 = vrot.slane %v2822, 3
  %v5016 = vsel %vm4815, %v5015, %v5014
  %v5017 = vrot.slane %v2823, 2
  %v5018 = vsel %vm4818, %v5017, %v5016
  %v5019 = vrot.slane %v2824, 1
  %v5020 = vsel %vm4821, %v5019, %v5018
  %v5021 = vrot.slane %v2826, 7
  %v5022 = vsel %vm4803, %v5021, %v2825
  %v5023 = vrot.slane %v2827, 6
  %v5024 = vsel %vm4806, %v5023, %v5022
  %v5025 = vrot.slane %v2828, 5
  %v5026 = vsel %vm4809, %v5025, %v5024
  %v5027 = vrot.slane %v2829, 4
  %v5028 = vsel %vm4812, %v5027, %v5026
  %v5029 = vrot.slane %v2830, 3
  %v5030 = vsel %vm4815, %v5029, %v5028
  %v5031 = vrot.slane %v2831, 2
  %v5032 = vsel %vm4818, %v5031, %v5030
  %v5033 = vrot.slane %v2832, 1
  %v5034 = vsel %vm4821, %v5033, %v5032
  %v5035 = vrot.slane %v2834, 7
  %v5036 = vsel %vm4803, %v5035, %v2833
  %v5037 = vrot.slane %v2835, 6
  %v5038 = vsel %vm4806, %v5037, %v5036
  %v5039 = vrot.slane %v2836, 5
  %v5040 = vsel %vm4809, %v5039, %v5038
  %v5041 = vrot.slane %v2837, 4
  %v5042 = vsel %vm4812, %v5041, %v5040
  %v5043 = vrot.slane %v2838, 3
  %v5044 = vsel %vm4815, %v5043, %v5042
  %v5045 = vrot.slane %v2839, 2
  %v5046 = vsel %vm4818, %v5045, %v5044
  %v5047 = vrot.slane %v2840, 1
  %v5048 = vsel %vm4821, %v5047, %v5046
  %v5049 = vrot.slane %v2842, 7
  %v5050 = vsel %vm4803, %v5049, %v2841
  %v5051 = vrot.slane %v2843, 6
  %v5052 = vsel %vm4806, %v5051, %v5050
  %v5053 = vrot.slane %v2844, 5
  %v5054 = vsel %vm4809, %v5053, %v5052
  %v5055 = vrot.slane %v2845, 4
  %v5056 = vsel %vm4812, %v5055, %v5054
  %v5057 = vrot.slane %v2846, 3
  %v5058 = vsel %vm4815, %v5057, %v5056
  %v5059 = vrot.slane %v2847, 2
  %v5060 = vsel %vm4818, %v5059, %v5058
  %v5061 = vrot.slane %v2848, 1
  %v5062 = vsel %vm4821, %v5061, %v5060
  %v5063 = vrot.slane %v2850, 7
  %v5064 = vsel %vm4803, %v5063, %v2849
  %v5065 = vrot.slane %v2851, 6
  %v5066 = vsel %vm4806, %v5065, %v5064
  %v5067 = vrot.slane %v2852, 5
  %v5068 = vsel %vm4809, %v5067, %v5066
  %v5069 = vrot.slane %v2853, 4
  %v5070 = vsel %vm4812, %v5069, %v5068
  %v5071 = vrot.slane %v2854, 3
  %v5072 = vsel %vm4815, %v5071, %v5070
  %v5073 = vrot.slane %v2855, 2
  %v5074 = vsel %vm4818, %v5073, %v5072
  %v5075 = vrot.slane %v2856, 1
  %v5076 = vsel %vm4821, %v5075, %v5074
  %v5077 = vrot.slane %v2858, 7
  %v5078 = vsel %vm4803, %v5077, %v2857
  %v5079 = vrot.slane %v2859, 6
  %v5080 = vsel %vm4806, %v5079, %v5078
  %v5081 = vrot.slane %v2860, 5
  %v5082 = vsel %vm4809, %v5081, %v5080
  %v5083 = vrot.slane %v2861, 4
  %v5084 = vsel %vm4812, %v5083, %v5082
  %v5085 = vrot.slane %v2862, 3
  %v5086 = vsel %vm4815, %v5085, %v5084
  %v5087 = vrot.slane %v2863, 2
  %v5088 = vsel %vm4818, %v5087, %v5086
  %v5089 = vrot.slane %v2864, 1
  %v5090 = vsel %vm4821, %v5089, %v5088
  %v5091 = vrot.slane %v2866, 7
  %v5092 = vsel %vm4803, %v5091, %v2865
  %v5093 = vrot.slane %v2867, 6
  %v5094 = vsel %vm4806, %v5093, %v5092
  %v5095 = vrot.slane %v2868, 5
  %v5096 = vsel %vm4809, %v5095, %v5094
  %v5097 = vrot.slane %v2869, 4
  %v5098 = vsel %vm4812, %v5097, %v5096
  %v5099 = vrot.slane %v2870, 3
  %v5100 = vsel %vm4815, %v5099, %v5098
  %v5101 = vrot.slane %v2871, 2
  %v5102 = vsel %vm4818, %v5101, %v5100
  %v5103 = vrot.slane %v2872, 1
  %v5104 = vsel %vm4821, %v5103, %v5102
  %v5177 = vrot.slane %v4675, 7
  %v5178 = vsel %vm4803, %v5177, %v4674
  %v5179 = vrot.slane %v4676, 6
  %v5180 = vsel %vm4806, %v5179, %v5178
  %v5181 = vrot.slane %v4677, 5
  %v5182 = vsel %vm4809, %v5181, %v5180
  %v5183 = vrot.slane %v4678, 4
  %v5184 = vsel %vm4812, %v5183, %v5182
  %v5185 = vrot.slane %v4679, 3
  %v5186 = vsel %vm4815, %v5185, %v5184
  %v5187 = vrot.slane %v4680, 2
  %v5188 = vsel %vm4818, %v5187, %v5186
  %v5189 = vrot.slane %v4681, 1
  %v5190 = vsel %vm4821, %v5189, %v5188
  %v5191 = vrot.slane %v4683, 7
  %v5192 = vsel %vm4803, %v5191, %v4682
  %v5193 = vrot.slane %v4684, 6
  %v5194 = vsel %vm4806, %v5193, %v5192
  %v5195 = vrot.slane %v4685, 5
  %v5196 = vsel %vm4809, %v5195, %v5194
  %v5197 = vrot.slane %v4686, 4
  %v5198 = vsel %vm4812, %v5197, %v5196
  %v5199 = vrot.slane %v4687, 3
  %v5200 = vsel %vm4815, %v5199, %v5198
  %v5201 = vrot.slane %v4688, 2
  %v5202 = vsel %vm4818, %v5201, %v5200
  %v5203 = vrot.slane %v4689, 1
  %v5204 = vsel %vm4821, %v5203, %v5202
  %v5205 = vrot.slane %v4691, 7
  %v5206 = vsel %vm4803, %v5205, %v4690
  %v5207 = vrot.slane %v4692, 6
  %v5208 = vsel %vm4806, %v5207, %v5206
  %v5209 = vrot.slane %v4693, 5
  %v5210 = vsel %vm4809, %v5209, %v5208
  %v5211 = vrot.slane %v4694, 4
  %v5212 = vsel %vm4812, %v5211, %v5210
  %v5213 = vrot.slane %v4695, 3
  %v5214 = vsel %vm4815, %v5213, %v5212
  %v5215 = vrot.slane %v4696, 2
  %v5216 = vsel %vm4818, %v5215, %v5214
  %v5217 = vrot.slane %v4697, 1
  %v5218 = vsel %vm4821, %v5217, %v5216
  %v5219 = vrot.slane %v4699, 7
  %v5220 = vsel %vm4803, %v5219, %v4698
  %v5221 = vrot.slane %v4700, 6
  %v5222 = vsel %vm4806, %v5221, %v5220
  %v5223 = vrot.slane %v4701, 5
  %v5224 = vsel %vm4809, %v5223, %v5222
  %v5225 = vrot.slane %v4702, 4
  %v5226 = vsel %vm4812, %v5225, %v5224
  %v5227 = vrot.slane %v4703, 3
  %v5228 = vsel %vm4815, %v5227, %v5226
  %v5229 = vrot.slane %v4704, 2
  %v5230 = vsel %vm4818, %v5229, %v5228
  %v5231 = vrot.slane %v4705, 1
  %v5232 = vsel %vm4821, %v5231, %v5230
  %v5233 = vrot.slane %v4707, 7
  %v5234 = vsel %vm4803, %v5233, %v4706
  %v5235 = vrot.slane %v4708, 6
  %v5236 = vsel %vm4806, %v5235, %v5234
  %v5237 = vrot.slane %v4709, 5
  %v5238 = vsel %vm4809, %v5237, %v5236
  %v5239 = vrot.slane %v4710, 4
  %v5240 = vsel %vm4812, %v5239, %v5238
  %v5241 = vrot.slane %v4711, 3
  %v5242 = vsel %vm4815, %v5241, %v5240
  %v5243 = vrot.slane %v4712, 2
  %v5244 = vsel %vm4818, %v5243, %v5242
  %v5245 = vrot.slane %v4713, 1
  %v5246 = vsel %vm4821, %v5245, %v5244
  %v5247 = vrot.slane %v4715, 7
  %v5248 = vsel %vm4803, %v5247, %v4714
  %v5249 = vrot.slane %v4716, 6
  %v5250 = vsel %vm4806, %v5249, %v5248
  %v5251 = vrot.slane %v4717, 5
  %v5252 = vsel %vm4809, %v5251, %v5250
  %v5253 = vrot.slane %v4718, 4
  %v5254 = vsel %vm4812, %v5253, %v5252
  %v5255 = vrot.slane %v4719, 3
  %v5256 = vsel %vm4815, %v5255, %v5254
  %v5257 = vrot.slane %v4720, 2
  %v5258 = vsel %vm4818, %v5257, %v5256
  %v5259 = vrot.slane %v4721, 1
  %v5260 = vsel %vm4821, %v5259, %v5258
  %v5261 = vrot.slane %v4723, 7
  %v5262 = vsel %vm4803, %v5261, %v4722
  %v5263 = vrot.slane %v4724, 6
  %v5264 = vsel %vm4806, %v5263, %v5262
  %v5265 = vrot.slane %v4725, 5
  %v5266 = vsel %vm4809, %v5265, %v5264
  %v5267 = vrot.slane %v4726, 4
  %v5268 = vsel %vm4812, %v5267, %v5266
  %v5269 = vrot.slane %v4727, 3
  %v5270 = vsel %vm4815, %v5269, %v5268
  %v5271 = vrot.slane %v4728, 2
  %v5272 = vsel %vm4818, %v5271, %v5270
  %v5273 = vrot.slane %v4729, 1
  %v5274 = vsel %vm4821, %v5273, %v5272
  %v5275 = vrot.slane %v4731, 7
  %v5276 = vsel %vm4803, %v5275, %v4730
  %v5277 = vrot.slane %v4732, 6
  %v5278 = vsel %vm4806, %v5277, %v5276
  %v5279 = vrot.slane %v4733, 5
  %v5280 = vsel %vm4809, %v5279, %v5278
  %v5281 = vrot.slane %v4734, 4
  %v5282 = vsel %vm4812, %v5281, %v5280
  %v5283 = vrot.slane %v4735, 3
  %v5284 = vsel %vm4815, %v5283, %v5282
  %v5285 = vrot.slane %v4736, 2
  %v5286 = vsel %vm4818, %v5285, %v5284
  %v5287 = vrot.slane %v4737, 1
  %v5288 = vsel %vm4821, %v5287, %v5286
  %5289 = vrot.lane.b32.xlu0 %v5190, 64
  %v5290 = vpop.permute.xlu0 %5289
  %5291 = vrot.lane.b32.xlu0 %v5204, 64
  %v5292 = vpop.permute.xlu0 %5291
  %5293 = vrot.lane.b32.xlu0 %v5218, 64
  %v5294 = vpop.permute.xlu0 %5293
  %5295 = vrot.lane.b32.xlu0 %v5232, 64
  %v5296 = vpop.permute.xlu0 %5295
  %5297 = vrot.lane.b32.xlu0 %v5246, 64
  %v5298 = vpop.permute.xlu0 %5297
  %5299 = vrot.lane.b32.xlu0 %v5260, 64
  %v5300 = vpop.permute.xlu0 %5299
  %5301 = vrot.lane.b32.xlu0 %v5274, 64
  %v5302 = vpop.permute.xlu0 %5301
  %5303 = vrot.lane.b32.xlu0 %v5288, 64
  %v5304 = vpop.permute.xlu0 %5303
  %v5313 = vsel %vm998, %v4822, %v5006
  %v5314 = vsel %vm998, %v4836, %v5020
  %v5315 = vsel %vm998, %v4850, %v5034
  %v5316 = vsel %vm998, %v4864, %v5048
  %v5317 = vsel %vm998, %v4878, %v5062
  %v5318 = vsel %vm998, %v4892, %v5076
  %v5319 = vsel %vm998, %v4906, %v5090
  %v5320 = vsel %vm998, %v4920, %v5104
  %vm5321 = vcmask 523264
  %v5322 = vsel %vm5321, %v5313, %v5290
  %v5323 = vsel %vm5321, %v5314, %v5292
  %v5324 = vsel %vm5321, %v5315, %v5294
  %v5325 = vsel %vm5321, %v5316, %v5296
  %v5326 = vsel %vm5321, %v5317, %v5298
  %v5327 = vsel %vm5321, %v5318, %v5300
  %v5328 = vsel %vm5321, %v5319, %v5302
  %v5329 = vsel %vm5321, %v5320, %v5304
  %vm5330 = vcmask 785408
  %v5331 = vsel %vm5330, %v5322, 0.0
  %v5332 = vsel %vm5330, %v5323, 0.0
  %v5333 = vsel %vm5330, %v5324, 0.0
  %v5334 = vsel %vm5330, %v5325, 0.0
  %v5335 = vsel %vm5330, %v5326, 0.0
  %v5336 = vsel %vm5330, %v5327, 0.0
  %v5337 = vsel %vm5330, %v5328, 0.0
  %v5338 = vsel %vm5330, %v5329, 0.0
  %v5339 = vpack.c.bf16 %v5332, %v5331
  %v5340 = vpack.c.bf16 %v5334, %v5333
  %v5341 = vpack.c.bf16 %v5336, %v5335
  %v5342 = vpack.c.bf16 %v5338, %v5337
  %v5347 = vunpack.c.l.b16 %v5339
  %v5348 = vunpack.c.h.b16 %v5339
  %v5349 = vunpack.c.l.b16 %v5340
  %v5350 = vunpack.c.h.b16 %v5340
  %v5351 = vunpack.c.l.b16 %v5341
  %v5352 = vunpack.c.h.b16 %v5341
  %v5353 = vunpack.c.l.b16 %v5342
  %v5354 = vunpack.c.h.b16 %v5342
  %v5355 = vpack.c.b16 %v5347, %v5347
  %v5356 = vpack.c.b16 %v5348, %v5348
  %v5357 = vpack.c.b16 %v5349, %v5349
  %v5358 = vpack.c.b16 %v5350, %v5350
  %v5359 = vpack.c.b16 %v5351, %v5351
  %v5360 = vpack.c.b16 %v5352, %v5352
  %v5361 = vpack.c.b16 %v5353, %v5353
  %v5362 = vpack.c.b16 %v5354, %v5354
  %5371 = vst [vmem:[%s3] sm:$0xf] %v5355
  %5372 = vst [vmem:[%s3 + $0x4] sm:$0xf] %v5356
  %5373 = vst [vmem:[%s3 + $0x8] sm:$0xf] %v5357
  %5374 = vst [vmem:[%s3 + $0xc] sm:$0xf] %v5358
  %5375 = vst [vmem:[%s3 + $0x10] sm:$0xf] %v5359
  %5376 = vst [vmem:[%s3 + $0x14] sm:$0xf] %v5360
  %5377 = vst [vmem:[%s3 + $0x18] sm:$0xf] %v5361
  %5378 = vst [vmem:[%s3 + $0x1c] sm:$0xf] %v5362
  // Predicated region
  $region14: #{bilstm_tagger_forward.2} parent=0 // pred_check
    _
  $region15: #{bilstm_tagger_forward.2} parent=0 // pred_check_branch
    %5380 = sbr.rel (0) target = $region17
  $region16: #{bilstm_tagger_forward.2} parent=0 // pred_region
    _
  $region17: #{bilstm_tagger_forward.2} parent=0 // pred_fallthru
    _
  // Predicated region
  $region18: #{bilstm_tagger_forward.2} parent=0 // pred_check
    _
  $region19: #{bilstm_tagger_forward.2} parent=0 // pred_check_branch
    %5382 = sbr.rel (0) target = $region21
  $region20: #{bilstm_tagger_forward.2} parent=0 // pred_region
    _
  $region21: #{bilstm_tagger_forward.2} parent=0 // pred_fallthru
    _

</llo_original>
